<compile_context>
chip_gen: v7x
topology: tpu7x:2x2x1
jax: 0.10.0
libtpu: 0.0.40
codegen_flags: <defaults>
</compile_context>

<pallas_src>
import math

import jax
import jax.numpy as jnp
from jax.experimental import pallas as pl

D_MODEL = 32
NHEAD = 4
HEAD_DIM = D_MODEL // NHEAD
DIM_FF = 64
NUM_LAYERS = 2
T = 8     # number of decoder queries (tgt length)
S = 16    # memory sequence length
B = 2     # batch
EPS = 1e-5


# --------------------------------- kernel -----------------------------------

def decoder_stack_kernel(tgt_ref, mem_ref, qpos_ref, pos_ref,
                         sa_wqkv_ref, attn_w_ref, misc_b_ref,
                         ca_wkv_ref, ca_bkv_ref, qp_w_ref, qp_b_ref,
                         w1_ref, b1_ref, w2_ref, norm_wb_ref,
                         out_ref):
    """Runs all decoder layers for all batches in a single invocation.

    sa_wqkv : (L, D, 3D)    self-attn fused [Wq^T*scale | Wk^T | Wv^T]
    attn_w  : (L, 3, D, D)  [cross Wq^T*scale, self Wo^T, cross Wo^T]
    misc_b  : (L, 4, 1, D)  [self bv, self bo, cross bo, ffn b2]
    ca_wkv  : (2, D, L*D)   cross-attn [Wk^T | Wv^T] stacked over layers
    ca_bkv  : (2, 1, L*D)   matching biases
    qp_w    : (D, L*3D)     per layer [self Wq^T*s | self Wk^T | cross Wq^T*s]
    qp_b    : (1, L*3D)     matching (pre-scaled) biases
    w1/b1/w2: FFN params stacked over layers (b2 lives in misc_b[:, 3])
    norm_wb : (2, L, 3, 1, D)  LayerNorm weights / biases (norm1..norm3)
    """
    b_, t_, d = tgt_ref.shape
    s_ = mem_ref.shape[1]
    n_layers = w1_ref.shape[0]

    # (B, N, D) -> (B*N, D): layout preserving (N is a multiple of 8).
    x = tgt_ref[...].reshape(b_ * t_, d)               # decoder state
    qp = qpos_ref[...].reshape(b_ * t_, d)             # query_pos
    mem_v = mem_ref[...].reshape(b_ * s_, d)           # cross-attn value
    mem_k = mem_v + pos_ref[...].reshape(b_ * s_, d)   # cross-attn key input

    def layer_norm(v, w, b):
        # Independent reductions: mean(x) and mean(x*x) have no data
        # dependence, so the two XLU lane reductions can co-issue.
        mu = jnp.mean(v, axis=-1, keepdims=True)
        m2 = jnp.mean(v * v, axis=-1, keepdims=True)
        return (v - mu) * jax.lax.rsqrt(m2 - mu * mu + EPS) * w + b

    def to_heads(m, n):
        # (B*n, D) -> (NHEAD*B, n, HEAD_DIM).  Slices / reshapes are layout
        # preserving (n multiple of 8, HEAD_DIM=8); concat is leading-axis.
        parts = [m[:, h * HEAD_DIM:(h + 1) * HEAD_DIM].reshape(b_, n, HEAD_DIM)
                 for h in range(NHEAD)]
        return jnp.concatenate(parts, axis=0)

    def from_heads(oh, n):
        # (NHEAD*B, n, HEAD_DIM) -> (B*n, D): heads back into lanes.
        return jnp.concatenate(
            [oh[h * b_:(h + 1) * b_].reshape(b_ * n, HEAD_DIM)
             for h in range(NHEAD)], axis=-1)

    def mha(q, k, v, wo, bo, n_q, n_kv):
        """nn.MultiheadAttention core, all heads & batches in one batched
        contraction / one softmax (1/sqrt(head_dim) already folded into q)."""
        qh = to_heads(q, n_q)
        kh = to_heads(k, n_kv)
        vh = to_heads(v, n_kv)
        sc = jnp.einsum('gqd,gkd->gqk', qh, kh,
                        preferred_element_type=jnp.float32)
        sc = sc - jnp.max(sc, axis=-1, keepdims=True)
        p = jnp.exp(sc)
        p = p * pl.reciprocal(jnp.sum(p, axis=-1, keepdims=True), approx=True)
        oh = jnp.einsum('gqk,gkd->gqd', p, vh,
                        preferred_element_type=jnp.float32)
        # Single K=D output projection instead of NHEAD small accumulations.
        return jnp.dot(from_heads(oh, n_q), wo,
                       preferred_element_type=jnp.float32) + bo

    # ------- hoisted projections of layer-invariant inputs (run once) -------
    # Cross-attention K/V of memory for every layer: two wide matmuls.
    k_all = jnp.dot(mem_k, ca_wkv_ref[0],
                    preferred_element_type=jnp.float32) + ca_bkv_ref[0]
    v_all = jnp.dot(mem_v, ca_wkv_ref[1],
                    preferred_element_type=jnp.float32) + ca_bkv_ref[1]
    # query_pos additive terms (qp @ W + b) for every layer: one wide matmul.
    qp_all = jnp.dot(qp, qp_w_ref[...],
                     preferred_element_type=jnp.float32) + qp_b_ref[...]

    for l in range(n_layers):                           # unrolled at trace time
        c0 = l * 3 * d
        # --- self attention (pre-norm): q = k = norm1(x)+qpos, v = norm1(x) ---
        x2 = layer_norm(x, norm_wb_ref[0, l, 0], norm_wb_ref[1, l, 0])
        qkv = jnp.dot(x2, sa_wqkv_ref[l],               # fused (D, 3D) proj
                      preferred_element_type=jnp.float32)
        q = qkv[:, :d] + qp_all[:, c0:c0 + d]                 # + (qp Wq + bq)*s
        k = qkv[:, d:2 * d] + qp_all[:, c0 + d:c0 + 2 * d]    # + qp Wk + bk
        v = qkv[:, 2 * d:] + misc_b_ref[l, 0]                 # + bv
        x = x + mha(q, k, v, attn_w_ref[l, 1], misc_b_ref[l, 1], t_, t_)
        # --- cross attention: q = norm2(x)+qpos, k = memory+pos, v = memory ---
        x2 = layer_norm(x, norm_wb_ref[0, l, 1], norm_wb_ref[1, l, 1])
        qc = (jnp.dot(x2, attn_w_ref[l, 0], preferred_element_type=jnp.float32)
              + qp_all[:, c0 + 2 * d:c0 + 3 * d])
        kc = k_all[:, l * d:(l + 1) * d]
        vc = v_all[:, l * d:(l + 1) * d]
        x = x + mha(qc, kc, vc, attn_w_ref[l, 2], misc_b_ref[l, 2], t_, s_)
        # --- FFN: linear2(relu(linear1(norm3(x)))) ---
        x2 = layer_norm(x, norm_wb_ref[0, l, 2], norm_wb_ref[1, l, 2])
        hid = jnp.maximum(
            jnp.dot(x2, w1_ref[l], preferred_element_type=jnp.float32)
            + b1_ref[l], 0.0)
        x = x + jnp.dot(hid, w2_ref[l],
                        preferred_element_type=jnp.float32) + misc_b_ref[l, 3]

    out_ref[...] = x.reshape(b_, t_, d)


# ------------------------------ pallas wrapper -------------------------------

@jax.jit
def transformer_decoder(tgt, memory, pos, query_pos, packed_params):
    """TransformerDecoder.forward with all masks None, eval mode.

    tgt/query_pos: (T, B, D); memory/pos: (S, B, D).
    Returns (1, T, B, D) == output.unsqueeze(0).
    """
    # TODO(synk): tgt_mask / memory_mask / key-padding masks / dropout are not
    # exercised (the reference forward is run with masks = None, eval mode).
    t_, b_, d_ = tgt.shape
    tgt_b = jnp.transpose(tgt, (1, 0, 2))        # (B, T, D)
    mem_b = jnp.transpose(memory, (1, 0, 2))     # (B, S, D)
    qp_b = jnp.transpose(query_pos, (1, 0, 2))
    pos_b = jnp.transpose(pos, (1, 0, 2))
    out = pl.pallas_call(
        decoder_stack_kernel,
        out_shape=jax.ShapeDtypeStruct((b_, t_, d_), jnp.float32),
    )(tgt_b, mem_b, qp_b, pos_b, *packed_params)
    return jnp.transpose(out, (1, 0, 2))[None]   # (1, T, B, D)


# --------------------------- deterministic params ----------------------------

def _mha_raw(key, d):
    """Raw nn.MultiheadAttention-style params: in_proj (3d,d)/(3d,), out (d,d)/(d,)."""
    k0, k1, k2, k3 = jax.random.split(key, 4)
    in_w = 0.02 * jax.random.normal(k0, (3 * d, d), jnp.float32)
    in_b = 0.02 * jax.random.normal(k1, (3 * d,), jnp.float32)
    out_w = 0.02 * jax.random.normal(k2, (d, d), jnp.float32)
    out_b = 0.02 * jax.random.normal(k3, (d,), jnp.float32)
    return in_w, in_b, out_w, out_b


def init_layer_params(key):
    d, dff = D_MODEL, DIM_FF
    ksa, kca, k1w, k1b, k2w, k2b = jax.random.split(key, 6)
    return dict(
        sa=_mha_raw(ksa, d),
        ca=_mha_raw(kca, d),
        w1=0.02 * jax.random.normal(k1w, (dff, d), jnp.float32),
        b1=0.02 * jax.random.normal(k1b, (dff,), jnp.float32),
        w2=0.02 * jax.random.normal(k2w, (d, dff), jnp.float32),
        b2=0.02 * jax.random.normal(k2b, (d,), jnp.float32),
    )


def pack_layers(per_layer):
    """Pack per-layer params into 11 slab arrays (few DMAs, pre-transposed,
    1/sqrt(head_dim) folded into the q projections, layer-invariant-input
    projections concatenated into wide weight slabs)."""
    d, dff, n_l = D_MODEL, DIM_FF, len(per_layer)
    scale = 1.0 / math.sqrt(HEAD_DIM)
    sa_wqkv, attn_w, misc_b = [], [], []
    ca_wk, ca_wv, ca_bk, ca_bv = [], [], [], []
    qp_wb, qp_bb = [], []
    w1s, b1s, w2s = [], [], []
    for p in per_layer:
        sw, sb, sow, sob = p["sa"]
        cw, cb, cow, cob = p["ca"]
        s_wq, s_wk, s_wv = sw[:d].T * scale, sw[d:2 * d].T, sw[2 * d:].T
        s_bq, s_bk, s_bv = sb[:d] * scale, sb[d:2 * d], sb[2 * d:]
        c_wq, c_wk, c_wv = cw[:d].T * scale, cw[d:2 * d].T, cw[2 * d:].T
        c_bq, c_bk, c_bv = cb[:d] * scale, cb[d:2 * d], cb[2 * d:]
        sa_wqkv.append(jnp.concatenate([s_wq, s_wk, s_wv], axis=1))     # (D,3D)
        attn_w.append(jnp.stack([c_wq, sow.T, cow.T]))                  # (3,D,D)
        misc_b.append(jnp.stack([s_bv, sob, cob, p["b2"]]).reshape(4, 1, d))
        ca_wk.append(c_wk)
        ca_wv.append(c_wv)
        ca_bk.append(c_bk)
        ca_bv.append(c_bv)
        qp_wb.append(jnp.concatenate([s_wq, s_wk, c_wq], axis=1))       # (D,3D)
        qp_bb.append(jnp.concatenate([s_bq, s_bk, c_bq]))               # (3D,)
        w1s.append(p["w1"].T)                                           # (D,DFF)
        b1s.append(p["b1"].reshape(1, dff))
        w2s.append(p["w2"].T)                                           # (DFF,D)
    return [
        jnp.stack(sa_wqkv),                                             # (L,D,3D)
        jnp.stack(attn_w),                                              # (L,3,D,D)
        jnp.stack(misc_b),                                              # (L,4,1,D)
        jnp.stack([jnp.concatenate(ca_wk, axis=1),
                   jnp.concatenate(ca_wv, axis=1)]),                    # (2,D,L*D)
        jnp.stack([jnp.concatenate(ca_bk).reshape(1, n_l * d),
                   jnp.concatenate(ca_bv).reshape(1, n_l * d)]),        # (2,1,L*D)
        jnp.concatenate(qp_wb, axis=1),                                 # (D,L*3D)
        jnp.concatenate(qp_bb).reshape(1, n_l * 3 * d),                 # (1,L*3D)
        jnp.stack(w1s), jnp.stack(b1s), jnp.stack(w2s),                 # FFN
        jnp.stack([jnp.ones((n_l, 3, 1, d), jnp.float32),               # LN w
                   jnp.zeros((n_l, 3, 1, d), jnp.float32)]),            # LN b
    ]


# ----------------------------- pure-JAX reference ----------------------------

def reference_decoder(tgt, memory, pos, query_pos, per_layer):
    d = tgt.shape[-1]
    scale = 1.0 / math.sqrt(HEAD_DIM)

    def ln(x):
        mu = jnp.mean(x, -1, keepdims=True)
        var = jnp.mean((x - mu) ** 2, -1, keepdims=True)
        return (x - mu) / jnp.sqrt(var + EPS)

    def mha(q_in, k_in, v_in, p):
        in_w, in_b, out_w, out_b = p
        nq, b = q_in.shape[0], q_in.shape[1]
        nk = k_in.shape[0]
        q = (q_in @ in_w[:d].T + in_b[:d]) * scale
        k = k_in @ in_w[d:2 * d].T + in_b[d:2 * d]
        v = v_in @ in_w[2 * d:].T + in_b[2 * d:]
        q = q.reshape(nq, b * NHEAD, HEAD_DIM).transpose(1, 0, 2)
        k = k.reshape(nk, b * NHEAD, HEAD_DIM).transpose(1, 0, 2)
        v = v.reshape(nk, b * NHEAD, HEAD_DIM).transpose(1, 0, 2)
        a = jax.nn.softmax(q @ k.transpose(0, 2, 1), axis=-1)
        o = (a @ v).transpose(1, 0, 2).reshape(nq, b, d)
        return o @ out_w.T + out_b

    x = tgt
    for p in per_layer:
        x2 = ln(x)
        qk = x2 + query_pos
        x = x + mha(qk, qk, x2, p["sa"])
        x2 = ln(x)
        x = x + mha(x2 + query_pos, memory + pos, memory, p["ca"])
        x2 = ln(x)
        h = jax.nn.relu(x2 @ p["w1"].T + p["b1"])
        x = x + h @ p["w2"].T + p["b2"]
    return x[None]


# ----------------------------------- main ------------------------------------

if __name__ == "__main__":
    key = jax.random.PRNGKey(0)
    k1, k2, k3, k4, kp = jax.random.split(key, 5)
    tgt = jax.random.normal(k1, (T, B, D_MODEL), jnp.float32)
    memory = jax.random.normal(k2, (S, B, D_MODEL), jnp.float32)
    pos = jax.random.normal(k3, (S, B, D_MODEL), jnp.float32)
    query_pos = jax.random.normal(k4, (T, B, D_MODEL), jnp.float32)

    layer_keys = jax.random.split(kp, NUM_LAYERS)
    per_layer = [init_layer_params(k) for k in layer_keys]
    packed = pack_layers(per_layer)

    out = transformer_decoder(tgt, memory, pos, query_pos, packed)
    out = jax.block_until_ready(out)
    assert out.shape == (1, T, B, D_MODEL), out.shape
    assert bool(jnp.all(jnp.isfinite(out)))

    ref = reference_decoder(tgt, memory, pos, query_pos, per_layer)
    err = float(jnp.max(jnp.abs(out - ref)))
    # approx reciprocal in the softmax gives ~1e-3-level deviations; 1e-2 is
    # a generous margin that still catches structural / packing mistakes.
    assert err < 1e-2, f"kernel vs reference mismatch: {err}"
    print("KERNEL_OK")
</pallas_src>

<mosaic_0001>
module attributes {stable_mosaic.version = 11 : i64} {
  func.func @decoder_stack_kernel(%arg0: memref<2x8x32xf32, #tpu.memory_space<vmem>>, %arg1: memref<2x16x32xf32, #tpu.memory_space<vmem>>, %arg2: memref<2x8x32xf32, #tpu.memory_space<vmem>>, %arg3: memref<2x16x32xf32, #tpu.memory_space<vmem>>, %arg4: memref<2x32x96xf32, #tpu.memory_space<vmem>>, %arg5: memref<2x3x32x32xf32, #tpu.memory_space<vmem>>, %arg6: memref<2x4x1x32xf32, #tpu.memory_space<vmem>>, %arg7: memref<2x32x64xf32, #tpu.memory_space<vmem>>, %arg8: memref<2x1x64xf32, #tpu.memory_space<vmem>>, %arg9: memref<32x192xf32, #tpu.memory_space<vmem>>, %arg10: memref<1x192xf32, #tpu.memory_space<vmem>>, %arg11: memref<2x32x64xf32, #tpu.memory_space<vmem>>, %arg12: memref<2x1x64xf32, #tpu.memory_space<vmem>>, %arg13: memref<2x64x32xf32, #tpu.memory_space<vmem>>, %arg14: memref<2x2x3x1x32xf32, #tpu.memory_space<vmem>>, %arg15: memref<2x8x32xf32, #tpu.memory_space<vmem>>) attributes {dimension_semantics = [], scalar_prefetch = 0 : i64, scratch_operands = 0 : i64, tpu.core_type = #tpu.core_type<tc>} {
    %c0 = arith.constant 0 : index
    %c0_0 = arith.constant 0 : index
    %c0_1 = arith.constant 0 : index
    %0 = vector.load %arg0[%c0, %c0_0, %c0_1] : memref<2x8x32xf32, #tpu.memory_space<vmem>>, vector<2x8x32xf32>
    %1 = vector.shape_cast %0 : vector<2x8x32xf32> to vector<16x32xf32>
    %c0_2 = arith.constant 0 : index
    %c0_3 = arith.constant 0 : index
    %c0_4 = arith.constant 0 : index
    %2 = vector.load %arg2[%c0_2, %c0_3, %c0_4] : memref<2x8x32xf32, #tpu.memory_space<vmem>>, vector<2x8x32xf32>
    %3 = vector.shape_cast %2 : vector<2x8x32xf32> to vector<16x32xf32>
    %c0_5 = arith.constant 0 : index
    %c0_6 = arith.constant 0 : index
    %c0_7 = arith.constant 0 : index
    %4 = vector.load %arg1[%c0_5, %c0_6, %c0_7] : memref<2x16x32xf32, #tpu.memory_space<vmem>>, vector<2x16x32xf32>
    %5 = vector.shape_cast %4 : vector<2x16x32xf32> to vector<32x32xf32>
    %c0_8 = arith.constant 0 : index
    %c0_9 = arith.constant 0 : index
    %c0_10 = arith.constant 0 : index
    %6 = vector.load %arg3[%c0_8, %c0_9, %c0_10] : memref<2x16x32xf32, #tpu.memory_space<vmem>>, vector<2x16x32xf32>
    %7 = vector.shape_cast %6 : vector<2x16x32xf32> to vector<32x32xf32>
    %8 = arith.addf %5, %7 : vector<32x32xf32>
    %c0_11 = arith.constant 0 : index
    %c0_12 = arith.constant 0 : index
    %c0_13 = arith.constant 0 : index
    %9 = vector.load %arg7[%c0_11, %c0_12, %c0_13] : memref<2x32x64xf32, #tpu.memory_space<vmem>>, vector<1x32x64xf32>
    %10 = vector.shape_cast %9 : vector<1x32x64xf32> to vector<32x64xf32>
    %cst = arith.constant dense<0.000000e+00> : vector<32x64xf32>
    %11 = tpu.matmul %8, %10, %cst {dimension_numbers = #tpu.dot_dimension_numbers<[1], [0], [0], [1], [0, 0, 1, 1], [], []>} : vector<32x32xf32>, vector<32x64xf32>, vector<32x64xf32> -> vector<32x64xf32>
    %c0_14 = arith.constant 0 : index
    %c0_15 = arith.constant 0 : index
    %c0_16 = arith.constant 0 : index
    %12 = vector.load %arg8[%c0_14, %c0_15, %c0_16] : memref<2x1x64xf32, #tpu.memory_space<vmem>>, vector<1x1x64xf32>
    %13 = vector.shape_cast %12 : vector<1x1x64xf32> to vector<1x64xf32>
    %14 = vector.broadcast %13 : vector<1x64xf32> to vector<32x64xf32>
    %15 = arith.addf %11, %14 : vector<32x64xf32>
    %c1 = arith.constant 1 : index
    %c0_17 = arith.constant 0 : index
    %c0_18 = arith.constant 0 : index
    %16 = vector.load %arg7[%c1, %c0_17, %c0_18] : memref<2x32x64xf32, #tpu.memory_space<vmem>>, vector<1x32x64xf32>
    %17 = vector.shape_cast %16 : vector<1x32x64xf32> to vector<32x64xf32>
    %cst_19 = arith.constant dense<0.000000e+00> : vector<32x64xf32>
    %18 = tpu.matmul %5, %17, %cst_19 {dimension_numbers = #tpu.dot_dimension_numbers<[1], [0], [0], [1], [0, 0, 1, 1], [], []>} : vector<32x32xf32>, vector<32x64xf32>, vector<32x64xf32> -> vector<32x64xf32>
    %c1_20 = arith.constant 1 : index
    %c0_21 = arith.constant 0 : index
    %c0_22 = arith.constant 0 : index
    %19 = vector.load %arg8[%c1_20, %c0_21, %c0_22] : memref<2x1x64xf32, #tpu.memory_space<vmem>>, vector<1x1x64xf32>
    %20 = vector.shape_cast %19 : vector<1x1x64xf32> to vector<1x64xf32>
    %21 = vector.broadcast %20 : vector<1x64xf32> to vector<32x64xf32>
    %22 = arith.addf %18, %21 : vector<32x64xf32>
    %c0_23 = arith.constant 0 : index
    %c0_24 = arith.constant 0 : index
    %23 = vector.load %arg9[%c0_23, %c0_24] : memref<32x192xf32, #tpu.memory_space<vmem>>, vector<32x192xf32>
    %cst_25 = arith.constant dense<0.000000e+00> : vector<16x192xf32>
    %24 = tpu.matmul %3, %23, %cst_25 {dimension_numbers = #tpu.dot_dimension_numbers<[1], [0], [0], [1], [0, 0, 1, 1], [], []>} : vector<16x32xf32>, vector<32x192xf32>, vector<16x192xf32> -> vector<16x192xf32>
    %c0_26 = arith.constant 0 : index
    %c0_27 = arith.constant 0 : index
    %25 = vector.load %arg10[%c0_26, %c0_27] : memref<1x192xf32, #tpu.memory_space<vmem>>, vector<1x192xf32>
    %26 = vector.broadcast %25 : vector<1x192xf32> to vector<16x192xf32>
    %27 = arith.addf %24, %26 : vector<16x192xf32>
    %c0_28 = arith.constant 0 : index
    %c0_29 = arith.constant 0 : index
    %c0_30 = arith.constant 0 : index
    %c0_31 = arith.constant 0 : index
    %c0_32 = arith.constant 0 : index
    %28 = vector.load %arg14[%c0_28, %c0_29, %c0_30, %c0_31, %c0_32] : memref<2x2x3x1x32xf32, #tpu.memory_space<vmem>>, vector<1x1x1x1x32xf32>
    %29 = vector.shape_cast %28 : vector<1x1x1x1x32xf32> to vector<1x32xf32>
    %c1_33 = arith.constant 1 : index
    %c0_34 = arith.constant 0 : index
    %c0_35 = arith.constant 0 : index
    %c0_36 = arith.constant 0 : index
    %c0_37 = arith.constant 0 : index
    %30 = vector.load %arg14[%c1_33, %c0_34, %c0_35, %c0_36, %c0_37] : memref<2x2x3x1x32xf32, #tpu.memory_space<vmem>>, vector<1x1x1x1x32xf32>
    %31 = vector.shape_cast %30 : vector<1x1x1x1x32xf32> to vector<1x32xf32>
    %cst_38 = arith.constant dense<0.000000e+00> : vector<16xf32>
    %32 = vector.multi_reduction <add>, %1, %cst_38 [1] : vector<16x32xf32> to vector<16xf32>
    %33 = vector.shape_cast %32 : vector<16xf32> to vector<16x1xf32>
    %cst_39 = arith.constant 3.200000e+01 : f32
    %34 = vector.broadcast %cst_39 : f32 to vector<16x1xf32>
    %35 = arith.divf %33, %34 : vector<16x1xf32>
    %36 = arith.mulf %1, %1 : vector<16x32xf32>
    %cst_40 = arith.constant dense<0.000000e+00> : vector<16xf32>
    %37 = vector.multi_reduction <add>, %36, %cst_40 [1] : vector<16x32xf32> to vector<16xf32>
    %38 = vector.shape_cast %37 : vector<16xf32> to vector<16x1xf32>
    %cst_41 = arith.constant 3.200000e+01 : f32
    %39 = vector.broadcast %cst_41 : f32 to vector<16x1xf32>
    %40 = arith.divf %38, %39 : vector<16x1xf32>
    %41 = vector.broadcast %35 : vector<16x1xf32> to vector<16x32xf32>
    %42 = arith.subf %1, %41 : vector<16x32xf32>
    %43 = arith.mulf %35, %35 : vector<16x1xf32>
    %44 = arith.subf %40, %43 : vector<16x1xf32>
    %cst_42 = arith.constant 9.99999974E-6 : f32
    %45 = vector.broadcast %cst_42 : f32 to vector<16x1xf32>
    %46 = arith.addf %44, %45 : vector<16x1xf32>
    %47 = math.rsqrt %46 : vector<16x1xf32>
    %48 = vector.broadcast %47 : vector<16x1xf32> to vector<16x32xf32>
    %49 = arith.mulf %42, %48 : vector<16x32xf32>
    %50 = vector.broadcast %29 : vector<1x32xf32> to vector<16x32xf32>
    %51 = arith.mulf %49, %50 : vector<16x32xf32>
    %52 = vector.broadcast %31 : vector<1x32xf32> to vector<16x32xf32>
    %53 = arith.addf %51, %52 : vector<16x32xf32>
    %c0_43 = arith.constant 0 : index
    %c0_44 = arith.constant 0 : index
    %c0_45 = arith.constant 0 : index
    %54 = vector.load %arg4[%c0_43, %c0_44, %c0_45] : memref<2x32x96xf32, #tpu.memory_space<vmem>>, vector<1x32x96xf32>
    %55 = vector.shape_cast %54 : vector<1x32x96xf32> to vector<32x96xf32>
    %cst_46 = arith.constant dense<0.000000e+00> : vector<16x96xf32>
    %56 = tpu.matmul %53, %55, %cst_46 {dimension_numbers = #tpu.dot_dimension_numbers<[1], [0], [0], [1], [0, 0, 1, 1], [], []>} : vector<16x32xf32>, vector<32x96xf32>, vector<16x96xf32> -> vector<16x96xf32>
    %57 = vector.extract_strided_slice %56 {offsets = [0, 0], sizes = [16, 32], strides = [1, 1]} : vector<16x96xf32> to vector<16x32xf32>
    %58 = vector.extract_strided_slice %27 {offsets = [0, 0], sizes = [16, 32], strides = [1, 1]} : vector<16x192xf32> to vector<16x32xf32>
    %59 = arith.addf %57, %58 : vector<16x32xf32>
    %60 = vector.extract_strided_slice %56 {offsets = [0, 32], sizes = [16, 32], strides = [1, 1]} : vector<16x96xf32> to vector<16x32xf32>
    %61 = vector.extract_strided_slice %27 {offsets = [0, 32], sizes = [16, 32], strides = [1, 1]} : vector<16x192xf32> to vector<16x32xf32>
    %62 = arith.addf %60, %61 : vector<16x32xf32>
    %63 = vector.extract_strided_slice %56 {offsets = [0, 64], sizes = [16, 32], strides = [1, 1]} : vector<16x96xf32> to vector<16x32xf32>
    %c0_47 = arith.constant 0 : index
    %c0_48 = arith.constant 0 : index
    %c0_49 = arith.constant 0 : index
    %c0_50 = arith.constant 0 : index
    %64 = vector.load %arg6[%c0_47, %c0_48, %c0_49, %c0_50] : memref<2x4x1x32xf32, #tpu.memory_space<vmem>>, vector<1x1x1x32xf32>
    %65 = vector.shape_cast %64 : vector<1x1x1x32xf32> to vector<1x32xf32>
    %66 = vector.broadcast %65 : vector<1x32xf32> to vector<16x32xf32>
    %67 = arith.addf %63, %66 : vector<16x32xf32>
    %c0_51 = arith.constant 0 : index
    %c1_52 = arith.constant 1 : index
    %c0_53 = arith.constant 0 : index
    %c0_54 = arith.constant 0 : index
    %68 = vector.load %arg5[%c0_51, %c1_52, %c0_53, %c0_54] : memref<2x3x32x32xf32, #tpu.memory_space<vmem>>, vector<1x1x32x32xf32>
    %69 = vector.shape_cast %68 : vector<1x1x32x32xf32> to vector<32x32xf32>
    %c0_55 = arith.constant 0 : index
    %c1_56 = arith.constant 1 : index
    %c0_57 = arith.constant 0 : index
    %c0_58 = arith.constant 0 : index
    %70 = vector.load %arg6[%c0_55, %c1_56, %c0_57, %c0_58] : memref<2x4x1x32xf32, #tpu.memory_space<vmem>>, vector<1x1x1x32xf32>
    %71 = vector.shape_cast %70 : vector<1x1x1x32xf32> to vector<1x32xf32>
    %72 = vector.extract_strided_slice %59 {offsets = [0, 0], sizes = [16, 8], strides = [1, 1]} : vector<16x32xf32> to vector<16x8xf32>
    %73 = vector.shape_cast %72 : vector<16x8xf32> to vector<2x8x8xf32>
    %74 = vector.extract_strided_slice %59 {offsets = [0, 8], sizes = [16, 8], strides = [1, 1]} : vector<16x32xf32> to vector<16x8xf32>
    %75 = vector.shape_cast %74 : vector<16x8xf32> to vector<2x8x8xf32>
    %76 = vector.extract_strided_slice %59 {offsets = [0, 16], sizes = [16, 8], strides = [1, 1]} : vector<16x32xf32> to vector<16x8xf32>
    %77 = vector.shape_cast %76 : vector<16x8xf32> to vector<2x8x8xf32>
    %78 = vector.extract_strided_slice %59 {offsets = [0, 24], sizes = [16, 8], strides = [1, 1]} : vector<16x32xf32> to vector<16x8xf32>
    %79 = vector.shape_cast %78 : vector<16x8xf32> to vector<2x8x8xf32>
    %80 = tpu.concatenate %73, %75, %77, %79 in 0 : vector<2x8x8xf32>, vector<2x8x8xf32>, vector<2x8x8xf32>, vector<2x8x8xf32> -> vector<8x8x8xf32>
    %81 = vector.extract_strided_slice %62 {offsets = [0, 0], sizes = [16, 8], strides = [1, 1]} : vector<16x32xf32> to vector<16x8xf32>
    %82 = vector.shape_cast %81 : vector<16x8xf32> to vector<2x8x8xf32>
    %83 = vector.extract_strided_slice %62 {offsets = [0, 8], sizes = [16, 8], strides = [1, 1]} : vector<16x32xf32> to vector<16x8xf32>
    %84 = vector.shape_cast %83 : vector<16x8xf32> to vector<2x8x8xf32>
    %85 = vector.extract_strided_slice %62 {offsets = [0, 16], sizes = [16, 8], strides = [1, 1]} : vector<16x32xf32> to vector<16x8xf32>
    %86 = vector.shape_cast %85 : vector<16x8xf32> to vector<2x8x8xf32>
    %87 = vector.extract_strided_slice %62 {offsets = [0, 24], sizes = [16, 8], strides = [1, 1]} : vector<16x32xf32> to vector<16x8xf32>
    %88 = vector.shape_cast %87 : vector<16x8xf32> to vector<2x8x8xf32>
    %89 = tpu.concatenate %82, %84, %86, %88 in 0 : vector<2x8x8xf32>, vector<2x8x8xf32>, vector<2x8x8xf32>, vector<2x8x8xf32> -> vector<8x8x8xf32>
    %90 = vector.extract_strided_slice %67 {offsets = [0, 0], sizes = [16, 8], strides = [1, 1]} : vector<16x32xf32> to vector<16x8xf32>
    %91 = vector.shape_cast %90 : vector<16x8xf32> to vector<2x8x8xf32>
    %92 = vector.extract_strided_slice %67 {offsets = [0, 8], sizes = [16, 8], strides = [1, 1]} : vector<16x32xf32> to vector<16x8xf32>
    %93 = vector.shape_cast %92 : vector<16x8xf32> to vector<2x8x8xf32>
    %94 = vector.extract_strided_slice %67 {offsets = [0, 16], sizes = [16, 8], strides = [1, 1]} : vector<16x32xf32> to vector<16x8xf32>
    %95 = vector.shape_cast %94 : vector<16x8xf32> to vector<2x8x8xf32>
    %96 = vector.extract_strided_slice %67 {offsets = [0, 24], sizes = [16, 8], strides = [1, 1]} : vector<16x32xf32> to vector<16x8xf32>
    %97 = vector.shape_cast %96 : vector<16x8xf32> to vector<2x8x8xf32>
    %98 = tpu.concatenate %91, %93, %95, %97 in 0 : vector<2x8x8xf32>, vector<2x8x8xf32>, vector<2x8x8xf32>, vector<2x8x8xf32> -> vector<8x8x8xf32>
    "tpu.trace_start"() <{level = 10 : i32, message = "gqd,gkd->gqk"}> : () -> ()
    %cst_59 = arith.constant dense<0.000000e+00> : vector<8x8x8xf32>
    %99 = tpu.matmul %80, %89, %cst_59 {dimension_numbers = #tpu.dot_dimension_numbers<[2], [2], [1], [1], [0, 0, 0, 1, 1, 1], [0], [0]>} : vector<8x8x8xf32>, vector<8x8x8xf32>, vector<8x8x8xf32> -> vector<8x8x8xf32>
    "tpu.trace_stop"() : () -> ()
    %cst_60 = arith.constant dense<0xFF800000> : vector<8x8xf32>
    %100 = vector.multi_reduction <maximumf>, %99, %cst_60 [2] : vector<8x8x8xf32> to vector<8x8xf32>
    %101 = vector.shape_cast %100 : vector<8x8xf32> to vector<8x8x1xf32>
    %102 = vector.broadcast %101 : vector<8x8x1xf32> to vector<8x8x8xf32>
    %103 = arith.subf %99, %102 : vector<8x8x8xf32>
    %104 = math.exp %103 : vector<8x8x8xf32>
    %cst_61 = arith.constant dense<0.000000e+00> : vector<8x8xf32>
    %105 = vector.multi_reduction <add>, %104, %cst_61 [2] : vector<8x8x8xf32> to vector<8x8xf32>
    %106 = vector.shape_cast %105 : vector<8x8xf32> to vector<8x8x1xf32>
    %107 = tpu.reciprocal %106 {approx = true} : vector<8x8x1xf32> -> vector<8x8x1xf32>
    %108 = vector.broadcast %107 : vector<8x8x1xf32> to vector<8x8x8xf32>
    %109 = arith.mulf %104, %108 : vector<8x8x8xf32>
    "tpu.trace_start"() <{level = 10 : i32, message = "gqk,gkd->gqd"}> : () -> ()
    %cst_62 = arith.constant dense<0.000000e+00> : vector<8x8x8xf32>
    %110 = tpu.matmul %109, %98, %cst_62 {dimension_numbers = #tpu.dot_dimension_numbers<[2], [1], [1], [2], [0, 0, 0, 1, 1, 2], [0], [0]>} : vector<8x8x8xf32>, vector<8x8x8xf32>, vector<8x8x8xf32> -> vector<8x8x8xf32>
    "tpu.trace_stop"() : () -> ()
    %111 = vector.extract_strided_slice %110 {offsets = [0, 0, 0], sizes = [2, 8, 8], strides = [1, 1, 1]} : vector<8x8x8xf32> to vector<2x8x8xf32>
    %112 = vector.shape_cast %111 : vector<2x8x8xf32> to vector<16x8xf32>
    %113 = vector.extract_strided_slice %110 {offsets = [2, 0, 0], sizes = [2, 8, 8], strides = [1, 1, 1]} : vector<8x8x8xf32> to vector<2x8x8xf32>
    %114 = vector.shape_cast %113 : vector<2x8x8xf32> to vector<16x8xf32>
    %115 = vector.extract_strided_slice %110 {offsets = [4, 0, 0], sizes = [2, 8, 8], strides = [1, 1, 1]} : vector<8x8x8xf32> to vector<2x8x8xf32>
    %116 = vector.shape_cast %115 : vector<2x8x8xf32> to vector<16x8xf32>
    %117 = vector.extract_strided_slice %110 {offsets = [6, 0, 0], sizes = [2, 8, 8], strides = [1, 1, 1]} : vector<8x8x8xf32> to vector<2x8x8xf32>
    %118 = vector.shape_cast %117 : vector<2x8x8xf32> to vector<16x8xf32>
    %119 = tpu.concatenate %112, %114, %116, %118 in 1 : vector<16x8xf32>, vector<16x8xf32>, vector<16x8xf32>, vector<16x8xf32> -> vector<16x32xf32>
    %cst_63 = arith.constant dense<0.000000e+00> : vector<16x32xf32>
    %120 = tpu.matmul %119, %69, %cst_63 {dimension_numbers = #tpu.dot_dimension_numbers<[1], [0], [0], [1], [0, 0, 1, 1], [], []>} : vector<16x32xf32>, vector<32x32xf32>, vector<16x32xf32> -> vector<16x32xf32>
    %121 = vector.broadcast %71 : vector<1x32xf32> to vector<16x32xf32>
    %122 = arith.addf %120, %121 : vector<16x32xf32>
    %123 = arith.addf %1, %122 : vector<16x32xf32>
    %c0_64 = arith.constant 0 : index
    %c0_65 = arith.constant 0 : index
    %c1_66 = arith.constant 1 : index
    %c0_67 = arith.constant 0 : index
    %c0_68 = arith.constant 0 : index
    %124 = vector.load %arg14[%c0_64, %c0_65, %c1_66, %c0_67, %c0_68] : memref<2x2x3x1x32xf32, #tpu.memory_space<vmem>>, vector<1x1x1x1x32xf32>
    %125 = vector.shape_cast %124 : vector<1x1x1x1x32xf32> to vector<1x32xf32>
    %c1_69 = arith.constant 1 : index
    %c0_70 = arith.constant 0 : index
    %c1_71 = arith.constant 1 : index
    %c0_72 = arith.constant 0 : index
    %c0_73 = arith.constant 0 : index
    %126 = vector.load %arg14[%c1_69, %c0_70, %c1_71, %c0_72, %c0_73] : memref<2x2x3x1x32xf32, #tpu.memory_space<vmem>>, vector<1x1x1x1x32xf32>
    %127 = vector.shape_cast %126 : vector<1x1x1x1x32xf32> to vector<1x32xf32>
    %cst_74 = arith.constant dense<0.000000e+00> : vector<16xf32>
    %128 = vector.multi_reduction <add>, %123, %cst_74 [1] : vector<16x32xf32> to vector<16xf32>
    %129 = vector.shape_cast %128 : vector<16xf32> to vector<16x1xf32>
    %cst_75 = arith.constant 3.200000e+01 : f32
    %130 = vector.broadcast %cst_75 : f32 to vector<16x1xf32>
    %131 = arith.divf %129, %130 : vector<16x1xf32>
    %132 = arith.mulf %123, %123 : vector<16x32xf32>
    %cst_76 = arith.constant dense<0.000000e+00> : vector<16xf32>
    %133 = vector.multi_reduction <add>, %132, %cst_76 [1] : vector<16x32xf32> to vector<16xf32>
    %134 = vector.shape_cast %133 : vector<16xf32> to vector<16x1xf32>
    %cst_77 = arith.constant 3.200000e+01 : f32
    %135 = vector.broadcast %cst_77 : f32 to vector<16x1xf32>
    %136 = arith.divf %134, %135 : vector<16x1xf32>
    %137 = vector.broadcast %131 : vector<16x1xf32> to vector<16x32xf32>
    %138 = arith.subf %123, %137 : vector<16x32xf32>
    %139 = arith.mulf %131, %131 : vector<16x1xf32>
    %140 = arith.subf %136, %139 : vector<16x1xf32>
    %cst_78 = arith.constant 9.99999974E-6 : f32
    %141 = vector.broadcast %cst_78 : f32 to vector<16x1xf32>
    %142 = arith.addf %140, %141 : vector<16x1xf32>
    %143 = math.rsqrt %142 : vector<16x1xf32>
    %144 = vector.broadcast %143 : vector<16x1xf32> to vector<16x32xf32>
    %145 = arith.mulf %138, %144 : vector<16x32xf32>
    %146 = vector.broadcast %125 : vector<1x32xf32> to vector<16x32xf32>
    %147 = arith.mulf %145, %146 : vector<16x32xf32>
    %148 = vector.broadcast %127 : vector<1x32xf32> to vector<16x32xf32>
    %149 = arith.addf %147, %148 : vector<16x32xf32>
    %c0_79 = arith.constant 0 : index
    %c0_80 = arith.constant 0 : index
    %c0_81 = arith.constant 0 : index
    %c0_82 = arith.constant 0 : index
    %150 = vector.load %arg5[%c0_79, %c0_80, %c0_81, %c0_82] : memref<2x3x32x32xf32, #tpu.memory_space<vmem>>, vector<1x1x32x32xf32>
    %151 = vector.shape_cast %150 : vector<1x1x32x32xf32> to vector<32x32xf32>
    %cst_83 = arith.constant dense<0.000000e+00> : vector<16x32xf32>
    %152 = tpu.matmul %149, %151, %cst_83 {dimension_numbers = #tpu.dot_dimension_numbers<[1], [0], [0], [1], [0, 0, 1, 1], [], []>} : vector<16x32xf32>, vector<32x32xf32>, vector<16x32xf32> -> vector<16x32xf32>
    %153 = vector.extract_strided_slice %27 {offsets = [0, 64], sizes = [16, 32], strides = [1, 1]} : vector<16x192xf32> to vector<16x32xf32>
    %154 = arith.addf %152, %153 : vector<16x32xf32>
    %155 = vector.extract_strided_slice %15 {offsets = [0, 0], sizes = [32, 32], strides = [1, 1]} : vector<32x64xf32> to vector<32x32xf32>
    %156 = vector.extract_strided_slice %22 {offsets = [0, 0], sizes = [32, 32], strides = [1, 1]} : vector<32x64xf32> to vector<32x32xf32>
    %c0_84 = arith.constant 0 : index
    %c2 = arith.constant 2 : index
    %c0_85 = arith.constant 0 : index
    %c0_86 = arith.constant 0 : index
    %157 = vector.load %arg5[%c0_84, %c2, %c0_85, %c0_86] : memref<2x3x32x32xf32, #tpu.memory_space<vmem>>, vector<1x1x32x32xf32>
    %158 = vector.shape_cast %157 : vector<1x1x32x32xf32> to vector<32x32xf32>
    %c0_87 = arith.constant 0 : index
    %c2_88 = arith.constant 2 : index
    %c0_89 = arith.constant 0 : index
    %c0_90 = arith.constant 0 : index
    %159 = vector.load %arg6[%c0_87, %c2_88, %c0_89, %c0_90] : memref<2x4x1x32xf32, #tpu.memory_space<vmem>>, vector<1x1x1x32xf32>
    %160 = vector.shape_cast %159 : vector<1x1x1x32xf32> to vector<1x32xf32>
    %161 = vector.extract_strided_slice %154 {offsets = [0, 0], sizes = [16, 8], strides = [1, 1]} : vector<16x32xf32> to vector<16x8xf32>
    %162 = vector.shape_cast %161 : vector<16x8xf32> to vector<2x8x8xf32>
    %163 = vector.extract_strided_slice %154 {offsets = [0, 8], sizes = [16, 8], strides = [1, 1]} : vector<16x32xf32> to vector<16x8xf32>
    %164 = vector.shape_cast %163 : vector<16x8xf32> to vector<2x8x8xf32>
    %165 = vector.extract_strided_slice %154 {offsets = [0, 16], sizes = [16, 8], strides = [1, 1]} : vector<16x32xf32> to vector<16x8xf32>
    %166 = vector.shape_cast %165 : vector<16x8xf32> to vector<2x8x8xf32>
    %167 = vector.extract_strided_slice %154 {offsets = [0, 24], sizes = [16, 8], strides = [1, 1]} : vector<16x32xf32> to vector<16x8xf32>
    %168 = vector.shape_cast %167 : vector<16x8xf32> to vector<2x8x8xf32>
    %169 = tpu.concatenate %162, %164, %166, %168 in 0 : vector<2x8x8xf32>, vector<2x8x8xf32>, vector<2x8x8xf32>, vector<2x8x8xf32> -> vector<8x8x8xf32>
    %170 = vector.extract_strided_slice %155 {offsets = [0, 0], sizes = [32, 8], strides = [1, 1]} : vector<32x32xf32> to vector<32x8xf32>
    %171 = vector.shape_cast %170 : vector<32x8xf32> to vector<2x16x8xf32>
    %172 = vector.extract_strided_slice %155 {offsets = [0, 8], sizes = [32, 8], strides = [1, 1]} : vector<32x32xf32> to vector<32x8xf32>
    %173 = vector.shape_cast %172 : vector<32x8xf32> to vector<2x16x8xf32>
    %174 = vector.extract_strided_slice %155 {offsets = [0, 16], sizes = [32, 8], strides = [1, 1]} : vector<32x32xf32> to vector<32x8xf32>
    %175 = vector.shape_cast %174 : vector<32x8xf32> to vector<2x16x8xf32>
    %176 = vector.extract_strided_slice %155 {offsets = [0, 24], sizes = [32, 8], strides = [1, 1]} : vector<32x32xf32> to vector<32x8xf32>
    %177 = vector.shape_cast %176 : vector<32x8xf32> to vector<2x16x8xf32>
    %178 = tpu.concatenate %171, %173, %175, %177 in 0 : vector<2x16x8xf32>, vector<2x16x8xf32>, vector<2x16x8xf32>, vector<2x16x8xf32> -> vector<8x16x8xf32>
    %179 = vector.extract_strided_slice %156 {offsets = [0, 0], sizes = [32, 8], strides = [1, 1]} : vector<32x32xf32> to vector<32x8xf32>
    %180 = vector.shape_cast %179 : vector<32x8xf32> to vector<2x16x8xf32>
    %181 = vector.extract_strided_slice %156 {offsets = [0, 8], sizes = [32, 8], strides = [1, 1]} : vector<32x32xf32> to vector<32x8xf32>
    %182 = vector.shape_cast %181 : vector<32x8xf32> to vector<2x16x8xf32>
    %183 = vector.extract_strided_slice %156 {offsets = [0, 16], sizes = [32, 8], strides = [1, 1]} : vector<32x32xf32> to vector<32x8xf32>
    %184 = vector.shape_cast %183 : vector<32x8xf32> to vector<2x16x8xf32>
    %185 = vector.extract_strided_slice %156 {offsets = [0, 24], sizes = [32, 8], strides = [1, 1]} : vector<32x32xf32> to vector<32x8xf32>
    %186 = vector.shape_cast %185 : vector<32x8xf32> to vector<2x16x8xf32>
    %187 = tpu.concatenate %180, %182, %184, %186 in 0 : vector<2x16x8xf32>, vector<2x16x8xf32>, vector<2x16x8xf32>, vector<2x16x8xf32> -> vector<8x16x8xf32>
    "tpu.trace_start"() <{level = 10 : i32, message = "gqd,gkd->gqk"}> : () -> ()
    %cst_91 = arith.constant dense<0.000000e+00> : vector<8x8x16xf32>
    %188 = tpu.matmul %169, %178, %cst_91 {dimension_numbers = #tpu.dot_dimension_numbers<[2], [2], [1], [1], [0, 0, 0, 1, 1, 1], [0], [0]>} : vector<8x8x8xf32>, vector<8x16x8xf32>, vector<8x8x16xf32> -> vector<8x8x16xf32>
    "tpu.trace_stop"() : () -> ()
    %cst_92 = arith.constant dense<0xFF800000> : vector<8x8xf32>
    %189 = vector.multi_reduction <maximumf>, %188, %cst_92 [2] : vector<8x8x16xf32> to vector<8x8xf32>
    %190 = vector.shape_cast %189 : vector<8x8xf32> to vector<8x8x1xf32>
    %191 = vector.broadcast %190 : vector<8x8x1xf32> to vector<8x8x16xf32>
    %192 = arith.subf %188, %191 : vector<8x8x16xf32>
    %193 = math.exp %192 : vector<8x8x16xf32>
    %cst_93 = arith.constant dense<0.000000e+00> : vector<8x8xf32>
    %194 = vector.multi_reduction <add>, %193, %cst_93 [2] : vector<8x8x16xf32> to vector<8x8xf32>
    %195 = vector.shape_cast %194 : vector<8x8xf32> to vector<8x8x1xf32>
    %196 = tpu.reciprocal %195 {approx = true} : vector<8x8x1xf32> -> vector<8x8x1xf32>
    %197 = vector.broadcast %196 : vector<8x8x1xf32> to vector<8x8x16xf32>
    %198 = arith.mulf %193, %197 : vector<8x8x16xf32>
    "tpu.trace_start"() <{level = 10 : i32, message = "gqk,gkd->gqd"}> : () -> ()
    %cst_94 = arith.constant dense<0.000000e+00> : vector<8x8x8xf32>
    %199 = tpu.matmul %198, %187, %cst_94 {dimension_numbers = #tpu.dot_dimension_numbers<[2], [1], [1], [2], [0, 0, 0, 1, 1, 2], [0], [0]>} : vector<8x8x16xf32>, vector<8x16x8xf32>, vector<8x8x8xf32> -> vector<8x8x8xf32>
    "tpu.trace_stop"() : () -> ()
    %200 = vector.extract_strided_slice %199 {offsets = [0, 0, 0], sizes = [2, 8, 8], strides = [1, 1, 1]} : vector<8x8x8xf32> to vector<2x8x8xf32>
    %201 = vector.shape_cast %200 : vector<2x8x8xf32> to vector<16x8xf32>
    %202 = vector.extract_strided_slice %199 {offsets = [2, 0, 0], sizes = [2, 8, 8], strides = [1, 1, 1]} : vector<8x8x8xf32> to vector<2x8x8xf32>
    %203 = vector.shape_cast %202 : vector<2x8x8xf32> to vector<16x8xf32>
    %204 = vector.extract_strided_slice %199 {offsets = [4, 0, 0], sizes = [2, 8, 8], strides = [1, 1, 1]} : vector<8x8x8xf32> to vector<2x8x8xf32>
    %205 = vector.shape_cast %204 : vector<2x8x8xf32> to vector<16x8xf32>
    %206 = vector.extract_strided_slice %199 {offsets = [6, 0, 0], sizes = [2, 8, 8], strides = [1, 1, 1]} : vector<8x8x8xf32> to vector<2x8x8xf32>
    %207 = vector.shape_cast %206 : vector<2x8x8xf32> to vector<16x8xf32>
    %208 = tpu.concatenate %201, %203, %205, %207 in 1 : vector<16x8xf32>, vector<16x8xf32>, vector<16x8xf32>, vector<16x8xf32> -> vector<16x32xf32>
    %cst_95 = arith.constant dense<0.000000e+00> : vector<16x32xf32>
    %209 = tpu.matmul %208, %158, %cst_95 {dimension_numbers = #tpu.dot_dimension_numbers<[1], [0], [0], [1], [0, 0, 1, 1], [], []>} : vector<16x32xf32>, vector<32x32xf32>, vector<16x32xf32> -> vector<16x32xf32>
    %210 = vector.broadcast %160 : vector<1x32xf32> to vector<16x32xf32>
    %211 = arith.addf %209, %210 : vector<16x32xf32>
    %212 = arith.addf %123, %211 : vector<16x32xf32>
    %c0_96 = arith.constant 0 : index
    %c0_97 = arith.constant 0 : index
    %c2_98 = arith.constant 2 : index
    %c0_99 = arith.constant 0 : index
    %c0_100 = arith.constant 0 : index
    %213 = vector.load %arg14[%c0_96, %c0_97, %c2_98, %c0_99, %c0_100] : memref<2x2x3x1x32xf32, #tpu.memory_space<vmem>>, vector<1x1x1x1x32xf32>
    %214 = vector.shape_cast %213 : vector<1x1x1x1x32xf32> to vector<1x32xf32>
    %c1_101 = arith.constant 1 : index
    %c0_102 = arith.constant 0 : index
    %c2_103 = arith.constant 2 : index
    %c0_104 = arith.constant 0 : index
    %c0_105 = arith.constant 0 : index
    %215 = vector.load %arg14[%c1_101, %c0_102, %c2_103, %c0_104, %c0_105] : memref<2x2x3x1x32xf32, #tpu.memory_space<vmem>>, vector<1x1x1x1x32xf32>
    %216 = vector.shape_cast %215 : vector<1x1x1x1x32xf32> to vector<1x32xf32>
    %cst_106 = arith.constant dense<0.000000e+00> : vector<16xf32>
    %217 = vector.multi_reduction <add>, %212, %cst_106 [1] : vector<16x32xf32> to vector<16xf32>
    %218 = vector.shape_cast %217 : vector<16xf32> to vector<16x1xf32>
    %cst_107 = arith.constant 3.200000e+01 : f32
    %219 = vector.broadcast %cst_107 : f32 to vector<16x1xf32>
    %220 = arith.divf %218, %219 : vector<16x1xf32>
    %221 = arith.mulf %212, %212 : vector<16x32xf32>
    %cst_108 = arith.constant dense<0.000000e+00> : vector<16xf32>
    %222 = vector.multi_reduction <add>, %221, %cst_108 [1] : vector<16x32xf32> to vector<16xf32>
    %223 = vector.shape_cast %222 : vector<16xf32> to vector<16x1xf32>
    %cst_109 = arith.constant 3.200000e+01 : f32
    %224 = vector.broadcast %cst_109 : f32 to vector<16x1xf32>
    %225 = arith.divf %223, %224 : vector<16x1xf32>
    %226 = vector.broadcast %220 : vector<16x1xf32> to vector<16x32xf32>
    %227 = arith.subf %212, %226 : vector<16x32xf32>
    %228 = arith.mulf %220, %220 : vector<16x1xf32>
    %229 = arith.subf %225, %228 : vector<16x1xf32>
    %cst_110 = arith.constant 9.99999974E-6 : f32
    %230 = vector.broadcast %cst_110 : f32 to vector<16x1xf32>
    %231 = arith.addf %229, %230 : vector<16x1xf32>
    %232 = math.rsqrt %231 : vector<16x1xf32>
    %233 = vector.broadcast %232 : vector<16x1xf32> to vector<16x32xf32>
    %234 = arith.mulf %227, %233 : vector<16x32xf32>
    %235 = vector.broadcast %214 : vector<1x32xf32> to vector<16x32xf32>
    %236 = arith.mulf %234, %235 : vector<16x32xf32>
    %237 = vector.broadcast %216 : vector<1x32xf32> to vector<16x32xf32>
    %238 = arith.addf %236, %237 : vector<16x32xf32>
    %c0_111 = arith.constant 0 : index
    %c0_112 = arith.constant 0 : index
    %c0_113 = arith.constant 0 : index
    %239 = vector.load %arg11[%c0_111, %c0_112, %c0_113] : memref<2x32x64xf32, #tpu.memory_space<vmem>>, vector<1x32x64xf32>
    %240 = vector.shape_cast %239 : vector<1x32x64xf32> to vector<32x64xf32>
    %cst_114 = arith.constant dense<0.000000e+00> : vector<16x64xf32>
    %241 = tpu.matmul %238, %240, %cst_114 {dimension_numbers = #tpu.dot_dimension_numbers<[1], [0], [0], [1], [0, 0, 1, 1], [], []>} : vector<16x32xf32>, vector<32x64xf32>, vector<16x64xf32> -> vector<16x64xf32>
    %c0_115 = arith.constant 0 : index
    %c0_116 = arith.constant 0 : index
    %c0_117 = arith.constant 0 : index
    %242 = vector.load %arg12[%c0_115, %c0_116, %c0_117] : memref<2x1x64xf32, #tpu.memory_space<vmem>>, vector<1x1x64xf32>
    %243 = vector.shape_cast %242 : vector<1x1x64xf32> to vector<1x64xf32>
    %244 = vector.broadcast %243 : vector<1x64xf32> to vector<16x64xf32>
    %245 = arith.addf %241, %244 : vector<16x64xf32>
    %cst_118 = arith.constant 0.000000e+00 : f32
    %246 = vector.broadcast %cst_118 : f32 to vector<16x64xf32>
    %247 = arith.maximumf %245, %246 : vector<16x64xf32>
    %c0_119 = arith.constant 0 : index
    %c0_120 = arith.constant 0 : index
    %c0_121 = arith.constant 0 : index
    %248 = vector.load %arg13[%c0_119, %c0_120, %c0_121] : memref<2x64x32xf32, #tpu.memory_space<vmem>>, vector<1x64x32xf32>
    %249 = vector.shape_cast %248 : vector<1x64x32xf32> to vector<64x32xf32>
    %cst_122 = arith.constant dense<0.000000e+00> : vector<16x32xf32>
    %250 = tpu.matmul %247, %249, %cst_122 {dimension_numbers = #tpu.dot_dimension_numbers<[1], [0], [0], [1], [0, 0, 1, 1], [], []>} : vector<16x64xf32>, vector<64x32xf32>, vector<16x32xf32> -> vector<16x32xf32>
    %251 = arith.addf %212, %250 : vector<16x32xf32>
    %c0_123 = arith.constant 0 : index
    %c3 = arith.constant 3 : index
    %c0_124 = arith.constant 0 : index
    %c0_125 = arith.constant 0 : index
    %252 = vector.load %arg6[%c0_123, %c3, %c0_124, %c0_125] : memref<2x4x1x32xf32, #tpu.memory_space<vmem>>, vector<1x1x1x32xf32>
    %253 = vector.shape_cast %252 : vector<1x1x1x32xf32> to vector<1x32xf32>
    %254 = vector.broadcast %253 : vector<1x32xf32> to vector<16x32xf32>
    %255 = arith.addf %251, %254 : vector<16x32xf32>
    %c0_126 = arith.constant 0 : index
    %c1_127 = arith.constant 1 : index
    %c0_128 = arith.constant 0 : index
    %c0_129 = arith.constant 0 : index
    %c0_130 = arith.constant 0 : index
    %256 = vector.load %arg14[%c0_126, %c1_127, %c0_128, %c0_129, %c0_130] : memref<2x2x3x1x32xf32, #tpu.memory_space<vmem>>, vector<1x1x1x1x32xf32>
    %257 = vector.shape_cast %256 : vector<1x1x1x1x32xf32> to vector<1x32xf32>
    %c1_131 = arith.constant 1 : index
    %c1_132 = arith.constant 1 : index
    %c0_133 = arith.constant 0 : index
    %c0_134 = arith.constant 0 : index
    %c0_135 = arith.constant 0 : index
    %258 = vector.load %arg14[%c1_131, %c1_132, %c0_133, %c0_134, %c0_135] : memref<2x2x3x1x32xf32, #tpu.memory_space<vmem>>, vector<1x1x1x1x32xf32>
    %259 = vector.shape_cast %258 : vector<1x1x1x1x32xf32> to vector<1x32xf32>
    %cst_136 = arith.constant dense<0.000000e+00> : vector<16xf32>
    %260 = vector.multi_reduction <add>, %255, %cst_136 [1] : vector<16x32xf32> to vector<16xf32>
    %261 = vector.shape_cast %260 : vector<16xf32> to vector<16x1xf32>
    %cst_137 = arith.constant 3.200000e+01 : f32
    %262 = vector.broadcast %cst_137 : f32 to vector<16x1xf32>
    %263 = arith.divf %261, %262 : vector<16x1xf32>
    %264 = arith.mulf %255, %255 : vector<16x32xf32>
    %cst_138 = arith.constant dense<0.000000e+00> : vector<16xf32>
    %265 = vector.multi_reduction <add>, %264, %cst_138 [1] : vector<16x32xf32> to vector<16xf32>
    %266 = vector.shape_cast %265 : vector<16xf32> to vector<16x1xf32>
    %cst_139 = arith.constant 3.200000e+01 : f32
    %267 = vector.broadcast %cst_139 : f32 to vector<16x1xf32>
    %268 = arith.divf %266, %267 : vector<16x1xf32>
    %269 = vector.broadcast %263 : vector<16x1xf32> to vector<16x32xf32>
    %270 = arith.subf %255, %269 : vector<16x32xf32>
    %271 = arith.mulf %263, %263 : vector<16x1xf32>
    %272 = arith.subf %268, %271 : vector<16x1xf32>
    %cst_140 = arith.constant 9.99999974E-6 : f32
    %273 = vector.broadcast %cst_140 : f32 to vector<16x1xf32>
    %274 = arith.addf %272, %273 : vector<16x1xf32>
    %275 = math.rsqrt %274 : vector<16x1xf32>
    %276 = vector.broadcast %275 : vector<16x1xf32> to vector<16x32xf32>
    %277 = arith.mulf %270, %276 : vector<16x32xf32>
    %278 = vector.broadcast %257 : vector<1x32xf32> to vector<16x32xf32>
    %279 = arith.mulf %277, %278 : vector<16x32xf32>
    %280 = vector.broadcast %259 : vector<1x32xf32> to vector<16x32xf32>
    %281 = arith.addf %279, %280 : vector<16x32xf32>
    %c1_141 = arith.constant 1 : index
    %c0_142 = arith.constant 0 : index
    %c0_143 = arith.constant 0 : index
    %282 = vector.load %arg4[%c1_141, %c0_142, %c0_143] : memref<2x32x96xf32, #tpu.memory_space<vmem>>, vector<1x32x96xf32>
    %283 = vector.shape_cast %282 : vector<1x32x96xf32> to vector<32x96xf32>
    %cst_144 = arith.constant dense<0.000000e+00> : vector<16x96xf32>
    %284 = tpu.matmul %281, %283, %cst_144 {dimension_numbers = #tpu.dot_dimension_numbers<[1], [0], [0], [1], [0, 0, 1, 1], [], []>} : vector<16x32xf32>, vector<32x96xf32>, vector<16x96xf32> -> vector<16x96xf32>
    %285 = vector.extract_strided_slice %284 {offsets = [0, 0], sizes = [16, 32], strides = [1, 1]} : vector<16x96xf32> to vector<16x32xf32>
    %286 = vector.extract_strided_slice %27 {offsets = [0, 96], sizes = [16, 32], strides = [1, 1]} : vector<16x192xf32> to vector<16x32xf32>
    %287 = arith.addf %285, %286 : vector<16x32xf32>
    %288 = vector.extract_strided_slice %284 {offsets = [0, 32], sizes = [16, 32], strides = [1, 1]} : vector<16x96xf32> to vector<16x32xf32>
    %289 = vector.extract_strided_slice %27 {offsets = [0, 128], sizes = [16, 32], strides = [1, 1]} : vector<16x192xf32> to vector<16x32xf32>
    %290 = arith.addf %288, %289 : vector<16x32xf32>
    %291 = vector.extract_strided_slice %284 {offsets = [0, 64], sizes = [16, 32], strides = [1, 1]} : vector<16x96xf32> to vector<16x32xf32>
    %c1_145 = arith.constant 1 : index
    %c0_146 = arith.constant 0 : index
    %c0_147 = arith.constant 0 : index
    %c0_148 = arith.constant 0 : index
    %292 = vector.load %arg6[%c1_145, %c0_146, %c0_147, %c0_148] : memref<2x4x1x32xf32, #tpu.memory_space<vmem>>, vector<1x1x1x32xf32>
    %293 = vector.shape_cast %292 : vector<1x1x1x32xf32> to vector<1x32xf32>
    %294 = vector.broadcast %293 : vector<1x32xf32> to vector<16x32xf32>
    %295 = arith.addf %291, %294 : vector<16x32xf32>
    %c1_149 = arith.constant 1 : index
    %c1_150 = arith.constant 1 : index
    %c0_151 = arith.constant 0 : index
    %c0_152 = arith.constant 0 : index
    %296 = vector.load %arg5[%c1_149, %c1_150, %c0_151, %c0_152] : memref<2x3x32x32xf32, #tpu.memory_space<vmem>>, vector<1x1x32x32xf32>
    %297 = vector.shape_cast %296 : vector<1x1x32x32xf32> to vector<32x32xf32>
    %c1_153 = arith.constant 1 : index
    %c1_154 = arith.constant 1 : index
    %c0_155 = arith.constant 0 : index
    %c0_156 = arith.constant 0 : index
    %298 = vector.load %arg6[%c1_153, %c1_154, %c0_155, %c0_156] : memref<2x4x1x32xf32, #tpu.memory_space<vmem>>, vector<1x1x1x32xf32>
    %299 = vector.shape_cast %298 : vector<1x1x1x32xf32> to vector<1x32xf32>
    %300 = vector.extract_strided_slice %287 {offsets = [0, 0], sizes = [16, 8], strides = [1, 1]} : vector<16x32xf32> to vector<16x8xf32>
    %301 = vector.shape_cast %300 : vector<16x8xf32> to vector<2x8x8xf32>
    %302 = vector.extract_strided_slice %287 {offsets = [0, 8], sizes = [16, 8], strides = [1, 1]} : vector<16x32xf32> to vector<16x8xf32>
    %303 = vector.shape_cast %302 : vector<16x8xf32> to vector<2x8x8xf32>
    %304 = vector.extract_strided_slice %287 {offsets = [0, 16], sizes = [16, 8], strides = [1, 1]} : vector<16x32xf32> to vector<16x8xf32>
    %305 = vector.shape_cast %304 : vector<16x8xf32> to vector<2x8x8xf32>
    %306 = vector.extract_strided_slice %287 {offsets = [0, 24], sizes = [16, 8], strides = [1, 1]} : vector<16x32xf32> to vector<16x8xf32>
    %307 = vector.shape_cast %306 : vector<16x8xf32> to vector<2x8x8xf32>
    %308 = tpu.concatenate %301, %303, %305, %307 in 0 : vector<2x8x8xf32>, vector<2x8x8xf32>, vector<2x8x8xf32>, vector<2x8x8xf32> -> vector<8x8x8xf32>
    %309 = vector.extract_strided_slice %290 {offsets = [0, 0], sizes = [16, 8], strides = [1, 1]} : vector<16x32xf32> to vector<16x8xf32>
    %310 = vector.shape_cast %309 : vector<16x8xf32> to vector<2x8x8xf32>
    %311 = vector.extract_strided_slice %290 {offsets = [0, 8], sizes = [16, 8], strides = [1, 1]} : vector<16x32xf32> to vector<16x8xf32>
    %312 = vector.shape_cast %311 : vector<16x8xf32> to vector<2x8x8xf32>
    %313 = vector.extract_strided_slice %290 {offsets = [0, 16], sizes = [16, 8], strides = [1, 1]} : vector<16x32xf32> to vector<16x8xf32>
    %314 = vector.shape_cast %313 : vector<16x8xf32> to vector<2x8x8xf32>
    %315 = vector.extract_strided_slice %290 {offsets = [0, 24], sizes = [16, 8], strides = [1, 1]} : vector<16x32xf32> to vector<16x8xf32>
    %316 = vector.shape_cast %315 : vector<16x8xf32> to vector<2x8x8xf32>
    %317 = tpu.concatenate %310, %312, %314, %316 in 0 : vector<2x8x8xf32>, vector<2x8x8xf32>, vector<2x8x8xf32>, vector<2x8x8xf32> -> vector<8x8x8xf32>
    %318 = vector.extract_strided_slice %295 {offsets = [0, 0], sizes = [16, 8], strides = [1, 1]} : vector<16x32xf32> to vector<16x8xf32>
    %319 = vector.shape_cast %318 : vector<16x8xf32> to vector<2x8x8xf32>
    %320 = vector.extract_strided_slice %295 {offsets = [0, 8], sizes = [16, 8], strides = [1, 1]} : vector<16x32xf32> to vector<16x8xf32>
    %321 = vector.shape_cast %320 : vector<16x8xf32> to vector<2x8x8xf32>
    %322 = vector.extract_strided_slice %295 {offsets = [0, 16], sizes = [16, 8], strides = [1, 1]} : vector<16x32xf32> to vector<16x8xf32>
    %323 = vector.shape_cast %322 : vector<16x8xf32> to vector<2x8x8xf32>
    %324 = vector.extract_strided_slice %295 {offsets = [0, 24], sizes = [16, 8], strides = [1, 1]} : vector<16x32xf32> to vector<16x8xf32>
    %325 = vector.shape_cast %324 : vector<16x8xf32> to vector<2x8x8xf32>
    %326 = tpu.concatenate %319, %321, %323, %325 in 0 : vector<2x8x8xf32>, vector<2x8x8xf32>, vector<2x8x8xf32>, vector<2x8x8xf32> -> vector<8x8x8xf32>
    "tpu.trace_start"() <{level = 10 : i32, message = "gqd,gkd->gqk"}> : () -> ()
    %cst_157 = arith.constant dense<0.000000e+00> : vector<8x8x8xf32>
    %327 = tpu.matmul %308, %317, %cst_157 {dimension_numbers = #tpu.dot_dimension_numbers<[2], [2], [1], [1], [0, 0, 0, 1, 1, 1], [0], [0]>} : vector<8x8x8xf32>, vector<8x8x8xf32>, vector<8x8x8xf32> -> vector<8x8x8xf32>
    "tpu.trace_stop"() : () -> ()
    %cst_158 = arith.constant dense<0xFF800000> : vector<8x8xf32>
    %328 = vector.multi_reduction <maximumf>, %327, %cst_158 [2] : vector<8x8x8xf32> to vector<8x8xf32>
    %329 = vector.shape_cast %328 : vector<8x8xf32> to vector<8x8x1xf32>
    %330 = vector.broadcast %329 : vector<8x8x1xf32> to vector<8x8x8xf32>
    %331 = arith.subf %327, %330 : vector<8x8x8xf32>
    %332 = math.exp %331 : vector<8x8x8xf32>
    %cst_159 = arith.constant dense<0.000000e+00> : vector<8x8xf32>
    %333 = vector.multi_reduction <add>, %332, %cst_159 [2] : vector<8x8x8xf32> to vector<8x8xf32>
    %334 = vector.shape_cast %333 : vector<8x8xf32> to vector<8x8x1xf32>
    %335 = tpu.reciprocal %334 {approx = true} : vector<8x8x1xf32> -> vector<8x8x1xf32>
    %336 = vector.broadcast %335 : vector<8x8x1xf32> to vector<8x8x8xf32>
    %337 = arith.mulf %332, %336 : vector<8x8x8xf32>
    "tpu.trace_start"() <{level = 10 : i32, message = "gqk,gkd->gqd"}> : () -> ()
    %cst_160 = arith.constant dense<0.000000e+00> : vector<8x8x8xf32>
    %338 = tpu.matmul %337, %326, %cst_160 {dimension_numbers = #tpu.dot_dimension_numbers<[2], [1], [1], [2], [0, 0, 0, 1, 1, 2], [0], [0]>} : vector<8x8x8xf32>, vector<8x8x8xf32>, vector<8x8x8xf32> -> vector<8x8x8xf32>
    "tpu.trace_stop"() : () -> ()
    %339 = vector.extract_strided_slice %338 {offsets = [0, 0, 0], sizes = [2, 8, 8], strides = [1, 1, 1]} : vector<8x8x8xf32> to vector<2x8x8xf32>
    %340 = vector.shape_cast %339 : vector<2x8x8xf32> to vector<16x8xf32>
    %341 = vector.extract_strided_slice %338 {offsets = [2, 0, 0], sizes = [2, 8, 8], strides = [1, 1, 1]} : vector<8x8x8xf32> to vector<2x8x8xf32>
    %342 = vector.shape_cast %341 : vector<2x8x8xf32> to vector<16x8xf32>
    %343 = vector.extract_strided_slice %338 {offsets = [4, 0, 0], sizes = [2, 8, 8], strides = [1, 1, 1]} : vector<8x8x8xf32> to vector<2x8x8xf32>
    %344 = vector.shape_cast %343 : vector<2x8x8xf32> to vector<16x8xf32>
    %345 = vector.extract_strided_slice %338 {offsets = [6, 0, 0], sizes = [2, 8, 8], strides = [1, 1, 1]} : vector<8x8x8xf32> to vector<2x8x8xf32>
    %346 = vector.shape_cast %345 : vector<2x8x8xf32> to vector<16x8xf32>
    %347 = tpu.concatenate %340, %342, %344, %346 in 1 : vector<16x8xf32>, vector<16x8xf32>, vector<16x8xf32>, vector<16x8xf32> -> vector<16x32xf32>
    %cst_161 = arith.constant dense<0.000000e+00> : vector<16x32xf32>
    %348 = tpu.matmul %347, %297, %cst_161 {dimension_numbers = #tpu.dot_dimension_numbers<[1], [0], [0], [1], [0, 0, 1, 1], [], []>} : vector<16x32xf32>, vector<32x32xf32>, vector<16x32xf32> -> vector<16x32xf32>
    %349 = vector.broadcast %299 : vector<1x32xf32> to vector<16x32xf32>
    %350 = arith.addf %348, %349 : vector<16x32xf32>
    %351 = arith.addf %255, %350 : vector<16x32xf32>
    %c0_162 = arith.constant 0 : index
    %c1_163 = arith.constant 1 : index
    %c1_164 = arith.constant 1 : index
    %c0_165 = arith.constant 0 : index
    %c0_166 = arith.constant 0 : index
    %352 = vector.load %arg14[%c0_162, %c1_163, %c1_164, %c0_165, %c0_166] : memref<2x2x3x1x32xf32, #tpu.memory_space<vmem>>, vector<1x1x1x1x32xf32>
    %353 = vector.shape_cast %352 : vector<1x1x1x1x32xf32> to vector<1x32xf32>
    %c1_167 = arith.constant 1 : index
    %c1_168 = arith.constant 1 : index
    %c1_169 = arith.constant 1 : index
    %c0_170 = arith.constant 0 : index
    %c0_171 = arith.constant 0 : index
    %354 = vector.load %arg14[%c1_167, %c1_168, %c1_169, %c0_170, %c0_171] : memref<2x2x3x1x32xf32, #tpu.memory_space<vmem>>, vector<1x1x1x1x32xf32>
    %355 = vector.shape_cast %354 : vector<1x1x1x1x32xf32> to vector<1x32xf32>
    %cst_172 = arith.constant dense<0.000000e+00> : vector<16xf32>
    %356 = vector.multi_reduction <add>, %351, %cst_172 [1] : vector<16x32xf32> to vector<16xf32>
    %357 = vector.shape_cast %356 : vector<16xf32> to vector<16x1xf32>
    %cst_173 = arith.constant 3.200000e+01 : f32
    %358 = vector.broadcast %cst_173 : f32 to vector<16x1xf32>
    %359 = arith.divf %357, %358 : vector<16x1xf32>
    %360 = arith.mulf %351, %351 : vector<16x32xf32>
    %cst_174 = arith.constant dense<0.000000e+00> : vector<16xf32>
    %361 = vector.multi_reduction <add>, %360, %cst_174 [1] : vector<16x32xf32> to vector<16xf32>
    %362 = vector.shape_cast %361 : vector<16xf32> to vector<16x1xf32>
    %cst_175 = arith.constant 3.200000e+01 : f32
    %363 = vector.broadcast %cst_175 : f32 to vector<16x1xf32>
    %364 = arith.divf %362, %363 : vector<16x1xf32>
    %365 = vector.broadcast %359 : vector<16x1xf32> to vector<16x32xf32>
    %366 = arith.subf %351, %365 : vector<16x32xf32>
    %367 = arith.mulf %359, %359 : vector<16x1xf32>
    %368 = arith.subf %364, %367 : vector<16x1xf32>
    %cst_176 = arith.constant 9.99999974E-6 : f32
    %369 = vector.broadcast %cst_176 : f32 to vector<16x1xf32>
    %370 = arith.addf %368, %369 : vector<16x1xf32>
    %371 = math.rsqrt %370 : vector<16x1xf32>
    %372 = vector.broadcast %371 : vector<16x1xf32> to vector<16x32xf32>
    %373 = arith.mulf %366, %372 : vector<16x32xf32>
    %374 = vector.broadcast %353 : vector<1x32xf32> to vector<16x32xf32>
    %375 = arith.mulf %373, %374 : vector<16x32xf32>
    %376 = vector.broadcast %355 : vector<1x32xf32> to vector<16x32xf32>
    %377 = arith.addf %375, %376 : vector<16x32xf32>
    %c1_177 = arith.constant 1 : index
    %c0_178 = arith.constant 0 : index
    %c0_179 = arith.constant 0 : index
    %c0_180 = arith.constant 0 : index
    %378 = vector.load %arg5[%c1_177, %c0_178, %c0_179, %c0_180] : memref<2x3x32x32xf32, #tpu.memory_space<vmem>>, vector<1x1x32x32xf32>
    %379 = vector.shape_cast %378 : vector<1x1x32x32xf32> to vector<32x32xf32>
    %cst_181 = arith.constant dense<0.000000e+00> : vector<16x32xf32>
    %380 = tpu.matmul %377, %379, %cst_181 {dimension_numbers = #tpu.dot_dimension_numbers<[1], [0], [0], [1], [0, 0, 1, 1], [], []>} : vector<16x32xf32>, vector<32x32xf32>, vector<16x32xf32> -> vector<16x32xf32>
    %381 = vector.extract_strided_slice %27 {offsets = [0, 160], sizes = [16, 32], strides = [1, 1]} : vector<16x192xf32> to vector<16x32xf32>
    %382 = arith.addf %380, %381 : vector<16x32xf32>
    %383 = vector.extract_strided_slice %15 {offsets = [0, 32], sizes = [32, 32], strides = [1, 1]} : vector<32x64xf32> to vector<32x32xf32>
    %384 = vector.extract_strided_slice %22 {offsets = [0, 32], sizes = [32, 32], strides = [1, 1]} : vector<32x64xf32> to vector<32x32xf32>
    %c1_182 = arith.constant 1 : index
    %c2_183 = arith.constant 2 : index
    %c0_184 = arith.constant 0 : index
    %c0_185 = arith.constant 0 : index
    %385 = vector.load %arg5[%c1_182, %c2_183, %c0_184, %c0_185] : memref<2x3x32x32xf32, #tpu.memory_space<vmem>>, vector<1x1x32x32xf32>
    %386 = vector.shape_cast %385 : vector<1x1x32x32xf32> to vector<32x32xf32>
    %c1_186 = arith.constant 1 : index
    %c2_187 = arith.constant 2 : index
    %c0_188 = arith.constant 0 : index
    %c0_189 = arith.constant 0 : index
    %387 = vector.load %arg6[%c1_186, %c2_187, %c0_188, %c0_189] : memref<2x4x1x32xf32, #tpu.memory_space<vmem>>, vector<1x1x1x32xf32>
    %388 = vector.shape_cast %387 : vector<1x1x1x32xf32> to vector<1x32xf32>
    %389 = vector.extract_strided_slice %382 {offsets = [0, 0], sizes = [16, 8], strides = [1, 1]} : vector<16x32xf32> to vector<16x8xf32>
    %390 = vector.shape_cast %389 : vector<16x8xf32> to vector<2x8x8xf32>
    %391 = vector.extract_strided_slice %382 {offsets = [0, 8], sizes = [16, 8], strides = [1, 1]} : vector<16x32xf32> to vector<16x8xf32>
    %392 = vector.shape_cast %391 : vector<16x8xf32> to vector<2x8x8xf32>
    %393 = vector.extract_strided_slice %382 {offsets = [0, 16], sizes = [16, 8], strides = [1, 1]} : vector<16x32xf32> to vector<16x8xf32>
    %394 = vector.shape_cast %393 : vector<16x8xf32> to vector<2x8x8xf32>
    %395 = vector.extract_strided_slice %382 {offsets = [0, 24], sizes = [16, 8], strides = [1, 1]} : vector<16x32xf32> to vector<16x8xf32>
    %396 = vector.shape_cast %395 : vector<16x8xf32> to vector<2x8x8xf32>
    %397 = tpu.concatenate %390, %392, %394, %396 in 0 : vector<2x8x8xf32>, vector<2x8x8xf32>, vector<2x8x8xf32>, vector<2x8x8xf32> -> vector<8x8x8xf32>
    %398 = vector.extract_strided_slice %383 {offsets = [0, 0], sizes = [32, 8], strides = [1, 1]} : vector<32x32xf32> to vector<32x8xf32>
    %399 = vector.shape_cast %398 : vector<32x8xf32> to vector<2x16x8xf32>
    %400 = vector.extract_strided_slice %383 {offsets = [0, 8], sizes = [32, 8], strides = [1, 1]} : vector<32x32xf32> to vector<32x8xf32>
    %401 = vector.shape_cast %400 : vector<32x8xf32> to vector<2x16x8xf32>
    %402 = vector.extract_strided_slice %383 {offsets = [0, 16], sizes = [32, 8], strides = [1, 1]} : vector<32x32xf32> to vector<32x8xf32>
    %403 = vector.shape_cast %402 : vector<32x8xf32> to vector<2x16x8xf32>
    %404 = vector.extract_strided_slice %383 {offsets = [0, 24], sizes = [32, 8], strides = [1, 1]} : vector<32x32xf32> to vector<32x8xf32>
    %405 = vector.shape_cast %404 : vector<32x8xf32> to vector<2x16x8xf32>
    %406 = tpu.concatenate %399, %401, %403, %405 in 0 : vector<2x16x8xf32>, vector<2x16x8xf32>, vector<2x16x8xf32>, vector<2x16x8xf32> -> vector<8x16x8xf32>
    %407 = vector.extract_strided_slice %384 {offsets = [0, 0], sizes = [32, 8], strides = [1, 1]} : vector<32x32xf32> to vector<32x8xf32>
    %408 = vector.shape_cast %407 : vector<32x8xf32> to vector<2x16x8xf32>
    %409 = vector.extract_strided_slice %384 {offsets = [0, 8], sizes = [32, 8], strides = [1, 1]} : vector<32x32xf32> to vector<32x8xf32>
    %410 = vector.shape_cast %409 : vector<32x8xf32> to vector<2x16x8xf32>
    %411 = vector.extract_strided_slice %384 {offsets = [0, 16], sizes = [32, 8], strides = [1, 1]} : vector<32x32xf32> to vector<32x8xf32>
    %412 = vector.shape_cast %411 : vector<32x8xf32> to vector<2x16x8xf32>
    %413 = vector.extract_strided_slice %384 {offsets = [0, 24], sizes = [32, 8], strides = [1, 1]} : vector<32x32xf32> to vector<32x8xf32>
    %414 = vector.shape_cast %413 : vector<32x8xf32> to vector<2x16x8xf32>
    %415 = tpu.concatenate %408, %410, %412, %414 in 0 : vector<2x16x8xf32>, vector<2x16x8xf32>, vector<2x16x8xf32>, vector<2x16x8xf32> -> vector<8x16x8xf32>
    "tpu.trace_start"() <{level = 10 : i32, message = "gqd,gkd->gqk"}> : () -> ()
    %cst_190 = arith.constant dense<0.000000e+00> : vector<8x8x16xf32>
    %416 = tpu.matmul %397, %406, %cst_190 {dimension_numbers = #tpu.dot_dimension_numbers<[2], [2], [1], [1], [0, 0, 0, 1, 1, 1], [0], [0]>} : vector<8x8x8xf32>, vector<8x16x8xf32>, vector<8x8x16xf32> -> vector<8x8x16xf32>
    "tpu.trace_stop"() : () -> ()
    %cst_191 = arith.constant dense<0xFF800000> : vector<8x8xf32>
    %417 = vector.multi_reduction <maximumf>, %416, %cst_191 [2] : vector<8x8x16xf32> to vector<8x8xf32>
    %418 = vector.shape_cast %417 : vector<8x8xf32> to vector<8x8x1xf32>
    %419 = vector.broadcast %418 : vector<8x8x1xf32> to vector<8x8x16xf32>
    %420 = arith.subf %416, %419 : vector<8x8x16xf32>
    %421 = math.exp %420 : vector<8x8x16xf32>
    %cst_192 = arith.constant dense<0.000000e+00> : vector<8x8xf32>
    %422 = vector.multi_reduction <add>, %421, %cst_192 [2] : vector<8x8x16xf32> to vector<8x8xf32>
    %423 = vector.shape_cast %422 : vector<8x8xf32> to vector<8x8x1xf32>
    %424 = tpu.reciprocal %423 {approx = true} : vector<8x8x1xf32> -> vector<8x8x1xf32>
    %425 = vector.broadcast %424 : vector<8x8x1xf32> to vector<8x8x16xf32>
    %426 = arith.mulf %421, %425 : vector<8x8x16xf32>
    "tpu.trace_start"() <{level = 10 : i32, message = "gqk,gkd->gqd"}> : () -> ()
    %cst_193 = arith.constant dense<0.000000e+00> : vector<8x8x8xf32>
    %427 = tpu.matmul %426, %415, %cst_193 {dimension_numbers = #tpu.dot_dimension_numbers<[2], [1], [1], [2], [0, 0, 0, 1, 1, 2], [0], [0]>} : vector<8x8x16xf32>, vector<8x16x8xf32>, vector<8x8x8xf32> -> vector<8x8x8xf32>
    "tpu.trace_stop"() : () -> ()
    %428 = vector.extract_strided_slice %427 {offsets = [0, 0, 0], sizes = [2, 8, 8], strides = [1, 1, 1]} : vector<8x8x8xf32> to vector<2x8x8xf32>
    %429 = vector.shape_cast %428 : vector<2x8x8xf32> to vector<16x8xf32>
    %430 = vector.extract_strided_slice %427 {offsets = [2, 0, 0], sizes = [2, 8, 8], strides = [1, 1, 1]} : vector<8x8x8xf32> to vector<2x8x8xf32>
    %431 = vector.shape_cast %430 : vector<2x8x8xf32> to vector<16x8xf32>
    %432 = vector.extract_strided_slice %427 {offsets = [4, 0, 0], sizes = [2, 8, 8], strides = [1, 1, 1]} : vector<8x8x8xf32> to vector<2x8x8xf32>
    %433 = vector.shape_cast %432 : vector<2x8x8xf32> to vector<16x8xf32>
    %434 = vector.extract_strided_slice %427 {offsets = [6, 0, 0], sizes = [2, 8, 8], strides = [1, 1, 1]} : vector<8x8x8xf32> to vector<2x8x8xf32>
    %435 = vector.shape_cast %434 : vector<2x8x8xf32> to vector<16x8xf32>
    %436 = tpu.concatenate %429, %431, %433, %435 in 1 : vector<16x8xf32>, vector<16x8xf32>, vector<16x8xf32>, vector<16x8xf32> -> vector<16x32xf32>
    %cst_194 = arith.constant dense<0.000000e+00> : vector<16x32xf32>
    %437 = tpu.matmul %436, %386, %cst_194 {dimension_numbers = #tpu.dot_dimension_numbers<[1], [0], [0], [1], [0, 0, 1, 1], [], []>} : vector<16x32xf32>, vector<32x32xf32>, vector<16x32xf32> -> vector<16x32xf32>
    %438 = vector.broadcast %388 : vector<1x32xf32> to vector<16x32xf32>
    %439 = arith.addf %437, %438 : vector<16x32xf32>
    %440 = arith.addf %351, %439 : vector<16x32xf32>
    %c0_195 = arith.constant 0 : index
    %c1_196 = arith.constant 1 : index
    %c2_197 = arith.constant 2 : index
    %c0_198 = arith.constant 0 : index
    %c0_199 = arith.constant 0 : index
    %441 = vector.load %arg14[%c0_195, %c1_196, %c2_197, %c0_198, %c0_199] : memref<2x2x3x1x32xf32, #tpu.memory_space<vmem>>, vector<1x1x1x1x32xf32>
    %442 = vector.shape_cast %441 : vector<1x1x1x1x32xf32> to vector<1x32xf32>
    %c1_200 = arith.constant 1 : index
    %c1_201 = arith.constant 1 : index
    %c2_202 = arith.constant 2 : index
    %c0_203 = arith.constant 0 : index
    %c0_204 = arith.constant 0 : index
    %443 = vector.load %arg14[%c1_200, %c1_201, %c2_202, %c0_203, %c0_204] : memref<2x2x3x1x32xf32, #tpu.memory_space<vmem>>, vector<1x1x1x1x32xf32>
    %444 = vector.shape_cast %443 : vector<1x1x1x1x32xf32> to vector<1x32xf32>
    %cst_205 = arith.constant dense<0.000000e+00> : vector<16xf32>
    %445 = vector.multi_reduction <add>, %440, %cst_205 [1] : vector<16x32xf32> to vector<16xf32>
    %446 = vector.shape_cast %445 : vector<16xf32> to vector<16x1xf32>
    %cst_206 = arith.constant 3.200000e+01 : f32
    %447 = vector.broadcast %cst_206 : f32 to vector<16x1xf32>
    %448 = arith.divf %446, %447 : vector<16x1xf32>
    %449 = arith.mulf %440, %440 : vector<16x32xf32>
    %cst_207 = arith.constant dense<0.000000e+00> : vector<16xf32>
    %450 = vector.multi_reduction <add>, %449, %cst_207 [1] : vector<16x32xf32> to vector<16xf32>
    %451 = vector.shape_cast %450 : vector<16xf32> to vector<16x1xf32>
    %cst_208 = arith.constant 3.200000e+01 : f32
    %452 = vector.broadcast %cst_208 : f32 to vector<16x1xf32>
    %453 = arith.divf %451, %452 : vector<16x1xf32>
    %454 = vector.broadcast %448 : vector<16x1xf32> to vector<16x32xf32>
    %455 = arith.subf %440, %454 : vector<16x32xf32>
    %456 = arith.mulf %448, %448 : vector<16x1xf32>
    %457 = arith.subf %453, %456 : vector<16x1xf32>
    %cst_209 = arith.constant 9.99999974E-6 : f32
    %458 = vector.broadcast %cst_209 : f32 to vector<16x1xf32>
    %459 = arith.addf %457, %458 : vector<16x1xf32>
    %460 = math.rsqrt %459 : vector<16x1xf32>
    %461 = vector.broadcast %460 : vector<16x1xf32> to vector<16x32xf32>
    %462 = arith.mulf %455, %461 : vector<16x32xf32>
    %463 = vector.broadcast %442 : vector<1x32xf32> to vector<16x32xf32>
    %464 = arith.mulf %462, %463 : vector<16x32xf32>
    %465 = vector.broadcast %444 : vector<1x32xf32> to vector<16x32xf32>
    %466 = arith.addf %464, %465 : vector<16x32xf32>
    %c1_210 = arith.constant 1 : index
    %c0_211 = arith.constant 0 : index
    %c0_212 = arith.constant 0 : index
    %467 = vector.load %arg11[%c1_210, %c0_211, %c0_212] : memref<2x32x64xf32, #tpu.memory_space<vmem>>, vector<1x32x64xf32>
    %468 = vector.shape_cast %467 : vector<1x32x64xf32> to vector<32x64xf32>
    %cst_213 = arith.constant dense<0.000000e+00> : vector<16x64xf32>
    %469 = tpu.matmul %466, %468, %cst_213 {dimension_numbers = #tpu.dot_dimension_numbers<[1], [0], [0], [1], [0, 0, 1, 1], [], []>} : vector<16x32xf32>, vector<32x64xf32>, vector<16x64xf32> -> vector<16x64xf32>
    %c1_214 = arith.constant 1 : index
    %c0_215 = arith.constant 0 : index
    %c0_216 = arith.constant 0 : index
    %470 = vector.load %arg12[%c1_214, %c0_215, %c0_216] : memref<2x1x64xf32, #tpu.memory_space<vmem>>, vector<1x1x64xf32>
    %471 = vector.shape_cast %470 : vector<1x1x64xf32> to vector<1x64xf32>
    %472 = vector.broadcast %471 : vector<1x64xf32> to vector<16x64xf32>
    %473 = arith.addf %469, %472 : vector<16x64xf32>
    %cst_217 = arith.constant 0.000000e+00 : f32
    %474 = vector.broadcast %cst_217 : f32 to vector<16x64xf32>
    %475 = arith.maximumf %473, %474 : vector<16x64xf32>
    %c1_218 = arith.constant 1 : index
    %c0_219 = arith.constant 0 : index
    %c0_220 = arith.constant 0 : index
    %476 = vector.load %arg13[%c1_218, %c0_219, %c0_220] : memref<2x64x32xf32, #tpu.memory_space<vmem>>, vector<1x64x32xf32>
    %477 = vector.shape_cast %476 : vector<1x64x32xf32> to vector<64x32xf32>
    %cst_221 = arith.constant dense<0.000000e+00> : vector<16x32xf32>
    %478 = tpu.matmul %475, %477, %cst_221 {dimension_numbers = #tpu.dot_dimension_numbers<[1], [0], [0], [1], [0, 0, 1, 1], [], []>} : vector<16x64xf32>, vector<64x32xf32>, vector<16x32xf32> -> vector<16x32xf32>
    %479 = arith.addf %440, %478 : vector<16x32xf32>
    %c1_222 = arith.constant 1 : index
    %c3_223 = arith.constant 3 : index
    %c0_224 = arith.constant 0 : index
    %c0_225 = arith.constant 0 : index
    %480 = vector.load %arg6[%c1_222, %c3_223, %c0_224, %c0_225] : memref<2x4x1x32xf32, #tpu.memory_space<vmem>>, vector<1x1x1x32xf32>
    %481 = vector.shape_cast %480 : vector<1x1x1x32xf32> to vector<1x32xf32>
    %482 = vector.broadcast %481 : vector<1x32xf32> to vector<16x32xf32>
    %483 = arith.addf %479, %482 : vector<16x32xf32>
    %484 = vector.shape_cast %483 : vector<16x32xf32> to vector<2x8x32xf32>
    %c0_226 = arith.constant 0 : index
    %c0_227 = arith.constant 0 : index
    %c0_228 = arith.constant 0 : index
    %485 = vector.load %arg15[%c0_226, %c0_227, %c0_228] : memref<2x8x32xf32, #tpu.memory_space<vmem>>, vector<2x8x32xf32>
    tpu.vector_store %arg15[%c0_226, %c0_227, %c0_228], %484 {strides = array<i32>} : memref<2x8x32xf32, #tpu.memory_space<vmem>>, vector<2x8x32xf32>,
    return
  }
}

</mosaic_0001>

<llo_original>
// kernel: transformer_decoder.1
$region0: #{transformer_decoder.1}
  #allocation0 [shape = 'u32[]', space=smem, size = 0x4, offset = 0x4, fixed_abs, tag = 'smem constant byte address 0x4 - core index']
  #allocation1 [shape = 'u32[144,128]{1,0:T(1,128)}', space=vmem, size = 0x12000, scoped, tag = 'internal scratch']
  %s0 = inlined_call_operand.vmem [shape: f32[2,8,32], index: 0, kind: input, shape index: {}]
  %s1 = inlined_call_operand.vmem [shape: f32[2,16,32], index: 1, kind: input, shape index: {}]
  %s2 = inlined_call_operand.vmem [shape: f32[2,8,32], index: 2, kind: input, shape index: {}]
  %s3 = inlined_call_operand.vmem [shape: f32[2,16,32], index: 3, kind: input, shape index: {}]
  %s4 = inlined_call_operand.vmem [shape: f32[2,32,96], index: 4, kind: input, shape index: {}]
  %s5 = inlined_call_operand.vmem [shape: f32[2,3,32,32], index: 5, kind: input, shape index: {}]
  %s6 = inlined_call_operand.vmem [shape: f32[2,4,1,32], index: 6, kind: input, shape index: {}]
  %s7 = inlined_call_operand.vmem [shape: f32[2,32,64], index: 7, kind: input, shape index: {}]
  %s8 = inlined_call_operand.vmem [shape: f32[2,1,64], index: 8, kind: input, shape index: {}]
  %s9 = inlined_call_operand.hbm [shape: f32[32,192], index: 9, kind: input, shape index: {}]
  %s10 = inlined_call_operand.vmem [shape: f32[1,192], index: 10, kind: input, shape index: {}]
  %s11 = inlined_call_operand.hbm [shape: f32[2,32,64], index: 11, kind: input, shape index: {}]
  %s12 = inlined_call_operand.vmem [shape: f32[2,1,64], index: 12, kind: input, shape index: {}]
  %s13 = inlined_call_operand.vmem [shape: f32[2,64,32], index: 13, kind: input, shape index: {}]
  %s14 = inlined_call_operand.vmem [shape: f32[2,2,3,1,32], index: 14, kind: input, shape index: {}]
  %s15 = inlined_call_operand.vmem [shape: f32[2,8,32], index: 15, kind: output, shape index: {}]
  %s16 = sld [smem:[#allocation0]]
  $region78: #{transformer_decoder.1} parent=0
    _
  %s18 = ssub.s32 1, %s16
  %s19 = scalar_select 0, %s18, %s16
  $region1: #{transformer_decoder.1} parent=0
    #allocation2 [shape = 'u8[32768]{0}', space=vmem, size = 0x8000, scoped, tag = 'input window, operand 9, single buffered']
    #allocation3 [shape = 's32[1]{0}', space=sflag, size = 0x4, scoped, tag = 'scoped memory for transformer_decoder.1']
    #allocation4 [shape = 'u8[32768]{0}', space=vmem, size = 0x8000, scoped, tag = 'input window, operand 11, single buffered']
    #allocation5 [shape = 's32[1]{0}', space=sflag, size = 0x4, scoped, tag = 'scoped memory for transformer_decoder.1']
    %20 = vsyncpa [#allocation3], 0
    %21 = vsyncpa [#allocation5], 0
    // Predicated region
    $region2: #{transformer_decoder.1} parent=1 // pred_check
      _
    $region3: #{transformer_decoder.1} parent=1 // pred_check_branch
      %23 = sbr.rel (0) target = $region5
    $region4: #{transformer_decoder.1} parent=1 // pred_region
      _
    $region5: #{transformer_decoder.1} parent=1 // pred_fallthru
      _
    // Predicated region
    $region6: #{transformer_decoder.1} parent=1 // pred_check
      _
    $region7: #{transformer_decoder.1} parent=1 // pred_check_branch
      %25 = sbr.rel (0) target = $region9
    $region8: #{transformer_decoder.1} parent=1 // pred_region
      _
    $region9: #{transformer_decoder.1} parent=1 // pred_fallthru
      _
    // Predicated region
    $region10: #{transformer_decoder.1} parent=1 // pred_check
      _
    $region11: #{transformer_decoder.1} parent=1 // pred_check_branch
      %27 = sbr.rel (0) target = $region13
    $region12: #{transformer_decoder.1} parent=1 // pred_region
      _
    $region13: #{transformer_decoder.1} parent=1 // pred_fallthru
      _
    // Predicated region
    $region14: #{transformer_decoder.1} parent=1 // pred_check
      _
    $region15: #{transformer_decoder.1} parent=1 // pred_check_branch
      %29 = sbr.rel (0) target = $region17
    $region16: #{transformer_decoder.1} parent=1 // pred_region
      _
    $region17: #{transformer_decoder.1} parent=1 // pred_fallthru
      _
    // Predicated region
    $region18: #{transformer_decoder.1} parent=1 // pred_check
      _
    $region19: #{transformer_decoder.1} parent=1 // pred_check_branch
      %31 = sbr.rel (0) target = $region21
    $region20: #{transformer_decoder.1} parent=1 // pred_region
      _
    $region21: #{transformer_decoder.1} parent=1 // pred_fallthru
      _
    // Predicated region
    $region22: #{transformer_decoder.1} parent=1 // pred_check
      _
    $region23: #{transformer_decoder.1} parent=1 // pred_check_branch
      %33 = sbr.rel (0) target = $region25
    $region24: #{transformer_decoder.1} parent=1 // pred_region
      _
    $region25: #{transformer_decoder.1} parent=1 // pred_fallthru
      _
    // Predicated region
    $region26: #{transformer_decoder.1} parent=1 // pred_check
      _
    $region27: #{transformer_decoder.1} parent=1 // pred_check_branch
      %35 = sbr.rel (0) target = $region29
    $region28: #{transformer_decoder.1} parent=1 // pred_region
      _
    $region29: #{transformer_decoder.1} parent=1 // pred_fallthru
      _
    // Predicated region
    $region30: #{transformer_decoder.1} parent=1 // pred_check
      _
    $region31: #{transformer_decoder.1} parent=1 // pred_check_branch
      %37 = sbr.rel (0) target = $region33
    $region32: #{transformer_decoder.1} parent=1 // pred_region
      _
    $region33: #{transformer_decoder.1} parent=1 // pred_fallthru
      _
    // Predicated region
    $region34: #{transformer_decoder.1} parent=1 // pred_check
      _
    $region35: #{transformer_decoder.1} parent=1 // pred_check_branch
      %39 = sbr.rel (0) target = $region37
    $region36: #{transformer_decoder.1} parent=1 // pred_region
      _
    $region37: #{transformer_decoder.1} parent=1 // pred_fallthru
      _
    // Predicated region
    $region38: #{transformer_decoder.1} parent=1 // pred_check
      _
    $region39: #{transformer_decoder.1} parent=1 // pred_check_branch
      %41 = sbr.rel (0) target = $region41
    $region40: #{transformer_decoder.1} parent=1 // pred_region
      %s43 = ssub.s32 1024, 1024
      %44 = vsyncadd [#allocation3], %s43
      %s45 = sshll.u32 [#allocation2], 4
      %s46 = int_to_ptr.vmem [resolvable:$true] %s45
      %51 = dma.hbm_to_vmem [thread:$0]  %s9, 1024, %s46, [#allocation3], 256, 256, 16
    $region41: #{transformer_decoder.1} parent=1 // pred_fallthru
      _
    // Predicated region
    $region42: #{transformer_decoder.1} parent=1 // pred_check
      _
    $region43: #{transformer_decoder.1} parent=1 // pred_check_branch
      %53 = sbr.rel (0) target = $region45
    $region44: #{transformer_decoder.1} parent=1 // pred_region
      _
    $region45: #{transformer_decoder.1} parent=1 // pred_fallthru
      _
    // Predicated region
    $region46: #{transformer_decoder.1} parent=1 // pred_check
      _
    $region47: #{transformer_decoder.1} parent=1 // pred_check_branch
      %55 = sbr.rel (0) target = $region49
    $region48: #{transformer_decoder.1} parent=1 // pred_region
      %s57 = ssub.s32 1024, 1024
      %58 = vsyncadd [#allocation5], %s57
      %s59 = sshll.u32 [#allocation4], 4
      %s60 = int_to_ptr.vmem [resolvable:$true] %s59
      %65 = dma.hbm_to_vmem [thread:$0]  %s11, 1024, %s60, [#allocation5], 128, 128, 8
    $region49: #{transformer_decoder.1} parent=1 // pred_fallthru
      _
    // Predicated region
    $region50: #{transformer_decoder.1} parent=1 // pred_check
      _
    $region51: #{transformer_decoder.1} parent=1 // pred_check_branch
      %67 = sbr.rel (0) target = $region53
    $region52: #{transformer_decoder.1} parent=1 // pred_region
      _
    $region53: #{transformer_decoder.1} parent=1 // pred_fallthru
      _
    // Predicated region
    $region54: #{transformer_decoder.1} parent=1 // pred_check
      _
    $region55: #{transformer_decoder.1} parent=1 // pred_check_branch
      %69 = sbr.rel (0) target = $region57
    $region56: #{transformer_decoder.1} parent=1 // pred_region
      _
    $region57: #{transformer_decoder.1} parent=1 // pred_fallthru
      _
    // Predicated region
    $region58: #{transformer_decoder.1} parent=1 // pred_check
      _
    $region59: #{transformer_decoder.1} parent=1 // pred_check_branch
      %71 = sbr.rel (0) target = $region61
    $region60: #{transformer_decoder.1} parent=1 // pred_region
      _
    $region61: #{transformer_decoder.1} parent=1 // pred_fallthru
      _
    // Predicated region
    $region62: #{transformer_decoder.1} parent=1 // pred_check
      _
    $region63: #{transformer_decoder.1} parent=1 // pred_check_branch
      %73 = sbr.rel (0) target = $region65
    $region64: #{transformer_decoder.1} parent=1 // pred_region
      %74 = dma.done [#allocation3], 1024
    $region65: #{transformer_decoder.1} parent=1 // pred_fallthru
      _
    // Predicated region
    $region66: #{transformer_decoder.1} parent=1 // pred_check
      _
    $region67: #{transformer_decoder.1} parent=1 // pred_check_branch
      %76 = sbr.rel (0) target = $region69
    $region68: #{transformer_decoder.1} parent=1 // pred_region
      %77 = dma.done [#allocation5], 1024
    $region69: #{transformer_decoder.1} parent=1 // pred_fallthru
      _
    %v78 = vld [vmem:[%s0] sm:$0xff]
    %v79 = vld [vmem:[%s0 + $0x8] sm:$0xff]
    %v80 = vld [vmem:[%s2] sm:$0xff]
    %v81 = vld [vmem:[%s2 + $0x8] sm:$0xff]
    %v82 = vld [vmem:[%s1] sm:$0xff]
    %v83 = vld [vmem:[%s1 + $0x8] sm:$0xff]
    %v84 = vld [vmem:[%s1 + $0x10] sm:$0xff]
    %v85 = vld [vmem:[%s1 + $0x18] sm:$0xff]
    %v86 = vld [vmem:[%s3] sm:$0xff]
    %v87 = vld [vmem:[%s3 + $0x8] sm:$0xff]
    %v88 = vld [vmem:[%s3 + $0x10] sm:$0xff]
    %v89 = vld [vmem:[%s3 + $0x18] sm:$0xff]
    %v90 = vadd.f32 %v82, %v86
    %v91 = vadd.f32 %v83, %v87
    %v92 = vadd.f32 %v84, %v88
    %v93 = vadd.f32 %v85, %v89
    %v94 = vld [vmem:[%s7] sm:$0xff]
    %v95 = vld [vmem:[%s7 + $0x8] sm:$0xff]
    %v96 = vld [vmem:[%s7 + $0x10] sm:$0xff]
    %v97 = vld [vmem:[%s7 + $0x18] sm:$0xff]
    %v98 = vld [vmem:[%s8] sm:$0x1]
    %v100 = vlaneseq
    %v101 = vshrl.u32 %v100, 7
    %v102 = vsub.s32 0, %v101
    %v103 = vrot.slane %v98, %v102
    %vm105 = vcmask 261120
    %v107 = vsel %vm105, %v90, 0
    %v110 = vsel %vm105, %v91, 0
    %v113 = vsel %vm105, %v92, 0
    %v116 = vsel %vm105, %v93, 0
    %118 = vmatprep.subr.mxu0 0.0
    %119 = vmatpush1.msra.mxu0 %v94
    %120 = vmatprep.subr.mxu0 0.0
    %121 = vmatpush1.msra.mxu0 %v95
    %122 = vmatprep.subr.mxu0 0.0
    %123 = vmatpush1.msra.mxu0 %v96
    %124 = vmatprep.subr.mxu0 0.0
    %125 = vmatpush1.msra.mxu0 %v97
    %126 = vmatprep.subr.mxu0 0.0
    %127 = vmatpush1.msra.mxu0 0.0
    %128 = vmatprep.subr.mxu0 0.0
    %129 = vmatpush1.msra.mxu0 0.0
    %130 = vmatprep.subr.mxu0 0.0
    %131 = vmatpush1.msra.mxu0 0.0
    %132 = vmatprep.subr.mxu0 0.0
    %133 = vmatpush1.msra.mxu0 0.0
    %134 = vmatprep.subr.mxu0 0.0
    %135 = vmatpush1.msra.mxu0 0.0
    %136 = vmatprep.subr.mxu0 0.0
    %137 = vmatpush1.msra.mxu0 0.0
    %138 = vmatprep.subr.mxu0 0.0
    %139 = vmatpush1.msra.mxu0 0.0
    %140 = vmatprep.subr.mxu0 0.0
    %141 = vmatpush1.msra.mxu0 0.0
    %142 = vmatprep.subr.mxu0 0.0
    %143 = vmatpush1.msra.mxu0 0.0
    %144 = vmatprep.subr.mxu0 0.0
    %145 = vmatpush1.msra.mxu0 0.0
    %146 = vmatprep.subr.mxu0 0.0
    %147 = vmatpush1.msra.mxu0 0.0
    %148 = vmatprep.subr.mxu0 0.0
    %149 = vmatpush1.msra.mxu0 0.0
    %150 = vmatprep.subr.mxu0 0.0
    %151 = vmatpush1.msra.mxu0 0.0
    %152 = vmatprep.subr.mxu0 0.0
    %153 = vmatpush1.msra.mxu0 0.0
    %154 = vmatprep.subr.mxu0 0.0
    %155 = vmatpush1.msra.mxu0 0.0
    %156 = vmatprep.subr.mxu0 0.0
    %157 = vmatpush1.msra.mxu0 0.0
    %158 = vmatprep.subr.mxu0 0.0
    %159 = vmatpush1.msra.mxu0 0.0
    %160 = vmatprep.subr.mxu0 0.0
    %161 = vmatpush1.msra.mxu0 0.0
    %162 = vmatprep.subr.mxu0 0.0
    %163 = vmatpush1.msra.mxu0 0.0
    %164 = vmatprep.subr.mxu0 0.0
    %165 = vmatpush1.msra.mxu0 0.0
    %166 = vmatprep.subr.mxu0 0.0
    %167 = vmatpush1.msra.mxu0 0.0
    %168 = vmatprep.subr.mxu0 0.0
    %169 = vmatpush1.msra.mxu0 0.0
    %170 = vmatprep.subr.mxu0 0.0
    %171 = vmatpush1.msra.mxu0 0.0
    %172 = vmatprep.subr.mxu0 0.0
    %173 = vmatpush1.msra.mxu0 0.0
    %174 = vmatprep.subr.mxu0 0.0
    %175 = vmatpush1.msra.mxu0 0.0
    %176 = vmatprep.subr.mxu0 0.0
    %177 = vmatpush1.msra.mxu0 0.0
    %178 = vmatprep.subr.mxu0 0.0
    %179 = vmatpush1.msra.mxu0 0.0
    %180 = vmatprep.subr.mxu0 0.0
    %181 = vmatpush1.msra.mxu0 0.0
    %182 = vmatprep.mubr.f32.mxu0 0.0
    %183 = vmatmul.mubr.f32.gmra.mrb[0].mxu0 %v107
    %v184 = vpop.f32.mrb[0].mxu0
    %v185 = vadd.f32 %v103, %v184
    %v186 = vpop.f32.mrb[0].mxu0
    %187 = vmatprep.mubr.f32.mxu0 0.0
    %188 = vmatmul.mubr.f32.gmra.mrb[0].mxu0 %v110
    %v189 = vpop.f32.mrb[0].mxu0
    %v190 = vadd.f32 %v103, %v189
    %v191 = vpop.f32.mrb[0].mxu0
    %192 = vmatprep.mubr.f32.mxu0 0.0
    %193 = vmatmul.mubr.f32.gmra.mrb[0].mxu0 %v113
    %v194 = vpop.f32.mrb[0].mxu0
    %v195 = vadd.f32 %v103, %v194
    %v196 = vpop.f32.mrb[0].mxu0
    %197 = vmatprep.mubr.f32.mxu0 0.0
    %198 = vmatmul.mubr.f32.gmra.mrb[0].mxu0 %v116
    %v199 = vpop.f32.mrb[0].mxu0
    %v200 = vadd.f32 %v103, %v199
    %v201 = vpop.f32.mrb[0].mxu0
    %202 = vdwg.mxu0
    %s203 = scalar_lea.vmem %s7, 32
    %v204 = vld [vmem:[%s203] sm:$0xff]
    %v205 = vld [vmem:[%s203 + $0x8] sm:$0xff]
    %v206 = vld [vmem:[%s203 + $0x10] sm:$0xff]
    %v207 = vld [vmem:[%s203 + $0x18] sm:$0xff]
    %s208 = scalar_lea.vmem %s8, 1
    %v209 = vld [vmem:[%s208] sm:$0x1]
    %v211 = vlaneseq
    %v212 = vshrl.u32 %v211, 7
    %v213 = vsub.s32 0, %v212
    %v214 = vrot.slane %v209, %v213
    %v217 = vsel %vm105, %v82, 0
    %v220 = vsel %vm105, %v83, 0
    %v223 = vsel %vm105, %v84, 0
    %v226 = vsel %vm105, %v85, 0
    %228 = vmatprep.subr.mxu0 0.0
    %229 = vmatpush1.msra.mxu0 %v204
    %230 = vmatprep.subr.mxu0 0.0
    %231 = vmatpush1.msra.mxu0 %v205
    %232 = vmatprep.subr.mxu0 0.0
    %233 = vmatpush1.msra.mxu0 %v206
    %234 = vmatprep.subr.mxu0 0.0
    %235 = vmatpush1.msra.mxu0 %v207
    %236 = vmatprep.subr.mxu0 0.0
    %237 = vmatpush1.msra.mxu0 0.0
    %238 = vmatprep.subr.mxu0 0.0
    %239 = vmatpush1.msra.mxu0 0.0
    %240 = vmatprep.subr.mxu0 0.0
    %241 = vmatpush1.msra.mxu0 0.0
    %242 = vmatprep.subr.mxu0 0.0
    %243 = vmatpush1.msra.mxu0 0.0
    %244 = vmatprep.subr.mxu0 0.0
    %245 = vmatpush1.msra.mxu0 0.0
    %246 = vmatprep.subr.mxu0 0.0
    %247 = vmatpush1.msra.mxu0 0.0
    %248 = vmatprep.subr.mxu0 0.0
    %249 = vmatpush1.msra.mxu0 0.0
    %250 = vmatprep.subr.mxu0 0.0
    %251 = vmatpush1.msra.mxu0 0.0
    %252 = vmatprep.subr.mxu0 0.0
    %253 = vmatpush1.msra.mxu0 0.0
    %254 = vmatprep.subr.mxu0 0.0
    %255 = vmatpush1.msra.mxu0 0.0
    %256 = vmatprep.subr.mxu0 0.0
    %257 = vmatpush1.msra.mxu0 0.0
    %258 = vmatprep.subr.mxu0 0.0
    %259 = vmatpush1.msra.mxu0 0.0
    %260 = vmatprep.subr.mxu0 0.0
    %261 = vmatpush1.msra.mxu0 0.0
    %262 = vmatprep.subr.mxu0 0.0
    %263 = vmatpush1.msra.mxu0 0.0
    %264 = vmatprep.subr.mxu0 0.0
    %265 = vmatpush1.msra.mxu0 0.0
    %266 = vmatprep.subr.mxu0 0.0
    %267 = vmatpush1.msra.mxu0 0.0
    %268 = vmatprep.subr.mxu0 0.0
    %269 = vmatpush1.msra.mxu0 0.0
    %270 = vmatprep.subr.mxu0 0.0
    %271 = vmatpush1.msra.mxu0 0.0
    %272 = vmatprep.subr.mxu0 0.0
    %273 = vmatpush1.msra.mxu0 0.0
    %274 = vmatprep.subr.mxu0 0.0
    %275 = vmatpush1.msra.mxu0 0.0
    %276 = vmatprep.subr.mxu0 0.0
    %277 = vmatpush1.msra.mxu0 0.0
    %278 = vmatprep.subr.mxu0 0.0
    %279 = vmatpush1.msra.mxu0 0.0
    %280 = vmatprep.subr.mxu0 0.0
    %281 = vmatpush1.msra.mxu0 0.0
    %282 = vmatprep.subr.mxu0 0.0
    %283 = vmatpush1.msra.mxu0 0.0
    %284 = vmatprep.subr.mxu0 0.0
    %285 = vmatpush1.msra.mxu0 0.0
    %286 = vmatprep.subr.mxu0 0.0
    %287 = vmatpush1.msra.mxu0 0.0
    %288 = vmatprep.subr.mxu0 0.0
    %289 = vmatpush1.msra.mxu0 0.0
    %290 = vmatprep.subr.mxu0 0.0
    %291 = vmatpush1.msra.mxu0 0.0
    %292 = vmatprep.mubr.f32.mxu0 0.0
    %293 = vmatmul.mubr.f32.gmra.mrb[0].mxu0 %v217
    %v294 = vpop.f32.mrb[0].mxu0
    %v295 = vadd.f32 %v214, %v294
    %v296 = vpop.f32.mrb[0].mxu0
    %297 = vmatprep.mubr.f32.mxu0 0.0
    %298 = vmatmul.mubr.f32.gmra.mrb[0].mxu0 %v220
    %v299 = vpop.f32.mrb[0].mxu0
    %v300 = vadd.f32 %v214, %v299
    %v301 = vpop.f32.mrb[0].mxu0
    %302 = vmatprep.mubr.f32.mxu0 0.0
    %303 = vmatmul.mubr.f32.gmra.mrb[0].mxu0 %v223
    %v304 = vpop.f32.mrb[0].mxu0
    %v305 = vadd.f32 %v214, %v304
    %v306 = vpop.f32.mrb[0].mxu0
    %307 = vmatprep.mubr.f32.mxu0 0.0
    %308 = vmatmul.mubr.f32.gmra.mrb[0].mxu0 %v226
    %v309 = vpop.f32.mrb[0].mxu0
    %v310 = vadd.f32 %v214, %v309
    %v311 = vpop.f32.mrb[0].mxu0
    %312 = vdwg.mxu0
    %v313 = vld [vmem:[#allocation2] sm:$0xff]
    %v314 = vld [vmem:[#allocation2 + $0x8] sm:$0xff]
    %v315 = vld [vmem:[#allocation2 + $0x10] sm:$0xff]
    %v316 = vld [vmem:[#allocation2 + $0x18] sm:$0xff]
    %v317 = vld [vmem:[#allocation2 + $0x20] sm:$0xff]
    %v318 = vld [vmem:[#allocation2 + $0x28] sm:$0xff]
    %v319 = vld [vmem:[#allocation2 + $0x30] sm:$0xff]
    %v320 = vld [vmem:[#allocation2 + $0x38] sm:$0xff]
    %v321 = vld [vmem:[%s10] sm:$0x3]
    %v323 = vlaneseq
    %v324 = vshrl.u32 %v323, 7
    %v325 = vsub.s32 0, %v324
    %v326 = vrot.slane %v321, %v325
    %v327 = vlaneseq
    %v328 = vshrl.u32 %v327, 7
    %v329 = vsub.s32 1, %v328
    %v330 = vrot.slane %v321, %v329
    %v334 = vsel %vm105, %v80, 0
    %v337 = vsel %vm105, %v81, 0
    %339 = vmatprep.subr.mxu0 %v314
    %340 = vmatpush1.msra.mxu0 %v313
    %341 = vmatprep.subr.mxu0 %v316
    %342 = vmatpush1.msra.mxu0 %v315
    %343 = vmatprep.subr.mxu0 %v318
    %344 = vmatpush1.msra.mxu0 %v317
    %345 = vmatprep.subr.mxu0 %v320
    %346 = vmatpush1.msra.mxu0 %v319
    %347 = vmatprep.subr.mxu0 0.0
    %348 = vmatpush1.msra.mxu0 0.0
    %349 = vmatprep.subr.mxu0 0.0
    %350 = vmatpush1.msra.mxu0 0.0
    %351 = vmatprep.subr.mxu0 0.0
    %352 = vmatpush1.msra.mxu0 0.0
    %353 = vmatprep.subr.mxu0 0.0
    %354 = vmatpush1.msra.mxu0 0.0
    %355 = vmatprep.subr.mxu0 0.0
    %356 = vmatpush1.msra.mxu0 0.0
    %357 = vmatprep.subr.mxu0 0.0
    %358 = vmatpush1.msra.mxu0 0.0
    %359 = vmatprep.subr.mxu0 0.0
    %360 = vmatpush1.msra.mxu0 0.0
    %361 = vmatprep.subr.mxu0 0.0
    %362 = vmatpush1.msra.mxu0 0.0
    %363 = vmatprep.subr.mxu0 0.0
    %364 = vmatpush1.msra.mxu0 0.0
    %365 = vmatprep.subr.mxu0 0.0
    %366 = vmatpush1.msra.mxu0 0.0
    %367 = vmatprep.subr.mxu0 0.0
    %368 = vmatpush1.msra.mxu0 0.0
    %369 = vmatprep.subr.mxu0 0.0
    %370 = vmatpush1.msra.mxu0 0.0
    %371 = vmatprep.subr.mxu0 0.0
    %372 = vmatpush1.msra.mxu0 0.0
    %373 = vmatprep.subr.mxu0 0.0
    %374 = vmatpush1.msra.mxu0 0.0
    %375 = vmatprep.subr.mxu0 0.0
    %376 = vmatpush1.msra.mxu0 0.0
    %377 = vmatprep.subr.mxu0 0.0
    %378 = vmatpush1.msra.mxu0 0.0
    %379 = vmatprep.subr.mxu0 0.0
    %380 = vmatpush1.msra.mxu0 0.0
    %381 = vmatprep.subr.mxu0 0.0
    %382 = vmatpush1.msra.mxu0 0.0
    %383 = vmatprep.subr.mxu0 0.0
    %384 = vmatpush1.msra.mxu0 0.0
    %385 = vmatprep.subr.mxu0 0.0
    %386 = vmatpush1.msra.mxu0 0.0
    %387 = vmatprep.subr.mxu0 0.0
    %388 = vmatpush1.msra.mxu0 0.0
    %389 = vmatprep.subr.mxu0 0.0
    %390 = vmatpush1.msra.mxu0 0.0
    %391 = vmatprep.subr.mxu0 0.0
    %392 = vmatpush1.msra.mxu0 0.0
    %393 = vmatprep.subr.mxu0 0.0
    %394 = vmatpush1.msra.mxu0 0.0
    %395 = vmatprep.subr.mxu0 0.0
    %396 = vmatpush1.msra.mxu0 0.0
    %397 = vmatprep.subr.mxu0 0.0
    %398 = vmatpush1.msra.mxu0 0.0
    %399 = vmatprep.subr.mxu0 0.0
    %400 = vmatpush1.msra.mxu0 0.0
    %401 = vmatprep.subr.mxu0 0.0
    %402 = vmatpush1.msra.mxu0 0.0
    %403 = vmatprep.mubr.f32.mxu0 0.0
    %404 = vmatmul.mubr.f32.gmra.mrb[0].mxu0 %v334
    %v405 = vpop.f32.mrb[0].mxu0
    %v406 = vadd.f32 %v326, %v405
    %v407 = vpop.f32.mrb[0].mxu0
    %v408 = vadd.f32 %v330, %v407
    %409 = vmatprep.mubr.f32.mxu0 0.0
    %410 = vmatmul.mubr.f32.gmra.mrb[0].mxu0 %v337
    %v411 = vpop.f32.mrb[0].mxu0
    %v412 = vadd.f32 %v326, %v411
    %v413 = vpop.f32.mrb[0].mxu0
    %v414 = vadd.f32 %v330, %v413
    %415 = vdwg.mxu0
    %v416 = vld [vmem:[%s14] sm:$0x1]
    %s417 = scalar_lea.vmem %s14, 6
    %v418 = vld [vmem:[%s417] sm:$0x1]
    %v419 = vsel %vm105, %v78, 0.0
    %420 = vadd.xlane.f32.xlu0 %v419
    %v421 = vpop.xlane.xlu0 %420
    %v422 = vsel %vm105, %v79, 0.0
    %423 = vadd.xlane.f32.xlu0 %v422
    %v424 = vpop.xlane.xlu0 %423
    %v425 = vrcp.pop 32.0
    %v426 = vmul.f32 %v421, %v425
    %v427 = vmul.f32 %v424, %v425
    %v428 = vmul.f32 %v78, %v78
    %v429 = vmul.f32 %v79, %v79
    %v430 = vsel %vm105, %v428, 0.0
    %431 = vadd.xlane.f32.xlu0 %v430
    %v432 = vpop.xlane.xlu0 %431
    %v433 = vsel %vm105, %v429, 0.0
    %434 = vadd.xlane.f32.xlu0 %v433
    %v435 = vpop.xlane.xlu0 %434
    %v436 = vmul.f32 %v432, %v425
    %v437 = vmul.f32 %v435, %v425
    %v438 = vsub.f32 %v78, %v426
    %v439 = vsub.f32 %v79, %v427
    %v440 = vmul.f32 %v426, %v426
    %v441 = vmul.f32 %v427, %v427
    %v442 = vsub.f32 %v436, %v440
    %v443 = vsub.f32 %v437, %v441
    %v444 = vadd.f32 %v442, 1e-05
    %v445 = vadd.f32 %v443, 1e-05
    %v446 = vrsqrt.pop %v444
    %v447 = vrsqrt.pop %v445
    %v448 = vmul.f32 %v438, %v446
    %v449 = vmul.f32 %v439, %v447
    %v451 = vlaneseq
    %v452 = vshrl.u32 %v451, 7
    %v453 = vsub.s32 0, %v452
    %v454 = vrot.slane %v416, %v453
    %v456 = vmul.f32 %v448, %v454
    %v457 = vmul.f32 %v449, %v454
    %v459 = vlaneseq
    %v460 = vshrl.u32 %v459, 7
    %v461 = vsub.s32 0, %v460
    %v462 = vrot.slane %v418, %v461
    %v464 = vadd.f32 %v456, %v462
    %v465 = vadd.f32 %v457, %v462
    %v466 = vld [vmem:[%s4] sm:$0xff]
    %v467 = vld [vmem:[%s4 + $0x8] sm:$0xff]
    %v468 = vld [vmem:[%s4 + $0x10] sm:$0xff]
    %v469 = vld [vmem:[%s4 + $0x18] sm:$0xff]
    %v471 = vsel %vm105, %v464, 0
    %v474 = vsel %vm105, %v465, 0
    %476 = vmatprep.subr.mxu0 0.0
    %477 = vmatpush1.msra.mxu0 %v466
    %478 = vmatprep.subr.mxu0 0.0
    %479 = vmatpush1.msra.mxu0 %v467
    %480 = vmatprep.subr.mxu0 0.0
    %481 = vmatpush1.msra.mxu0 %v468
    %482 = vmatprep.subr.mxu0 0.0
    %483 = vmatpush1.msra.mxu0 %v469
    %484 = vmatprep.subr.mxu0 0.0
    %485 = vmatpush1.msra.mxu0 0.0
    %486 = vmatprep.subr.mxu0 0.0
    %487 = vmatpush1.msra.mxu0 0.0
    %488 = vmatprep.subr.mxu0 0.0
    %489 = vmatpush1.msra.mxu0 0.0
    %490 = vmatprep.subr.mxu0 0.0
    %491 = vmatpush1.msra.mxu0 0.0
    %492 = vmatprep.subr.mxu0 0.0
    %493 = vmatpush1.msra.mxu0 0.0
    %494 = vmatprep.subr.mxu0 0.0
    %495 = vmatpush1.msra.mxu0 0.0
    %496 = vmatprep.subr.mxu0 0.0
    %497 = vmatpush1.msra.mxu0 0.0
    %498 = vmatprep.subr.mxu0 0.0
    %499 = vmatpush1.msra.mxu0 0.0
    %500 = vmatprep.subr.mxu0 0.0
    %501 = vmatpush1.msra.mxu0 0.0
    %502 = vmatprep.subr.mxu0 0.0
    %503 = vmatpush1.msra.mxu0 0.0
    %504 = vmatprep.subr.mxu0 0.0
    %505 = vmatpush1.msra.mxu0 0.0
    %506 = vmatprep.subr.mxu0 0.0
    %507 = vmatpush1.msra.mxu0 0.0
    %508 = vmatprep.subr.mxu0 0.0
    %509 = vmatpush1.msra.mxu0 0.0
    %510 = vmatprep.subr.mxu0 0.0
    %511 = vmatpush1.msra.mxu0 0.0
    %512 = vmatprep.subr.mxu0 0.0
    %513 = vmatpush1.msra.mxu0 0.0
    %514 = vmatprep.subr.mxu0 0.0
    %515 = vmatpush1.msra.mxu0 0.0
    %516 = vmatprep.subr.mxu0 0.0
    %517 = vmatpush1.msra.mxu0 0.0
    %518 = vmatprep.subr.mxu0 0.0
    %519 = vmatpush1.msra.mxu0 0.0
    %520 = vmatprep.subr.mxu0 0.0
    %521 = vmatpush1.msra.mxu0 0.0
    %522 = vmatprep.subr.mxu0 0.0
    %523 = vmatpush1.msra.mxu0 0.0
    %524 = vmatprep.subr.mxu0 0.0
    %525 = vmatpush1.msra.mxu0 0.0
    %526 = vmatprep.subr.mxu0 0.0
    %527 = vmatpush1.msra.mxu0 0.0
    %528 = vmatprep.subr.mxu0 0.0
    %529 = vmatpush1.msra.mxu0 0.0
    %530 = vmatprep.subr.mxu0 0.0
    %531 = vmatpush1.msra.mxu0 0.0
    %532 = vmatprep.subr.mxu0 0.0
    %533 = vmatpush1.msra.mxu0 0.0
    %534 = vmatprep.subr.mxu0 0.0
    %535 = vmatpush1.msra.mxu0 0.0
    %536 = vmatprep.subr.mxu0 0.0
    %537 = vmatpush1.msra.mxu0 0.0
    %538 = vmatprep.subr.mxu0 0.0
    %539 = vmatpush1.msra.mxu0 0.0
    %540 = vmatprep.mubr.f32.mxu0 0.0
    %541 = vmatmul.mubr.f32.gmra.mrb[0].mxu0 %v471
    %v542 = vpop.f32.mrb[0].mxu0
    %v543 = vadd.f32 0.0, %v542
    %v544 = vpop.f32.mrb[0].mxu0
    %545 = vmatprep.mubr.f32.mxu0 0.0
    %546 = vmatmul.mubr.f32.gmra.mrb[0].mxu0 %v474
    %v547 = vpop.f32.mrb[0].mxu0
    %v548 = vadd.f32 0.0, %v547
    %v549 = vpop.f32.mrb[0].mxu0
    %550 = vdwg.mxu0
    %v551 = vadd.f32 %v543, %v406
    %v552 = vadd.f32 %v548, %v412
    %v553 = vld [vmem:[%s6] sm:$0x1]
    %v555 = vlaneseq
    %v556 = vshrl.u32 %v555, 7
    %v557 = vsub.s32 0, %v556
    %v558 = vrot.slane %v553, %v557
    %559 = vrot.lane.b32.xlu0 %v558, 64
    %v560 = vpop.permute.xlu0 %559
    %v562 = vadd.f32 %v543, %v560
    %v563 = vadd.f32 %v548, %v560
    %s564 = scalar_lea.vmem %s5, 32
    %v565 = vld [vmem:[%s564] sm:$0xff]
    %v566 = vld [vmem:[%s564 + $0x8] sm:$0xff]
    %v567 = vld [vmem:[%s564 + $0x10] sm:$0xff]
    %v568 = vld [vmem:[%s564 + $0x18] sm:$0xff]
    %s569 = scalar_lea.vmem %s6, 1
    %v570 = vld [vmem:[%s569] sm:$0x1]
    %573 = vrot.lane.b32.xlu0 %v551, 120
    %v574 = vpop.permute.xlu0 %573
    %575 = vrot.lane.b32.xlu0 %v552, 120
    %v576 = vpop.permute.xlu0 %575
    %577 = vrot.lane.b32.xlu0 %v551, 112
    %v578 = vpop.permute.xlu0 %577
    %579 = vrot.lane.b32.xlu0 %v552, 112
    %v580 = vpop.permute.xlu0 %579
    %581 = vrot.lane.b32.xlu0 %v551, 104
    %v582 = vpop.permute.xlu0 %581
    %583 = vrot.lane.b32.xlu0 %v552, 104
    %v584 = vpop.permute.xlu0 %583
    %587 = vrot.lane.b32.xlu0 %v562, 120
    %v588 = vpop.permute.xlu0 %587
    %589 = vrot.lane.b32.xlu0 %v563, 120
    %v590 = vpop.permute.xlu0 %589
    %591 = vrot.lane.b32.xlu0 %v562, 112
    %v592 = vpop.permute.xlu0 %591
    %593 = vrot.lane.b32.xlu0 %v563, 112
    %v594 = vpop.permute.xlu0 %593
    %595 = vrot.lane.b32.xlu0 %v562, 104
    %v596 = vpop.permute.xlu0 %595
    %597 = vrot.lane.b32.xlu0 %v563, 104
    %v598 = vpop.permute.xlu0 %597
    %599 = vrot.lane.b32.xlu0 %v551, 96
    %v600 = vpop.permute.xlu0 %599
    %vm601 = vcmask 64512
    %v602 = vsel %vm601, %v551, 0
    %v604 = vsel %vm601, %v600, 0
    %606 = vmatprep.subr.mxu0 0.0
    %607 = vmatpush1.xpose.msra.mxu0 %v604
    %608 = vmatprep.subr.mxu0 0.0
    %609 = vmatpush1.xpose.msra.mxu0 0.0
    %610 = vmatprep.subr.mxu0 0.0
    %611 = vmatpush1.xpose.msra.mxu0 0.0
    %612 = vmatprep.subr.mxu0 0.0
    %613 = vmatpush1.xpose.msra.mxu0 0.0
    %614 = vmatprep.subr.mxu0 0.0
    %615 = vmatpush1.xpose.msra.mxu0 0.0
    %616 = vmatprep.subr.mxu0 0.0
    %617 = vmatpush1.xpose.msra.mxu0 0.0
    %618 = vmatprep.subr.mxu0 0.0
    %619 = vmatpush1.xpose.msra.mxu0 0.0
    %620 = vmatprep.subr.mxu0 0.0
    %621 = vmatpush1.xpose.msra.mxu0 0.0
    %622 = vmatprep.subr.mxu0 0.0
    %623 = vmatpush1.xpose.msra.mxu0 0.0
    %624 = vmatprep.subr.mxu0 0.0
    %625 = vmatpush1.xpose.msra.mxu0 0.0
    %626 = vmatprep.subr.mxu0 0.0
    %627 = vmatpush1.xpose.msra.mxu0 0.0
    %628 = vmatprep.subr.mxu0 0.0
    %629 = vmatpush1.xpose.msra.mxu0 0.0
    %630 = vmatprep.subr.mxu0 0.0
    %631 = vmatpush1.xpose.msra.mxu0 0.0
    %632 = vmatprep.subr.mxu0 0.0
    %633 = vmatpush1.xpose.msra.mxu0 0.0
    %634 = vmatprep.subr.mxu0 0.0
    %635 = vmatpush1.xpose.msra.mxu0 0.0
    %636 = vmatprep.subr.mxu0 0.0
    %637 = vmatpush1.xpose.msra.mxu0 0.0
    %638 = vmatprep.subr.mxu0 0.0
    %639 = vmatpush1.xpose.msra.mxu0 0.0
    %640 = vmatprep.subr.mxu0 0.0
    %641 = vmatpush1.xpose.msra.mxu0 0.0
    %642 = vmatprep.subr.mxu0 0.0
    %643 = vmatpush1.xpose.msra.mxu0 0.0
    %644 = vmatprep.subr.mxu0 0.0
    %645 = vmatpush1.xpose.msra.mxu0 0.0
    %646 = vmatprep.subr.mxu0 0.0
    %647 = vmatpush1.xpose.msra.mxu0 0.0
    %648 = vmatprep.subr.mxu0 0.0
    %649 = vmatpush1.xpose.msra.mxu0 0.0
    %650 = vmatprep.subr.mxu0 0.0
    %651 = vmatpush1.xpose.msra.mxu0 0.0
    %652 = vmatprep.subr.mxu0 0.0
    %653 = vmatpush1.xpose.msra.mxu0 0.0
    %654 = vmatprep.subr.mxu0 0.0
    %655 = vmatpush1.xpose.msra.mxu0 0.0
    %656 = vmatprep.subr.mxu0 0.0
    %657 = vmatpush1.xpose.msra.mxu0 0.0
    %658 = vmatprep.subr.mxu0 0.0
    %659 = vmatpush1.xpose.msra.mxu0 0.0
    %660 = vmatprep.subr.mxu0 0.0
    %661 = vmatpush1.xpose.msra.mxu0 0.0
    %662 = vmatprep.subr.mxu0 0.0
    %663 = vmatpush1.xpose.msra.mxu0 0.0
    %664 = vmatprep.subr.mxu0 0.0
    %665 = vmatpush1.xpose.msra.mxu0 0.0
    %666 = vmatprep.subr.mxu0 0.0
    %667 = vmatpush1.xpose.msra.mxu0 0.0
    %668 = vmatprep.subr.mxu0 0.0
    %669 = vmatpush1.xpose.msra.mxu0 0.0
    %670 = vmatprep.mubr.f32.mxu0 0.0
    %671 = vmatmul.mubr.f32.gmra.mrb[0].mxu0 %v602
    %v672 = vpop.f32.mrb[0].mxu0
    %v673 = vadd.f32 0.0, %v672
    %v674 = vpop.f32.mrb[0].mxu0
    %675 = vdwg.mxu0
    %676 = vrot.lane.b32.xlu0 %v552, 96
    %v677 = vpop.permute.xlu0 %676
    %v678 = vsel %vm601, %v552, 0
    %v680 = vsel %vm601, %v677, 0
    %682 = vmatprep.subr.mxu0 0.0
    %683 = vmatpush1.xpose.msra.mxu0 %v680
    %684 = vmatprep.subr.mxu0 0.0
    %685 = vmatpush1.xpose.msra.mxu0 0.0
    %686 = vmatprep.subr.mxu0 0.0
    %687 = vmatpush1.xpose.msra.mxu0 0.0
    %688 = vmatprep.subr.mxu0 0.0
    %689 = vmatpush1.xpose.msra.mxu0 0.0
    %690 = vmatprep.subr.mxu0 0.0
    %691 = vmatpush1.xpose.msra.mxu0 0.0
    %692 = vmatprep.subr.mxu0 0.0
    %693 = vmatpush1.xpose.msra.mxu0 0.0
    %694 = vmatprep.subr.mxu0 0.0
    %695 = vmatpush1.xpose.msra.mxu0 0.0
    %696 = vmatprep.subr.mxu0 0.0
    %697 = vmatpush1.xpose.msra.mxu0 0.0
    %698 = vmatprep.subr.mxu0 0.0
    %699 = vmatpush1.xpose.msra.mxu0 0.0
    %700 = vmatprep.subr.mxu0 0.0
    %701 = vmatpush1.xpose.msra.mxu0 0.0
    %702 = vmatprep.subr.mxu0 0.0
    %703 = vmatpush1.xpose.msra.mxu0 0.0
    %704 = vmatprep.subr.mxu0 0.0
    %705 = vmatpush1.xpose.msra.mxu0 0.0
    %706 = vmatprep.subr.mxu0 0.0
    %707 = vmatpush1.xpose.msra.mxu0 0.0
    %708 = vmatprep.subr.mxu0 0.0
    %709 = vmatpush1.xpose.msra.mxu0 0.0
    %710 = vmatprep.subr.mxu0 0.0
    %711 = vmatpush1.xpose.msra.mxu0 0.0
    %712 = vmatprep.subr.mxu0 0.0
    %713 = vmatpush1.xpose.msra.mxu0 0.0
    %714 = vmatprep.subr.mxu0 0.0
    %715 = vmatpush1.xpose.msra.mxu0 0.0
    %716 = vmatprep.subr.mxu0 0.0
    %717 = vmatpush1.xpose.msra.mxu0 0.0
    %718 = vmatprep.subr.mxu0 0.0
    %719 = vmatpush1.xpose.msra.mxu0 0.0
    %720 = vmatprep.subr.mxu0 0.0
    %721 = vmatpush1.xpose.msra.mxu0 0.0
    %722 = vmatprep.subr.mxu0 0.0
    %723 = vmatpush1.xpose.msra.mxu0 0.0
    %724 = vmatprep.subr.mxu0 0.0
    %725 = vmatpush1.xpose.msra.mxu0 0.0
    %726 = vmatprep.subr.mxu0 0.0
    %727 = vmatpush1.xpose.msra.mxu0 0.0
    %728 = vmatprep.subr.mxu0 0.0
    %729 = vmatpush1.xpose.msra.mxu0 0.0
    %730 = vmatprep.subr.mxu0 0.0
    %731 = vmatpush1.xpose.msra.mxu0 0.0
    %732 = vmatprep.subr.mxu0 0.0
    %733 = vmatpush1.xpose.msra.mxu0 0.0
    %734 = vmatprep.subr.mxu0 0.0
    %735 = vmatpush1.xpose.msra.mxu0 0.0
    %736 = vmatprep.subr.mxu0 0.0
    %737 = vmatpush1.xpose.msra.mxu0 0.0
    %738 = vmatprep.subr.mxu0 0.0
    %739 = vmatpush1.xpose.msra.mxu0 0.0
    %740 = vmatprep.subr.mxu0 0.0
    %741 = vmatpush1.xpose.msra.mxu0 0.0
    %742 = vmatprep.subr.mxu0 0.0
    %743 = vmatpush1.xpose.msra.mxu0 0.0
    %744 = vmatprep.subr.mxu0 0.0
    %745 = vmatpush1.xpose.msra.mxu0 0.0
    %746 = vmatprep.mubr.f32.mxu0 0.0
    %747 = vmatmul.mubr.f32.gmra.mrb[0].mxu0 %v678
    %v748 = vpop.f32.mrb[0].mxu0
    %v749 = vadd.f32 0.0, %v748
    %v750 = vpop.f32.mrb[0].mxu0
    %751 = vdwg.mxu0
    %752 = vrot.lane.b32.xlu0 %v574, 96
    %v753 = vpop.permute.xlu0 %752
    %v754 = vsel %vm601, %v574, 0
    %v756 = vsel %vm601, %v753, 0
    %758 = vmatprep.subr.mxu0 0.0
    %759 = vmatpush1.xpose.msra.mxu0 %v756
    %760 = vmatprep.subr.mxu0 0.0
    %761 = vmatpush1.xpose.msra.mxu0 0.0
    %762 = vmatprep.subr.mxu0 0.0
    %763 = vmatpush1.xpose.msra.mxu0 0.0
    %764 = vmatprep.subr.mxu0 0.0
    %765 = vmatpush1.xpose.msra.mxu0 0.0
    %766 = vmatprep.subr.mxu0 0.0
    %767 = vmatpush1.xpose.msra.mxu0 0.0
    %768 = vmatprep.subr.mxu0 0.0
    %769 = vmatpush1.xpose.msra.mxu0 0.0
    %770 = vmatprep.subr.mxu0 0.0
    %771 = vmatpush1.xpose.msra.mxu0 0.0
    %772 = vmatprep.subr.mxu0 0.0
    %773 = vmatpush1.xpose.msra.mxu0 0.0
    %774 = vmatprep.subr.mxu0 0.0
    %775 = vmatpush1.xpose.msra.mxu0 0.0
    %776 = vmatprep.subr.mxu0 0.0
    %777 = vmatpush1.xpose.msra.mxu0 0.0
    %778 = vmatprep.subr.mxu0 0.0
    %779 = vmatpush1.xpose.msra.mxu0 0.0
    %780 = vmatprep.subr.mxu0 0.0
    %781 = vmatpush1.xpose.msra.mxu0 0.0
    %782 = vmatprep.subr.mxu0 0.0
    %783 = vmatpush1.xpose.msra.mxu0 0.0
    %784 = vmatprep.subr.mxu0 0.0
    %785 = vmatpush1.xpose.msra.mxu0 0.0
    %786 = vmatprep.subr.mxu0 0.0
    %787 = vmatpush1.xpose.msra.mxu0 0.0
    %788 = vmatprep.subr.mxu0 0.0
    %789 = vmatpush1.xpose.msra.mxu0 0.0
    %790 = vmatprep.subr.mxu0 0.0
    %791 = vmatpush1.xpose.msra.mxu0 0.0
    %792 = vmatprep.subr.mxu0 0.0
    %793 = vmatpush1.xpose.msra.mxu0 0.0
    %794 = vmatprep.subr.mxu0 0.0
    %795 = vmatpush1.xpose.msra.mxu0 0.0
    %796 = vmatprep.subr.mxu0 0.0
    %797 = vmatpush1.xpose.msra.mxu0 0.0
    %798 = vmatprep.subr.mxu0 0.0
    %799 = vmatpush1.xpose.msra.mxu0 0.0
    %800 = vmatprep.subr.mxu0 0.0
    %801 = vmatpush1.xpose.msra.mxu0 0.0
    %802 = vmatprep.subr.mxu0 0.0
    %803 = vmatpush1.xpose.msra.mxu0 0.0
    %804 = vmatprep.subr.mxu0 0.0
    %805 = vmatpush1.xpose.msra.mxu0 0.0
    %806 = vmatprep.subr.mxu0 0.0
    %807 = vmatpush1.xpose.msra.mxu0 0.0
    %808 = vmatprep.subr.mxu0 0.0
    %809 = vmatpush1.xpose.msra.mxu0 0.0
    %810 = vmatprep.subr.mxu0 0.0
    %811 = vmatpush1.xpose.msra.mxu0 0.0
    %812 = vmatprep.subr.mxu0 0.0
    %813 = vmatpush1.xpose.msra.mxu0 0.0
    %814 = vmatprep.subr.mxu0 0.0
    %815 = vmatpush1.xpose.msra.mxu0 0.0
    %816 = vmatprep.subr.mxu0 0.0
    %817 = vmatpush1.xpose.msra.mxu0 0.0
    %818 = vmatprep.subr.mxu0 0.0
    %819 = vmatpush1.xpose.msra.mxu0 0.0
    %820 = vmatprep.subr.mxu0 0.0
    %821 = vmatpush1.xpose.msra.mxu0 0.0
    %822 = vmatprep.mubr.f32.mxu0 0.0
    %823 = vmatmul.mubr.f32.gmra.mrb[0].mxu0 %v754
    %v824 = vpop.f32.mrb[0].mxu0
    %v825 = vadd.f32 0.0, %v824
    %v826 = vpop.f32.mrb[0].mxu0
    %827 = vdwg.mxu0
    %828 = vrot.lane.b32.xlu0 %v576, 96
    %v829 = vpop.permute.xlu0 %828
    %v830 = vsel %vm601, %v576, 0
    %v832 = vsel %vm601, %v829, 0
    %834 = vmatprep.subr.mxu0 0.0
    %835 = vmatpush1.xpose.msra.mxu0 %v832
    %836 = vmatprep.subr.mxu0 0.0
    %837 = vmatpush1.xpose.msra.mxu0 0.0
    %838 = vmatprep.subr.mxu0 0.0
    %839 = vmatpush1.xpose.msra.mxu0 0.0
    %840 = vmatprep.subr.mxu0 0.0
    %841 = vmatpush1.xpose.msra.mxu0 0.0
    %842 = vmatprep.subr.mxu0 0.0
    %843 = vmatpush1.xpose.msra.mxu0 0.0
    %844 = vmatprep.subr.mxu0 0.0
    %845 = vmatpush1.xpose.msra.mxu0 0.0
    %846 = vmatprep.subr.mxu0 0.0
    %847 = vmatpush1.xpose.msra.mxu0 0.0
    %848 = vmatprep.subr.mxu0 0.0
    %849 = vmatpush1.xpose.msra.mxu0 0.0
    %850 = vmatprep.subr.mxu0 0.0
    %851 = vmatpush1.xpose.msra.mxu0 0.0
    %852 = vmatprep.subr.mxu0 0.0
    %853 = vmatpush1.xpose.msra.mxu0 0.0
    %854 = vmatprep.subr.mxu0 0.0
    %855 = vmatpush1.xpose.msra.mxu0 0.0
    %856 = vmatprep.subr.mxu0 0.0
    %857 = vmatpush1.xpose.msra.mxu0 0.0
    %858 = vmatprep.subr.mxu0 0.0
    %859 = vmatpush1.xpose.msra.mxu0 0.0
    %860 = vmatprep.subr.mxu0 0.0
    %861 = vmatpush1.xpose.msra.mxu0 0.0
    %862 = vmatprep.subr.mxu0 0.0
    %863 = vmatpush1.xpose.msra.mxu0 0.0
    %864 = vmatprep.subr.mxu0 0.0
    %865 = vmatpush1.xpose.msra.mxu0 0.0
    %866 = vmatprep.subr.mxu0 0.0
    %867 = vmatpush1.xpose.msra.mxu0 0.0
    %868 = vmatprep.subr.mxu0 0.0
    %869 = vmatpush1.xpose.msra.mxu0 0.0
    %870 = vmatprep.subr.mxu0 0.0
    %871 = vmatpush1.xpose.msra.mxu0 0.0
    %872 = vmatprep.subr.mxu0 0.0
    %873 = vmatpush1.xpose.msra.mxu0 0.0
    %874 = vmatprep.subr.mxu0 0.0
    %875 = vmatpush1.xpose.msra.mxu0 0.0
    %876 = vmatprep.subr.mxu0 0.0
    %877 = vmatpush1.xpose.msra.mxu0 0.0
    %878 = vmatprep.subr.mxu0 0.0
    %879 = vmatpush1.xpose.msra.mxu0 0.0
    %880 = vmatprep.subr.mxu0 0.0
    %881 = vmatpush1.xpose.msra.mxu0 0.0
    %882 = vmatprep.subr.mxu0 0.0
    %883 = vmatpush1.xpose.msra.mxu0 0.0
    %884 = vmatprep.subr.mxu0 0.0
    %885 = vmatpush1.xpose.msra.mxu0 0.0
    %886 = vmatprep.subr.mxu0 0.0
    %887 = vmatpush1.xpose.msra.mxu0 0.0
    %888 = vmatprep.subr.mxu0 0.0
    %889 = vmatpush1.xpose.msra.mxu0 0.0
    %890 = vmatprep.subr.mxu0 0.0
    %891 = vmatpush1.xpose.msra.mxu0 0.0
    %892 = vmatprep.subr.mxu0 0.0
    %893 = vmatpush1.xpose.msra.mxu0 0.0
    %894 = vmatprep.subr.mxu0 0.0
    %895 = vmatpush1.xpose.msra.mxu0 0.0
    %896 = vmatprep.subr.mxu0 0.0
    %897 = vmatpush1.xpose.msra.mxu0 0.0
    %898 = vmatprep.mubr.f32.mxu0 0.0
    %899 = vmatmul.mubr.f32.gmra.mrb[0].mxu0 %v830
    %v900 = vpop.f32.mrb[0].mxu0
    %v901 = vadd.f32 0.0, %v900
    %v902 = vpop.f32.mrb[0].mxu0
    %903 = vdwg.mxu0
    %904 = vrot.lane.b32.xlu0 %v578, 96
    %v905 = vpop.permute.xlu0 %904
    %v906 = vsel %vm601, %v578, 0
    %v908 = vsel %vm601, %v905, 0
    %910 = vmatprep.subr.mxu0 0.0
    %911 = vmatpush1.xpose.msra.mxu0 %v908
    %912 = vmatprep.subr.mxu0 0.0
    %913 = vmatpush1.xpose.msra.mxu0 0.0
    %914 = vmatprep.subr.mxu0 0.0
    %915 = vmatpush1.xpose.msra.mxu0 0.0
    %916 = vmatprep.subr.mxu0 0.0
    %917 = vmatpush1.xpose.msra.mxu0 0.0
    %918 = vmatprep.subr.mxu0 0.0
    %919 = vmatpush1.xpose.msra.mxu0 0.0
    %920 = vmatprep.subr.mxu0 0.0
    %921 = vmatpush1.xpose.msra.mxu0 0.0
    %922 = vmatprep.subr.mxu0 0.0
    %923 = vmatpush1.xpose.msra.mxu0 0.0
    %924 = vmatprep.subr.mxu0 0.0
    %925 = vmatpush1.xpose.msra.mxu0 0.0
    %926 = vmatprep.subr.mxu0 0.0
    %927 = vmatpush1.xpose.msra.mxu0 0.0
    %928 = vmatprep.subr.mxu0 0.0
    %929 = vmatpush1.xpose.msra.mxu0 0.0
    %930 = vmatprep.subr.mxu0 0.0
    %931 = vmatpush1.xpose.msra.mxu0 0.0
    %932 = vmatprep.subr.mxu0 0.0
    %933 = vmatpush1.xpose.msra.mxu0 0.0
    %934 = vmatprep.subr.mxu0 0.0
    %935 = vmatpush1.xpose.msra.mxu0 0.0
    %936 = vmatprep.subr.mxu0 0.0
    %937 = vmatpush1.xpose.msra.mxu0 0.0
    %938 = vmatprep.subr.mxu0 0.0
    %939 = vmatpush1.xpose.msra.mxu0 0.0
    %940 = vmatprep.subr.mxu0 0.0
    %941 = vmatpush1.xpose.msra.mxu0 0.0
    %942 = vmatprep.subr.mxu0 0.0
    %943 = vmatpush1.xpose.msra.mxu0 0.0
    %944 = vmatprep.subr.mxu0 0.0
    %945 = vmatpush1.xpose.msra.mxu0 0.0
    %946 = vmatprep.subr.mxu0 0.0
    %947 = vmatpush1.xpose.msra.mxu0 0.0
    %948 = vmatprep.subr.mxu0 0.0
    %949 = vmatpush1.xpose.msra.mxu0 0.0
    %950 = vmatprep.subr.mxu0 0.0
    %951 = vmatpush1.xpose.msra.mxu0 0.0
    %952 = vmatprep.subr.mxu0 0.0
    %953 = vmatpush1.xpose.msra.mxu0 0.0
    %954 = vmatprep.subr.mxu0 0.0
    %955 = vmatpush1.xpose.msra.mxu0 0.0
    %956 = vmatprep.subr.mxu0 0.0
    %957 = vmatpush1.xpose.msra.mxu0 0.0
    %958 = vmatprep.subr.mxu0 0.0
    %959 = vmatpush1.xpose.msra.mxu0 0.0
    %960 = vmatprep.subr.mxu0 0.0
    %961 = vmatpush1.xpose.msra.mxu0 0.0
    %962 = vmatprep.subr.mxu0 0.0
    %963 = vmatpush1.xpose.msra.mxu0 0.0
    %964 = vmatprep.subr.mxu0 0.0
    %965 = vmatpush1.xpose.msra.mxu0 0.0
    %966 = vmatprep.subr.mxu0 0.0
    %967 = vmatpush1.xpose.msra.mxu0 0.0
    %968 = vmatprep.subr.mxu0 0.0
    %969 = vmatpush1.xpose.msra.mxu0 0.0
    %970 = vmatprep.subr.mxu0 0.0
    %971 = vmatpush1.xpose.msra.mxu0 0.0
    %972 = vmatprep.subr.mxu0 0.0
    %973 = vmatpush1.xpose.msra.mxu0 0.0
    %974 = vmatprep.mubr.f32.mxu0 0.0
    %975 = vmatmul.mubr.f32.gmra.mrb[0].mxu0 %v906
    %v976 = vpop.f32.mrb[0].mxu0
    %v977 = vadd.f32 0.0, %v976
    %v978 = vpop.f32.mrb[0].mxu0
    %979 = vdwg.mxu0
    %980 = vrot.lane.b32.xlu0 %v580, 96
    %v981 = vpop.permute.xlu0 %980
    %v982 = vsel %vm601, %v580, 0
    %v984 = vsel %vm601, %v981, 0
    %986 = vmatprep.subr.mxu0 0.0
    %987 = vmatpush1.xpose.msra.mxu0 %v984
    %988 = vmatprep.subr.mxu0 0.0
    %989 = vmatpush1.xpose.msra.mxu0 0.0
    %990 = vmatprep.subr.mxu0 0.0
    %991 = vmatpush1.xpose.msra.mxu0 0.0
    %992 = vmatprep.subr.mxu0 0.0
    %993 = vmatpush1.xpose.msra.mxu0 0.0
    %994 = vmatprep.subr.mxu0 0.0
    %995 = vmatpush1.xpose.msra.mxu0 0.0
    %996 = vmatprep.subr.mxu0 0.0
    %997 = vmatpush1.xpose.msra.mxu0 0.0
    %998 = vmatprep.subr.mxu0 0.0
    %999 = vmatpush1.xpose.msra.mxu0 0.0
    %1000 = vmatprep.subr.mxu0 0.0
    %1001 = vmatpush1.xpose.msra.mxu0 0.0
    %1002 = vmatprep.subr.mxu0 0.0
    %1003 = vmatpush1.xpose.msra.mxu0 0.0
    %1004 = vmatprep.subr.mxu0 0.0
    %1005 = vmatpush1.xpose.msra.mxu0 0.0
    %1006 = vmatprep.subr.mxu0 0.0
    %1007 = vmatpush1.xpose.msra.mxu0 0.0
    %1008 = vmatprep.subr.mxu0 0.0
    %1009 = vmatpush1.xpose.msra.mxu0 0.0
    %1010 = vmatprep.subr.mxu0 0.0
    %1011 = vmatpush1.xpose.msra.mxu0 0.0
    %1012 = vmatprep.subr.mxu0 0.0
    %1013 = vmatpush1.xpose.msra.mxu0 0.0
    %1014 = vmatprep.subr.mxu0 0.0
    %1015 = vmatpush1.xpose.msra.mxu0 0.0
    %1016 = vmatprep.subr.mxu0 0.0
    %1017 = vmatpush1.xpose.msra.mxu0 0.0
    %1018 = vmatprep.subr.mxu0 0.0
    %1019 = vmatpush1.xpose.msra.mxu0 0.0
    %1020 = vmatprep.subr.mxu0 0.0
    %1021 = vmatpush1.xpose.msra.mxu0 0.0
    %1022 = vmatprep.subr.mxu0 0.0
    %1023 = vmatpush1.xpose.msra.mxu0 0.0
    %1024 = vmatprep.subr.mxu0 0.0
    %1025 = vmatpush1.xpose.msra.mxu0 0.0
    %1026 = vmatprep.subr.mxu0 0.0
    %1027 = vmatpush1.xpose.msra.mxu0 0.0
    %1028 = vmatprep.subr.mxu0 0.0
    %1029 = vmatpush1.xpose.msra.mxu0 0.0
    %1030 = vmatprep.subr.mxu0 0.0
    %1031 = vmatpush1.xpose.msra.mxu0 0.0
    %1032 = vmatprep.subr.mxu0 0.0
    %1033 = vmatpush1.xpose.msra.mxu0 0.0
    %1034 = vmatprep.subr.mxu0 0.0
    %1035 = vmatpush1.xpose.msra.mxu0 0.0
    %1036 = vmatprep.subr.mxu0 0.0
    %1037 = vmatpush1.xpose.msra.mxu0 0.0
    %1038 = vmatprep.subr.mxu0 0.0
    %1039 = vmatpush1.xpose.msra.mxu0 0.0
    %1040 = vmatprep.subr.mxu0 0.0
    %1041 = vmatpush1.xpose.msra.mxu0 0.0
    %1042 = vmatprep.subr.mxu0 0.0
    %1043 = vmatpush1.xpose.msra.mxu0 0.0
    %1044 = vmatprep.subr.mxu0 0.0
    %1045 = vmatpush1.xpose.msra.mxu0 0.0
    %1046 = vmatprep.subr.mxu0 0.0
    %1047 = vmatpush1.xpose.msra.mxu0 0.0
    %1048 = vmatprep.subr.mxu0 0.0
    %1049 = vmatpush1.xpose.msra.mxu0 0.0
    %1050 = vmatprep.mubr.f32.mxu0 0.0
    %1051 = vmatmul.mubr.f32.gmra.mrb[0].mxu0 %v982
    %v1052 = vpop.f32.mrb[0].mxu0
    %v1053 = vadd.f32 0.0, %v1052
    %v1054 = vpop.f32.mrb[0].mxu0
    %1055 = vdwg.mxu0
    %1056 = vrot.lane.b32.xlu0 %v582, 96
    %v1057 = vpop.permute.xlu0 %1056
    %v1058 = vsel %vm601, %v582, 0
    %v1060 = vsel %vm601, %v1057, 0
    %1062 = vmatprep.subr.mxu0 0.0
    %1063 = vmatpush1.xpose.msra.mxu0 %v1060
    %1064 = vmatprep.subr.mxu0 0.0
    %1065 = vmatpush1.xpose.msra.mxu0 0.0
    %1066 = vmatprep.subr.mxu0 0.0
    %1067 = vmatpush1.xpose.msra.mxu0 0.0
    %1068 = vmatprep.subr.mxu0 0.0
    %1069 = vmatpush1.xpose.msra.mxu0 0.0
    %1070 = vmatprep.subr.mxu0 0.0
    %1071 = vmatpush1.xpose.msra.mxu0 0.0
    %1072 = vmatprep.subr.mxu0 0.0
    %1073 = vmatpush1.xpose.msra.mxu0 0.0
    %1074 = vmatprep.subr.mxu0 0.0
    %1075 = vmatpush1.xpose.msra.mxu0 0.0
    %1076 = vmatprep.subr.mxu0 0.0
    %1077 = vmatpush1.xpose.msra.mxu0 0.0
    %1078 = vmatprep.subr.mxu0 0.0
    %1079 = vmatpush1.xpose.msra.mxu0 0.0
    %1080 = vmatprep.subr.mxu0 0.0
    %1081 = vmatpush1.xpose.msra.mxu0 0.0
    %1082 = vmatprep.subr.mxu0 0.0
    %1083 = vmatpush1.xpose.msra.mxu0 0.0
    %1084 = vmatprep.subr.mxu0 0.0
    %1085 = vmatpush1.xpose.msra.mxu0 0.0
    %1086 = vmatprep.subr.mxu0 0.0
    %1087 = vmatpush1.xpose.msra.mxu0 0.0
    %1088 = vmatprep.subr.mxu0 0.0
    %1089 = vmatpush1.xpose.msra.mxu0 0.0
    %1090 = vmatprep.subr.mxu0 0.0
    %1091 = vmatpush1.xpose.msra.mxu0 0.0
    %1092 = vmatprep.subr.mxu0 0.0
    %1093 = vmatpush1.xpose.msra.mxu0 0.0
    %1094 = vmatprep.subr.mxu0 0.0
    %1095 = vmatpush1.xpose.msra.mxu0 0.0
    %1096 = vmatprep.subr.mxu0 0.0
    %1097 = vmatpush1.xpose.msra.mxu0 0.0
    %1098 = vmatprep.subr.mxu0 0.0
    %1099 = vmatpush1.xpose.msra.mxu0 0.0
    %1100 = vmatprep.subr.mxu0 0.0
    %1101 = vmatpush1.xpose.msra.mxu0 0.0
    %1102 = vmatprep.subr.mxu0 0.0
    %1103 = vmatpush1.xpose.msra.mxu0 0.0
    %1104 = vmatprep.subr.mxu0 0.0
    %1105 = vmatpush1.xpose.msra.mxu0 0.0
    %1106 = vmatprep.subr.mxu0 0.0
    %1107 = vmatpush1.xpose.msra.mxu0 0.0
    %1108 = vmatprep.subr.mxu0 0.0
    %1109 = vmatpush1.xpose.msra.mxu0 0.0
    %1110 = vmatprep.subr.mxu0 0.0
    %1111 = vmatpush1.xpose.msra.mxu0 0.0
    %1112 = vmatprep.subr.mxu0 0.0
    %1113 = vmatpush1.xpose.msra.mxu0 0.0
    %1114 = vmatprep.subr.mxu0 0.0
    %1115 = vmatpush1.xpose.msra.mxu0 0.0
    %1116 = vmatprep.subr.mxu0 0.0
    %1117 = vmatpush1.xpose.msra.mxu0 0.0
    %1118 = vmatprep.subr.mxu0 0.0
    %1119 = vmatpush1.xpose.msra.mxu0 0.0
    %1120 = vmatprep.subr.mxu0 0.0
    %1121 = vmatpush1.xpose.msra.mxu0 0.0
    %1122 = vmatprep.subr.mxu0 0.0
    %1123 = vmatpush1.xpose.msra.mxu0 0.0
    %1124 = vmatprep.subr.mxu0 0.0
    %1125 = vmatpush1.xpose.msra.mxu0 0.0
    %1126 = vmatprep.mubr.f32.mxu0 0.0
    %1127 = vmatmul.mubr.f32.gmra.mrb[0].mxu0 %v1058
    %v1128 = vpop.f32.mrb[0].mxu0
    %v1129 = vadd.f32 0.0, %v1128
    %v1130 = vpop.f32.mrb[0].mxu0
    %1131 = vdwg.mxu0
    %1132 = vrot.lane.b32.xlu0 %v584, 96
    %v1133 = vpop.permute.xlu0 %1132
    %v1134 = vsel %vm601, %v584, 0
    %v1136 = vsel %vm601, %v1133, 0
    %1138 = vmatprep.subr.mxu0 0.0
    %1139 = vmatpush1.xpose.msra.mxu0 %v1136
    %1140 = vmatprep.subr.mxu0 0.0
    %1141 = vmatpush1.xpose.msra.mxu0 0.0
    %1142 = vmatprep.subr.mxu0 0.0
    %1143 = vmatpush1.xpose.msra.mxu0 0.0
    %1144 = vmatprep.subr.mxu0 0.0
    %1145 = vmatpush1.xpose.msra.mxu0 0.0
    %1146 = vmatprep.subr.mxu0 0.0
    %1147 = vmatpush1.xpose.msra.mxu0 0.0
    %1148 = vmatprep.subr.mxu0 0.0
    %1149 = vmatpush1.xpose.msra.mxu0 0.0
    %1150 = vmatprep.subr.mxu0 0.0
    %1151 = vmatpush1.xpose.msra.mxu0 0.0
    %1152 = vmatprep.subr.mxu0 0.0
    %1153 = vmatpush1.xpose.msra.mxu0 0.0
    %1154 = vmatprep.subr.mxu0 0.0
    %1155 = vmatpush1.xpose.msra.mxu0 0.0
    %1156 = vmatprep.subr.mxu0 0.0
    %1157 = vmatpush1.xpose.msra.mxu0 0.0
    %1158 = vmatprep.subr.mxu0 0.0
    %1159 = vmatpush1.xpose.msra.mxu0 0.0
    %1160 = vmatprep.subr.mxu0 0.0
    %1161 = vmatpush1.xpose.msra.mxu0 0.0
    %1162 = vmatprep.subr.mxu0 0.0
    %1163 = vmatpush1.xpose.msra.mxu0 0.0
    %1164 = vmatprep.subr.mxu0 0.0
    %1165 = vmatpush1.xpose.msra.mxu0 0.0
    %1166 = vmatprep.subr.mxu0 0.0
    %1167 = vmatpush1.xpose.msra.mxu0 0.0
    %1168 = vmatprep.subr.mxu0 0.0
    %1169 = vmatpush1.xpose.msra.mxu0 0.0
    %1170 = vmatprep.subr.mxu0 0.0
    %1171 = vmatpush1.xpose.msra.mxu0 0.0
    %1172 = vmatprep.subr.mxu0 0.0
    %1173 = vmatpush1.xpose.msra.mxu0 0.0
    %1174 = vmatprep.subr.mxu0 0.0
    %1175 = vmatpush1.xpose.msra.mxu0 0.0
    %1176 = vmatprep.subr.mxu0 0.0
    %1177 = vmatpush1.xpose.msra.mxu0 0.0
    %1178 = vmatprep.subr.mxu0 0.0
    %1179 = vmatpush1.xpose.msra.mxu0 0.0
    %1180 = vmatprep.subr.mxu0 0.0
    %1181 = vmatpush1.xpose.msra.mxu0 0.0
    %1182 = vmatprep.subr.mxu0 0.0
    %1183 = vmatpush1.xpose.msra.mxu0 0.0
    %1184 = vmatprep.subr.mxu0 0.0
    %1185 = vmatpush1.xpose.msra.mxu0 0.0
    %1186 = vmatprep.subr.mxu0 0.0
    %1187 = vmatpush1.xpose.msra.mxu0 0.0
    %1188 = vmatprep.subr.mxu0 0.0
    %1189 = vmatpush1.xpose.msra.mxu0 0.0
    %1190 = vmatprep.subr.mxu0 0.0
    %1191 = vmatpush1.xpose.msra.mxu0 0.0
    %1192 = vmatprep.subr.mxu0 0.0
    %1193 = vmatpush1.xpose.msra.mxu0 0.0
    %1194 = vmatprep.subr.mxu0 0.0
    %1195 = vmatpush1.xpose.msra.mxu0 0.0
    %1196 = vmatprep.subr.mxu0 0.0
    %1197 = vmatpush1.xpose.msra.mxu0 0.0
    %1198 = vmatprep.subr.mxu0 0.0
    %1199 = vmatpush1.xpose.msra.mxu0 0.0
    %1200 = vmatprep.subr.mxu0 0.0
    %1201 = vmatpush1.xpose.msra.mxu0 0.0
    %1202 = vmatprep.mubr.f32.mxu0 0.0
    %1203 = vmatmul.mubr.f32.gmra.mrb[0].mxu0 %v1134
    %v1204 = vpop.f32.mrb[0].mxu0
    %v1205 = vadd.f32 0.0, %v1204
    %v1206 = vpop.f32.mrb[0].mxu0
    %1207 = vdwg.mxu0
    %v1208 = vsel %vm601, %v673, -inf
    %1209 = vmax.xlane.f32.xlu0 %v1208
    %v1210 = vpop.xlane.xlu0 %1209
    %v1211 = vsel %vm601, %v749, -inf
    %1212 = vmax.xlane.f32.xlu0 %v1211
    %v1213 = vpop.xlane.xlu0 %1212
    %v1214 = vsel %vm601, %v825, -inf
    %1215 = vmax.xlane.f32.xlu0 %v1214
    %v1216 = vpop.xlane.xlu0 %1215
    %v1217 = vsel %vm601, %v901, -inf
    %1218 = vmax.xlane.f32.xlu0 %v1217
    %v1219 = vpop.xlane.xlu0 %1218
    %v1220 = vsel %vm601, %v977, -inf
    %1221 = vmax.xlane.f32.xlu0 %v1220
    %v1222 = vpop.xlane.xlu0 %1221
    %v1223 = vsel %vm601, %v1053, -inf
    %1224 = vmax.xlane.f32.xlu0 %v1223
    %v1225 = vpop.xlane.xlu0 %1224
    %v1226 = vsel %vm601, %v1129, -inf
    %1227 = vmax.xlane.f32.xlu0 %v1226
    %v1228 = vpop.xlane.xlu0 %1227
    %v1229 = vsel %vm601, %v1205, -inf
    %1230 = vmax.xlane.f32.xlu0 %v1229
    %v1231 = vpop.xlane.xlu0 %1230
    %v1232 = vsub.f32 %v673, %v1210
    %v1233 = vsub.f32 %v749, %v1213
    %v1234 = vsub.f32 %v825, %v1216
    %v1235 = vsub.f32 %v901, %v1219
    %v1236 = vsub.f32 %v977, %v1222
    %v1237 = vsub.f32 %v1053, %v1225
    %v1238 = vsub.f32 %v1129, %v1228
    %v1239 = vsub.f32 %v1205, %v1231
    %v1240 = vmul.f32 %v1232, 1.442695
    %v1241 = vpow.pop %v1240
    %v1242 = vmul.f32 %v1233, 1.442695
    %v1243 = vpow.pop %v1242
    %v1244 = vmul.f32 %v1234, 1.442695
    %v1245 = vpow.pop %v1244
    %v1246 = vmul.f32 %v1235, 1.442695
    %v1247 = vpow.pop %v1246
    %v1248 = vmul.f32 %v1236, 1.442695
    %v1249 = vpow.pop %v1248
    %v1250 = vmul.f32 %v1237, 1.442695
    %v1251 = vpow.pop %v1250
    %v1252 = vmul.f32 %v1238, 1.442695
    %v1253 = vpow.pop %v1252
    %v1254 = vmul.f32 %v1239, 1.442695
    %v1255 = vpow.pop %v1254
    %v1256 = vsel %vm601, %v1241, 0.0
    %1257 = vadd.xlane.f32.xlu0 %v1256
    %v1258 = vpop.xlane.xlu0 %1257
    %v1259 = vsel %vm601, %v1243, 0.0
    %1260 = vadd.xlane.f32.xlu0 %v1259
    %v1261 = vpop.xlane.xlu0 %1260
    %v1262 = vsel %vm601, %v1245, 0.0
    %1263 = vadd.xlane.f32.xlu0 %v1262
    %v1264 = vpop.xlane.xlu0 %1263
    %v1265 = vsel %vm601, %v1247, 0.0
    %1266 = vadd.xlane.f32.xlu0 %v1265
    %v1267 = vpop.xlane.xlu0 %1266
    %v1268 = vsel %vm601, %v1249, 0.0
    %1269 = vadd.xlane.f32.xlu0 %v1268
    %v1270 = vpop.xlane.xlu0 %1269
    %v1271 = vsel %vm601, %v1251, 0.0
    %1272 = vadd.xlane.f32.xlu0 %v1271
    %v1273 = vpop.xlane.xlu0 %1272
    %v1274 = vsel %vm601, %v1253, 0.0
    %1275 = vadd.xlane.f32.xlu0 %v1274
    %v1276 = vpop.xlane.xlu0 %1275
    %v1277 = vsel %vm601, %v1255, 0.0
    %1278 = vadd.xlane.f32.xlu0 %v1277
    %v1279 = vpop.xlane.xlu0 %1278
    %v1280 = vrcp.pop %v1258
    %v1281 = vrcp.pop %v1261
    %v1282 = vrcp.pop %v1264
    %v1283 = vrcp.pop %v1267
    %v1284 = vrcp.pop %v1270
    %v1285 = vrcp.pop %v1273
    %v1286 = vrcp.pop %v1276
    %v1287 = vrcp.pop %v1279
    %v1288 = vmul.f32 %v1241, %v1280
    %v1289 = vmul.f32 %v1243, %v1281
    %v1290 = vmul.f32 %v1245, %v1282
    %v1291 = vmul.f32 %v1247, %v1283
    %v1292 = vmul.f32 %v1249, %v1284
    %v1293 = vmul.f32 %v1251, %v1285
    %v1294 = vmul.f32 %v1253, %v1286
    %v1295 = vmul.f32 %v1255, %v1287
    %1296 = vrot.lane.b32.xlu0 %v562, 64
    %v1297 = vpop.permute.xlu0 %1296
    %v1300 = vsel %vm601, %v1288, 0
    %1302 = vmatprep.subr.mxu0 0.0
    %1303 = vmatpush1.msra.mxu0 %v1297
    %1304 = vmatprep.subr.mxu0 0.0
    %1305 = vmatpush1.msra.mxu0 0.0
    %1306 = vmatprep.subr.mxu0 0.0
    %1307 = vmatpush1.msra.mxu0 0.0
    %1308 = vmatprep.subr.mxu0 0.0
    %1309 = vmatpush1.msra.mxu0 0.0
    %1310 = vmatprep.subr.mxu0 0.0
    %1311 = vmatpush1.msra.mxu0 0.0
    %1312 = vmatprep.subr.mxu0 0.0
    %1313 = vmatpush1.msra.mxu0 0.0
    %1314 = vmatprep.subr.mxu0 0.0
    %1315 = vmatpush1.msra.mxu0 0.0
    %1316 = vmatprep.subr.mxu0 0.0
    %1317 = vmatpush1.msra.mxu0 0.0
    %1318 = vmatprep.subr.mxu0 0.0
    %1319 = vmatpush1.msra.mxu0 0.0
    %1320 = vmatprep.subr.mxu0 0.0
    %1321 = vmatpush1.msra.mxu0 0.0
    %1322 = vmatprep.subr.mxu0 0.0
    %1323 = vmatpush1.msra.mxu0 0.0
    %1324 = vmatprep.subr.mxu0 0.0
    %1325 = vmatpush1.msra.mxu0 0.0
    %1326 = vmatprep.subr.mxu0 0.0
    %1327 = vmatpush1.msra.mxu0 0.0
    %1328 = vmatprep.subr.mxu0 0.0
    %1329 = vmatpush1.msra.mxu0 0.0
    %1330 = vmatprep.subr.mxu0 0.0
    %1331 = vmatpush1.msra.mxu0 0.0
    %1332 = vmatprep.subr.mxu0 0.0
    %1333 = vmatpush1.msra.mxu0 0.0
    %1334 = vmatprep.subr.mxu0 0.0
    %1335 = vmatpush1.msra.mxu0 0.0
    %1336 = vmatprep.subr.mxu0 0.0
    %1337 = vmatpush1.msra.mxu0 0.0
    %1338 = vmatprep.subr.mxu0 0.0
    %1339 = vmatpush1.msra.mxu0 0.0
    %1340 = vmatprep.subr.mxu0 0.0
    %1341 = vmatpush1.msra.mxu0 0.0
    %1342 = vmatprep.subr.mxu0 0.0
    %1343 = vmatpush1.msra.mxu0 0.0
    %1344 = vmatprep.subr.mxu0 0.0
    %1345 = vmatpush1.msra.mxu0 0.0
    %1346 = vmatprep.subr.mxu0 0.0
    %1347 = vmatpush1.msra.mxu0 0.0
    %1348 = vmatprep.subr.mxu0 0.0
    %1349 = vmatpush1.msra.mxu0 0.0
    %1350 = vmatprep.subr.mxu0 0.0
    %1351 = vmatpush1.msra.mxu0 0.0
    %1352 = vmatprep.subr.mxu0 0.0
    %1353 = vmatpush1.msra.mxu0 0.0
    %1354 = vmatprep.subr.mxu0 0.0
    %1355 = vmatpush1.msra.mxu0 0.0
    %1356 = vmatprep.subr.mxu0 0.0
    %1357 = vmatpush1.msra.mxu0 0.0
    %1358 = vmatprep.subr.mxu0 0.0
    %1359 = vmatpush1.msra.mxu0 0.0
    %1360 = vmatprep.subr.mxu0 0.0
    %1361 = vmatpush1.msra.mxu0 0.0
    %1362 = vmatprep.subr.mxu0 0.0
    %1363 = vmatpush1.msra.mxu0 0.0
    %1364 = vmatprep.subr.mxu0 0.0
    %1365 = vmatpush1.msra.mxu0 0.0
    %1366 = vmatprep.mubr.f32.mxu0 0.0
    %1367 = vmatmul.mubr.f32.gmra.mrb[0].mxu0 %v1300
    %v1368 = vpop.f32.mrb[0].mxu0
    %v1369 = vadd.f32 0.0, %v1368
    %v1370 = vpop.f32.mrb[0].mxu0
    %1371 = vdwg.mxu0
    %1372 = vrot.lane.b32.xlu0 %v563, 64
    %v1373 = vpop.permute.xlu0 %1372
    %v1376 = vsel %vm601, %v1289, 0
    %1378 = vmatprep.subr.mxu0 0.0
    %1379 = vmatpush1.msra.mxu0 %v1373
    %1380 = vmatprep.subr.mxu0 0.0
    %1381 = vmatpush1.msra.mxu0 0.0
    %1382 = vmatprep.subr.mxu0 0.0
    %1383 = vmatpush1.msra.mxu0 0.0
    %1384 = vmatprep.subr.mxu0 0.0
    %1385 = vmatpush1.msra.mxu0 0.0
    %1386 = vmatprep.subr.mxu0 0.0
    %1387 = vmatpush1.msra.mxu0 0.0
    %1388 = vmatprep.subr.mxu0 0.0
    %1389 = vmatpush1.msra.mxu0 0.0
    %1390 = vmatprep.subr.mxu0 0.0
    %1391 = vmatpush1.msra.mxu0 0.0
    %1392 = vmatprep.subr.mxu0 0.0
    %1393 = vmatpush1.msra.mxu0 0.0
    %1394 = vmatprep.subr.mxu0 0.0
    %1395 = vmatpush1.msra.mxu0 0.0
    %1396 = vmatprep.subr.mxu0 0.0
    %1397 = vmatpush1.msra.mxu0 0.0
    %1398 = vmatprep.subr.mxu0 0.0
    %1399 = vmatpush1.msra.mxu0 0.0
    %1400 = vmatprep.subr.mxu0 0.0
    %1401 = vmatpush1.msra.mxu0 0.0
    %1402 = vmatprep.subr.mxu0 0.0
    %1403 = vmatpush1.msra.mxu0 0.0
    %1404 = vmatprep.subr.mxu0 0.0
    %1405 = vmatpush1.msra.mxu0 0.0
    %1406 = vmatprep.subr.mxu0 0.0
    %1407 = vmatpush1.msra.mxu0 0.0
    %1408 = vmatprep.subr.mxu0 0.0
    %1409 = vmatpush1.msra.mxu0 0.0
    %1410 = vmatprep.subr.mxu0 0.0
    %1411 = vmatpush1.msra.mxu0 0.0
    %1412 = vmatprep.subr.mxu0 0.0
    %1413 = vmatpush1.msra.mxu0 0.0
    %1414 = vmatprep.subr.mxu0 0.0
    %1415 = vmatpush1.msra.mxu0 0.0
    %1416 = vmatprep.subr.mxu0 0.0
    %1417 = vmatpush1.msra.mxu0 0.0
    %1418 = vmatprep.subr.mxu0 0.0
    %1419 = vmatpush1.msra.mxu0 0.0
    %1420 = vmatprep.subr.mxu0 0.0
    %1421 = vmatpush1.msra.mxu0 0.0
    %1422 = vmatprep.subr.mxu0 0.0
    %1423 = vmatpush1.msra.mxu0 0.0
    %1424 = vmatprep.subr.mxu0 0.0
    %1425 = vmatpush1.msra.mxu0 0.0
    %1426 = vmatprep.subr.mxu0 0.0
    %1427 = vmatpush1.msra.mxu0 0.0
    %1428 = vmatprep.subr.mxu0 0.0
    %1429 = vmatpush1.msra.mxu0 0.0
    %1430 = vmatprep.subr.mxu0 0.0
    %1431 = vmatpush1.msra.mxu0 0.0
    %1432 = vmatprep.subr.mxu0 0.0
    %1433 = vmatpush1.msra.mxu0 0.0
    %1434 = vmatprep.subr.mxu0 0.0
    %1435 = vmatpush1.msra.mxu0 0.0
    %1436 = vmatprep.subr.mxu0 0.0
    %1437 = vmatpush1.msra.mxu0 0.0
    %1438 = vmatprep.subr.mxu0 0.0
    %1439 = vmatpush1.msra.mxu0 0.0
    %1440 = vmatprep.subr.mxu0 0.0
    %1441 = vmatpush1.msra.mxu0 0.0
    %1442 = vmatprep.mubr.f32.mxu0 0.0
    %1443 = vmatmul.mubr.f32.gmra.mrb[0].mxu0 %v1376
    %v1444 = vpop.f32.mrb[0].mxu0
    %v1445 = vadd.f32 0.0, %v1444
    %v1446 = vpop.f32.mrb[0].mxu0
    %1447 = vdwg.mxu0
    %1448 = vrot.lane.b32.xlu0 %v588, 64
    %v1449 = vpop.permute.xlu0 %1448
    %v1452 = vsel %vm601, %v1290, 0
    %1454 = vmatprep.subr.mxu0 0.0
    %1455 = vmatpush1.msra.mxu0 %v1449
    %1456 = vmatprep.subr.mxu0 0.0
    %1457 = vmatpush1.msra.mxu0 0.0
    %1458 = vmatprep.subr.mxu0 0.0
    %1459 = vmatpush1.msra.mxu0 0.0
    %1460 = vmatprep.subr.mxu0 0.0
    %1461 = vmatpush1.msra.mxu0 0.0
    %1462 = vmatprep.subr.mxu0 0.0
    %1463 = vmatpush1.msra.mxu0 0.0
    %1464 = vmatprep.subr.mxu0 0.0
    %1465 = vmatpush1.msra.mxu0 0.0
    %1466 = vmatprep.subr.mxu0 0.0
    %1467 = vmatpush1.msra.mxu0 0.0
    %1468 = vmatprep.subr.mxu0 0.0
    %1469 = vmatpush1.msra.mxu0 0.0
    %1470 = vmatprep.subr.mxu0 0.0
    %1471 = vmatpush1.msra.mxu0 0.0
    %1472 = vmatprep.subr.mxu0 0.0
    %1473 = vmatpush1.msra.mxu0 0.0
    %1474 = vmatprep.subr.mxu0 0.0
    %1475 = vmatpush1.msra.mxu0 0.0
    %1476 = vmatprep.subr.mxu0 0.0
    %1477 = vmatpush1.msra.mxu0 0.0
    %1478 = vmatprep.subr.mxu0 0.0
    %1479 = vmatpush1.msra.mxu0 0.0
    %1480 = vmatprep.subr.mxu0 0.0
    %1481 = vmatpush1.msra.mxu0 0.0
    %1482 = vmatprep.subr.mxu0 0.0
    %1483 = vmatpush1.msra.mxu0 0.0
    %1484 = vmatprep.subr.mxu0 0.0
    %1485 = vmatpush1.msra.mxu0 0.0
    %1486 = vmatprep.subr.mxu0 0.0
    %1487 = vmatpush1.msra.mxu0 0.0
    %1488 = vmatprep.subr.mxu0 0.0
    %1489 = vmatpush1.msra.mxu0 0.0
    %1490 = vmatprep.subr.mxu0 0.0
    %1491 = vmatpush1.msra.mxu0 0.0
    %1492 = vmatprep.subr.mxu0 0.0
    %1493 = vmatpush1.msra.mxu0 0.0
    %1494 = vmatprep.subr.mxu0 0.0
    %1495 = vmatpush1.msra.mxu0 0.0
    %1496 = vmatprep.subr.mxu0 0.0
    %1497 = vmatpush1.msra.mxu0 0.0
    %1498 = vmatprep.subr.mxu0 0.0
    %1499 = vmatpush1.msra.mxu0 0.0
    %1500 = vmatprep.subr.mxu0 0.0
    %1501 = vmatpush1.msra.mxu0 0.0
    %1502 = vmatprep.subr.mxu0 0.0
    %1503 = vmatpush1.msra.mxu0 0.0
    %1504 = vmatprep.subr.mxu0 0.0
    %1505 = vmatpush1.msra.mxu0 0.0
    %1506 = vmatprep.subr.mxu0 0.0
    %1507 = vmatpush1.msra.mxu0 0.0
    %1508 = vmatprep.subr.mxu0 0.0
    %1509 = vmatpush1.msra.mxu0 0.0
    %1510 = vmatprep.subr.mxu0 0.0
    %1511 = vmatpush1.msra.mxu0 0.0
    %1512 = vmatprep.subr.mxu0 0.0
    %1513 = vmatpush1.msra.mxu0 0.0
    %1514 = vmatprep.subr.mxu0 0.0
    %1515 = vmatpush1.msra.mxu0 0.0
    %1516 = vmatprep.subr.mxu0 0.0
    %1517 = vmatpush1.msra.mxu0 0.0
    %1518 = vmatprep.mubr.f32.mxu0 0.0
    %1519 = vmatmul.mubr.f32.gmra.mrb[0].mxu0 %v1452
    %v1520 = vpop.f32.mrb[0].mxu0
    %v1521 = vadd.f32 0.0, %v1520
    %v1522 = vpop.f32.mrb[0].mxu0
    %1523 = vdwg.mxu0
    %1524 = vrot.lane.b32.xlu0 %v590, 64
    %v1525 = vpop.permute.xlu0 %1524
    %v1528 = vsel %vm601, %v1291, 0
    %1530 = vmatprep.subr.mxu0 0.0
    %1531 = vmatpush1.msra.mxu0 %v1525
    %1532 = vmatprep.subr.mxu0 0.0
    %1533 = vmatpush1.msra.mxu0 0.0
    %1534 = vmatprep.subr.mxu0 0.0
    %1535 = vmatpush1.msra.mxu0 0.0
    %1536 = vmatprep.subr.mxu0 0.0
    %1537 = vmatpush1.msra.mxu0 0.0
    %1538 = vmatprep.subr.mxu0 0.0
    %1539 = vmatpush1.msra.mxu0 0.0
    %1540 = vmatprep.subr.mxu0 0.0
    %1541 = vmatpush1.msra.mxu0 0.0
    %1542 = vmatprep.subr.mxu0 0.0
    %1543 = vmatpush1.msra.mxu0 0.0
    %1544 = vmatprep.subr.mxu0 0.0
    %1545 = vmatpush1.msra.mxu0 0.0
    %1546 = vmatprep.subr.mxu0 0.0
    %1547 = vmatpush1.msra.mxu0 0.0
    %1548 = vmatprep.subr.mxu0 0.0
    %1549 = vmatpush1.msra.mxu0 0.0
    %1550 = vmatprep.subr.mxu0 0.0
    %1551 = vmatpush1.msra.mxu0 0.0
    %1552 = vmatprep.subr.mxu0 0.0
    %1553 = vmatpush1.msra.mxu0 0.0
    %1554 = vmatprep.subr.mxu0 0.0
    %1555 = vmatpush1.msra.mxu0 0.0
    %1556 = vmatprep.subr.mxu0 0.0
    %1557 = vmatpush1.msra.mxu0 0.0
    %1558 = vmatprep.subr.mxu0 0.0
    %1559 = vmatpush1.msra.mxu0 0.0
    %1560 = vmatprep.subr.mxu0 0.0
    %1561 = vmatpush1.msra.mxu0 0.0
    %1562 = vmatprep.subr.mxu0 0.0
    %1563 = vmatpush1.msra.mxu0 0.0
    %1564 = vmatprep.subr.mxu0 0.0
    %1565 = vmatpush1.msra.mxu0 0.0
    %1566 = vmatprep.subr.mxu0 0.0
    %1567 = vmatpush1.msra.mxu0 0.0
    %1568 = vmatprep.subr.mxu0 0.0
    %1569 = vmatpush1.msra.mxu0 0.0
    %1570 = vmatprep.subr.mxu0 0.0
    %1571 = vmatpush1.msra.mxu0 0.0
    %1572 = vmatprep.subr.mxu0 0.0
    %1573 = vmatpush1.msra.mxu0 0.0
    %1574 = vmatprep.subr.mxu0 0.0
    %1575 = vmatpush1.msra.mxu0 0.0
    %1576 = vmatprep.subr.mxu0 0.0
    %1577 = vmatpush1.msra.mxu0 0.0
    %1578 = vmatprep.subr.mxu0 0.0
    %1579 = vmatpush1.msra.mxu0 0.0
    %1580 = vmatprep.subr.mxu0 0.0
    %1581 = vmatpush1.msra.mxu0 0.0
    %1582 = vmatprep.subr.mxu0 0.0
    %1583 = vmatpush1.msra.mxu0 0.0
    %1584 = vmatprep.subr.mxu0 0.0
    %1585 = vmatpush1.msra.mxu0 0.0
    %1586 = vmatprep.subr.mxu0 0.0
    %1587 = vmatpush1.msra.mxu0 0.0
    %1588 = vmatprep.subr.mxu0 0.0
    %1589 = vmatpush1.msra.mxu0 0.0
    %1590 = vmatprep.subr.mxu0 0.0
    %1591 = vmatpush1.msra.mxu0 0.0
    %1592 = vmatprep.subr.mxu0 0.0
    %1593 = vmatpush1.msra.mxu0 0.0
    %1594 = vmatprep.mubr.f32.mxu0 0.0
    %1595 = vmatmul.mubr.f32.gmra.mrb[0].mxu0 %v1528
    %v1596 = vpop.f32.mrb[0].mxu0
    %v1597 = vadd.f32 0.0, %v1596
    %v1598 = vpop.f32.mrb[0].mxu0
    %1599 = vdwg.mxu0
    %1600 = vrot.lane.b32.xlu0 %v592, 64
    %v1601 = vpop.permute.xlu0 %1600
    %v1604 = vsel %vm601, %v1292, 0
    %1606 = vmatprep.subr.mxu0 0.0
    %1607 = vmatpush1.msra.mxu0 %v1601
    %1608 = vmatprep.subr.mxu0 0.0
    %1609 = vmatpush1.msra.mxu0 0.0
    %1610 = vmatprep.subr.mxu0 0.0
    %1611 = vmatpush1.msra.mxu0 0.0
    %1612 = vmatprep.subr.mxu0 0.0
    %1613 = vmatpush1.msra.mxu0 0.0
    %1614 = vmatprep.subr.mxu0 0.0
    %1615 = vmatpush1.msra.mxu0 0.0
    %1616 = vmatprep.subr.mxu0 0.0
    %1617 = vmatpush1.msra.mxu0 0.0
    %1618 = vmatprep.subr.mxu0 0.0
    %1619 = vmatpush1.msra.mxu0 0.0
    %1620 = vmatprep.subr.mxu0 0.0
    %1621 = vmatpush1.msra.mxu0 0.0
    %1622 = vmatprep.subr.mxu0 0.0
    %1623 = vmatpush1.msra.mxu0 0.0
    %1624 = vmatprep.subr.mxu0 0.0
    %1625 = vmatpush1.msra.mxu0 0.0
    %1626 = vmatprep.subr.mxu0 0.0
    %1627 = vmatpush1.msra.mxu0 0.0
    %1628 = vmatprep.subr.mxu0 0.0
    %1629 = vmatpush1.msra.mxu0 0.0
    %1630 = vmatprep.subr.mxu0 0.0
    %1631 = vmatpush1.msra.mxu0 0.0
    %1632 = vmatprep.subr.mxu0 0.0
    %1633 = vmatpush1.msra.mxu0 0.0
    %1634 = vmatprep.subr.mxu0 0.0
    %1635 = vmatpush1.msra.mxu0 0.0
    %1636 = vmatprep.subr.mxu0 0.0
    %1637 = vmatpush1.msra.mxu0 0.0
    %1638 = vmatprep.subr.mxu0 0.0
    %1639 = vmatpush1.msra.mxu0 0.0
    %1640 = vmatprep.subr.mxu0 0.0
    %1641 = vmatpush1.msra.mxu0 0.0
    %1642 = vmatprep.subr.mxu0 0.0
    %1643 = vmatpush1.msra.mxu0 0.0
    %1644 = vmatprep.subr.mxu0 0.0
    %1645 = vmatpush1.msra.mxu0 0.0
    %1646 = vmatprep.subr.mxu0 0.0
    %1647 = vmatpush1.msra.mxu0 0.0
    %1648 = vmatprep.subr.mxu0 0.0
    %1649 = vmatpush1.msra.mxu0 0.0
    %1650 = vmatprep.subr.mxu0 0.0
    %1651 = vmatpush1.msra.mxu0 0.0
    %1652 = vmatprep.subr.mxu0 0.0
    %1653 = vmatpush1.msra.mxu0 0.0
    %1654 = vmatprep.subr.mxu0 0.0
    %1655 = vmatpush1.msra.mxu0 0.0
    %1656 = vmatprep.subr.mxu0 0.0
    %1657 = vmatpush1.msra.mxu0 0.0
    %1658 = vmatprep.subr.mxu0 0.0
    %1659 = vmatpush1.msra.mxu0 0.0
    %1660 = vmatprep.subr.mxu0 0.0
    %1661 = vmatpush1.msra.mxu0 0.0
    %1662 = vmatprep.subr.mxu0 0.0
    %1663 = vmatpush1.msra.mxu0 0.0
    %1664 = vmatprep.subr.mxu0 0.0
    %1665 = vmatpush1.msra.mxu0 0.0
    %1666 = vmatprep.subr.mxu0 0.0
    %1667 = vmatpush1.msra.mxu0 0.0
    %1668 = vmatprep.subr.mxu0 0.0
    %1669 = vmatpush1.msra.mxu0 0.0
    %1670 = vmatprep.mubr.f32.mxu0 0.0
    %1671 = vmatmul.mubr.f32.gmra.mrb[0].mxu0 %v1604
    %v1672 = vpop.f32.mrb[0].mxu0
    %v1673 = vadd.f32 0.0, %v1672
    %v1674 = vpop.f32.mrb[0].mxu0
    %1675 = vdwg.mxu0
    %1676 = vrot.lane.b32.xlu0 %v594, 64
    %v1677 = vpop.permute.xlu0 %1676
    %v1680 = vsel %vm601, %v1293, 0
    %1682 = vmatprep.subr.mxu0 0.0
    %1683 = vmatpush1.msra.mxu0 %v1677
    %1684 = vmatprep.subr.mxu0 0.0
    %1685 = vmatpush1.msra.mxu0 0.0
    %1686 = vmatprep.subr.mxu0 0.0
    %1687 = vmatpush1.msra.mxu0 0.0
    %1688 = vmatprep.subr.mxu0 0.0
    %1689 = vmatpush1.msra.mxu0 0.0
    %1690 = vmatprep.subr.mxu0 0.0
    %1691 = vmatpush1.msra.mxu0 0.0
    %1692 = vmatprep.subr.mxu0 0.0
    %1693 = vmatpush1.msra.mxu0 0.0
    %1694 = vmatprep.subr.mxu0 0.0
    %1695 = vmatpush1.msra.mxu0 0.0
    %1696 = vmatprep.subr.mxu0 0.0
    %1697 = vmatpush1.msra.mxu0 0.0
    %1698 = vmatprep.subr.mxu0 0.0
    %1699 = vmatpush1.msra.mxu0 0.0
    %1700 = vmatprep.subr.mxu0 0.0
    %1701 = vmatpush1.msra.mxu0 0.0
    %1702 = vmatprep.subr.mxu0 0.0
    %1703 = vmatpush1.msra.mxu0 0.0
    %1704 = vmatprep.subr.mxu0 0.0
    %1705 = vmatpush1.msra.mxu0 0.0
    %1706 = vmatprep.subr.mxu0 0.0
    %1707 = vmatpush1.msra.mxu0 0.0
    %1708 = vmatprep.subr.mxu0 0.0
    %1709 = vmatpush1.msra.mxu0 0.0
    %1710 = vmatprep.subr.mxu0 0.0
    %1711 = vmatpush1.msra.mxu0 0.0
    %1712 = vmatprep.subr.mxu0 0.0
    %1713 = vmatpush1.msra.mxu0 0.0
    %1714 = vmatprep.subr.mxu0 0.0
    %1715 = vmatpush1.msra.mxu0 0.0
    %1716 = vmatprep.subr.mxu0 0.0
    %1717 = vmatpush1.msra.mxu0 0.0
    %1718 = vmatprep.subr.mxu0 0.0
    %1719 = vmatpush1.msra.mxu0 0.0
    %1720 = vmatprep.subr.mxu0 0.0
    %1721 = vmatpush1.msra.mxu0 0.0
    %1722 = vmatprep.subr.mxu0 0.0
    %1723 = vmatpush1.msra.mxu0 0.0
    %1724 = vmatprep.subr.mxu0 0.0
    %1725 = vmatpush1.msra.mxu0 0.0
    %1726 = vmatprep.subr.mxu0 0.0
    %1727 = vmatpush1.msra.mxu0 0.0
    %1728 = vmatprep.subr.mxu0 0.0
    %1729 = vmatpush1.msra.mxu0 0.0
    %1730 = vmatprep.subr.mxu0 0.0
    %1731 = vmatpush1.msra.mxu0 0.0
    %1732 = vmatprep.subr.mxu0 0.0
    %1733 = vmatpush1.msra.mxu0 0.0
    %1734 = vmatprep.subr.mxu0 0.0
    %1735 = vmatpush1.msra.mxu0 0.0
    %1736 = vmatprep.subr.mxu0 0.0
    %1737 = vmatpush1.msra.mxu0 0.0
    %1738 = vmatprep.subr.mxu0 0.0
    %1739 = vmatpush1.msra.mxu0 0.0
    %1740 = vmatprep.subr.mxu0 0.0
    %1741 = vmatpush1.msra.mxu0 0.0
    %1742 = vmatprep.subr.mxu0 0.0
    %1743 = vmatpush1.msra.mxu0 0.0
    %1744 = vmatprep.subr.mxu0 0.0
    %1745 = vmatpush1.msra.mxu0 0.0
    %1746 = vmatprep.mubr.f32.mxu0 0.0
    %1747 = vmatmul.mubr.f32.gmra.mrb[0].mxu0 %v1680
    %v1748 = vpop.f32.mrb[0].mxu0
    %v1749 = vadd.f32 0.0, %v1748
    %v1750 = vpop.f32.mrb[0].mxu0
    %1751 = vdwg.mxu0
    %1752 = vrot.lane.b32.xlu0 %v596, 64
    %v1753 = vpop.permute.xlu0 %1752
    %v1756 = vsel %vm601, %v1294, 0
    %1758 = vmatprep.subr.mxu0 0.0
    %1759 = vmatpush1.msra.mxu0 %v1753
    %1760 = vmatprep.subr.mxu0 0.0
    %1761 = vmatpush1.msra.mxu0 0.0
    %1762 = vmatprep.subr.mxu0 0.0
    %1763 = vmatpush1.msra.mxu0 0.0
    %1764 = vmatprep.subr.mxu0 0.0
    %1765 = vmatpush1.msra.mxu0 0.0
    %1766 = vmatprep.subr.mxu0 0.0
    %1767 = vmatpush1.msra.mxu0 0.0
    %1768 = vmatprep.subr.mxu0 0.0
    %1769 = vmatpush1.msra.mxu0 0.0
    %1770 = vmatprep.subr.mxu0 0.0
    %1771 = vmatpush1.msra.mxu0 0.0
    %1772 = vmatprep.subr.mxu0 0.0
    %1773 = vmatpush1.msra.mxu0 0.0
    %1774 = vmatprep.subr.mxu0 0.0
    %1775 = vmatpush1.msra.mxu0 0.0
    %1776 = vmatprep.subr.mxu0 0.0
    %1777 = vmatpush1.msra.mxu0 0.0
    %1778 = vmatprep.subr.mxu0 0.0
    %1779 = vmatpush1.msra.mxu0 0.0
    %1780 = vmatprep.subr.mxu0 0.0
    %1781 = vmatpush1.msra.mxu0 0.0
    %1782 = vmatprep.subr.mxu0 0.0
    %1783 = vmatpush1.msra.mxu0 0.0
    %1784 = vmatprep.subr.mxu0 0.0
    %1785 = vmatpush1.msra.mxu0 0.0
    %1786 = vmatprep.subr.mxu0 0.0
    %1787 = vmatpush1.msra.mxu0 0.0
    %1788 = vmatprep.subr.mxu0 0.0
    %1789 = vmatpush1.msra.mxu0 0.0
    %1790 = vmatprep.subr.mxu0 0.0
    %1791 = vmatpush1.msra.mxu0 0.0
    %1792 = vmatprep.subr.mxu0 0.0
    %1793 = vmatpush1.msra.mxu0 0.0
    %1794 = vmatprep.subr.mxu0 0.0
    %1795 = vmatpush1.msra.mxu0 0.0
    %1796 = vmatprep.subr.mxu0 0.0
    %1797 = vmatpush1.msra.mxu0 0.0
    %1798 = vmatprep.subr.mxu0 0.0
    %1799 = vmatpush1.msra.mxu0 0.0
    %1800 = vmatprep.subr.mxu0 0.0
    %1801 = vmatpush1.msra.mxu0 0.0
    %1802 = vmatprep.subr.mxu0 0.0
    %1803 = vmatpush1.msra.mxu0 0.0
    %1804 = vmatprep.subr.mxu0 0.0
    %1805 = vmatpush1.msra.mxu0 0.0
    %1806 = vmatprep.subr.mxu0 0.0
    %1807 = vmatpush1.msra.mxu0 0.0
    %1808 = vmatprep.subr.mxu0 0.0
    %1809 = vmatpush1.msra.mxu0 0.0
    %1810 = vmatprep.subr.mxu0 0.0
    %1811 = vmatpush1.msra.mxu0 0.0
    %1812 = vmatprep.subr.mxu0 0.0
    %1813 = vmatpush1.msra.mxu0 0.0
    %1814 = vmatprep.subr.mxu0 0.0
    %1815 = vmatpush1.msra.mxu0 0.0
    %1816 = vmatprep.subr.mxu0 0.0
    %1817 = vmatpush1.msra.mxu0 0.0
    %1818 = vmatprep.subr.mxu0 0.0
    %1819 = vmatpush1.msra.mxu0 0.0
    %1820 = vmatprep.subr.mxu0 0.0
    %1821 = vmatpush1.msra.mxu0 0.0
    %1822 = vmatprep.mubr.f32.mxu0 0.0
    %1823 = vmatmul.mubr.f32.gmra.mrb[0].mxu0 %v1756
    %v1824 = vpop.f32.mrb[0].mxu0
    %v1825 = vadd.f32 0.0, %v1824
    %v1826 = vpop.f32.mrb[0].mxu0
    %1827 = vdwg.mxu0
    %1828 = vrot.lane.b32.xlu0 %v598, 64
    %v1829 = vpop.permute.xlu0 %1828
    %v1832 = vsel %vm601, %v1295, 0
    %1834 = vmatprep.subr.mxu0 0.0
    %1835 = vmatpush1.msra.mxu0 %v1829
    %1836 = vmatprep.subr.mxu0 0.0
    %1837 = vmatpush1.msra.mxu0 0.0
    %1838 = vmatprep.subr.mxu0 0.0
    %1839 = vmatpush1.msra.mxu0 0.0
    %1840 = vmatprep.subr.mxu0 0.0
    %1841 = vmatpush1.msra.mxu0 0.0
    %1842 = vmatprep.subr.mxu0 0.0
    %1843 = vmatpush1.msra.mxu0 0.0
    %1844 = vmatprep.subr.mxu0 0.0
    %1845 = vmatpush1.msra.mxu0 0.0
    %1846 = vmatprep.subr.mxu0 0.0
    %1847 = vmatpush1.msra.mxu0 0.0
    %1848 = vmatprep.subr.mxu0 0.0
    %1849 = vmatpush1.msra.mxu0 0.0
    %1850 = vmatprep.subr.mxu0 0.0
    %1851 = vmatpush1.msra.mxu0 0.0
    %1852 = vmatprep.subr.mxu0 0.0
    %1853 = vmatpush1.msra.mxu0 0.0
    %1854 = vmatprep.subr.mxu0 0.0
    %1855 = vmatpush1.msra.mxu0 0.0
    %1856 = vmatprep.subr.mxu0 0.0
    %1857 = vmatpush1.msra.mxu0 0.0
    %1858 = vmatprep.subr.mxu0 0.0
    %1859 = vmatpush1.msra.mxu0 0.0
    %1860 = vmatprep.subr.mxu0 0.0
    %1861 = vmatpush1.msra.mxu0 0.0
    %1862 = vmatprep.subr.mxu0 0.0
    %1863 = vmatpush1.msra.mxu0 0.0
    %1864 = vmatprep.subr.mxu0 0.0
    %1865 = vmatpush1.msra.mxu0 0.0
    %1866 = vmatprep.subr.mxu0 0.0
    %1867 = vmatpush1.msra.mxu0 0.0
    %1868 = vmatprep.subr.mxu0 0.0
    %1869 = vmatpush1.msra.mxu0 0.0
    %1870 = vmatprep.subr.mxu0 0.0
    %1871 = vmatpush1.msra.mxu0 0.0
    %1872 = vmatprep.subr.mxu0 0.0
    %1873 = vmatpush1.msra.mxu0 0.0
    %1874 = vmatprep.subr.mxu0 0.0
    %1875 = vmatpush1.msra.mxu0 0.0
    %1876 = vmatprep.subr.mxu0 0.0
    %1877 = vmatpush1.msra.mxu0 0.0
    %1878 = vmatprep.subr.mxu0 0.0
    %1879 = vmatpush1.msra.mxu0 0.0
    %1880 = vmatprep.subr.mxu0 0.0
    %1881 = vmatpush1.msra.mxu0 0.0
    %1882 = vmatprep.subr.mxu0 0.0
    %1883 = vmatpush1.msra.mxu0 0.0
    %1884 = vmatprep.subr.mxu0 0.0
    %1885 = vmatpush1.msra.mxu0 0.0
    %1886 = vmatprep.subr.mxu0 0.0
    %1887 = vmatpush1.msra.mxu0 0.0
    %1888 = vmatprep.subr.mxu0 0.0
    %1889 = vmatpush1.msra.mxu0 0.0
    %1890 = vmatprep.subr.mxu0 0.0
    %1891 = vmatpush1.msra.mxu0 0.0
    %1892 = vmatprep.subr.mxu0 0.0
    %1893 = vmatpush1.msra.mxu0 0.0
    %1894 = vmatprep.subr.mxu0 0.0
    %1895 = vmatpush1.msra.mxu0 0.0
    %1896 = vmatprep.subr.mxu0 0.0
    %1897 = vmatpush1.msra.mxu0 0.0
    %1898 = vmatprep.mubr.f32.mxu0 0.0
    %1899 = vmatmul.mubr.f32.gmra.mrb[0].mxu0 %v1832
    %v1900 = vpop.f32.mrb[0].mxu0
    %v1901 = vadd.f32 0.0, %v1900
    %v1902 = vpop.f32.mrb[0].mxu0
    %1903 = vdwg.mxu0
    %1906 = vrot.lane.b32.xlu0 %v1521, 8
    %v1907 = vpop.permute.xlu0 %1906
    %1908 = vrot.lane.b32.xlu0 %v1597, 8
    %v1909 = vpop.permute.xlu0 %1908
    %1914 = vrot.lane.b32.xlu0 %v1673, 16
    %v1915 = vpop.permute.xlu0 %1914
    %1916 = vrot.lane.b32.xlu0 %v1749, 16
    %v1917 = vpop.permute.xlu0 %1916
    %1922 = vrot.lane.b32.xlu0 %v1825, 24
    %v1923 = vpop.permute.xlu0 %1922
    %1924 = vrot.lane.b32.xlu0 %v1901, 24
    %v1925 = vpop.permute.xlu0 %1924
    %v1928 = vsel %vm601, %v1369, %v1907
    %v1929 = vsel %vm601, %v1445, %v1909
    %vm1930 = vcmask 130048
    %v1931 = vsel %vm1930, %v1928, %v1915
    %v1932 = vsel %vm1930, %v1929, %v1917
    %vm1933 = vcmask 195584
    %v1934 = vsel %vm1933, %v1931, %v1923
    %v1935 = vsel %vm1933, %v1932, %v1925
    %v1937 = vlaneseq
    %v1938 = vshrl.u32 %v1937, 7
    %v1939 = vsub.s32 0, %v1938
    %v1940 = vrot.slane %v570, %v1939
    %v1943 = vsel %vm105, %v1934, 0
    %v1946 = vsel %vm105, %v1935, 0
    %1948 = vmatprep.subr.mxu0 0.0
    %1949 = vmatpush1.msra.mxu0 %v565
    %1950 = vmatprep.subr.mxu0 0.0
    %1951 = vmatpush1.msra.mxu0 %v566
    %1952 = vmatprep.subr.mxu0 0.0
    %1953 = vmatpush1.msra.mxu0 %v567
    %1954 = vmatprep.subr.mxu0 0.0
    %1955 = vmatpush1.msra.mxu0 %v568
    %1956 = vmatprep.subr.mxu0 0.0
    %1957 = vmatpush1.msra.mxu0 0.0
    %1958 = vmatprep.subr.mxu0 0.0
    %1959 = vmatpush1.msra.mxu0 0.0
    %1960 = vmatprep.subr.mxu0 0.0
    %1961 = vmatpush1.msra.mxu0 0.0
    %1962 = vmatprep.subr.mxu0 0.0
    %1963 = vmatpush1.msra.mxu0 0.0
    %1964 = vmatprep.subr.mxu0 0.0
    %1965 = vmatpush1.msra.mxu0 0.0
    %1966 = vmatprep.subr.mxu0 0.0
    %1967 = vmatpush1.msra.mxu0 0.0
    %1968 = vmatprep.subr.mxu0 0.0
    %1969 = vmatpush1.msra.mxu0 0.0
    %1970 = vmatprep.subr.mxu0 0.0
    %1971 = vmatpush1.msra.mxu0 0.0
    %1972 = vmatprep.subr.mxu0 0.0
    %1973 = vmatpush1.msra.mxu0 0.0
    %1974 = vmatprep.subr.mxu0 0.0
    %1975 = vmatpush1.msra.mxu0 0.0
    %1976 = vmatprep.subr.mxu0 0.0
    %1977 = vmatpush1.msra.mxu0 0.0
    %1978 = vmatprep.subr.mxu0 0.0
    %1979 = vmatpush1.msra.mxu0 0.0
    %1980 = vmatprep.subr.mxu0 0.0
    %1981 = vmatpush1.msra.mxu0 0.0
    %1982 = vmatprep.subr.mxu0 0.0
    %1983 = vmatpush1.msra.mxu0 0.0
    %1984 = vmatprep.subr.mxu0 0.0
    %1985 = vmatpush1.msra.mxu0 0.0
    %1986 = vmatprep.subr.mxu0 0.0
    %1987 = vmatpush1.msra.mxu0 0.0
    %1988 = vmatprep.subr.mxu0 0.0
    %1989 = vmatpush1.msra.mxu0 0.0
    %1990 = vmatprep.subr.mxu0 0.0
    %1991 = vmatpush1.msra.mxu0 0.0
    %1992 = vmatprep.subr.mxu0 0.0
    %1993 = vmatpush1.msra.mxu0 0.0
    %1994 = vmatprep.subr.mxu0 0.0
    %1995 = vmatpush1.msra.mxu0 0.0
    %1996 = vmatprep.subr.mxu0 0.0
    %1997 = vmatpush1.msra.mxu0 0.0
    %1998 = vmatprep.subr.mxu0 0.0
    %1999 = vmatpush1.msra.mxu0 0.0
    %2000 = vmatprep.subr.mxu0 0.0
    %2001 = vmatpush1.msra.mxu0 0.0
    %2002 = vmatprep.subr.mxu0 0.0
    %2003 = vmatpush1.msra.mxu0 0.0
    %2004 = vmatprep.subr.mxu0 0.0
    %2005 = vmatpush1.msra.mxu0 0.0
    %2006 = vmatprep.subr.mxu0 0.0
    %2007 = vmatpush1.msra.mxu0 0.0
    %2008 = vmatprep.subr.mxu0 0.0
    %2009 = vmatpush1.msra.mxu0 0.0
    %2010 = vmatprep.subr.mxu0 0.0
    %2011 = vmatpush1.msra.mxu0 0.0
    %2012 = vmatprep.mubr.f32.mxu0 0.0
    %2013 = vmatmul.mubr.f32.gmra.mrb[0].mxu0 %v1943
    %v2014 = vpop.f32.mrb[0].mxu0
    %v2015 = vadd.f32 %v1940, %v2014
    %v2016 = vpop.f32.mrb[0].mxu0
    %2017 = vmatprep.mubr.f32.mxu0 0.0
    %2018 = vmatmul.mubr.f32.gmra.mrb[0].mxu0 %v1946
    %v2019 = vpop.f32.mrb[0].mxu0
    %v2020 = vadd.f32 %v1940, %v2019
    %v2021 = vpop.f32.mrb[0].mxu0
    %2022 = vdwg.mxu0
    %v2023 = vadd.f32 %v78, %v2015
    %v2024 = vadd.f32 %v79, %v2020
    %s2025 = scalar_lea.vmem %s14, 1
    %v2026 = vld [vmem:[%s2025] sm:$0x1]
    %s2027 = scalar_lea.vmem %s14, 7
    %v2028 = vld [vmem:[%s2027] sm:$0x1]
    %v2029 = vsel %vm105, %v2023, 0.0
    %2030 = vadd.xlane.f32.xlu0 %v2029
    %v2031 = vpop.xlane.xlu0 %2030
    %v2032 = vsel %vm105, %v2024, 0.0
    %2033 = vadd.xlane.f32.xlu0 %v2032
    %v2034 = vpop.xlane.xlu0 %2033
    %v2035 = vmul.f32 %v2031, %v425
    %v2036 = vmul.f32 %v2034, %v425
    %v2037 = vmul.f32 %v2023, %v2023
    %v2038 = vmul.f32 %v2024, %v2024
    %v2039 = vsel %vm105, %v2037, 0.0
    %2040 = vadd.xlane.f32.xlu0 %v2039
    %v2041 = vpop.xlane.xlu0 %2040
    %v2042 = vsel %vm105, %v2038, 0.0
    %2043 = vadd.xlane.f32.xlu0 %v2042
    %v2044 = vpop.xlane.xlu0 %2043
    %v2045 = vmul.f32 %v2041, %v425
    %v2046 = vmul.f32 %v2044, %v425
    %v2047 = vsub.f32 %v2023, %v2035
    %v2048 = vsub.f32 %v2024, %v2036
    %v2049 = vmul.f32 %v2035, %v2035
    %v2050 = vmul.f32 %v2036, %v2036
    %v2051 = vsub.f32 %v2045, %v2049
    %v2052 = vsub.f32 %v2046, %v2050
    %v2053 = vadd.f32 %v2051, 1e-05
    %v2054 = vadd.f32 %v2052, 1e-05
    %v2055 = vrsqrt.pop %v2053
    %v2056 = vrsqrt.pop %v2054
    %v2057 = vmul.f32 %v2047, %v2055
    %v2058 = vmul.f32 %v2048, %v2056
    %v2060 = vlaneseq
    %v2061 = vshrl.u32 %v2060, 7
    %v2062 = vsub.s32 0, %v2061
    %v2063 = vrot.slane %v2026, %v2062
    %v2065 = vmul.f32 %v2057, %v2063
    %v2066 = vmul.f32 %v2058, %v2063
    %v2068 = vlaneseq
    %v2069 = vshrl.u32 %v2068, 7
    %v2070 = vsub.s32 0, %v2069
    %v2071 = vrot.slane %v2028, %v2070
    %v2073 = vadd.f32 %v2065, %v2071
    %v2074 = vadd.f32 %v2066, %v2071
    %v2075 = vld [vmem:[%s5] sm:$0xff]
    %v2076 = vld [vmem:[%s5 + $0x8] sm:$0xff]
    %v2077 = vld [vmem:[%s5 + $0x10] sm:$0xff]
    %v2078 = vld [vmem:[%s5 + $0x18] sm:$0xff]
    %2081 = vrot.lane.b32.xlu0 %v406, 64
    %v2082 = vpop.permute.xlu0 %2081
    %2083 = vrot.lane.b32.xlu0 %v412, 64
    %v2084 = vpop.permute.xlu0 %2083
    %v2088 = vsel %vm105, %v2073, 0
    %v2091 = vsel %vm105, %v2074, 0
    %2093 = vmatprep.subr.mxu0 0.0
    %2094 = vmatpush1.msra.mxu0 %v2075
    %2095 = vmatprep.subr.mxu0 0.0
    %2096 = vmatpush1.msra.mxu0 %v2076
    %2097 = vmatprep.subr.mxu0 0.0
    %2098 = vmatpush1.msra.mxu0 %v2077
    %2099 = vmatprep.subr.mxu0 0.0
    %2100 = vmatpush1.msra.mxu0 %v2078
    %2101 = vmatprep.subr.mxu0 0.0
    %2102 = vmatpush1.msra.mxu0 0.0
    %2103 = vmatprep.subr.mxu0 0.0
    %2104 = vmatpush1.msra.mxu0 0.0
    %2105 = vmatprep.subr.mxu0 0.0
    %2106 = vmatpush1.msra.mxu0 0.0
    %2107 = vmatprep.subr.mxu0 0.0
    %2108 = vmatpush1.msra.mxu0 0.0
    %2109 = vmatprep.subr.mxu0 0.0
    %2110 = vmatpush1.msra.mxu0 0.0
    %2111 = vmatprep.subr.mxu0 0.0
    %2112 = vmatpush1.msra.mxu0 0.0
    %2113 = vmatprep.subr.mxu0 0.0
    %2114 = vmatpush1.msra.mxu0 0.0
    %2115 = vmatprep.subr.mxu0 0.0
    %2116 = vmatpush1.msra.mxu0 0.0
    %2117 = vmatprep.subr.mxu0 0.0
    %2118 = vmatpush1.msra.mxu0 0.0
    %2119 = vmatprep.subr.mxu0 0.0
    %2120 = vmatpush1.msra.mxu0 0.0
    %2121 = vmatprep.subr.mxu0 0.0
    %2122 = vmatpush1.msra.mxu0 0.0
    %2123 = vmatprep.subr.mxu0 0.0
    %2124 = vmatpush1.msra.mxu0 0.0
    %2125 = vmatprep.subr.mxu0 0.0
    %2126 = vmatpush1.msra.mxu0 0.0
    %2127 = vmatprep.subr.mxu0 0.0
    %2128 = vmatpush1.msra.mxu0 0.0
    %2129 = vmatprep.subr.mxu0 0.0
    %2130 = vmatpush1.msra.mxu0 0.0
    %2131 = vmatprep.subr.mxu0 0.0
    %2132 = vmatpush1.msra.mxu0 0.0
    %2133 = vmatprep.subr.mxu0 0.0
    %2134 = vmatpush1.msra.mxu0 0.0
    %2135 = vmatprep.subr.mxu0 0.0
    %2136 = vmatpush1.msra.mxu0 0.0
    %2137 = vmatprep.subr.mxu0 0.0
    %2138 = vmatpush1.msra.mxu0 0.0
    %2139 = vmatprep.subr.mxu0 0.0
    %2140 = vmatpush1.msra.mxu0 0.0
    %2141 = vmatprep.subr.mxu0 0.0
    %2142 = vmatpush1.msra.mxu0 0.0
    %2143 = vmatprep.subr.mxu0 0.0
    %2144 = vmatpush1.msra.mxu0 0.0
    %2145 = vmatprep.subr.mxu0 0.0
    %2146 = vmatpush1.msra.mxu0 0.0
    %2147 = vmatprep.subr.mxu0 0.0
    %2148 = vmatpush1.msra.mxu0 0.0
    %2149 = vmatprep.subr.mxu0 0.0
    %2150 = vmatpush1.msra.mxu0 0.0
    %2151 = vmatprep.subr.mxu0 0.0
    %2152 = vmatpush1.msra.mxu0 0.0
    %2153 = vmatprep.subr.mxu0 0.0
    %2154 = vmatpush1.msra.mxu0 0.0
    %2155 = vmatprep.subr.mxu0 0.0
    %2156 = vmatpush1.msra.mxu0 0.0
    %2157 = vmatprep.mubr.f32.mxu0 0.0
    %2158 = vmatmul.mubr.f32.gmra.mrb[0].mxu0 %v2088
    %v2159 = vpop.f32.mrb[0].mxu0
    %v2160 = vadd.f32 %v2082, %v2159
    %v2161 = vpop.f32.mrb[0].mxu0
    %2162 = vmatprep.mubr.f32.mxu0 0.0
    %2163 = vmatmul.mubr.f32.gmra.mrb[0].mxu0 %v2091
    %v2164 = vpop.f32.mrb[0].mxu0
    %v2165 = vadd.f32 %v2084, %v2164
    %v2166 = vpop.f32.mrb[0].mxu0
    %2167 = vdwg.mxu0
    %s2168 = scalar_lea.vmem %s5, 64
    %v2169 = vld [vmem:[%s2168] sm:$0xff]
    %v2170 = vld [vmem:[%s2168 + $0x8] sm:$0xff]
    %v2171 = vld [vmem:[%s2168 + $0x10] sm:$0xff]
    %v2172 = vld [vmem:[%s2168 + $0x18] sm:$0xff]
    %s2173 = scalar_lea.vmem %s6, 2
    %v2174 = vld [vmem:[%s2173] sm:$0x1]
    %2177 = vrot.lane.b32.xlu0 %v2160, 120
    %v2178 = vpop.permute.xlu0 %2177
    %2179 = vrot.lane.b32.xlu0 %v2165, 120
    %v2180 = vpop.permute.xlu0 %2179
    %2181 = vrot.lane.b32.xlu0 %v2160, 112
    %v2182 = vpop.permute.xlu0 %2181
    %2183 = vrot.lane.b32.xlu0 %v2165, 112
    %v2184 = vpop.permute.xlu0 %2183
    %2185 = vrot.lane.b32.xlu0 %v2160, 104
    %v2186 = vpop.permute.xlu0 %2185
    %2187 = vrot.lane.b32.xlu0 %v2165, 104
    %v2188 = vpop.permute.xlu0 %2187
    %2193 = vrot.lane.b32.xlu0 %v185, 120
    %v2194 = vpop.permute.xlu0 %2193
    %2195 = vrot.lane.b32.xlu0 %v190, 120
    %v2196 = vpop.permute.xlu0 %2195
    %2197 = vrot.lane.b32.xlu0 %v195, 120
    %v2198 = vpop.permute.xlu0 %2197
    %2199 = vrot.lane.b32.xlu0 %v200, 120
    %v2200 = vpop.permute.xlu0 %2199
    %2201 = vrot.lane.b32.xlu0 %v185, 112
    %v2202 = vpop.permute.xlu0 %2201
    %2203 = vrot.lane.b32.xlu0 %v190, 112
    %v2204 = vpop.permute.xlu0 %2203
    %2205 = vrot.lane.b32.xlu0 %v195, 112
    %v2206 = vpop.permute.xlu0 %2205
    %2207 = vrot.lane.b32.xlu0 %v200, 112
    %v2208 = vpop.permute.xlu0 %2207
    %2209 = vrot.lane.b32.xlu0 %v185, 104
    %v2210 = vpop.permute.xlu0 %2209
    %2211 = vrot.lane.b32.xlu0 %v190, 104
    %v2212 = vpop.permute.xlu0 %2211
    %2213 = vrot.lane.b32.xlu0 %v195, 104
    %v2214 = vpop.permute.xlu0 %2213
    %2215 = vrot.lane.b32.xlu0 %v200, 104
    %v2216 = vpop.permute.xlu0 %2215
    %2221 = vrot.lane.b32.xlu0 %v295, 120
    %v2222 = vpop.permute.xlu0 %2221
    %2223 = vrot.lane.b32.xlu0 %v300, 120
    %v2224 = vpop.permute.xlu0 %2223
    %2225 = vrot.lane.b32.xlu0 %v305, 120
    %v2226 = vpop.permute.xlu0 %2225
    %2227 = vrot.lane.b32.xlu0 %v310, 120
    %v2228 = vpop.permute.xlu0 %2227
    %2233 = vrot.lane.b32.xlu0 %v295, 112
    %v2234 = vpop.permute.xlu0 %2233
    %2235 = vrot.lane.b32.xlu0 %v300, 112
    %v2236 = vpop.permute.xlu0 %2235
    %2237 = vrot.lane.b32.xlu0 %v305, 112
    %v2238 = vpop.permute.xlu0 %2237
    %2239 = vrot.lane.b32.xlu0 %v310, 112
    %v2240 = vpop.permute.xlu0 %2239
    %2245 = vrot.lane.b32.xlu0 %v295, 104
    %v2246 = vpop.permute.xlu0 %2245
    %2247 = vrot.lane.b32.xlu0 %v300, 104
    %v2248 = vpop.permute.xlu0 %2247
    %2249 = vrot.lane.b32.xlu0 %v305, 104
    %v2250 = vpop.permute.xlu0 %2249
    %2251 = vrot.lane.b32.xlu0 %v310, 104
    %v2252 = vpop.permute.xlu0 %2251
    %v2257 = vsel %vm601, %v2160, 0
    %v2259 = vsel %vm601, %v185, 0
    %v2261 = vsel %vm601, %v190, 0
    %2263 = vmatprep.subr.mxu0 0.0
    %2264 = vmatpush1.xpose.msra.mxu0 %v2259
    %2265 = vmatprep.subr.mxu0 0.0
    %2266 = vmatpush1.xpose.msra.mxu0 %v2261
    %2267 = vmatprep.subr.mxu0 0.0
    %2268 = vmatpush1.xpose.msra.mxu0 0.0
    %2269 = vmatprep.subr.mxu0 0.0
    %2270 = vmatpush1.xpose.msra.mxu0 0.0
    %2271 = vmatprep.subr.mxu0 0.0
    %2272 = vmatpush1.xpose.msra.mxu0 0.0
    %2273 = vmatprep.subr.mxu0 0.0
    %2274 = vmatpush1.xpose.msra.mxu0 0.0
    %2275 = vmatprep.subr.mxu0 0.0
    %2276 = vmatpush1.xpose.msra.mxu0 0.0
    %2277 = vmatprep.subr.mxu0 0.0
    %2278 = vmatpush1.xpose.msra.mxu0 0.0
    %2279 = vmatprep.subr.mxu0 0.0
    %2280 = vmatpush1.xpose.msra.mxu0 0.0
    %2281 = vmatprep.subr.mxu0 0.0
    %2282 = vmatpush1.xpose.msra.mxu0 0.0
    %2283 = vmatprep.subr.mxu0 0.0
    %2284 = vmatpush1.xpose.msra.mxu0 0.0
    %2285 = vmatprep.subr.mxu0 0.0
    %2286 = vmatpush1.xpose.msra.mxu0 0.0
    %2287 = vmatprep.subr.mxu0 0.0
    %2288 = vmatpush1.xpose.msra.mxu0 0.0
    %2289 = vmatprep.subr.mxu0 0.0
    %2290 = vmatpush1.xpose.msra.mxu0 0.0
    %2291 = vmatprep.subr.mxu0 0.0
    %2292 = vmatpush1.xpose.msra.mxu0 0.0
    %2293 = vmatprep.subr.mxu0 0.0
    %2294 = vmatpush1.xpose.msra.mxu0 0.0
    %2295 = vmatprep.subr.mxu0 0.0
    %2296 = vmatpush1.xpose.msra.mxu0 0.0
    %2297 = vmatprep.subr.mxu0 0.0
    %2298 = vmatpush1.xpose.msra.mxu0 0.0
    %2299 = vmatprep.subr.mxu0 0.0
    %2300 = vmatpush1.xpose.msra.mxu0 0.0
    %2301 = vmatprep.subr.mxu0 0.0
    %2302 = vmatpush1.xpose.msra.mxu0 0.0
    %2303 = vmatprep.subr.mxu0 0.0
    %2304 = vmatpush1.xpose.msra.mxu0 0.0
    %2305 = vmatprep.subr.mxu0 0.0
    %2306 = vmatpush1.xpose.msra.mxu0 0.0
    %2307 = vmatprep.subr.mxu0 0.0
    %2308 = vmatpush1.xpose.msra.mxu0 0.0
    %2309 = vmatprep.subr.mxu0 0.0
    %2310 = vmatpush1.xpose.msra.mxu0 0.0
    %2311 = vmatprep.subr.mxu0 0.0
    %2312 = vmatpush1.xpose.msra.mxu0 0.0
    %2313 = vmatprep.subr.mxu0 0.0
    %2314 = vmatpush1.xpose.msra.mxu0 0.0
    %2315 = vmatprep.subr.mxu0 0.0
    %2316 = vmatpush1.xpose.msra.mxu0 0.0
    %2317 = vmatprep.subr.mxu0 0.0
    %2318 = vmatpush1.xpose.msra.mxu0 0.0
    %2319 = vmatprep.subr.mxu0 0.0
    %2320 = vmatpush1.xpose.msra.mxu0 0.0
    %2321 = vmatprep.subr.mxu0 0.0
    %2322 = vmatpush1.xpose.msra.mxu0 0.0
    %2323 = vmatprep.subr.mxu0 0.0
    %2324 = vmatpush1.xpose.msra.mxu0 0.0
    %2325 = vmatprep.subr.mxu0 0.0
    %2326 = vmatpush1.xpose.msra.mxu0 0.0
    %2327 = vmatprep.mubr.f32.mxu0 0.0
    %2328 = vmatmul.mubr.f32.gmra.mrb[0].mxu0 %v2257
    %v2329 = vpop.f32.mrb[0].mxu0
    %v2330 = vadd.f32 0.0, %v2329
    %v2331 = vpop.f32.mrb[0].mxu0
    %2332 = vdwg.mxu0
    %v2333 = vsel %vm601, %v2165, 0
    %v2335 = vsel %vm601, %v195, 0
    %v2337 = vsel %vm601, %v200, 0
    %2339 = vmatprep.subr.mxu0 0.0
    %2340 = vmatpush1.xpose.msra.mxu0 %v2335
    %2341 = vmatprep.subr.mxu0 0.0
    %2342 = vmatpush1.xpose.msra.mxu0 %v2337
    %2343 = vmatprep.subr.mxu0 0.0
    %2344 = vmatpush1.xpose.msra.mxu0 0.0
    %2345 = vmatprep.subr.mxu0 0.0
    %2346 = vmatpush1.xpose.msra.mxu0 0.0
    %2347 = vmatprep.subr.mxu0 0.0
    %2348 = vmatpush1.xpose.msra.mxu0 0.0
    %2349 = vmatprep.subr.mxu0 0.0
    %2350 = vmatpush1.xpose.msra.mxu0 0.0
    %2351 = vmatprep.subr.mxu0 0.0
    %2352 = vmatpush1.xpose.msra.mxu0 0.0
    %2353 = vmatprep.subr.mxu0 0.0
    %2354 = vmatpush1.xpose.msra.mxu0 0.0
    %2355 = vmatprep.subr.mxu0 0.0
    %2356 = vmatpush1.xpose.msra.mxu0 0.0
    %2357 = vmatprep.subr.mxu0 0.0
    %2358 = vmatpush1.xpose.msra.mxu0 0.0
    %2359 = vmatprep.subr.mxu0 0.0
    %2360 = vmatpush1.xpose.msra.mxu0 0.0
    %2361 = vmatprep.subr.mxu0 0.0
    %2362 = vmatpush1.xpose.msra.mxu0 0.0
    %2363 = vmatprep.subr.mxu0 0.0
    %2364 = vmatpush1.xpose.msra.mxu0 0.0
    %2365 = vmatprep.subr.mxu0 0.0
    %2366 = vmatpush1.xpose.msra.mxu0 0.0
    %2367 = vmatprep.subr.mxu0 0.0
    %2368 = vmatpush1.xpose.msra.mxu0 0.0
    %2369 = vmatprep.subr.mxu0 0.0
    %2370 = vmatpush1.xpose.msra.mxu0 0.0
    %2371 = vmatprep.subr.mxu0 0.0
    %2372 = vmatpush1.xpose.msra.mxu0 0.0
    %2373 = vmatprep.subr.mxu0 0.0
    %2374 = vmatpush1.xpose.msra.mxu0 0.0
    %2375 = vmatprep.subr.mxu0 0.0
    %2376 = vmatpush1.xpose.msra.mxu0 0.0
    %2377 = vmatprep.subr.mxu0 0.0
    %2378 = vmatpush1.xpose.msra.mxu0 0.0
    %2379 = vmatprep.subr.mxu0 0.0
    %2380 = vmatpush1.xpose.msra.mxu0 0.0
    %2381 = vmatprep.subr.mxu0 0.0
    %2382 = vmatpush1.xpose.msra.mxu0 0.0
    %2383 = vmatprep.subr.mxu0 0.0
    %2384 = vmatpush1.xpose.msra.mxu0 0.0
    %2385 = vmatprep.subr.mxu0 0.0
    %2386 = vmatpush1.xpose.msra.mxu0 0.0
    %2387 = vmatprep.subr.mxu0 0.0
    %2388 = vmatpush1.xpose.msra.mxu0 0.0
    %2389 = vmatprep.subr.mxu0 0.0
    %2390 = vmatpush1.xpose.msra.mxu0 0.0
    %2391 = vmatprep.subr.mxu0 0.0
    %2392 = vmatpush1.xpose.msra.mxu0 0.0
    %2393 = vmatprep.subr.mxu0 0.0
    %2394 = vmatpush1.xpose.msra.mxu0 0.0
    %2395 = vmatprep.subr.mxu0 0.0
    %2396 = vmatpush1.xpose.msra.mxu0 0.0
    %2397 = vmatprep.subr.mxu0 0.0
    %2398 = vmatpush1.xpose.msra.mxu0 0.0
    %2399 = vmatprep.subr.mxu0 0.0
    %2400 = vmatpush1.xpose.msra.mxu0 0.0
    %2401 = vmatprep.subr.mxu0 0.0
    %2402 = vmatpush1.xpose.msra.mxu0 0.0
    %2403 = vmatprep.mubr.f32.mxu0 0.0
    %2404 = vmatmul.mubr.f32.gmra.mrb[0].mxu0 %v2333
    %v2405 = vpop.f32.mrb[0].mxu0
    %v2406 = vadd.f32 0.0, %v2405
    %v2407 = vpop.f32.mrb[0].mxu0
    %2408 = vdwg.mxu0
    %v2409 = vsel %vm601, %v2178, 0
    %v2411 = vsel %vm601, %v2194, 0
    %v2413 = vsel %vm601, %v2196, 0
    %2415 = vmatprep.subr.mxu0 0.0
    %2416 = vmatpush1.xpose.msra.mxu0 %v2411
    %2417 = vmatprep.subr.mxu0 0.0
    %2418 = vmatpush1.xpose.msra.mxu0 %v2413
    %2419 = vmatprep.subr.mxu0 0.0
    %2420 = vmatpush1.xpose.msra.mxu0 0.0
    %2421 = vmatprep.subr.mxu0 0.0
    %2422 = vmatpush1.xpose.msra.mxu0 0.0
    %2423 = vmatprep.subr.mxu0 0.0
    %2424 = vmatpush1.xpose.msra.mxu0 0.0
    %2425 = vmatprep.subr.mxu0 0.0
    %2426 = vmatpush1.xpose.msra.mxu0 0.0
    %2427 = vmatprep.subr.mxu0 0.0
    %2428 = vmatpush1.xpose.msra.mxu0 0.0
    %2429 = vmatprep.subr.mxu0 0.0
    %2430 = vmatpush1.xpose.msra.mxu0 0.0
    %2431 = vmatprep.subr.mxu0 0.0
    %2432 = vmatpush1.xpose.msra.mxu0 0.0
    %2433 = vmatprep.subr.mxu0 0.0
    %2434 = vmatpush1.xpose.msra.mxu0 0.0
    %2435 = vmatprep.subr.mxu0 0.0
    %2436 = vmatpush1.xpose.msra.mxu0 0.0
    %2437 = vmatprep.subr.mxu0 0.0
    %2438 = vmatpush1.xpose.msra.mxu0 0.0
    %2439 = vmatprep.subr.mxu0 0.0
    %2440 = vmatpush1.xpose.msra.mxu0 0.0
    %2441 = vmatprep.subr.mxu0 0.0
    %2442 = vmatpush1.xpose.msra.mxu0 0.0
    %2443 = vmatprep.subr.mxu0 0.0
    %2444 = vmatpush1.xpose.msra.mxu0 0.0
    %2445 = vmatprep.subr.mxu0 0.0
    %2446 = vmatpush1.xpose.msra.mxu0 0.0
    %2447 = vmatprep.subr.mxu0 0.0
    %2448 = vmatpush1.xpose.msra.mxu0 0.0
    %2449 = vmatprep.subr.mxu0 0.0
    %2450 = vmatpush1.xpose.msra.mxu0 0.0
    %2451 = vmatprep.subr.mxu0 0.0
    %2452 = vmatpush1.xpose.msra.mxu0 0.0
    %2453 = vmatprep.subr.mxu0 0.0
    %2454 = vmatpush1.xpose.msra.mxu0 0.0
    %2455 = vmatprep.subr.mxu0 0.0
    %2456 = vmatpush1.xpose.msra.mxu0 0.0
    %2457 = vmatprep.subr.mxu0 0.0
    %2458 = vmatpush1.xpose.msra.mxu0 0.0
    %2459 = vmatprep.subr.mxu0 0.0
    %2460 = vmatpush1.xpose.msra.mxu0 0.0
    %2461 = vmatprep.subr.mxu0 0.0
    %2462 = vmatpush1.xpose.msra.mxu0 0.0
    %2463 = vmatprep.subr.mxu0 0.0
    %2464 = vmatpush1.xpose.msra.mxu0 0.0
    %2465 = vmatprep.subr.mxu0 0.0
    %2466 = vmatpush1.xpose.msra.mxu0 0.0
    %2467 = vmatprep.subr.mxu0 0.0
    %2468 = vmatpush1.xpose.msra.mxu0 0.0
    %2469 = vmatprep.subr.mxu0 0.0
    %2470 = vmatpush1.xpose.msra.mxu0 0.0
    %2471 = vmatprep.subr.mxu0 0.0
    %2472 = vmatpush1.xpose.msra.mxu0 0.0
    %2473 = vmatprep.subr.mxu0 0.0
    %2474 = vmatpush1.xpose.msra.mxu0 0.0
    %2475 = vmatprep.subr.mxu0 0.0
    %2476 = vmatpush1.xpose.msra.mxu0 0.0
    %2477 = vmatprep.subr.mxu0 0.0
    %2478 = vmatpush1.xpose.msra.mxu0 0.0
    %2479 = vmatprep.mubr.f32.mxu0 0.0
    %2480 = vmatmul.mubr.f32.gmra.mrb[0].mxu0 %v2409
    %v2481 = vpop.f32.mrb[0].mxu0
    %v2482 = vadd.f32 0.0, %v2481
    %v2483 = vpop.f32.mrb[0].mxu0
    %2484 = vdwg.mxu0
    %v2485 = vsel %vm601, %v2180, 0
    %v2487 = vsel %vm601, %v2198, 0
    %v2489 = vsel %vm601, %v2200, 0
    %2491 = vmatprep.subr.mxu0 0.0
    %2492 = vmatpush1.xpose.msra.mxu0 %v2487
    %2493 = vmatprep.subr.mxu0 0.0
    %2494 = vmatpush1.xpose.msra.mxu0 %v2489
    %2495 = vmatprep.subr.mxu0 0.0
    %2496 = vmatpush1.xpose.msra.mxu0 0.0
    %2497 = vmatprep.subr.mxu0 0.0
    %2498 = vmatpush1.xpose.msra.mxu0 0.0
    %2499 = vmatprep.subr.mxu0 0.0
    %2500 = vmatpush1.xpose.msra.mxu0 0.0
    %2501 = vmatprep.subr.mxu0 0.0
    %2502 = vmatpush1.xpose.msra.mxu0 0.0
    %2503 = vmatprep.subr.mxu0 0.0
    %2504 = vmatpush1.xpose.msra.mxu0 0.0
    %2505 = vmatprep.subr.mxu0 0.0
    %2506 = vmatpush1.xpose.msra.mxu0 0.0
    %2507 = vmatprep.subr.mxu0 0.0
    %2508 = vmatpush1.xpose.msra.mxu0 0.0
    %2509 = vmatprep.subr.mxu0 0.0
    %2510 = vmatpush1.xpose.msra.mxu0 0.0
    %2511 = vmatprep.subr.mxu0 0.0
    %2512 = vmatpush1.xpose.msra.mxu0 0.0
    %2513 = vmatprep.subr.mxu0 0.0
    %2514 = vmatpush1.xpose.msra.mxu0 0.0
    %2515 = vmatprep.subr.mxu0 0.0
    %2516 = vmatpush1.xpose.msra.mxu0 0.0
    %2517 = vmatprep.subr.mxu0 0.0
    %2518 = vmatpush1.xpose.msra.mxu0 0.0
    %2519 = vmatprep.subr.mxu0 0.0
    %2520 = vmatpush1.xpose.msra.mxu0 0.0
    %2521 = vmatprep.subr.mxu0 0.0
    %2522 = vmatpush1.xpose.msra.mxu0 0.0
    %2523 = vmatprep.subr.mxu0 0.0
    %2524 = vmatpush1.xpose.msra.mxu0 0.0
    %2525 = vmatprep.subr.mxu0 0.0
    %2526 = vmatpush1.xpose.msra.mxu0 0.0
    %2527 = vmatprep.subr.mxu0 0.0
    %2528 = vmatpush1.xpose.msra.mxu0 0.0
    %2529 = vmatprep.subr.mxu0 0.0
    %2530 = vmatpush1.xpose.msra.mxu0 0.0
    %2531 = vmatprep.subr.mxu0 0.0
    %2532 = vmatpush1.xpose.msra.mxu0 0.0
    %2533 = vmatprep.subr.mxu0 0.0
    %2534 = vmatpush1.xpose.msra.mxu0 0.0
    %2535 = vmatprep.subr.mxu0 0.0
    %2536 = vmatpush1.xpose.msra.mxu0 0.0
    %2537 = vmatprep.subr.mxu0 0.0
    %2538 = vmatpush1.xpose.msra.mxu0 0.0
    %2539 = vmatprep.subr.mxu0 0.0
    %2540 = vmatpush1.xpose.msra.mxu0 0.0
    %2541 = vmatprep.subr.mxu0 0.0
    %2542 = vmatpush1.xpose.msra.mxu0 0.0
    %2543 = vmatprep.subr.mxu0 0.0
    %2544 = vmatpush1.xpose.msra.mxu0 0.0
    %2545 = vmatprep.subr.mxu0 0.0
    %2546 = vmatpush1.xpose.msra.mxu0 0.0
    %2547 = vmatprep.subr.mxu0 0.0
    %2548 = vmatpush1.xpose.msra.mxu0 0.0
    %2549 = vmatprep.subr.mxu0 0.0
    %2550 = vmatpush1.xpose.msra.mxu0 0.0
    %2551 = vmatprep.subr.mxu0 0.0
    %2552 = vmatpush1.xpose.msra.mxu0 0.0
    %2553 = vmatprep.subr.mxu0 0.0
    %2554 = vmatpush1.xpose.msra.mxu0 0.0
    %2555 = vmatprep.mubr.f32.mxu0 0.0
    %2556 = vmatmul.mubr.f32.gmra.mrb[0].mxu0 %v2485
    %v2557 = vpop.f32.mrb[0].mxu0
    %v2558 = vadd.f32 0.0, %v2557
    %v2559 = vpop.f32.mrb[0].mxu0
    %2560 = vdwg.mxu0
    %v2561 = vsel %vm601, %v2182, 0
    %v2563 = vsel %vm601, %v2202, 0
    %v2565 = vsel %vm601, %v2204, 0
    %2567 = vmatprep.subr.mxu0 0.0
    %2568 = vmatpush1.xpose.msra.mxu0 %v2563
    %2569 = vmatprep.subr.mxu0 0.0
    %2570 = vmatpush1.xpose.msra.mxu0 %v2565
    %2571 = vmatprep.subr.mxu0 0.0
    %2572 = vmatpush1.xpose.msra.mxu0 0.0
    %2573 = vmatprep.subr.mxu0 0.0
    %2574 = vmatpush1.xpose.msra.mxu0 0.0
    %2575 = vmatprep.subr.mxu0 0.0
    %2576 = vmatpush1.xpose.msra.mxu0 0.0
    %2577 = vmatprep.subr.mxu0 0.0
    %2578 = vmatpush1.xpose.msra.mxu0 0.0
    %2579 = vmatprep.subr.mxu0 0.0
    %2580 = vmatpush1.xpose.msra.mxu0 0.0
    %2581 = vmatprep.subr.mxu0 0.0
    %2582 = vmatpush1.xpose.msra.mxu0 0.0
    %2583 = vmatprep.subr.mxu0 0.0
    %2584 = vmatpush1.xpose.msra.mxu0 0.0
    %2585 = vmatprep.subr.mxu0 0.0
    %2586 = vmatpush1.xpose.msra.mxu0 0.0
    %2587 = vmatprep.subr.mxu0 0.0
    %2588 = vmatpush1.xpose.msra.mxu0 0.0
    %2589 = vmatprep.subr.mxu0 0.0
    %2590 = vmatpush1.xpose.msra.mxu0 0.0
    %2591 = vmatprep.subr.mxu0 0.0
    %2592 = vmatpush1.xpose.msra.mxu0 0.0
    %2593 = vmatprep.subr.mxu0 0.0
    %2594 = vmatpush1.xpose.msra.mxu0 0.0
    %2595 = vmatprep.subr.mxu0 0.0
    %2596 = vmatpush1.xpose.msra.mxu0 0.0
    %2597 = vmatprep.subr.mxu0 0.0
    %2598 = vmatpush1.xpose.msra.mxu0 0.0
    %2599 = vmatprep.subr.mxu0 0.0
    %2600 = vmatpush1.xpose.msra.mxu0 0.0
    %2601 = vmatprep.subr.mxu0 0.0
    %2602 = vmatpush1.xpose.msra.mxu0 0.0
    %2603 = vmatprep.subr.mxu0 0.0
    %2604 = vmatpush1.xpose.msra.mxu0 0.0
    %2605 = vmatprep.subr.mxu0 0.0
    %2606 = vmatpush1.xpose.msra.mxu0 0.0
    %2607 = vmatprep.subr.mxu0 0.0
    %2608 = vmatpush1.xpose.msra.mxu0 0.0
    %2609 = vmatprep.subr.mxu0 0.0
    %2610 = vmatpush1.xpose.msra.mxu0 0.0
    %2611 = vmatprep.subr.mxu0 0.0
    %2612 = vmatpush1.xpose.msra.mxu0 0.0
    %2613 = vmatprep.subr.mxu0 0.0
    %2614 = vmatpush1.xpose.msra.mxu0 0.0
    %2615 = vmatprep.subr.mxu0 0.0
    %2616 = vmatpush1.xpose.msra.mxu0 0.0
    %2617 = vmatprep.subr.mxu0 0.0
    %2618 = vmatpush1.xpose.msra.mxu0 0.0
    %2619 = vmatprep.subr.mxu0 0.0
    %2620 = vmatpush1.xpose.msra.mxu0 0.0
    %2621 = vmatprep.subr.mxu0 0.0
    %2622 = vmatpush1.xpose.msra.mxu0 0.0
    %2623 = vmatprep.subr.mxu0 0.0
    %2624 = vmatpush1.xpose.msra.mxu0 0.0
    %2625 = vmatprep.subr.mxu0 0.0
    %2626 = vmatpush1.xpose.msra.mxu0 0.0
    %2627 = vmatprep.subr.mxu0 0.0
    %2628 = vmatpush1.xpose.msra.mxu0 0.0
    %2629 = vmatprep.subr.mxu0 0.0
    %2630 = vmatpush1.xpose.msra.mxu0 0.0
    %2631 = vmatprep.mubr.f32.mxu0 0.0
    %2632 = vmatmul.mubr.f32.gmra.mrb[0].mxu0 %v2561
    %v2633 = vpop.f32.mrb[0].mxu0
    %v2634 = vadd.f32 0.0, %v2633
    %v2635 = vpop.f32.mrb[0].mxu0
    %2636 = vdwg.mxu0
    %v2637 = vsel %vm601, %v2184, 0
    %v2639 = vsel %vm601, %v2206, 0
    %v2641 = vsel %vm601, %v2208, 0
    %2643 = vmatprep.subr.mxu0 0.0
    %2644 = vmatpush1.xpose.msra.mxu0 %v2639
    %2645 = vmatprep.subr.mxu0 0.0
    %2646 = vmatpush1.xpose.msra.mxu0 %v2641
    %2647 = vmatprep.subr.mxu0 0.0
    %2648 = vmatpush1.xpose.msra.mxu0 0.0
    %2649 = vmatprep.subr.mxu0 0.0
    %2650 = vmatpush1.xpose.msra.mxu0 0.0
    %2651 = vmatprep.subr.mxu0 0.0
    %2652 = vmatpush1.xpose.msra.mxu0 0.0
    %2653 = vmatprep.subr.mxu0 0.0
    %2654 = vmatpush1.xpose.msra.mxu0 0.0
    %2655 = vmatprep.subr.mxu0 0.0
    %2656 = vmatpush1.xpose.msra.mxu0 0.0
    %2657 = vmatprep.subr.mxu0 0.0
    %2658 = vmatpush1.xpose.msra.mxu0 0.0
    %2659 = vmatprep.subr.mxu0 0.0
    %2660 = vmatpush1.xpose.msra.mxu0 0.0
    %2661 = vmatprep.subr.mxu0 0.0
    %2662 = vmatpush1.xpose.msra.mxu0 0.0
    %2663 = vmatprep.subr.mxu0 0.0
    %2664 = vmatpush1.xpose.msra.mxu0 0.0
    %2665 = vmatprep.subr.mxu0 0.0
    %2666 = vmatpush1.xpose.msra.mxu0 0.0
    %2667 = vmatprep.subr.mxu0 0.0
    %2668 = vmatpush1.xpose.msra.mxu0 0.0
    %2669 = vmatprep.subr.mxu0 0.0
    %2670 = vmatpush1.xpose.msra.mxu0 0.0
    %2671 = vmatprep.subr.mxu0 0.0
    %2672 = vmatpush1.xpose.msra.mxu0 0.0
    %2673 = vmatprep.subr.mxu0 0.0
    %2674 = vmatpush1.xpose.msra.mxu0 0.0
    %2675 = vmatprep.subr.mxu0 0.0
    %2676 = vmatpush1.xpose.msra.mxu0 0.0
    %2677 = vmatprep.subr.mxu0 0.0
    %2678 = vmatpush1.xpose.msra.mxu0 0.0
    %2679 = vmatprep.subr.mxu0 0.0
    %2680 = vmatpush1.xpose.msra.mxu0 0.0
    %2681 = vmatprep.subr.mxu0 0.0
    %2682 = vmatpush1.xpose.msra.mxu0 0.0
    %2683 = vmatprep.subr.mxu0 0.0
    %2684 = vmatpush1.xpose.msra.mxu0 0.0
    %2685 = vmatprep.subr.mxu0 0.0
    %2686 = vmatpush1.xpose.msra.mxu0 0.0
    %2687 = vmatprep.subr.mxu0 0.0
    %2688 = vmatpush1.xpose.msra.mxu0 0.0
    %2689 = vmatprep.subr.mxu0 0.0
    %2690 = vmatpush1.xpose.msra.mxu0 0.0
    %2691 = vmatprep.subr.mxu0 0.0
    %2692 = vmatpush1.xpose.msra.mxu0 0.0
    %2693 = vmatprep.subr.mxu0 0.0
    %2694 = vmatpush1.xpose.msra.mxu0 0.0
    %2695 = vmatprep.subr.mxu0 0.0
    %2696 = vmatpush1.xpose.msra.mxu0 0.0
    %2697 = vmatprep.subr.mxu0 0.0
    %2698 = vmatpush1.xpose.msra.mxu0 0.0
    %2699 = vmatprep.subr.mxu0 0.0
    %2700 = vmatpush1.xpose.msra.mxu0 0.0
    %2701 = vmatprep.subr.mxu0 0.0
    %2702 = vmatpush1.xpose.msra.mxu0 0.0
    %2703 = vmatprep.subr.mxu0 0.0
    %2704 = vmatpush1.xpose.msra.mxu0 0.0
    %2705 = vmatprep.subr.mxu0 0.0
    %2706 = vmatpush1.xpose.msra.mxu0 0.0
    %2707 = vmatprep.mubr.f32.mxu0 0.0
    %2708 = vmatmul.mubr.f32.gmra.mrb[0].mxu0 %v2637
    %v2709 = vpop.f32.mrb[0].mxu0
    %v2710 = vadd.f32 0.0, %v2709
    %v2711 = vpop.f32.mrb[0].mxu0
    %2712 = vdwg.mxu0
    %v2713 = vsel %vm601, %v2186, 0
    %v2715 = vsel %vm601, %v2210, 0
    %v2717 = vsel %vm601, %v2212, 0
    %2719 = vmatprep.subr.mxu0 0.0
    %2720 = vmatpush1.xpose.msra.mxu0 %v2715
    %2721 = vmatprep.subr.mxu0 0.0
    %2722 = vmatpush1.xpose.msra.mxu0 %v2717
    %2723 = vmatprep.subr.mxu0 0.0
    %2724 = vmatpush1.xpose.msra.mxu0 0.0
    %2725 = vmatprep.subr.mxu0 0.0
    %2726 = vmatpush1.xpose.msra.mxu0 0.0
    %2727 = vmatprep.subr.mxu0 0.0
    %2728 = vmatpush1.xpose.msra.mxu0 0.0
    %2729 = vmatprep.subr.mxu0 0.0
    %2730 = vmatpush1.xpose.msra.mxu0 0.0
    %2731 = vmatprep.subr.mxu0 0.0
    %2732 = vmatpush1.xpose.msra.mxu0 0.0
    %2733 = vmatprep.subr.mxu0 0.0
    %2734 = vmatpush1.xpose.msra.mxu0 0.0
    %2735 = vmatprep.subr.mxu0 0.0
    %2736 = vmatpush1.xpose.msra.mxu0 0.0
    %2737 = vmatprep.subr.mxu0 0.0
    %2738 = vmatpush1.xpose.msra.mxu0 0.0
    %2739 = vmatprep.subr.mxu0 0.0
    %2740 = vmatpush1.xpose.msra.mxu0 0.0
    %2741 = vmatprep.subr.mxu0 0.0
    %2742 = vmatpush1.xpose.msra.mxu0 0.0
    %2743 = vmatprep.subr.mxu0 0.0
    %2744 = vmatpush1.xpose.msra.mxu0 0.0
    %2745 = vmatprep.subr.mxu0 0.0
    %2746 = vmatpush1.xpose.msra.mxu0 0.0
    %2747 = vmatprep.subr.mxu0 0.0
    %2748 = vmatpush1.xpose.msra.mxu0 0.0
    %2749 = vmatprep.subr.mxu0 0.0
    %2750 = vmatpush1.xpose.msra.mxu0 0.0
    %2751 = vmatprep.subr.mxu0 0.0
    %2752 = vmatpush1.xpose.msra.mxu0 0.0
    %2753 = vmatprep.subr.mxu0 0.0
    %2754 = vmatpush1.xpose.msra.mxu0 0.0
    %2755 = vmatprep.subr.mxu0 0.0
    %2756 = vmatpush1.xpose.msra.mxu0 0.0
    %2757 = vmatprep.subr.mxu0 0.0
    %2758 = vmatpush1.xpose.msra.mxu0 0.0
    %2759 = vmatprep.subr.mxu0 0.0
    %2760 = vmatpush1.xpose.msra.mxu0 0.0
    %2761 = vmatprep.subr.mxu0 0.0
    %2762 = vmatpush1.xpose.msra.mxu0 0.0
    %2763 = vmatprep.subr.mxu0 0.0
    %2764 = vmatpush1.xpose.msra.mxu0 0.0
    %2765 = vmatprep.subr.mxu0 0.0
    %2766 = vmatpush1.xpose.msra.mxu0 0.0
    %2767 = vmatprep.subr.mxu0 0.0
    %2768 = vmatpush1.xpose.msra.mxu0 0.0
    %2769 = vmatprep.subr.mxu0 0.0
    %2770 = vmatpush1.xpose.msra.mxu0 0.0
    %2771 = vmatprep.subr.mxu0 0.0
    %2772 = vmatpush1.xpose.msra.mxu0 0.0
    %2773 = vmatprep.subr.mxu0 0.0
    %2774 = vmatpush1.xpose.msra.mxu0 0.0
    %2775 = vmatprep.subr.mxu0 0.0
    %2776 = vmatpush1.xpose.msra.mxu0 0.0
    %2777 = vmatprep.subr.mxu0 0.0
    %2778 = vmatpush1.xpose.msra.mxu0 0.0
    %2779 = vmatprep.subr.mxu0 0.0
    %2780 = vmatpush1.xpose.msra.mxu0 0.0
    %2781 = vmatprep.subr.mxu0 0.0
    %2782 = vmatpush1.xpose.msra.mxu0 0.0
    %2783 = vmatprep.mubr.f32.mxu0 0.0
    %2784 = vmatmul.mubr.f32.gmra.mrb[0].mxu0 %v2713
    %v2785 = vpop.f32.mrb[0].mxu0
    %v2786 = vadd.f32 0.0, %v2785
    %v2787 = vpop.f32.mrb[0].mxu0
    %2788 = vdwg.mxu0
    %v2789 = vsel %vm601, %v2188, 0
    %v2791 = vsel %vm601, %v2214, 0
    %v2793 = vsel %vm601, %v2216, 0
    %2795 = vmatprep.subr.mxu0 0.0
    %2796 = vmatpush1.xpose.msra.mxu0 %v2791
    %2797 = vmatprep.subr.mxu0 0.0
    %2798 = vmatpush1.xpose.msra.mxu0 %v2793
    %2799 = vmatprep.subr.mxu0 0.0
    %2800 = vmatpush1.xpose.msra.mxu0 0.0
    %2801 = vmatprep.subr.mxu0 0.0
    %2802 = vmatpush1.xpose.msra.mxu0 0.0
    %2803 = vmatprep.subr.mxu0 0.0
    %2804 = vmatpush1.xpose.msra.mxu0 0.0
    %2805 = vmatprep.subr.mxu0 0.0
    %2806 = vmatpush1.xpose.msra.mxu0 0.0
    %2807 = vmatprep.subr.mxu0 0.0
    %2808 = vmatpush1.xpose.msra.mxu0 0.0
    %2809 = vmatprep.subr.mxu0 0.0
    %2810 = vmatpush1.xpose.msra.mxu0 0.0
    %2811 = vmatprep.subr.mxu0 0.0
    %2812 = vmatpush1.xpose.msra.mxu0 0.0
    %2813 = vmatprep.subr.mxu0 0.0
    %2814 = vmatpush1.xpose.msra.mxu0 0.0
    %2815 = vmatprep.subr.mxu0 0.0
    %2816 = vmatpush1.xpose.msra.mxu0 0.0
    %2817 = vmatprep.subr.mxu0 0.0
    %2818 = vmatpush1.xpose.msra.mxu0 0.0
    %2819 = vmatprep.subr.mxu0 0.0
    %2820 = vmatpush1.xpose.msra.mxu0 0.0
    %2821 = vmatprep.subr.mxu0 0.0
    %2822 = vmatpush1.xpose.msra.mxu0 0.0
    %2823 = vmatprep.subr.mxu0 0.0
    %2824 = vmatpush1.xpose.msra.mxu0 0.0
    %2825 = vmatprep.subr.mxu0 0.0
    %2826 = vmatpush1.xpose.msra.mxu0 0.0
    %2827 = vmatprep.subr.mxu0 0.0
    %2828 = vmatpush1.xpose.msra.mxu0 0.0
    %2829 = vmatprep.subr.mxu0 0.0
    %2830 = vmatpush1.xpose.msra.mxu0 0.0
    %2831 = vmatprep.subr.mxu0 0.0
    %2832 = vmatpush1.xpose.msra.mxu0 0.0
    %2833 = vmatprep.subr.mxu0 0.0
    %2834 = vmatpush1.xpose.msra.mxu0 0.0
    %2835 = vmatprep.subr.mxu0 0.0
    %2836 = vmatpush1.xpose.msra.mxu0 0.0
    %2837 = vmatprep.subr.mxu0 0.0
    %2838 = vmatpush1.xpose.msra.mxu0 0.0
    %2839 = vmatprep.subr.mxu0 0.0
    %2840 = vmatpush1.xpose.msra.mxu0 0.0
    %2841 = vmatprep.subr.mxu0 0.0
    %2842 = vmatpush1.xpose.msra.mxu0 0.0
    %2843 = vmatprep.subr.mxu0 0.0
    %2844 = vmatpush1.xpose.msra.mxu0 0.0
    %2845 = vmatprep.subr.mxu0 0.0
    %2846 = vmatpush1.xpose.msra.mxu0 0.0
    %2847 = vmatprep.subr.mxu0 0.0
    %2848 = vmatpush1.xpose.msra.mxu0 0.0
    %2849 = vmatprep.subr.mxu0 0.0
    %2850 = vmatpush1.xpose.msra.mxu0 0.0
    %2851 = vmatprep.subr.mxu0 0.0
    %2852 = vmatpush1.xpose.msra.mxu0 0.0
    %2853 = vmatprep.subr.mxu0 0.0
    %2854 = vmatpush1.xpose.msra.mxu0 0.0
    %2855 = vmatprep.subr.mxu0 0.0
    %2856 = vmatpush1.xpose.msra.mxu0 0.0
    %2857 = vmatprep.subr.mxu0 0.0
    %2858 = vmatpush1.xpose.msra.mxu0 0.0
    %2859 = vmatprep.mubr.f32.mxu0 0.0
    %2860 = vmatmul.mubr.f32.gmra.mrb[0].mxu0 %v2789
    %v2861 = vpop.f32.mrb[0].mxu0
    %v2862 = vadd.f32 0.0, %v2861
    %v2863 = vpop.f32.mrb[0].mxu0
    %2864 = vdwg.mxu0
    %v2865 = vsel %vm1930, %v2330, -inf
    %2866 = vmax.xlane.f32.xlu0 %v2865
    %v2867 = vpop.xlane.xlu0 %2866
    %v2868 = vsel %vm1930, %v2406, -inf
    %2869 = vmax.xlane.f32.xlu0 %v2868
    %v2870 = vpop.xlane.xlu0 %2869
    %v2871 = vsel %vm1930, %v2482, -inf
    %2872 = vmax.xlane.f32.xlu0 %v2871
    %v2873 = vpop.xlane.xlu0 %2872
    %v2874 = vsel %vm1930, %v2558, -inf
    %2875 = vmax.xlane.f32.xlu0 %v2874
    %v2876 = vpop.xlane.xlu0 %2875
    %v2877 = vsel %vm1930, %v2634, -inf
    %2878 = vmax.xlane.f32.xlu0 %v2877
    %v2879 = vpop.xlane.xlu0 %2878
    %v2880 = vsel %vm1930, %v2710, -inf
    %2881 = vmax.xlane.f32.xlu0 %v2880
    %v2882 = vpop.xlane.xlu0 %2881
    %v2883 = vsel %vm1930, %v2786, -inf
    %2884 = vmax.xlane.f32.xlu0 %v2883
    %v2885 = vpop.xlane.xlu0 %2884
    %v2886 = vsel %vm1930, %v2862, -inf
    %2887 = vmax.xlane.f32.xlu0 %v2886
    %v2888 = vpop.xlane.xlu0 %2887
    %v2889 = vsub.f32 %v2330, %v2867
    %v2890 = vsub.f32 %v2406, %v2870
    %v2891 = vsub.f32 %v2482, %v2873
    %v2892 = vsub.f32 %v2558, %v2876
    %v2893 = vsub.f32 %v2634, %v2879
    %v2894 = vsub.f32 %v2710, %v2882
    %v2895 = vsub.f32 %v2786, %v2885
    %v2896 = vsub.f32 %v2862, %v2888
    %v2897 = vmul.f32 %v2889, 1.442695
    %v2898 = vpow.pop %v2897
    %v2899 = vmul.f32 %v2890, 1.442695
    %v2900 = vpow.pop %v2899
    %v2901 = vmul.f32 %v2891, 1.442695
    %v2902 = vpow.pop %v2901
    %v2903 = vmul.f32 %v2892, 1.442695
    %v2904 = vpow.pop %v2903
    %v2905 = vmul.f32 %v2893, 1.442695
    %v2906 = vpow.pop %v2905
    %v2907 = vmul.f32 %v2894, 1.442695
    %v2908 = vpow.pop %v2907
    %v2909 = vmul.f32 %v2895, 1.442695
    %v2910 = vpow.pop %v2909
    %v2911 = vmul.f32 %v2896, 1.442695
    %v2912 = vpow.pop %v2911
    %v2913 = vsel %vm1930, %v2898, 0.0
    %2914 = vadd.xlane.f32.xlu0 %v2913
    %v2915 = vpop.xlane.xlu0 %2914
    %v2916 = vsel %vm1930, %v2900, 0.0
    %2917 = vadd.xlane.f32.xlu0 %v2916
    %v2918 = vpop.xlane.xlu0 %2917
    %v2919 = vsel %vm1930, %v2902, 0.0
    %2920 = vadd.xlane.f32.xlu0 %v2919
    %v2921 = vpop.xlane.xlu0 %2920
    %v2922 = vsel %vm1930, %v2904, 0.0
    %2923 = vadd.xlane.f32.xlu0 %v2922
    %v2924 = vpop.xlane.xlu0 %2923
    %v2925 = vsel %vm1930, %v2906, 0.0
    %2926 = vadd.xlane.f32.xlu0 %v2925
    %v2927 = vpop.xlane.xlu0 %2926
    %v2928 = vsel %vm1930, %v2908, 0.0
    %2929 = vadd.xlane.f32.xlu0 %v2928
    %v2930 = vpop.xlane.xlu0 %2929
    %v2931 = vsel %vm1930, %v2910, 0.0
    %2932 = vadd.xlane.f32.xlu0 %v2931
    %v2933 = vpop.xlane.xlu0 %2932
    %v2934 = vsel %vm1930, %v2912, 0.0
    %2935 = vadd.xlane.f32.xlu0 %v2934
    %v2936 = vpop.xlane.xlu0 %2935
    %v2937 = vrcp.pop %v2915
    %v2938 = vrcp.pop %v2918
    %v2939 = vrcp.pop %v2921
    %v2940 = vrcp.pop %v2924
    %v2941 = vrcp.pop %v2927
    %v2942 = vrcp.pop %v2930
    %v2943 = vrcp.pop %v2933
    %v2944 = vrcp.pop %v2936
    %v2945 = vmul.f32 %v2898, %v2937
    %v2946 = vmul.f32 %v2900, %v2938
    %v2947 = vmul.f32 %v2902, %v2939
    %v2948 = vmul.f32 %v2904, %v2940
    %v2949 = vmul.f32 %v2906, %v2941
    %v2950 = vmul.f32 %v2908, %v2942
    %v2951 = vmul.f32 %v2910, %v2943
    %v2952 = vmul.f32 %v2912, %v2944
    %v2954 = vsel %vm1930, %v2945, 0
    %2956 = vmatprep.subr.mxu0 0.0
    %2957 = vmatpush1.msra.mxu0 %v295
    %2958 = vmatprep.subr.mxu0 0.0
    %2959 = vmatpush1.msra.mxu0 %v300
    %2960 = vmatprep.subr.mxu0 0.0
    %2961 = vmatpush1.msra.mxu0 0.0
    %2962 = vmatprep.subr.mxu0 0.0
    %2963 = vmatpush1.msra.mxu0 0.0
    %2964 = vmatprep.subr.mxu0 0.0
    %2965 = vmatpush1.msra.mxu0 0.0
    %2966 = vmatprep.subr.mxu0 0.0
    %2967 = vmatpush1.msra.mxu0 0.0
    %2968 = vmatprep.subr.mxu0 0.0
    %2969 = vmatpush1.msra.mxu0 0.0
    %2970 = vmatprep.subr.mxu0 0.0
    %2971 = vmatpush1.msra.mxu0 0.0
    %2972 = vmatprep.subr.mxu0 0.0
    %2973 = vmatpush1.msra.mxu0 0.0
    %2974 = vmatprep.subr.mxu0 0.0
    %2975 = vmatpush1.msra.mxu0 0.0
    %2976 = vmatprep.subr.mxu0 0.0
    %2977 = vmatpush1.msra.mxu0 0.0
    %2978 = vmatprep.subr.mxu0 0.0
    %2979 = vmatpush1.msra.mxu0 0.0
    %2980 = vmatprep.subr.mxu0 0.0
    %2981 = vmatpush1.msra.mxu0 0.0
    %2982 = vmatprep.subr.mxu0 0.0
    %2983 = vmatpush1.msra.mxu0 0.0
    %2984 = vmatprep.subr.mxu0 0.0
    %2985 = vmatpush1.msra.mxu0 0.0
    %2986 = vmatprep.subr.mxu0 0.0
    %2987 = vmatpush1.msra.mxu0 0.0
    %2988 = vmatprep.subr.mxu0 0.0
    %2989 = vmatpush1.msra.mxu0 0.0
    %2990 = vmatprep.subr.mxu0 0.0
    %2991 = vmatpush1.msra.mxu0 0.0
    %2992 = vmatprep.subr.mxu0 0.0
    %2993 = vmatpush1.msra.mxu0 0.0
    %2994 = vmatprep.subr.mxu0 0.0
    %2995 = vmatpush1.msra.mxu0 0.0
    %2996 = vmatprep.subr.mxu0 0.0
    %2997 = vmatpush1.msra.mxu0 0.0
    %2998 = vmatprep.subr.mxu0 0.0
    %2999 = vmatpush1.msra.mxu0 0.0
    %3000 = vmatprep.subr.mxu0 0.0
    %3001 = vmatpush1.msra.mxu0 0.0
    %3002 = vmatprep.subr.mxu0 0.0
    %3003 = vmatpush1.msra.mxu0 0.0
    %3004 = vmatprep.subr.mxu0 0.0
    %3005 = vmatpush1.msra.mxu0 0.0
    %3006 = vmatprep.subr.mxu0 0.0
    %3007 = vmatpush1.msra.mxu0 0.0
    %3008 = vmatprep.subr.mxu0 0.0
    %3009 = vmatpush1.msra.mxu0 0.0
    %3010 = vmatprep.subr.mxu0 0.0
    %3011 = vmatpush1.msra.mxu0 0.0
    %3012 = vmatprep.subr.mxu0 0.0
    %3013 = vmatpush1.msra.mxu0 0.0
    %3014 = vmatprep.subr.mxu0 0.0
    %3015 = vmatpush1.msra.mxu0 0.0
    %3016 = vmatprep.subr.mxu0 0.0
    %3017 = vmatpush1.msra.mxu0 0.0
    %3018 = vmatprep.subr.mxu0 0.0
    %3019 = vmatpush1.msra.mxu0 0.0
    %3020 = vmatprep.mubr.f32.mxu0 0.0
    %3021 = vmatmul.mubr.f32.gmra.mrb[0].mxu0 %v2954
    %v3022 = vpop.f32.mrb[0].mxu0
    %v3023 = vadd.f32 0.0, %v3022
    %v3024 = vpop.f32.mrb[0].mxu0
    %3025 = vdwg.mxu0
    %v3027 = vsel %vm1930, %v2946, 0
    %3029 = vmatprep.subr.mxu0 0.0
    %3030 = vmatpush1.msra.mxu0 %v305
    %3031 = vmatprep.subr.mxu0 0.0
    %3032 = vmatpush1.msra.mxu0 %v310
    %3033 = vmatprep.subr.mxu0 0.0
    %3034 = vmatpush1.msra.mxu0 0.0
    %3035 = vmatprep.subr.mxu0 0.0
    %3036 = vmatpush1.msra.mxu0 0.0
    %3037 = vmatprep.subr.mxu0 0.0
    %3038 = vmatpush1.msra.mxu0 0.0
    %3039 = vmatprep.subr.mxu0 0.0
    %3040 = vmatpush1.msra.mxu0 0.0
    %3041 = vmatprep.subr.mxu0 0.0
    %3042 = vmatpush1.msra.mxu0 0.0
    %3043 = vmatprep.subr.mxu0 0.0
    %3044 = vmatpush1.msra.mxu0 0.0
    %3045 = vmatprep.subr.mxu0 0.0
    %3046 = vmatpush1.msra.mxu0 0.0
    %3047 = vmatprep.subr.mxu0 0.0
    %3048 = vmatpush1.msra.mxu0 0.0
    %3049 = vmatprep.subr.mxu0 0.0
    %3050 = vmatpush1.msra.mxu0 0.0
    %3051 = vmatprep.subr.mxu0 0.0
    %3052 = vmatpush1.msra.mxu0 0.0
    %3053 = vmatprep.subr.mxu0 0.0
    %3054 = vmatpush1.msra.mxu0 0.0
    %3055 = vmatprep.subr.mxu0 0.0
    %3056 = vmatpush1.msra.mxu0 0.0
    %3057 = vmatprep.subr.mxu0 0.0
    %3058 = vmatpush1.msra.mxu0 0.0
    %3059 = vmatprep.subr.mxu0 0.0
    %3060 = vmatpush1.msra.mxu0 0.0
    %3061 = vmatprep.subr.mxu0 0.0
    %3062 = vmatpush1.msra.mxu0 0.0
    %3063 = vmatprep.subr.mxu0 0.0
    %3064 = vmatpush1.msra.mxu0 0.0
    %3065 = vmatprep.subr.mxu0 0.0
    %3066 = vmatpush1.msra.mxu0 0.0
    %3067 = vmatprep.subr.mxu0 0.0
    %3068 = vmatpush1.msra.mxu0 0.0
    %3069 = vmatprep.subr.mxu0 0.0
    %3070 = vmatpush1.msra.mxu0 0.0
    %3071 = vmatprep.subr.mxu0 0.0
    %3072 = vmatpush1.msra.mxu0 0.0
    %3073 = vmatprep.subr.mxu0 0.0
    %3074 = vmatpush1.msra.mxu0 0.0
    %3075 = vmatprep.subr.mxu0 0.0
    %3076 = vmatpush1.msra.mxu0 0.0
    %3077 = vmatprep.subr.mxu0 0.0
    %3078 = vmatpush1.msra.mxu0 0.0
    %3079 = vmatprep.subr.mxu0 0.0
    %3080 = vmatpush1.msra.mxu0 0.0
    %3081 = vmatprep.subr.mxu0 0.0
    %3082 = vmatpush1.msra.mxu0 0.0
    %3083 = vmatprep.subr.mxu0 0.0
    %3084 = vmatpush1.msra.mxu0 0.0
    %3085 = vmatprep.subr.mxu0 0.0
    %3086 = vmatpush1.msra.mxu0 0.0
    %3087 = vmatprep.subr.mxu0 0.0
    %3088 = vmatpush1.msra.mxu0 0.0
    %3089 = vmatprep.subr.mxu0 0.0
    %3090 = vmatpush1.msra.mxu0 0.0
    %3091 = vmatprep.subr.mxu0 0.0
    %3092 = vmatpush1.msra.mxu0 0.0
    %3093 = vmatprep.mubr.f32.mxu0 0.0
    %3094 = vmatmul.mubr.f32.gmra.mrb[0].mxu0 %v3027
    %v3095 = vpop.f32.mrb[0].mxu0
    %v3096 = vadd.f32 0.0, %v3095
    %v3097 = vpop.f32.mrb[0].mxu0
    %3098 = vdwg.mxu0
    %v3100 = vsel %vm1930, %v2947, 0
    %3102 = vmatprep.subr.mxu0 0.0
    %3103 = vmatpush1.msra.mxu0 %v2222
    %3104 = vmatprep.subr.mxu0 0.0
    %3105 = vmatpush1.msra.mxu0 %v2224
    %3106 = vmatprep.subr.mxu0 0.0
    %3107 = vmatpush1.msra.mxu0 0.0
    %3108 = vmatprep.subr.mxu0 0.0
    %3109 = vmatpush1.msra.mxu0 0.0
    %3110 = vmatprep.subr.mxu0 0.0
    %3111 = vmatpush1.msra.mxu0 0.0
    %3112 = vmatprep.subr.mxu0 0.0
    %3113 = vmatpush1.msra.mxu0 0.0
    %3114 = vmatprep.subr.mxu0 0.0
    %3115 = vmatpush1.msra.mxu0 0.0
    %3116 = vmatprep.subr.mxu0 0.0
    %3117 = vmatpush1.msra.mxu0 0.0
    %3118 = vmatprep.subr.mxu0 0.0
    %3119 = vmatpush1.msra.mxu0 0.0
    %3120 = vmatprep.subr.mxu0 0.0
    %3121 = vmatpush1.msra.mxu0 0.0
    %3122 = vmatprep.subr.mxu0 0.0
    %3123 = vmatpush1.msra.mxu0 0.0
    %3124 = vmatprep.subr.mxu0 0.0
    %3125 = vmatpush1.msra.mxu0 0.0
    %3126 = vmatprep.subr.mxu0 0.0
    %3127 = vmatpush1.msra.mxu0 0.0
    %3128 = vmatprep.subr.mxu0 0.0
    %3129 = vmatpush1.msra.mxu0 0.0
    %3130 = vmatprep.subr.mxu0 0.0
    %3131 = vmatpush1.msra.mxu0 0.0
    %3132 = vmatprep.subr.mxu0 0.0
    %3133 = vmatpush1.msra.mxu0 0.0
    %3134 = vmatprep.subr.mxu0 0.0
    %3135 = vmatpush1.msra.mxu0 0.0
    %3136 = vmatprep.subr.mxu0 0.0
    %3137 = vmatpush1.msra.mxu0 0.0
    %3138 = vmatprep.subr.mxu0 0.0
    %3139 = vmatpush1.msra.mxu0 0.0
    %3140 = vmatprep.subr.mxu0 0.0
    %3141 = vmatpush1.msra.mxu0 0.0
    %3142 = vmatprep.subr.mxu0 0.0
    %3143 = vmatpush1.msra.mxu0 0.0
    %3144 = vmatprep.subr.mxu0 0.0
    %3145 = vmatpush1.msra.mxu0 0.0
    %3146 = vmatprep.subr.mxu0 0.0
    %3147 = vmatpush1.msra.mxu0 0.0
    %3148 = vmatprep.subr.mxu0 0.0
    %3149 = vmatpush1.msra.mxu0 0.0
    %3150 = vmatprep.subr.mxu0 0.0
    %3151 = vmatpush1.msra.mxu0 0.0
    %3152 = vmatprep.subr.mxu0 0.0
    %3153 = vmatpush1.msra.mxu0 0.0
    %3154 = vmatprep.subr.mxu0 0.0
    %3155 = vmatpush1.msra.mxu0 0.0
    %3156 = vmatprep.subr.mxu0 0.0
    %3157 = vmatpush1.msra.mxu0 0.0
    %3158 = vmatprep.subr.mxu0 0.0
    %3159 = vmatpush1.msra.mxu0 0.0
    %3160 = vmatprep.subr.mxu0 0.0
    %3161 = vmatpush1.msra.mxu0 0.0
    %3162 = vmatprep.subr.mxu0 0.0
    %3163 = vmatpush1.msra.mxu0 0.0
    %3164 = vmatprep.subr.mxu0 0.0
    %3165 = vmatpush1.msra.mxu0 0.0
    %3166 = vmatprep.mubr.f32.mxu0 0.0
    %3167 = vmatmul.mubr.f32.gmra.mrb[0].mxu0 %v3100
    %v3168 = vpop.f32.mrb[0].mxu0
    %v3169 = vadd.f32 0.0, %v3168
    %v3170 = vpop.f32.mrb[0].mxu0
    %3171 = vdwg.mxu0
    %v3173 = vsel %vm1930, %v2948, 0
    %3175 = vmatprep.subr.mxu0 0.0
    %3176 = vmatpush1.msra.mxu0 %v2226
    %3177 = vmatprep.subr.mxu0 0.0
    %3178 = vmatpush1.msra.mxu0 %v2228
    %3179 = vmatprep.subr.mxu0 0.0
    %3180 = vmatpush1.msra.mxu0 0.0
    %3181 = vmatprep.subr.mxu0 0.0
    %3182 = vmatpush1.msra.mxu0 0.0
    %3183 = vmatprep.subr.mxu0 0.0
    %3184 = vmatpush1.msra.mxu0 0.0
    %3185 = vmatprep.subr.mxu0 0.0
    %3186 = vmatpush1.msra.mxu0 0.0
    %3187 = vmatprep.subr.mxu0 0.0
    %3188 = vmatpush1.msra.mxu0 0.0
    %3189 = vmatprep.subr.mxu0 0.0
    %3190 = vmatpush1.msra.mxu0 0.0
    %3191 = vmatprep.subr.mxu0 0.0
    %3192 = vmatpush1.msra.mxu0 0.0
    %3193 = vmatprep.subr.mxu0 0.0
    %3194 = vmatpush1.msra.mxu0 0.0
    %3195 = vmatprep.subr.mxu0 0.0
    %3196 = vmatpush1.msra.mxu0 0.0
    %3197 = vmatprep.subr.mxu0 0.0
    %3198 = vmatpush1.msra.mxu0 0.0
    %3199 = vmatprep.subr.mxu0 0.0
    %3200 = vmatpush1.msra.mxu0 0.0
    %3201 = vmatprep.subr.mxu0 0.0
    %3202 = vmatpush1.msra.mxu0 0.0
    %3203 = vmatprep.subr.mxu0 0.0
    %3204 = vmatpush1.msra.mxu0 0.0
    %3205 = vmatprep.subr.mxu0 0.0
    %3206 = vmatpush1.msra.mxu0 0.0
    %3207 = vmatprep.subr.mxu0 0.0
    %3208 = vmatpush1.msra.mxu0 0.0
    %3209 = vmatprep.subr.mxu0 0.0
    %3210 = vmatpush1.msra.mxu0 0.0
    %3211 = vmatprep.subr.mxu0 0.0
    %3212 = vmatpush1.msra.mxu0 0.0
    %3213 = vmatprep.subr.mxu0 0.0
    %3214 = vmatpush1.msra.mxu0 0.0
    %3215 = vmatprep.subr.mxu0 0.0
    %3216 = vmatpush1.msra.mxu0 0.0
    %3217 = vmatprep.subr.mxu0 0.0
    %3218 = vmatpush1.msra.mxu0 0.0
    %3219 = vmatprep.subr.mxu0 0.0
    %3220 = vmatpush1.msra.mxu0 0.0
    %3221 = vmatprep.subr.mxu0 0.0
    %3222 = vmatpush1.msra.mxu0 0.0
    %3223 = vmatprep.subr.mxu0 0.0
    %3224 = vmatpush1.msra.mxu0 0.0
    %3225 = vmatprep.subr.mxu0 0.0
    %3226 = vmatpush1.msra.mxu0 0.0
    %3227 = vmatprep.subr.mxu0 0.0
    %3228 = vmatpush1.msra.mxu0 0.0
    %3229 = vmatprep.subr.mxu0 0.0
    %3230 = vmatpush1.msra.mxu0 0.0
    %3231 = vmatprep.subr.mxu0 0.0
    %3232 = vmatpush1.msra.mxu0 0.0
    %3233 = vmatprep.subr.mxu0 0.0
    %3234 = vmatpush1.msra.mxu0 0.0
    %3235 = vmatprep.subr.mxu0 0.0
    %3236 = vmatpush1.msra.mxu0 0.0
    %3237 = vmatprep.subr.mxu0 0.0
    %3238 = vmatpush1.msra.mxu0 0.0
    %3239 = vmatprep.mubr.f32.mxu0 0.0
    %3240 = vmatmul.mubr.f32.gmra.mrb[0].mxu0 %v3173
    %v3241 = vpop.f32.mrb[0].mxu0
    %v3242 = vadd.f32 0.0, %v3241
    %v3243 = vpop.f32.mrb[0].mxu0
    %3244 = vdwg.mxu0
    %v3246 = vsel %vm1930, %v2949, 0
    %3248 = vmatprep.subr.mxu0 0.0
    %3249 = vmatpush1.msra.mxu0 %v2234
    %3250 = vmatprep.subr.mxu0 0.0
    %3251 = vmatpush1.msra.mxu0 %v2236
    %3252 = vmatprep.subr.mxu0 0.0
    %3253 = vmatpush1.msra.mxu0 0.0
    %3254 = vmatprep.subr.mxu0 0.0
    %3255 = vmatpush1.msra.mxu0 0.0
    %3256 = vmatprep.subr.mxu0 0.0
    %3257 = vmatpush1.msra.mxu0 0.0
    %3258 = vmatprep.subr.mxu0 0.0
    %3259 = vmatpush1.msra.mxu0 0.0
    %3260 = vmatprep.subr.mxu0 0.0
    %3261 = vmatpush1.msra.mxu0 0.0
    %3262 = vmatprep.subr.mxu0 0.0
    %3263 = vmatpush1.msra.mxu0 0.0
    %3264 = vmatprep.subr.mxu0 0.0
    %3265 = vmatpush1.msra.mxu0 0.0
    %3266 = vmatprep.subr.mxu0 0.0
    %3267 = vmatpush1.msra.mxu0 0.0
    %3268 = vmatprep.subr.mxu0 0.0
    %3269 = vmatpush1.msra.mxu0 0.0
    %3270 = vmatprep.subr.mxu0 0.0
    %3271 = vmatpush1.msra.mxu0 0.0
    %3272 = vmatprep.subr.mxu0 0.0
    %3273 = vmatpush1.msra.mxu0 0.0
    %3274 = vmatprep.subr.mxu0 0.0
    %3275 = vmatpush1.msra.mxu0 0.0
    %3276 = vmatprep.subr.mxu0 0.0
    %3277 = vmatpush1.msra.mxu0 0.0
    %3278 = vmatprep.subr.mxu0 0.0
    %3279 = vmatpush1.msra.mxu0 0.0
    %3280 = vmatprep.subr.mxu0 0.0
    %3281 = vmatpush1.msra.mxu0 0.0
    %3282 = vmatprep.subr.mxu0 0.0
    %3283 = vmatpush1.msra.mxu0 0.0
    %3284 = vmatprep.subr.mxu0 0.0
    %3285 = vmatpush1.msra.mxu0 0.0
    %3286 = vmatprep.subr.mxu0 0.0
    %3287 = vmatpush1.msra.mxu0 0.0
    %3288 = vmatprep.subr.mxu0 0.0
    %3289 = vmatpush1.msra.mxu0 0.0
    %3290 = vmatprep.subr.mxu0 0.0
    %3291 = vmatpush1.msra.mxu0 0.0
    %3292 = vmatprep.subr.mxu0 0.0
    %3293 = vmatpush1.msra.mxu0 0.0
    %3294 = vmatprep.subr.mxu0 0.0
    %3295 = vmatpush1.msra.mxu0 0.0
    %3296 = vmatprep.subr.mxu0 0.0
    %3297 = vmatpush1.msra.mxu0 0.0
    %3298 = vmatprep.subr.mxu0 0.0
    %3299 = vmatpush1.msra.mxu0 0.0
    %3300 = vmatprep.subr.mxu0 0.0
    %3301 = vmatpush1.msra.mxu0 0.0
    %3302 = vmatprep.subr.mxu0 0.0
    %3303 = vmatpush1.msra.mxu0 0.0
    %3304 = vmatprep.subr.mxu0 0.0
    %3305 = vmatpush1.msra.mxu0 0.0
    %3306 = vmatprep.subr.mxu0 0.0
    %3307 = vmatpush1.msra.mxu0 0.0
    %3308 = vmatprep.subr.mxu0 0.0
    %3309 = vmatpush1.msra.mxu0 0.0
    %3310 = vmatprep.subr.mxu0 0.0
    %3311 = vmatpush1.msra.mxu0 0.0
    %3312 = vmatprep.mubr.f32.mxu0 0.0
    %3313 = vmatmul.mubr.f32.gmra.mrb[0].mxu0 %v3246
    %v3314 = vpop.f32.mrb[0].mxu0
    %v3315 = vadd.f32 0.0, %v3314
    %v3316 = vpop.f32.mrb[0].mxu0
    %3317 = vdwg.mxu0
    %v3319 = vsel %vm1930, %v2950, 0
    %3321 = vmatprep.subr.mxu0 0.0
    %3322 = vmatpush1.msra.mxu0 %v2238
    %3323 = vmatprep.subr.mxu0 0.0
    %3324 = vmatpush1.msra.mxu0 %v2240
    %3325 = vmatprep.subr.mxu0 0.0
    %3326 = vmatpush1.msra.mxu0 0.0
    %3327 = vmatprep.subr.mxu0 0.0
    %3328 = vmatpush1.msra.mxu0 0.0
    %3329 = vmatprep.subr.mxu0 0.0
    %3330 = vmatpush1.msra.mxu0 0.0
    %3331 = vmatprep.subr.mxu0 0.0
    %3332 = vmatpush1.msra.mxu0 0.0
    %3333 = vmatprep.subr.mxu0 0.0
    %3334 = vmatpush1.msra.mxu0 0.0
    %3335 = vmatprep.subr.mxu0 0.0
    %3336 = vmatpush1.msra.mxu0 0.0
    %3337 = vmatprep.subr.mxu0 0.0
    %3338 = vmatpush1.msra.mxu0 0.0
    %3339 = vmatprep.subr.mxu0 0.0
    %3340 = vmatpush1.msra.mxu0 0.0
    %3341 = vmatprep.subr.mxu0 0.0
    %3342 = vmatpush1.msra.mxu0 0.0
    %3343 = vmatprep.subr.mxu0 0.0
    %3344 = vmatpush1.msra.mxu0 0.0
    %3345 = vmatprep.subr.mxu0 0.0
    %3346 = vmatpush1.msra.mxu0 0.0
    %3347 = vmatprep.subr.mxu0 0.0
    %3348 = vmatpush1.msra.mxu0 0.0
    %3349 = vmatprep.subr.mxu0 0.0
    %3350 = vmatpush1.msra.mxu0 0.0
    %3351 = vmatprep.subr.mxu0 0.0
    %3352 = vmatpush1.msra.mxu0 0.0
    %3353 = vmatprep.subr.mxu0 0.0
    %3354 = vmatpush1.msra.mxu0 0.0
    %3355 = vmatprep.subr.mxu0 0.0
    %3356 = vmatpush1.msra.mxu0 0.0
    %3357 = vmatprep.subr.mxu0 0.0
    %3358 = vmatpush1.msra.mxu0 0.0
    %3359 = vmatprep.subr.mxu0 0.0
    %3360 = vmatpush1.msra.mxu0 0.0
    %3361 = vmatprep.subr.mxu0 0.0
    %3362 = vmatpush1.msra.mxu0 0.0
    %3363 = vmatprep.subr.mxu0 0.0
    %3364 = vmatpush1.msra.mxu0 0.0
    %3365 = vmatprep.subr.mxu0 0.0
    %3366 = vmatpush1.msra.mxu0 0.0
    %3367 = vmatprep.subr.mxu0 0.0
    %3368 = vmatpush1.msra.mxu0 0.0
    %3369 = vmatprep.subr.mxu0 0.0
    %3370 = vmatpush1.msra.mxu0 0.0
    %3371 = vmatprep.subr.mxu0 0.0
    %3372 = vmatpush1.msra.mxu0 0.0
    %3373 = vmatprep.subr.mxu0 0.0
    %3374 = vmatpush1.msra.mxu0 0.0
    %3375 = vmatprep.subr.mxu0 0.0
    %3376 = vmatpush1.msra.mxu0 0.0
    %3377 = vmatprep.subr.mxu0 0.0
    %3378 = vmatpush1.msra.mxu0 0.0
    %3379 = vmatprep.subr.mxu0 0.0
    %3380 = vmatpush1.msra.mxu0 0.0
    %3381 = vmatprep.subr.mxu0 0.0
    %3382 = vmatpush1.msra.mxu0 0.0
    %3383 = vmatprep.subr.mxu0 0.0
    %3384 = vmatpush1.msra.mxu0 0.0
    %3385 = vmatprep.mubr.f32.mxu0 0.0
    %3386 = vmatmul.mubr.f32.gmra.mrb[0].mxu0 %v3319
    %v3387 = vpop.f32.mrb[0].mxu0
    %v3388 = vadd.f32 0.0, %v3387
    %v3389 = vpop.f32.mrb[0].mxu0
    %3390 = vdwg.mxu0
    %v3392 = vsel %vm1930, %v2951, 0
    %3394 = vmatprep.subr.mxu0 0.0
    %3395 = vmatpush1.msra.mxu0 %v2246
    %3396 = vmatprep.subr.mxu0 0.0
    %3397 = vmatpush1.msra.mxu0 %v2248
    %3398 = vmatprep.subr.mxu0 0.0
    %3399 = vmatpush1.msra.mxu0 0.0
    %3400 = vmatprep.subr.mxu0 0.0
    %3401 = vmatpush1.msra.mxu0 0.0
    %3402 = vmatprep.subr.mxu0 0.0
    %3403 = vmatpush1.msra.mxu0 0.0
    %3404 = vmatprep.subr.mxu0 0.0
    %3405 = vmatpush1.msra.mxu0 0.0
    %3406 = vmatprep.subr.mxu0 0.0
    %3407 = vmatpush1.msra.mxu0 0.0
    %3408 = vmatprep.subr.mxu0 0.0
    %3409 = vmatpush1.msra.mxu0 0.0
    %3410 = vmatprep.subr.mxu0 0.0
    %3411 = vmatpush1.msra.mxu0 0.0
    %3412 = vmatprep.subr.mxu0 0.0
    %3413 = vmatpush1.msra.mxu0 0.0
    %3414 = vmatprep.subr.mxu0 0.0
    %3415 = vmatpush1.msra.mxu0 0.0
    %3416 = vmatprep.subr.mxu0 0.0
    %3417 = vmatpush1.msra.mxu0 0.0
    %3418 = vmatprep.subr.mxu0 0.0
    %3419 = vmatpush1.msra.mxu0 0.0
    %3420 = vmatprep.subr.mxu0 0.0
    %3421 = vmatpush1.msra.mxu0 0.0
    %3422 = vmatprep.subr.mxu0 0.0
    %3423 = vmatpush1.msra.mxu0 0.0
    %3424 = vmatprep.subr.mxu0 0.0
    %3425 = vmatpush1.msra.mxu0 0.0
    %3426 = vmatprep.subr.mxu0 0.0
    %3427 = vmatpush1.msra.mxu0 0.0
    %3428 = vmatprep.subr.mxu0 0.0
    %3429 = vmatpush1.msra.mxu0 0.0
    %3430 = vmatprep.subr.mxu0 0.0
    %3431 = vmatpush1.msra.mxu0 0.0
    %3432 = vmatprep.subr.mxu0 0.0
    %3433 = vmatpush1.msra.mxu0 0.0
    %3434 = vmatprep.subr.mxu0 0.0
    %3435 = vmatpush1.msra.mxu0 0.0
    %3436 = vmatprep.subr.mxu0 0.0
    %3437 = vmatpush1.msra.mxu0 0.0
    %3438 = vmatprep.subr.mxu0 0.0
    %3439 = vmatpush1.msra.mxu0 0.0
    %3440 = vmatprep.subr.mxu0 0.0
    %3441 = vmatpush1.msra.mxu0 0.0
    %3442 = vmatprep.subr.mxu0 0.0
    %3443 = vmatpush1.msra.mxu0 0.0
    %3444 = vmatprep.subr.mxu0 0.0
    %3445 = vmatpush1.msra.mxu0 0.0
    %3446 = vmatprep.subr.mxu0 0.0
    %3447 = vmatpush1.msra.mxu0 0.0
    %3448 = vmatprep.subr.mxu0 0.0
    %3449 = vmatpush1.msra.mxu0 0.0
    %3450 = vmatprep.subr.mxu0 0.0
    %3451 = vmatpush1.msra.mxu0 0.0
    %3452 = vmatprep.subr.mxu0 0.0
    %3453 = vmatpush1.msra.mxu0 0.0
    %3454 = vmatprep.subr.mxu0 0.0
    %3455 = vmatpush1.msra.mxu0 0.0
    %3456 = vmatprep.subr.mxu0 0.0
    %3457 = vmatpush1.msra.mxu0 0.0
    %3458 = vmatprep.mubr.f32.mxu0 0.0
    %3459 = vmatmul.mubr.f32.gmra.mrb[0].mxu0 %v3392
    %v3460 = vpop.f32.mrb[0].mxu0
    %v3461 = vadd.f32 0.0, %v3460
    %v3462 = vpop.f32.mrb[0].mxu0
    %3463 = vdwg.mxu0
    %v3465 = vsel %vm1930, %v2952, 0
    %3467 = vmatprep.subr.mxu0 0.0
    %3468 = vmatpush1.msra.mxu0 %v2250
    %3469 = vmatprep.subr.mxu0 0.0
    %3470 = vmatpush1.msra.mxu0 %v2252
    %3471 = vmatprep.subr.mxu0 0.0
    %3472 = vmatpush1.msra.mxu0 0.0
    %3473 = vmatprep.subr.mxu0 0.0
    %3474 = vmatpush1.msra.mxu0 0.0
    %3475 = vmatprep.subr.mxu0 0.0
    %3476 = vmatpush1.msra.mxu0 0.0
    %3477 = vmatprep.subr.mxu0 0.0
    %3478 = vmatpush1.msra.mxu0 0.0
    %3479 = vmatprep.subr.mxu0 0.0
    %3480 = vmatpush1.msra.mxu0 0.0
    %3481 = vmatprep.subr.mxu0 0.0
    %3482 = vmatpush1.msra.mxu0 0.0
    %3483 = vmatprep.subr.mxu0 0.0
    %3484 = vmatpush1.msra.mxu0 0.0
    %3485 = vmatprep.subr.mxu0 0.0
    %3486 = vmatpush1.msra.mxu0 0.0
    %3487 = vmatprep.subr.mxu0 0.0
    %3488 = vmatpush1.msra.mxu0 0.0
    %3489 = vmatprep.subr.mxu0 0.0
    %3490 = vmatpush1.msra.mxu0 0.0
    %3491 = vmatprep.subr.mxu0 0.0
    %3492 = vmatpush1.msra.mxu0 0.0
    %3493 = vmatprep.subr.mxu0 0.0
    %3494 = vmatpush1.msra.mxu0 0.0
    %3495 = vmatprep.subr.mxu0 0.0
    %3496 = vmatpush1.msra.mxu0 0.0
    %3497 = vmatprep.subr.mxu0 0.0
    %3498 = vmatpush1.msra.mxu0 0.0
    %3499 = vmatprep.subr.mxu0 0.0
    %3500 = vmatpush1.msra.mxu0 0.0
    %3501 = vmatprep.subr.mxu0 0.0
    %3502 = vmatpush1.msra.mxu0 0.0
    %3503 = vmatprep.subr.mxu0 0.0
    %3504 = vmatpush1.msra.mxu0 0.0
    %3505 = vmatprep.subr.mxu0 0.0
    %3506 = vmatpush1.msra.mxu0 0.0
    %3507 = vmatprep.subr.mxu0 0.0
    %3508 = vmatpush1.msra.mxu0 0.0
    %3509 = vmatprep.subr.mxu0 0.0
    %3510 = vmatpush1.msra.mxu0 0.0
    %3511 = vmatprep.subr.mxu0 0.0
    %3512 = vmatpush1.msra.mxu0 0.0
    %3513 = vmatprep.subr.mxu0 0.0
    %3514 = vmatpush1.msra.mxu0 0.0
    %3515 = vmatprep.subr.mxu0 0.0
    %3516 = vmatpush1.msra.mxu0 0.0
    %3517 = vmatprep.subr.mxu0 0.0
    %3518 = vmatpush1.msra.mxu0 0.0
    %3519 = vmatprep.subr.mxu0 0.0
    %3520 = vmatpush1.msra.mxu0 0.0
    %3521 = vmatprep.subr.mxu0 0.0
    %3522 = vmatpush1.msra.mxu0 0.0
    %3523 = vmatprep.subr.mxu0 0.0
    %3524 = vmatpush1.msra.mxu0 0.0
    %3525 = vmatprep.subr.mxu0 0.0
    %3526 = vmatpush1.msra.mxu0 0.0
    %3527 = vmatprep.subr.mxu0 0.0
    %3528 = vmatpush1.msra.mxu0 0.0
    %3529 = vmatprep.subr.mxu0 0.0
    %3530 = vmatpush1.msra.mxu0 0.0
    %3531 = vmatprep.mubr.f32.mxu0 0.0
    %3532 = vmatmul.mubr.f32.gmra.mrb[0].mxu0 %v3465
    %v3533 = vpop.f32.mrb[0].mxu0
    %v3534 = vadd.f32 0.0, %v3533
    %v3535 = vpop.f32.mrb[0].mxu0
    %3536 = vdwg.mxu0
    %3539 = vrot.lane.b32.xlu0 %v3169, 8
    %v3540 = vpop.permute.xlu0 %3539
    %3541 = vrot.lane.b32.xlu0 %v3242, 8
    %v3542 = vpop.permute.xlu0 %3541
    %3547 = vrot.lane.b32.xlu0 %v3315, 16
    %v3548 = vpop.permute.xlu0 %3547
    %3549 = vrot.lane.b32.xlu0 %v3388, 16
    %v3550 = vpop.permute.xlu0 %3549
    %3555 = vrot.lane.b32.xlu0 %v3461, 24
    %v3556 = vpop.permute.xlu0 %3555
    %3557 = vrot.lane.b32.xlu0 %v3534, 24
    %v3558 = vpop.permute.xlu0 %3557
    %v3561 = vsel %vm601, %v3023, %v3540
    %v3562 = vsel %vm601, %v3096, %v3542
    %v3563 = vsel %vm1930, %v3561, %v3548
    %v3564 = vsel %vm1930, %v3562, %v3550
    %v3565 = vsel %vm1933, %v3563, %v3556
    %v3566 = vsel %vm1933, %v3564, %v3558
    %v3568 = vlaneseq
    %v3569 = vshrl.u32 %v3568, 7
    %v3570 = vsub.s32 0, %v3569
    %v3571 = vrot.slane %v2174, %v3570
    %v3574 = vsel %vm105, %v3565, 0
    %v3577 = vsel %vm105, %v3566, 0
    %3579 = vmatprep.subr.mxu0 0.0
    %3580 = vmatpush1.msra.mxu0 %v2169
    %3581 = vmatprep.subr.mxu0 0.0
    %3582 = vmatpush1.msra.mxu0 %v2170
    %3583 = vmatprep.subr.mxu0 0.0
    %3584 = vmatpush1.msra.mxu0 %v2171
    %3585 = vmatprep.subr.mxu0 0.0
    %3586 = vmatpush1.msra.mxu0 %v2172
    %3587 = vmatprep.subr.mxu0 0.0
    %3588 = vmatpush1.msra.mxu0 0.0
    %3589 = vmatprep.subr.mxu0 0.0
    %3590 = vmatpush1.msra.mxu0 0.0
    %3591 = vmatprep.subr.mxu0 0.0
    %3592 = vmatpush1.msra.mxu0 0.0
    %3593 = vmatprep.subr.mxu0 0.0
    %3594 = vmatpush1.msra.mxu0 0.0
    %3595 = vmatprep.subr.mxu0 0.0
    %3596 = vmatpush1.msra.mxu0 0.0
    %3597 = vmatprep.subr.mxu0 0.0
    %3598 = vmatpush1.msra.mxu0 0.0
    %3599 = vmatprep.subr.mxu0 0.0
    %3600 = vmatpush1.msra.mxu0 0.0
    %3601 = vmatprep.subr.mxu0 0.0
    %3602 = vmatpush1.msra.mxu0 0.0
    %3603 = vmatprep.subr.mxu0 0.0
    %3604 = vmatpush1.msra.mxu0 0.0
    %3605 = vmatprep.subr.mxu0 0.0
    %3606 = vmatpush1.msra.mxu0 0.0
    %3607 = vmatprep.subr.mxu0 0.0
    %3608 = vmatpush1.msra.mxu0 0.0
    %3609 = vmatprep.subr.mxu0 0.0
    %3610 = vmatpush1.msra.mxu0 0.0
    %3611 = vmatprep.subr.mxu0 0.0
    %3612 = vmatpush1.msra.mxu0 0.0
    %3613 = vmatprep.subr.mxu0 0.0
    %3614 = vmatpush1.msra.mxu0 0.0
    %3615 = vmatprep.subr.mxu0 0.0
    %3616 = vmatpush1.msra.mxu0 0.0
    %3617 = vmatprep.subr.mxu0 0.0
    %3618 = vmatpush1.msra.mxu0 0.0
    %3619 = vmatprep.subr.mxu0 0.0
    %3620 = vmatpush1.msra.mxu0 0.0
    %3621 = vmatprep.subr.mxu0 0.0
    %3622 = vmatpush1.msra.mxu0 0.0
    %3623 = vmatprep.subr.mxu0 0.0
    %3624 = vmatpush1.msra.mxu0 0.0
    %3625 = vmatprep.subr.mxu0 0.0
    %3626 = vmatpush1.msra.mxu0 0.0
    %3627 = vmatprep.subr.mxu0 0.0
    %3628 = vmatpush1.msra.mxu0 0.0
    %3629 = vmatprep.subr.mxu0 0.0
    %3630 = vmatpush1.msra.mxu0 0.0
    %3631 = vmatprep.subr.mxu0 0.0
    %3632 = vmatpush1.msra.mxu0 0.0
    %3633 = vmatprep.subr.mxu0 0.0
    %3634 = vmatpush1.msra.mxu0 0.0
    %3635 = vmatprep.subr.mxu0 0.0
    %3636 = vmatpush1.msra.mxu0 0.0
    %3637 = vmatprep.subr.mxu0 0.0
    %3638 = vmatpush1.msra.mxu0 0.0
    %3639 = vmatprep.subr.mxu0 0.0
    %3640 = vmatpush1.msra.mxu0 0.0
    %3641 = vmatprep.subr.mxu0 0.0
    %3642 = vmatpush1.msra.mxu0 0.0
    %3643 = vmatprep.mubr.f32.mxu0 0.0
    %3644 = vmatmul.mubr.f32.gmra.mrb[0].mxu0 %v3574
    %v3645 = vpop.f32.mrb[0].mxu0
    %v3646 = vadd.f32 %v3571, %v3645
    %v3647 = vpop.f32.mrb[0].mxu0
    %3648 = vmatprep.mubr.f32.mxu0 0.0
    %3649 = vmatmul.mubr.f32.gmra.mrb[0].mxu0 %v3577
    %v3650 = vpop.f32.mrb[0].mxu0
    %v3651 = vadd.f32 %v3571, %v3650
    %v3652 = vpop.f32.mrb[0].mxu0
    %3653 = vdwg.mxu0
    %v3654 = vadd.f32 %v2023, %v3646
    %v3655 = vadd.f32 %v2024, %v3651
    %s3656 = scalar_lea.vmem %s14, 2
    %v3657 = vld [vmem:[%s3656] sm:$0x1]
    %s3658 = scalar_lea.vmem %s14, 8
    %v3659 = vld [vmem:[%s3658] sm:$0x1]
    %v3660 = vsel %vm105, %v3654, 0.0
    %3661 = vadd.xlane.f32.xlu0 %v3660
    %v3662 = vpop.xlane.xlu0 %3661
    %v3663 = vsel %vm105, %v3655, 0.0
    %3664 = vadd.xlane.f32.xlu0 %v3663
    %v3665 = vpop.xlane.xlu0 %3664
    %v3666 = vmul.f32 %v3662, %v425
    %v3667 = vmul.f32 %v3665, %v425
    %v3668 = vmul.f32 %v3654, %v3654
    %v3669 = vmul.f32 %v3655, %v3655
    %v3670 = vsel %vm105, %v3668, 0.0
    %3671 = vadd.xlane.f32.xlu0 %v3670
    %v3672 = vpop.xlane.xlu0 %3671
    %v3673 = vsel %vm105, %v3669, 0.0
    %3674 = vadd.xlane.f32.xlu0 %v3673
    %v3675 = vpop.xlane.xlu0 %3674
    %v3676 = vmul.f32 %v3672, %v425
    %v3677 = vmul.f32 %v3675, %v425
    %v3678 = vsub.f32 %v3654, %v3666
    %v3679 = vsub.f32 %v3655, %v3667
    %v3680 = vmul.f32 %v3666, %v3666
    %v3681 = vmul.f32 %v3667, %v3667
    %v3682 = vsub.f32 %v3676, %v3680
    %v3683 = vsub.f32 %v3677, %v3681
    %v3684 = vadd.f32 %v3682, 1e-05
    %v3685 = vadd.f32 %v3683, 1e-05
    %v3686 = vrsqrt.pop %v3684
    %v3687 = vrsqrt.pop %v3685
    %v3688 = vmul.f32 %v3678, %v3686
    %v3689 = vmul.f32 %v3679, %v3687
    %v3691 = vlaneseq
    %v3692 = vshrl.u32 %v3691, 7
    %v3693 = vsub.s32 0, %v3692
    %v3694 = vrot.slane %v3657, %v3693
    %v3696 = vmul.f32 %v3688, %v3694
    %v3697 = vmul.f32 %v3689, %v3694
    %v3699 = vlaneseq
    %v3700 = vshrl.u32 %v3699, 7
    %v3701 = vsub.s32 0, %v3700
    %v3702 = vrot.slane %v3659, %v3701
    %v3704 = vadd.f32 %v3696, %v3702
    %v3705 = vadd.f32 %v3697, %v3702
    %v3706 = vld [vmem:[#allocation4] sm:$0xff]
    %v3707 = vld [vmem:[#allocation4 + $0x8] sm:$0xff]
    %v3708 = vld [vmem:[#allocation4 + $0x10] sm:$0xff]
    %v3709 = vld [vmem:[#allocation4 + $0x18] sm:$0xff]
    %v3710 = vld [vmem:[%s12] sm:$0x1]
    %v3712 = vlaneseq
    %v3713 = vshrl.u32 %v3712, 7
    %v3714 = vsub.s32 0, %v3713
    %v3715 = vrot.slane %v3710, %v3714
    %v3718 = vsel %vm105, %v3704, 0
    %v3721 = vsel %vm105, %v3705, 0
    %3723 = vmatprep.subr.mxu0 0.0
    %3724 = vmatpush1.msra.mxu0 %v3706
    %3725 = vmatprep.subr.mxu0 0.0
    %3726 = vmatpush1.msra.mxu0 %v3707
    %3727 = vmatprep.subr.mxu0 0.0
    %3728 = vmatpush1.msra.mxu0 %v3708
    %3729 = vmatprep.subr.mxu0 0.0
    %3730 = vmatpush1.msra.mxu0 %v3709
    %3731 = vmatprep.subr.mxu0 0.0
    %3732 = vmatpush1.msra.mxu0 0.0
    %3733 = vmatprep.subr.mxu0 0.0
    %3734 = vmatpush1.msra.mxu0 0.0
    %3735 = vmatprep.subr.mxu0 0.0
    %3736 = vmatpush1.msra.mxu0 0.0
    %3737 = vmatprep.subr.mxu0 0.0
    %3738 = vmatpush1.msra.mxu0 0.0
    %3739 = vmatprep.subr.mxu0 0.0
    %3740 = vmatpush1.msra.mxu0 0.0
    %3741 = vmatprep.subr.mxu0 0.0
    %3742 = vmatpush1.msra.mxu0 0.0
    %3743 = vmatprep.subr.mxu0 0.0
    %3744 = vmatpush1.msra.mxu0 0.0
    %3745 = vmatprep.subr.mxu0 0.0
    %3746 = vmatpush1.msra.mxu0 0.0
    %3747 = vmatprep.subr.mxu0 0.0
    %3748 = vmatpush1.msra.mxu0 0.0
    %3749 = vmatprep.subr.mxu0 0.0
    %3750 = vmatpush1.msra.mxu0 0.0
    %3751 = vmatprep.subr.mxu0 0.0
    %3752 = vmatpush1.msra.mxu0 0.0
    %3753 = vmatprep.subr.mxu0 0.0
    %3754 = vmatpush1.msra.mxu0 0.0
    %3755 = vmatprep.subr.mxu0 0.0
    %3756 = vmatpush1.msra.mxu0 0.0
    %3757 = vmatprep.subr.mxu0 0.0
    %3758 = vmatpush1.msra.mxu0 0.0
    %3759 = vmatprep.subr.mxu0 0.0
    %3760 = vmatpush1.msra.mxu0 0.0
    %3761 = vmatprep.subr.mxu0 0.0
    %3762 = vmatpush1.msra.mxu0 0.0
    %3763 = vmatprep.subr.mxu0 0.0
    %3764 = vmatpush1.msra.mxu0 0.0
    %3765 = vmatprep.subr.mxu0 0.0
    %3766 = vmatpush1.msra.mxu0 0.0
    %3767 = vmatprep.subr.mxu0 0.0
    %3768 = vmatpush1.msra.mxu0 0.0
    %3769 = vmatprep.subr.mxu0 0.0
    %3770 = vmatpush1.msra.mxu0 0.0
    %3771 = vmatprep.subr.mxu0 0.0
    %3772 = vmatpush1.msra.mxu0 0.0
    %3773 = vmatprep.subr.mxu0 0.0
    %3774 = vmatpush1.msra.mxu0 0.0
    %3775 = vmatprep.subr.mxu0 0.0
    %3776 = vmatpush1.msra.mxu0 0.0
    %3777 = vmatprep.subr.mxu0 0.0
    %3778 = vmatpush1.msra.mxu0 0.0
    %3779 = vmatprep.subr.mxu0 0.0
    %3780 = vmatpush1.msra.mxu0 0.0
    %3781 = vmatprep.subr.mxu0 0.0
    %3782 = vmatpush1.msra.mxu0 0.0
    %3783 = vmatprep.subr.mxu0 0.0
    %3784 = vmatpush1.msra.mxu0 0.0
    %3785 = vmatprep.subr.mxu0 0.0
    %3786 = vmatpush1.msra.mxu0 0.0
    %3787 = vmatprep.mubr.f32.mxu0 0.0
    %3788 = vmatmul.mubr.f32.gmra.mrb[0].mxu0 %v3718
    %v3789 = vpop.f32.mrb[0].mxu0
    %v3790 = vadd.f32 %v3715, %v3789
    %v3791 = vpop.f32.mrb[0].mxu0
    %3792 = vmatprep.mubr.f32.mxu0 0.0
    %3793 = vmatmul.mubr.f32.gmra.mrb[0].mxu0 %v3721
    %v3794 = vpop.f32.mrb[0].mxu0
    %v3795 = vadd.f32 %v3715, %v3794
    %v3796 = vpop.f32.mrb[0].mxu0
    %3797 = vdwg.mxu0
    %v3798 = vmax.f32 %v3790, 0.0
    %v3799 = vmax.f32 %v3795, 0.0
    %v3800 = vld [vmem:[%s13] sm:$0xff]
    %v3801 = vld [vmem:[%s13 + $0x8] sm:$0xff]
    %v3802 = vld [vmem:[%s13 + $0x10] sm:$0xff]
    %v3803 = vld [vmem:[%s13 + $0x18] sm:$0xff]
    %v3804 = vld [vmem:[%s13 + $0x20] sm:$0xff]
    %v3805 = vld [vmem:[%s13 + $0x28] sm:$0xff]
    %v3806 = vld [vmem:[%s13 + $0x30] sm:$0xff]
    %v3807 = vld [vmem:[%s13 + $0x38] sm:$0xff]
    %vm3808 = vcmask 523264
    %v3810 = vsel %vm3808, %v3798, 0
    %v3813 = vsel %vm3808, %v3799, 0
    %3815 = vmatprep.subr.mxu0 0.0
    %3816 = vmatpush1.msra.mxu0 %v3800
    %3817 = vmatprep.subr.mxu0 0.0
    %3818 = vmatpush1.msra.mxu0 %v3801
    %3819 = vmatprep.subr.mxu0 0.0
    %3820 = vmatpush1.msra.mxu0 %v3802
    %3821 = vmatprep.subr.mxu0 0.0
    %3822 = vmatpush1.msra.mxu0 %v3803
    %3823 = vmatprep.subr.mxu0 0.0
    %3824 = vmatpush1.msra.mxu0 %v3804
    %3825 = vmatprep.subr.mxu0 0.0
    %3826 = vmatpush1.msra.mxu0 %v3805
    %3827 = vmatprep.subr.mxu0 0.0
    %3828 = vmatpush1.msra.mxu0 %v3806
    %3829 = vmatprep.subr.mxu0 0.0
    %3830 = vmatpush1.msra.mxu0 %v3807
    %3831 = vmatprep.subr.mxu0 0.0
    %3832 = vmatpush1.msra.mxu0 0.0
    %3833 = vmatprep.subr.mxu0 0.0
    %3834 = vmatpush1.msra.mxu0 0.0
    %3835 = vmatprep.subr.mxu0 0.0
    %3836 = vmatpush1.msra.mxu0 0.0
    %3837 = vmatprep.subr.mxu0 0.0
    %3838 = vmatpush1.msra.mxu0 0.0
    %3839 = vmatprep.subr.mxu0 0.0
    %3840 = vmatpush1.msra.mxu0 0.0
    %3841 = vmatprep.subr.mxu0 0.0
    %3842 = vmatpush1.msra.mxu0 0.0
    %3843 = vmatprep.subr.mxu0 0.0
    %3844 = vmatpush1.msra.mxu0 0.0
    %3845 = vmatprep.subr.mxu0 0.0
    %3846 = vmatpush1.msra.mxu0 0.0
    %3847 = vmatprep.subr.mxu0 0.0
    %3848 = vmatpush1.msra.mxu0 0.0
    %3849 = vmatprep.subr.mxu0 0.0
    %3850 = vmatpush1.msra.mxu0 0.0
    %3851 = vmatprep.subr.mxu0 0.0
    %3852 = vmatpush1.msra.mxu0 0.0
    %3853 = vmatprep.subr.mxu0 0.0
    %3854 = vmatpush1.msra.mxu0 0.0
    %3855 = vmatprep.subr.mxu0 0.0
    %3856 = vmatpush1.msra.mxu0 0.0
    %3857 = vmatprep.subr.mxu0 0.0
    %3858 = vmatpush1.msra.mxu0 0.0
    %3859 = vmatprep.subr.mxu0 0.0
    %3860 = vmatpush1.msra.mxu0 0.0
    %3861 = vmatprep.subr.mxu0 0.0
    %3862 = vmatpush1.msra.mxu0 0.0
    %3863 = vmatprep.subr.mxu0 0.0
    %3864 = vmatpush1.msra.mxu0 0.0
    %3865 = vmatprep.subr.mxu0 0.0
    %3866 = vmatpush1.msra.mxu0 0.0
    %3867 = vmatprep.subr.mxu0 0.0
    %3868 = vmatpush1.msra.mxu0 0.0
    %3869 = vmatprep.subr.mxu0 0.0
    %3870 = vmatpush1.msra.mxu0 0.0
    %3871 = vmatprep.subr.mxu0 0.0
    %3872 = vmatpush1.msra.mxu0 0.0
    %3873 = vmatprep.subr.mxu0 0.0
    %3874 = vmatpush1.msra.mxu0 0.0
    %3875 = vmatprep.subr.mxu0 0.0
    %3876 = vmatpush1.msra.mxu0 0.0
    %3877 = vmatprep.subr.mxu0 0.0
    %3878 = vmatpush1.msra.mxu0 0.0
    %3879 = vmatprep.mubr.f32.mxu0 0.0
    %3880 = vmatmul.mubr.f32.gmra.mrb[0].mxu0 %v3810
    %v3881 = vpop.f32.mrb[0].mxu0
    %v3882 = vadd.f32 0.0, %v3881
    %v3883 = vpop.f32.mrb[0].mxu0
    %3884 = vmatprep.mubr.f32.mxu0 0.0
    %3885 = vmatmul.mubr.f32.gmra.mrb[0].mxu0 %v3813
    %v3886 = vpop.f32.mrb[0].mxu0
    %v3887 = vadd.f32 0.0, %v3886
    %v3888 = vpop.f32.mrb[0].mxu0
    %3889 = vdwg.mxu0
    %v3890 = vadd.f32 %v3654, %v3882
    %v3891 = vadd.f32 %v3655, %v3887
    %s3892 = scalar_lea.vmem %s6, 3
    %v3893 = vld [vmem:[%s3892] sm:$0x1]
    %v3895 = vlaneseq
    %v3896 = vshrl.u32 %v3895, 7
    %v3897 = vsub.s32 0, %v3896
    %v3898 = vrot.slane %v3893, %v3897
    %v3900 = vadd.f32 %v3890, %v3898
    %v3901 = vadd.f32 %v3891, %v3898
    %s3902 = scalar_lea.vmem %s14, 3
    %v3903 = vld [vmem:[%s3902] sm:$0x1]
    %s3904 = scalar_lea.vmem %s14, 9
    %v3905 = vld [vmem:[%s3904] sm:$0x1]
    %v3906 = vsel %vm105, %v3900, 0.0
    %3907 = vadd.xlane.f32.xlu0 %v3906
    %v3908 = vpop.xlane.xlu0 %3907
    %v3909 = vsel %vm105, %v3901, 0.0
    %3910 = vadd.xlane.f32.xlu0 %v3909
    %v3911 = vpop.xlane.xlu0 %3910
    %v3912 = vmul.f32 %v3908, %v425
    %v3913 = vmul.f32 %v3911, %v425
    %v3914 = vmul.f32 %v3900, %v3900
    %v3915 = vmul.f32 %v3901, %v3901
    %v3916 = vsel %vm105, %v3914, 0.0
    %3917 = vadd.xlane.f32.xlu0 %v3916
    %v3918 = vpop.xlane.xlu0 %3917
    %v3919 = vsel %vm105, %v3915, 0.0
    %3920 = vadd.xlane.f32.xlu0 %v3919
    %v3921 = vpop.xlane.xlu0 %3920
    %v3922 = vmul.f32 %v3918, %v425
    %v3923 = vmul.f32 %v3921, %v425
    %v3924 = vsub.f32 %v3900, %v3912
    %v3925 = vsub.f32 %v3901, %v3913
    %v3926 = vmul.f32 %v3912, %v3912
    %v3927 = vmul.f32 %v3913, %v3913
    %v3928 = vsub.f32 %v3922, %v3926
    %v3929 = vsub.f32 %v3923, %v3927
    %v3930 = vadd.f32 %v3928, 1e-05
    %v3931 = vadd.f32 %v3929, 1e-05
    %v3932 = vrsqrt.pop %v3930
    %v3933 = vrsqrt.pop %v3931
    %v3934 = vmul.f32 %v3924, %v3932
    %v3935 = vmul.f32 %v3925, %v3933
    %v3937 = vlaneseq
    %v3938 = vshrl.u32 %v3937, 7
    %v3939 = vsub.s32 0, %v3938
    %v3940 = vrot.slane %v3903, %v3939
    %v3942 = vmul.f32 %v3934, %v3940
    %v3943 = vmul.f32 %v3935, %v3940
    %v3945 = vlaneseq
    %v3946 = vshrl.u32 %v3945, 7
    %v3947 = vsub.s32 0, %v3946
    %v3948 = vrot.slane %v3905, %v3947
    %v3950 = vadd.f32 %v3942, %v3948
    %v3951 = vadd.f32 %v3943, %v3948
    %s3952 = scalar_lea.vmem %s4, 32
    %v3953 = vld [vmem:[%s3952] sm:$0xff]
    %v3954 = vld [vmem:[%s3952 + $0x8] sm:$0xff]
    %v3955 = vld [vmem:[%s3952 + $0x10] sm:$0xff]
    %v3956 = vld [vmem:[%s3952 + $0x18] sm:$0xff]
    %v3958 = vsel %vm105, %v3950, 0
    %v3961 = vsel %vm105, %v3951, 0
    %3963 = vmatprep.subr.mxu0 0.0
    %3964 = vmatpush1.msra.mxu0 %v3953
    %3965 = vmatprep.subr.mxu0 0.0
    %3966 = vmatpush1.msra.mxu0 %v3954
    %3967 = vmatprep.subr.mxu0 0.0
    %3968 = vmatpush1.msra.mxu0 %v3955
    %3969 = vmatprep.subr.mxu0 0.0
    %3970 = vmatpush1.msra.mxu0 %v3956
    %3971 = vmatprep.subr.mxu0 0.0
    %3972 = vmatpush1.msra.mxu0 0.0
    %3973 = vmatprep.subr.mxu0 0.0
    %3974 = vmatpush1.msra.mxu0 0.0
    %3975 = vmatprep.subr.mxu0 0.0
    %3976 = vmatpush1.msra.mxu0 0.0
    %3977 = vmatprep.subr.mxu0 0.0
    %3978 = vmatpush1.msra.mxu0 0.0
    %3979 = vmatprep.subr.mxu0 0.0
    %3980 = vmatpush1.msra.mxu0 0.0
    %3981 = vmatprep.subr.mxu0 0.0
    %3982 = vmatpush1.msra.mxu0 0.0
    %3983 = vmatprep.subr.mxu0 0.0
    %3984 = vmatpush1.msra.mxu0 0.0
    %3985 = vmatprep.subr.mxu0 0.0
    %3986 = vmatpush1.msra.mxu0 0.0
    %3987 = vmatprep.subr.mxu0 0.0
    %3988 = vmatpush1.msra.mxu0 0.0
    %3989 = vmatprep.subr.mxu0 0.0
    %3990 = vmatpush1.msra.mxu0 0.0
    %3991 = vmatprep.subr.mxu0 0.0
    %3992 = vmatpush1.msra.mxu0 0.0
    %3993 = vmatprep.subr.mxu0 0.0
    %3994 = vmatpush1.msra.mxu0 0.0
    %3995 = vmatprep.subr.mxu0 0.0
    %3996 = vmatpush1.msra.mxu0 0.0
    %3997 = vmatprep.subr.mxu0 0.0
    %3998 = vmatpush1.msra.mxu0 0.0
    %3999 = vmatprep.subr.mxu0 0.0
    %4000 = vmatpush1.msra.mxu0 0.0
    %4001 = vmatprep.subr.mxu0 0.0
    %4002 = vmatpush1.msra.mxu0 0.0
    %4003 = vmatprep.subr.mxu0 0.0
    %4004 = vmatpush1.msra.mxu0 0.0
    %4005 = vmatprep.subr.mxu0 0.0
    %4006 = vmatpush1.msra.mxu0 0.0
    %4007 = vmatprep.subr.mxu0 0.0
    %4008 = vmatpush1.msra.mxu0 0.0
    %4009 = vmatprep.subr.mxu0 0.0
    %4010 = vmatpush1.msra.mxu0 0.0
    %4011 = vmatprep.subr.mxu0 0.0
    %4012 = vmatpush1.msra.mxu0 0.0
    %4013 = vmatprep.subr.mxu0 0.0
    %4014 = vmatpush1.msra.mxu0 0.0
    %4015 = vmatprep.subr.mxu0 0.0
    %4016 = vmatpush1.msra.mxu0 0.0
    %4017 = vmatprep.subr.mxu0 0.0
    %4018 = vmatpush1.msra.mxu0 0.0
    %4019 = vmatprep.subr.mxu0 0.0
    %4020 = vmatpush1.msra.mxu0 0.0
    %4021 = vmatprep.subr.mxu0 0.0
    %4022 = vmatpush1.msra.mxu0 0.0
    %4023 = vmatprep.subr.mxu0 0.0
    %4024 = vmatpush1.msra.mxu0 0.0
    %4025 = vmatprep.subr.mxu0 0.0
    %4026 = vmatpush1.msra.mxu0 0.0
    %4027 = vmatprep.mubr.f32.mxu0 0.0
    %4028 = vmatmul.mubr.f32.gmra.mrb[0].mxu0 %v3958
    %v4029 = vpop.f32.mrb[0].mxu0
    %v4030 = vadd.f32 0.0, %v4029
    %v4031 = vpop.f32.mrb[0].mxu0
    %4032 = vmatprep.mubr.f32.mxu0 0.0
    %4033 = vmatmul.mubr.f32.gmra.mrb[0].mxu0 %v3961
    %v4034 = vpop.f32.mrb[0].mxu0
    %v4035 = vadd.f32 0.0, %v4034
    %v4036 = vpop.f32.mrb[0].mxu0
    %4037 = vdwg.mxu0
    %4038 = vrot.lane.b32.xlu0 %v406, 32
    %v4039 = vpop.permute.xlu0 %4038
    %4040 = vrot.lane.b32.xlu0 %v412, 32
    %v4041 = vpop.permute.xlu0 %4040
    %v4044 = vadd.f32 %v4030, %v4039
    %v4045 = vadd.f32 %v4035, %v4041
    %4048 = vrot.lane.b32.xlu0 %v408, 32
    %v4049 = vpop.permute.xlu0 %4048
    %4050 = vrot.lane.b32.xlu0 %v414, 32
    %v4051 = vpop.permute.xlu0 %4050
    %v4054 = vadd.f32 %v4030, %v4049
    %v4055 = vadd.f32 %v4035, %v4051
    %s4056 = scalar_lea.vmem %s6, 4
    %v4057 = vld [vmem:[%s4056] sm:$0x1]
    %v4059 = vlaneseq
    %v4060 = vshrl.u32 %v4059, 7
    %v4061 = vsub.s32 0, %v4060
    %v4062 = vrot.slane %v4057, %v4061
    %4063 = vrot.lane.b32.xlu0 %v4062, 64
    %v4064 = vpop.permute.xlu0 %4063
    %v4066 = vadd.f32 %v4030, %v4064
    %v4067 = vadd.f32 %v4035, %v4064
    %s4068 = scalar_lea.vmem %s5, 128
    %v4069 = vld [vmem:[%s4068] sm:$0xff]
    %v4070 = vld [vmem:[%s4068 + $0x8] sm:$0xff]
    %v4071 = vld [vmem:[%s4068 + $0x10] sm:$0xff]
    %v4072 = vld [vmem:[%s4068 + $0x18] sm:$0xff]
    %s4073 = scalar_lea.vmem %s6, 5
    %v4074 = vld [vmem:[%s4073] sm:$0x1]
    %4077 = vrot.lane.b32.xlu0 %v4044, 120
    %v4078 = vpop.permute.xlu0 %4077
    %4079 = vrot.lane.b32.xlu0 %v4045, 120
    %v4080 = vpop.permute.xlu0 %4079
    %4081 = vrot.lane.b32.xlu0 %v4044, 112
    %v4082 = vpop.permute.xlu0 %4081
    %4083 = vrot.lane.b32.xlu0 %v4045, 112
    %v4084 = vpop.permute.xlu0 %4083
    %4085 = vrot.lane.b32.xlu0 %v4044, 104
    %v4086 = vpop.permute.xlu0 %4085
    %4087 = vrot.lane.b32.xlu0 %v4045, 104
    %v4088 = vpop.permute.xlu0 %4087
    %4091 = vrot.lane.b32.xlu0 %v4054, 120
    %v4092 = vpop.permute.xlu0 %4091
    %4093 = vrot.lane.b32.xlu0 %v4055, 120
    %v4094 = vpop.permute.xlu0 %4093
    %4095 = vrot.lane.b32.xlu0 %v4054, 112
    %v4096 = vpop.permute.xlu0 %4095
    %4097 = vrot.lane.b32.xlu0 %v4055, 112
    %v4098 = vpop.permute.xlu0 %4097
    %4099 = vrot.lane.b32.xlu0 %v4054, 104
    %v4100 = vpop.permute.xlu0 %4099
    %4101 = vrot.lane.b32.xlu0 %v4055, 104
    %v4102 = vpop.permute.xlu0 %4101
    %4105 = vrot.lane.b32.xlu0 %v4066, 120
    %v4106 = vpop.permute.xlu0 %4105
    %4107 = vrot.lane.b32.xlu0 %v4067, 120
    %v4108 = vpop.permute.xlu0 %4107
    %4109 = vrot.lane.b32.xlu0 %v4066, 112
    %v4110 = vpop.permute.xlu0 %4109
    %4111 = vrot.lane.b32.xlu0 %v4067, 112
    %v4112 = vpop.permute.xlu0 %4111
    %4113 = vrot.lane.b32.xlu0 %v4066, 104
    %v4114 = vpop.permute.xlu0 %4113
    %4115 = vrot.lane.b32.xlu0 %v4067, 104
    %v4116 = vpop.permute.xlu0 %4115
    %4117 = vrot.lane.b32.xlu0 %v4054, 96
    %v4118 = vpop.permute.xlu0 %4117
    %v4119 = vsel %vm601, %v4044, 0
    %v4121 = vsel %vm601, %v4118, 0
    %4123 = vmatprep.subr.mxu0 0.0
    %4124 = vmatpush1.xpose.msra.mxu0 %v4121
    %4125 = vmatprep.subr.mxu0 0.0
    %4126 = vmatpush1.xpose.msra.mxu0 0.0
    %4127 = vmatprep.subr.mxu0 0.0
    %4128 = vmatpush1.xpose.msra.mxu0 0.0
    %4129 = vmatprep.subr.mxu0 0.0
    %4130 = vmatpush1.xpose.msra.mxu0 0.0
    %4131 = vmatprep.subr.mxu0 0.0
    %4132 = vmatpush1.xpose.msra.mxu0 0.0
    %4133 = vmatprep.subr.mxu0 0.0
    %4134 = vmatpush1.xpose.msra.mxu0 0.0
    %4135 = vmatprep.subr.mxu0 0.0
    %4136 = vmatpush1.xpose.msra.mxu0 0.0
    %4137 = vmatprep.subr.mxu0 0.0
    %4138 = vmatpush1.xpose.msra.mxu0 0.0
    %4139 = vmatprep.subr.mxu0 0.0
    %4140 = vmatpush1.xpose.msra.mxu0 0.0
    %4141 = vmatprep.subr.mxu0 0.0
    %4142 = vmatpush1.xpose.msra.mxu0 0.0
    %4143 = vmatprep.subr.mxu0 0.0
    %4144 = vmatpush1.xpose.msra.mxu0 0.0
    %4145 = vmatprep.subr.mxu0 0.0
    %4146 = vmatpush1.xpose.msra.mxu0 0.0
    %4147 = vmatprep.subr.mxu0 0.0
    %4148 = vmatpush1.xpose.msra.mxu0 0.0
    %4149 = vmatprep.subr.mxu0 0.0
    %4150 = vmatpush1.xpose.msra.mxu0 0.0
    %4151 = vmatprep.subr.mxu0 0.0
    %4152 = vmatpush1.xpose.msra.mxu0 0.0
    %4153 = vmatprep.subr.mxu0 0.0
    %4154 = vmatpush1.xpose.msra.mxu0 0.0
    %4155 = vmatprep.subr.mxu0 0.0
    %4156 = vmatpush1.xpose.msra.mxu0 0.0
    %4157 = vmatprep.subr.mxu0 0.0
    %4158 = vmatpush1.xpose.msra.mxu0 0.0
    %4159 = vmatprep.subr.mxu0 0.0
    %4160 = vmatpush1.xpose.msra.mxu0 0.0
    %4161 = vmatprep.subr.mxu0 0.0
    %4162 = vmatpush1.xpose.msra.mxu0 0.0
    %4163 = vmatprep.subr.mxu0 0.0
    %4164 = vmatpush1.xpose.msra.mxu0 0.0
    %4165 = vmatprep.subr.mxu0 0.0
    %4166 = vmatpush1.xpose.msra.mxu0 0.0
    %4167 = vmatprep.subr.mxu0 0.0
    %4168 = vmatpush1.xpose.msra.mxu0 0.0
    %4169 = vmatprep.subr.mxu0 0.0
    %4170 = vmatpush1.xpose.msra.mxu0 0.0
    %4171 = vmatprep.subr.mxu0 0.0
    %4172 = vmatpush1.xpose.msra.mxu0 0.0
    %4173 = vmatprep.subr.mxu0 0.0
    %4174 = vmatpush1.xpose.msra.mxu0 0.0
    %4175 = vmatprep.subr.mxu0 0.0
    %4176 = vmatpush1.xpose.msra.mxu0 0.0
    %4177 = vmatprep.subr.mxu0 0.0
    %4178 = vmatpush1.xpose.msra.mxu0 0.0
    %4179 = vmatprep.subr.mxu0 0.0
    %4180 = vmatpush1.xpose.msra.mxu0 0.0
    %4181 = vmatprep.subr.mxu0 0.0
    %4182 = vmatpush1.xpose.msra.mxu0 0.0
    %4183 = vmatprep.subr.mxu0 0.0
    %4184 = vmatpush1.xpose.msra.mxu0 0.0
    %4185 = vmatprep.subr.mxu0 0.0
    %4186 = vmatpush1.xpose.msra.mxu0 0.0
    %4187 = vmatprep.mubr.f32.mxu0 0.0
    %4188 = vmatmul.mubr.f32.gmra.mrb[0].mxu0 %v4119
    %v4189 = vpop.f32.mrb[0].mxu0
    %v4190 = vadd.f32 0.0, %v4189
    %v4191 = vpop.f32.mrb[0].mxu0
    %4192 = vdwg.mxu0
    %4193 = vrot.lane.b32.xlu0 %v4055, 96
    %v4194 = vpop.permute.xlu0 %4193
    %v4195 = vsel %vm601, %v4045, 0
    %v4197 = vsel %vm601, %v4194, 0
    %4199 = vmatprep.subr.mxu0 0.0
    %4200 = vmatpush1.xpose.msra.mxu0 %v4197
    %4201 = vmatprep.subr.mxu0 0.0
    %4202 = vmatpush1.xpose.msra.mxu0 0.0
    %4203 = vmatprep.subr.mxu0 0.0
    %4204 = vmatpush1.xpose.msra.mxu0 0.0
    %4205 = vmatprep.subr.mxu0 0.0
    %4206 = vmatpush1.xpose.msra.mxu0 0.0
    %4207 = vmatprep.subr.mxu0 0.0
    %4208 = vmatpush1.xpose.msra.mxu0 0.0
    %4209 = vmatprep.subr.mxu0 0.0
    %4210 = vmatpush1.xpose.msra.mxu0 0.0
    %4211 = vmatprep.subr.mxu0 0.0
    %4212 = vmatpush1.xpose.msra.mxu0 0.0
    %4213 = vmatprep.subr.mxu0 0.0
    %4214 = vmatpush1.xpose.msra.mxu0 0.0
    %4215 = vmatprep.subr.mxu0 0.0
    %4216 = vmatpush1.xpose.msra.mxu0 0.0
    %4217 = vmatprep.subr.mxu0 0.0
    %4218 = vmatpush1.xpose.msra.mxu0 0.0
    %4219 = vmatprep.subr.mxu0 0.0
    %4220 = vmatpush1.xpose.msra.mxu0 0.0
    %4221 = vmatprep.subr.mxu0 0.0
    %4222 = vmatpush1.xpose.msra.mxu0 0.0
    %4223 = vmatprep.subr.mxu0 0.0
    %4224 = vmatpush1.xpose.msra.mxu0 0.0
    %4225 = vmatprep.subr.mxu0 0.0
    %4226 = vmatpush1.xpose.msra.mxu0 0.0
    %4227 = vmatprep.subr.mxu0 0.0
    %4228 = vmatpush1.xpose.msra.mxu0 0.0
    %4229 = vmatprep.subr.mxu0 0.0
    %4230 = vmatpush1.xpose.msra.mxu0 0.0
    %4231 = vmatprep.subr.mxu0 0.0
    %4232 = vmatpush1.xpose.msra.mxu0 0.0
    %4233 = vmatprep.subr.mxu0 0.0
    %4234 = vmatpush1.xpose.msra.mxu0 0.0
    %4235 = vmatprep.subr.mxu0 0.0
    %4236 = vmatpush1.xpose.msra.mxu0 0.0
    %4237 = vmatprep.subr.mxu0 0.0
    %4238 = vmatpush1.xpose.msra.mxu0 0.0
    %4239 = vmatprep.subr.mxu0 0.0
    %4240 = vmatpush1.xpose.msra.mxu0 0.0
    %4241 = vmatprep.subr.mxu0 0.0
    %4242 = vmatpush1.xpose.msra.mxu0 0.0
    %4243 = vmatprep.subr.mxu0 0.0
    %4244 = vmatpush1.xpose.msra.mxu0 0.0
    %4245 = vmatprep.subr.mxu0 0.0
    %4246 = vmatpush1.xpose.msra.mxu0 0.0
    %4247 = vmatprep.subr.mxu0 0.0
    %4248 = vmatpush1.xpose.msra.mxu0 0.0
    %4249 = vmatprep.subr.mxu0 0.0
    %4250 = vmatpush1.xpose.msra.mxu0 0.0
    %4251 = vmatprep.subr.mxu0 0.0
    %4252 = vmatpush1.xpose.msra.mxu0 0.0
    %4253 = vmatprep.subr.mxu0 0.0
    %4254 = vmatpush1.xpose.msra.mxu0 0.0
    %4255 = vmatprep.subr.mxu0 0.0
    %4256 = vmatpush1.xpose.msra.mxu0 0.0
    %4257 = vmatprep.subr.mxu0 0.0
    %4258 = vmatpush1.xpose.msra.mxu0 0.0
    %4259 = vmatprep.subr.mxu0 0.0
    %4260 = vmatpush1.xpose.msra.mxu0 0.0
    %4261 = vmatprep.subr.mxu0 0.0
    %4262 = vmatpush1.xpose.msra.mxu0 0.0
    %4263 = vmatprep.mubr.f32.mxu0 0.0
    %4264 = vmatmul.mubr.f32.gmra.mrb[0].mxu0 %v4195
    %v4265 = vpop.f32.mrb[0].mxu0
    %v4266 = vadd.f32 0.0, %v4265
    %v4267 = vpop.f32.mrb[0].mxu0
    %4268 = vdwg.mxu0
    %4269 = vrot.lane.b32.xlu0 %v4092, 96
    %v4270 = vpop.permute.xlu0 %4269
    %v4271 = vsel %vm601, %v4078, 0
    %v4273 = vsel %vm601, %v4270, 0
    %4275 = vmatprep.subr.mxu0 0.0
    %4276 = vmatpush1.xpose.msra.mxu0 %v4273
    %4277 = vmatprep.subr.mxu0 0.0
    %4278 = vmatpush1.xpose.msra.mxu0 0.0
    %4279 = vmatprep.subr.mxu0 0.0
    %4280 = vmatpush1.xpose.msra.mxu0 0.0
    %4281 = vmatprep.subr.mxu0 0.0
    %4282 = vmatpush1.xpose.msra.mxu0 0.0
    %4283 = vmatprep.subr.mxu0 0.0
    %4284 = vmatpush1.xpose.msra.mxu0 0.0
    %4285 = vmatprep.subr.mxu0 0.0
    %4286 = vmatpush1.xpose.msra.mxu0 0.0
    %4287 = vmatprep.subr.mxu0 0.0
    %4288 = vmatpush1.xpose.msra.mxu0 0.0
    %4289 = vmatprep.subr.mxu0 0.0
    %4290 = vmatpush1.xpose.msra.mxu0 0.0
    %4291 = vmatprep.subr.mxu0 0.0
    %4292 = vmatpush1.xpose.msra.mxu0 0.0
    %4293 = vmatprep.subr.mxu0 0.0
    %4294 = vmatpush1.xpose.msra.mxu0 0.0
    %4295 = vmatprep.subr.mxu0 0.0
    %4296 = vmatpush1.xpose.msra.mxu0 0.0
    %4297 = vmatprep.subr.mxu0 0.0
    %4298 = vmatpush1.xpose.msra.mxu0 0.0
    %4299 = vmatprep.subr.mxu0 0.0
    %4300 = vmatpush1.xpose.msra.mxu0 0.0
    %4301 = vmatprep.subr.mxu0 0.0
    %4302 = vmatpush1.xpose.msra.mxu0 0.0
    %4303 = vmatprep.subr.mxu0 0.0
    %4304 = vmatpush1.xpose.msra.mxu0 0.0
    %4305 = vmatprep.subr.mxu0 0.0
    %4306 = vmatpush1.xpose.msra.mxu0 0.0
    %4307 = vmatprep.subr.mxu0 0.0
    %4308 = vmatpush1.xpose.msra.mxu0 0.0
    %4309 = vmatprep.subr.mxu0 0.0
    %4310 = vmatpush1.xpose.msra.mxu0 0.0
    %4311 = vmatprep.subr.mxu0 0.0
    %4312 = vmatpush1.xpose.msra.mxu0 0.0
    %4313 = vmatprep.subr.mxu0 0.0
    %4314 = vmatpush1.xpose.msra.mxu0 0.0
    %4315 = vmatprep.subr.mxu0 0.0
    %4316 = vmatpush1.xpose.msra.mxu0 0.0
    %4317 = vmatprep.subr.mxu0 0.0
    %4318 = vmatpush1.xpose.msra.mxu0 0.0
    %4319 = vmatprep.subr.mxu0 0.0
    %4320 = vmatpush1.xpose.msra.mxu0 0.0
    %4321 = vmatprep.subr.mxu0 0.0
    %4322 = vmatpush1.xpose.msra.mxu0 0.0
    %4323 = vmatprep.subr.mxu0 0.0
    %4324 = vmatpush1.xpose.msra.mxu0 0.0
    %4325 = vmatprep.subr.mxu0 0.0
    %4326 = vmatpush1.xpose.msra.mxu0 0.0
    %4327 = vmatprep.subr.mxu0 0.0
    %4328 = vmatpush1.xpose.msra.mxu0 0.0
    %4329 = vmatprep.subr.mxu0 0.0
    %4330 = vmatpush1.xpose.msra.mxu0 0.0
    %4331 = vmatprep.subr.mxu0 0.0
    %4332 = vmatpush1.xpose.msra.mxu0 0.0
    %4333 = vmatprep.subr.mxu0 0.0
    %4334 = vmatpush1.xpose.msra.mxu0 0.0
    %4335 = vmatprep.subr.mxu0 0.0
    %4336 = vmatpush1.xpose.msra.mxu0 0.0
    %4337 = vmatprep.subr.mxu0 0.0
    %4338 = vmatpush1.xpose.msra.mxu0 0.0
    %4339 = vmatprep.mubr.f32.mxu0 0.0
    %4340 = vmatmul.mubr.f32.gmra.mrb[0].mxu0 %v4271
    %v4341 = vpop.f32.mrb[0].mxu0
    %v4342 = vadd.f32 0.0, %v4341
    %v4343 = vpop.f32.mrb[0].mxu0
    %4344 = vdwg.mxu0
    %4345 = vrot.lane.b32.xlu0 %v4094, 96
    %v4346 = vpop.permute.xlu0 %4345
    %v4347 = vsel %vm601, %v4080, 0
    %v4349 = vsel %vm601, %v4346, 0
    %4351 = vmatprep.subr.mxu0 0.0
    %4352 = vmatpush1.xpose.msra.mxu0 %v4349
    %4353 = vmatprep.subr.mxu0 0.0
    %4354 = vmatpush1.xpose.msra.mxu0 0.0
    %4355 = vmatprep.subr.mxu0 0.0
    %4356 = vmatpush1.xpose.msra.mxu0 0.0
    %4357 = vmatprep.subr.mxu0 0.0
    %4358 = vmatpush1.xpose.msra.mxu0 0.0
    %4359 = vmatprep.subr.mxu0 0.0
    %4360 = vmatpush1.xpose.msra.mxu0 0.0
    %4361 = vmatprep.subr.mxu0 0.0
    %4362 = vmatpush1.xpose.msra.mxu0 0.0
    %4363 = vmatprep.subr.mxu0 0.0
    %4364 = vmatpush1.xpose.msra.mxu0 0.0
    %4365 = vmatprep.subr.mxu0 0.0
    %4366 = vmatpush1.xpose.msra.mxu0 0.0
    %4367 = vmatprep.subr.mxu0 0.0
    %4368 = vmatpush1.xpose.msra.mxu0 0.0
    %4369 = vmatprep.subr.mxu0 0.0
    %4370 = vmatpush1.xpose.msra.mxu0 0.0
    %4371 = vmatprep.subr.mxu0 0.0
    %4372 = vmatpush1.xpose.msra.mxu0 0.0
    %4373 = vmatprep.subr.mxu0 0.0
    %4374 = vmatpush1.xpose.msra.mxu0 0.0
    %4375 = vmatprep.subr.mxu0 0.0
    %4376 = vmatpush1.xpose.msra.mxu0 0.0
    %4377 = vmatprep.subr.mxu0 0.0
    %4378 = vmatpush1.xpose.msra.mxu0 0.0
    %4379 = vmatprep.subr.mxu0 0.0
    %4380 = vmatpush1.xpose.msra.mxu0 0.0
    %4381 = vmatprep.subr.mxu0 0.0
    %4382 = vmatpush1.xpose.msra.mxu0 0.0
    %4383 = vmatprep.subr.mxu0 0.0
    %4384 = vmatpush1.xpose.msra.mxu0 0.0
    %4385 = vmatprep.subr.mxu0 0.0
    %4386 = vmatpush1.xpose.msra.mxu0 0.0
    %4387 = vmatprep.subr.mxu0 0.0
    %4388 = vmatpush1.xpose.msra.mxu0 0.0
    %4389 = vmatprep.subr.mxu0 0.0
    %4390 = vmatpush1.xpose.msra.mxu0 0.0
    %4391 = vmatprep.subr.mxu0 0.0
    %4392 = vmatpush1.xpose.msra.mxu0 0.0
    %4393 = vmatprep.subr.mxu0 0.0
    %4394 = vmatpush1.xpose.msra.mxu0 0.0
    %4395 = vmatprep.subr.mxu0 0.0
    %4396 = vmatpush1.xpose.msra.mxu0 0.0
    %4397 = vmatprep.subr.mxu0 0.0
    %4398 = vmatpush1.xpose.msra.mxu0 0.0
    %4399 = vmatprep.subr.mxu0 0.0
    %4400 = vmatpush1.xpose.msra.mxu0 0.0
    %4401 = vmatprep.subr.mxu0 0.0
    %4402 = vmatpush1.xpose.msra.mxu0 0.0
    %4403 = vmatprep.subr.mxu0 0.0
    %4404 = vmatpush1.xpose.msra.mxu0 0.0
    %4405 = vmatprep.subr.mxu0 0.0
    %4406 = vmatpush1.xpose.msra.mxu0 0.0
    %4407 = vmatprep.subr.mxu0 0.0
    %4408 = vmatpush1.xpose.msra.mxu0 0.0
    %4409 = vmatprep.subr.mxu0 0.0
    %4410 = vmatpush1.xpose.msra.mxu0 0.0
    %4411 = vmatprep.subr.mxu0 0.0
    %4412 = vmatpush1.xpose.msra.mxu0 0.0
    %4413 = vmatprep.subr.mxu0 0.0
    %4414 = vmatpush1.xpose.msra.mxu0 0.0
    %4415 = vmatprep.mubr.f32.mxu0 0.0
    %4416 = vmatmul.mubr.f32.gmra.mrb[0].mxu0 %v4347
    %v4417 = vpop.f32.mrb[0].mxu0
    %v4418 = vadd.f32 0.0, %v4417
    %v4419 = vpop.f32.mrb[0].mxu0
    %4420 = vdwg.mxu0
    %4421 = vrot.lane.b32.xlu0 %v4096, 96
    %v4422 = vpop.permute.xlu0 %4421
    %v4423 = vsel %vm601, %v4082, 0
    %v4425 = vsel %vm601, %v4422, 0
    %4427 = vmatprep.subr.mxu0 0.0
    %4428 = vmatpush1.xpose.msra.mxu0 %v4425
    %4429 = vmatprep.subr.mxu0 0.0
    %4430 = vmatpush1.xpose.msra.mxu0 0.0
    %4431 = vmatprep.subr.mxu0 0.0
    %4432 = vmatpush1.xpose.msra.mxu0 0.0
    %4433 = vmatprep.subr.mxu0 0.0
    %4434 = vmatpush1.xpose.msra.mxu0 0.0
    %4435 = vmatprep.subr.mxu0 0.0
    %4436 = vmatpush1.xpose.msra.mxu0 0.0
    %4437 = vmatprep.subr.mxu0 0.0
    %4438 = vmatpush1.xpose.msra.mxu0 0.0
    %4439 = vmatprep.subr.mxu0 0.0
    %4440 = vmatpush1.xpose.msra.mxu0 0.0
    %4441 = vmatprep.subr.mxu0 0.0
    %4442 = vmatpush1.xpose.msra.mxu0 0.0
    %4443 = vmatprep.subr.mxu0 0.0
    %4444 = vmatpush1.xpose.msra.mxu0 0.0
    %4445 = vmatprep.subr.mxu0 0.0
    %4446 = vmatpush1.xpose.msra.mxu0 0.0
    %4447 = vmatprep.subr.mxu0 0.0
    %4448 = vmatpush1.xpose.msra.mxu0 0.0
    %4449 = vmatprep.subr.mxu0 0.0
    %4450 = vmatpush1.xpose.msra.mxu0 0.0
    %4451 = vmatprep.subr.mxu0 0.0
    %4452 = vmatpush1.xpose.msra.mxu0 0.0
    %4453 = vmatprep.subr.mxu0 0.0
    %4454 = vmatpush1.xpose.msra.mxu0 0.0
    %4455 = vmatprep.subr.mxu0 0.0
    %4456 = vmatpush1.xpose.msra.mxu0 0.0
    %4457 = vmatprep.subr.mxu0 0.0
    %4458 = vmatpush1.xpose.msra.mxu0 0.0
    %4459 = vmatprep.subr.mxu0 0.0
    %4460 = vmatpush1.xpose.msra.mxu0 0.0
    %4461 = vmatprep.subr.mxu0 0.0
    %4462 = vmatpush1.xpose.msra.mxu0 0.0
    %4463 = vmatprep.subr.mxu0 0.0
    %4464 = vmatpush1.xpose.msra.mxu0 0.0
    %4465 = vmatprep.subr.mxu0 0.0
    %4466 = vmatpush1.xpose.msra.mxu0 0.0
    %4467 = vmatprep.subr.mxu0 0.0
    %4468 = vmatpush1.xpose.msra.mxu0 0.0
    %4469 = vmatprep.subr.mxu0 0.0
    %4470 = vmatpush1.xpose.msra.mxu0 0.0
    %4471 = vmatprep.subr.mxu0 0.0
    %4472 = vmatpush1.xpose.msra.mxu0 0.0
    %4473 = vmatprep.subr.mxu0 0.0
    %4474 = vmatpush1.xpose.msra.mxu0 0.0
    %4475 = vmatprep.subr.mxu0 0.0
    %4476 = vmatpush1.xpose.msra.mxu0 0.0
    %4477 = vmatprep.subr.mxu0 0.0
    %4478 = vmatpush1.xpose.msra.mxu0 0.0
    %4479 = vmatprep.subr.mxu0 0.0
    %4480 = vmatpush1.xpose.msra.mxu0 0.0
    %4481 = vmatprep.subr.mxu0 0.0
    %4482 = vmatpush1.xpose.msra.mxu0 0.0
    %4483 = vmatprep.subr.mxu0 0.0
    %4484 = vmatpush1.xpose.msra.mxu0 0.0
    %4485 = vmatprep.subr.mxu0 0.0
    %4486 = vmatpush1.xpose.msra.mxu0 0.0
    %4487 = vmatprep.subr.mxu0 0.0
    %4488 = vmatpush1.xpose.msra.mxu0 0.0
    %4489 = vmatprep.subr.mxu0 0.0
    %4490 = vmatpush1.xpose.msra.mxu0 0.0
    %4491 = vmatprep.mubr.f32.mxu0 0.0
    %4492 = vmatmul.mubr.f32.gmra.mrb[0].mxu0 %v4423
    %v4493 = vpop.f32.mrb[0].mxu0
    %v4494 = vadd.f32 0.0, %v4493
    %v4495 = vpop.f32.mrb[0].mxu0
    %4496 = vdwg.mxu0
    %4497 = vrot.lane.b32.xlu0 %v4098, 96
    %v4498 = vpop.permute.xlu0 %4497
    %v4499 = vsel %vm601, %v4084, 0
    %v4501 = vsel %vm601, %v4498, 0
    %4503 = vmatprep.subr.mxu0 0.0
    %4504 = vmatpush1.xpose.msra.mxu0 %v4501
    %4505 = vmatprep.subr.mxu0 0.0
    %4506 = vmatpush1.xpose.msra.mxu0 0.0
    %4507 = vmatprep.subr.mxu0 0.0
    %4508 = vmatpush1.xpose.msra.mxu0 0.0
    %4509 = vmatprep.subr.mxu0 0.0
    %4510 = vmatpush1.xpose.msra.mxu0 0.0
    %4511 = vmatprep.subr.mxu0 0.0
    %4512 = vmatpush1.xpose.msra.mxu0 0.0
    %4513 = vmatprep.subr.mxu0 0.0
    %4514 = vmatpush1.xpose.msra.mxu0 0.0
    %4515 = vmatprep.subr.mxu0 0.0
    %4516 = vmatpush1.xpose.msra.mxu0 0.0
    %4517 = vmatprep.subr.mxu0 0.0
    %4518 = vmatpush1.xpose.msra.mxu0 0.0
    %4519 = vmatprep.subr.mxu0 0.0
    %4520 = vmatpush1.xpose.msra.mxu0 0.0
    %4521 = vmatprep.subr.mxu0 0.0
    %4522 = vmatpush1.xpose.msra.mxu0 0.0
    %4523 = vmatprep.subr.mxu0 0.0
    %4524 = vmatpush1.xpose.msra.mxu0 0.0
    %4525 = vmatprep.subr.mxu0 0.0
    %4526 = vmatpush1.xpose.msra.mxu0 0.0
    %4527 = vmatprep.subr.mxu0 0.0
    %4528 = vmatpush1.xpose.msra.mxu0 0.0
    %4529 = vmatprep.subr.mxu0 0.0
    %4530 = vmatpush1.xpose.msra.mxu0 0.0
    %4531 = vmatprep.subr.mxu0 0.0
    %4532 = vmatpush1.xpose.msra.mxu0 0.0
    %4533 = vmatprep.subr.mxu0 0.0
    %4534 = vmatpush1.xpose.msra.mxu0 0.0
    %4535 = vmatprep.subr.mxu0 0.0
    %4536 = vmatpush1.xpose.msra.mxu0 0.0
    %4537 = vmatprep.subr.mxu0 0.0
    %4538 = vmatpush1.xpose.msra.mxu0 0.0
    %4539 = vmatprep.subr.mxu0 0.0
    %4540 = vmatpush1.xpose.msra.mxu0 0.0
    %4541 = vmatprep.subr.mxu0 0.0
    %4542 = vmatpush1.xpose.msra.mxu0 0.0
    %4543 = vmatprep.subr.mxu0 0.0
    %4544 = vmatpush1.xpose.msra.mxu0 0.0
    %4545 = vmatprep.subr.mxu0 0.0
    %4546 = vmatpush1.xpose.msra.mxu0 0.0
    %4547 = vmatprep.subr.mxu0 0.0
    %4548 = vmatpush1.xpose.msra.mxu0 0.0
    %4549 = vmatprep.subr.mxu0 0.0
    %4550 = vmatpush1.xpose.msra.mxu0 0.0
    %4551 = vmatprep.subr.mxu0 0.0
    %4552 = vmatpush1.xpose.msra.mxu0 0.0
    %4553 = vmatprep.subr.mxu0 0.0
    %4554 = vmatpush1.xpose.msra.mxu0 0.0
    %4555 = vmatprep.subr.mxu0 0.0
    %4556 = vmatpush1.xpose.msra.mxu0 0.0
    %4557 = vmatprep.subr.mxu0 0.0
    %4558 = vmatpush1.xpose.msra.mxu0 0.0
    %4559 = vmatprep.subr.mxu0 0.0
    %4560 = vmatpush1.xpose.msra.mxu0 0.0
    %4561 = vmatprep.subr.mxu0 0.0
    %4562 = vmatpush1.xpose.msra.mxu0 0.0
    %4563 = vmatprep.subr.mxu0 0.0
    %4564 = vmatpush1.xpose.msra.mxu0 0.0
    %4565 = vmatprep.subr.mxu0 0.0
    %4566 = vmatpush1.xpose.msra.mxu0 0.0
    %4567 = vmatprep.mubr.f32.mxu0 0.0
    %4568 = vmatmul.mubr.f32.gmra.mrb[0].mxu0 %v4499
    %v4569 = vpop.f32.mrb[0].mxu0
    %v4570 = vadd.f32 0.0, %v4569
    %v4571 = vpop.f32.mrb[0].mxu0
    %4572 = vdwg.mxu0
    %4573 = vrot.lane.b32.xlu0 %v4100, 96
    %v4574 = vpop.permute.xlu0 %4573
    %v4575 = vsel %vm601, %v4086, 0
    %v4577 = vsel %vm601, %v4574, 0
    %4579 = vmatprep.subr.mxu0 0.0
    %4580 = vmatpush1.xpose.msra.mxu0 %v4577
    %4581 = vmatprep.subr.mxu0 0.0
    %4582 = vmatpush1.xpose.msra.mxu0 0.0
    %4583 = vmatprep.subr.mxu0 0.0
    %4584 = vmatpush1.xpose.msra.mxu0 0.0
    %4585 = vmatprep.subr.mxu0 0.0
    %4586 = vmatpush1.xpose.msra.mxu0 0.0
    %4587 = vmatprep.subr.mxu0 0.0
    %4588 = vmatpush1.xpose.msra.mxu0 0.0
    %4589 = vmatprep.subr.mxu0 0.0
    %4590 = vmatpush1.xpose.msra.mxu0 0.0
    %4591 = vmatprep.subr.mxu0 0.0
    %4592 = vmatpush1.xpose.msra.mxu0 0.0
    %4593 = vmatprep.subr.mxu0 0.0
    %4594 = vmatpush1.xpose.msra.mxu0 0.0
    %4595 = vmatprep.subr.mxu0 0.0
    %4596 = vmatpush1.xpose.msra.mxu0 0.0
    %4597 = vmatprep.subr.mxu0 0.0
    %4598 = vmatpush1.xpose.msra.mxu0 0.0
    %4599 = vmatprep.subr.mxu0 0.0
    %4600 = vmatpush1.xpose.msra.mxu0 0.0
    %4601 = vmatprep.subr.mxu0 0.0
    %4602 = vmatpush1.xpose.msra.mxu0 0.0
    %4603 = vmatprep.subr.mxu0 0.0
    %4604 = vmatpush1.xpose.msra.mxu0 0.0
    %4605 = vmatprep.subr.mxu0 0.0
    %4606 = vmatpush1.xpose.msra.mxu0 0.0
    %4607 = vmatprep.subr.mxu0 0.0
    %4608 = vmatpush1.xpose.msra.mxu0 0.0
    %4609 = vmatprep.subr.mxu0 0.0
    %4610 = vmatpush1.xpose.msra.mxu0 0.0
    %4611 = vmatprep.subr.mxu0 0.0
    %4612 = vmatpush1.xpose.msra.mxu0 0.0
    %4613 = vmatprep.subr.mxu0 0.0
    %4614 = vmatpush1.xpose.msra.mxu0 0.0
    %4615 = vmatprep.subr.mxu0 0.0
    %4616 = vmatpush1.xpose.msra.mxu0 0.0
    %4617 = vmatprep.subr.mxu0 0.0
    %4618 = vmatpush1.xpose.msra.mxu0 0.0
    %4619 = vmatprep.subr.mxu0 0.0
    %4620 = vmatpush1.xpose.msra.mxu0 0.0
    %4621 = vmatprep.subr.mxu0 0.0
    %4622 = vmatpush1.xpose.msra.mxu0 0.0
    %4623 = vmatprep.subr.mxu0 0.0
    %4624 = vmatpush1.xpose.msra.mxu0 0.0
    %4625 = vmatprep.subr.mxu0 0.0
    %4626 = vmatpush1.xpose.msra.mxu0 0.0
    %4627 = vmatprep.subr.mxu0 0.0
    %4628 = vmatpush1.xpose.msra.mxu0 0.0
    %4629 = vmatprep.subr.mxu0 0.0
    %4630 = vmatpush1.xpose.msra.mxu0 0.0
    %4631 = vmatprep.subr.mxu0 0.0
    %4632 = vmatpush1.xpose.msra.mxu0 0.0
    %4633 = vmatprep.subr.mxu0 0.0
    %4634 = vmatpush1.xpose.msra.mxu0 0.0
    %4635 = vmatprep.subr.mxu0 0.0
    %4636 = vmatpush1.xpose.msra.mxu0 0.0
    %4637 = vmatprep.subr.mxu0 0.0
    %4638 = vmatpush1.xpose.msra.mxu0 0.0
    %4639 = vmatprep.subr.mxu0 0.0
    %4640 = vmatpush1.xpose.msra.mxu0 0.0
    %4641 = vmatprep.subr.mxu0 0.0
    %4642 = vmatpush1.xpose.msra.mxu0 0.0
    %4643 = vmatprep.mubr.f32.mxu0 0.0
    %4644 = vmatmul.mubr.f32.gmra.mrb[0].mxu0 %v4575
    %v4645 = vpop.f32.mrb[0].mxu0
    %v4646 = vadd.f32 0.0, %v4645
    %v4647 = vpop.f32.mrb[0].mxu0
    %4648 = vdwg.mxu0
    %4649 = vrot.lane.b32.xlu0 %v4102, 96
    %v4650 = vpop.permute.xlu0 %4649
    %v4651 = vsel %vm601, %v4088, 0
    %v4653 = vsel %vm601, %v4650, 0
    %4655 = vmatprep.subr.mxu0 0.0
    %4656 = vmatpush1.xpose.msra.mxu0 %v4653
    %4657 = vmatprep.subr.mxu0 0.0
    %4658 = vmatpush1.xpose.msra.mxu0 0.0
    %4659 = vmatprep.subr.mxu0 0.0
    %4660 = vmatpush1.xpose.msra.mxu0 0.0
    %4661 = vmatprep.subr.mxu0 0.0
    %4662 = vmatpush1.xpose.msra.mxu0 0.0
    %4663 = vmatprep.subr.mxu0 0.0
    %4664 = vmatpush1.xpose.msra.mxu0 0.0
    %4665 = vmatprep.subr.mxu0 0.0
    %4666 = vmatpush1.xpose.msra.mxu0 0.0
    %4667 = vmatprep.subr.mxu0 0.0
    %4668 = vmatpush1.xpose.msra.mxu0 0.0
    %4669 = vmatprep.subr.mxu0 0.0
    %4670 = vmatpush1.xpose.msra.mxu0 0.0
    %4671 = vmatprep.subr.mxu0 0.0
    %4672 = vmatpush1.xpose.msra.mxu0 0.0
    %4673 = vmatprep.subr.mxu0 0.0
    %4674 = vmatpush1.xpose.msra.mxu0 0.0
    %4675 = vmatprep.subr.mxu0 0.0
    %4676 = vmatpush1.xpose.msra.mxu0 0.0
    %4677 = vmatprep.subr.mxu0 0.0
    %4678 = vmatpush1.xpose.msra.mxu0 0.0
    %4679 = vmatprep.subr.mxu0 0.0
    %4680 = vmatpush1.xpose.msra.mxu0 0.0
    %4681 = vmatprep.subr.mxu0 0.0
    %4682 = vmatpush1.xpose.msra.mxu0 0.0
    %4683 = vmatprep.subr.mxu0 0.0
    %4684 = vmatpush1.xpose.msra.mxu0 0.0
    %4685 = vmatprep.subr.mxu0 0.0
    %4686 = vmatpush1.xpose.msra.mxu0 0.0
    %4687 = vmatprep.subr.mxu0 0.0
    %4688 = vmatpush1.xpose.msra.mxu0 0.0
    %4689 = vmatprep.subr.mxu0 0.0
    %4690 = vmatpush1.xpose.msra.mxu0 0.0
    %4691 = vmatprep.subr.mxu0 0.0
    %4692 = vmatpush1.xpose.msra.mxu0 0.0
    %4693 = vmatprep.subr.mxu0 0.0
    %4694 = vmatpush1.xpose.msra.mxu0 0.0
    %4695 = vmatprep.subr.mxu0 0.0
    %4696 = vmatpush1.xpose.msra.mxu0 0.0
    %4697 = vmatprep.subr.mxu0 0.0
    %4698 = vmatpush1.xpose.msra.mxu0 0.0
    %4699 = vmatprep.subr.mxu0 0.0
    %4700 = vmatpush1.xpose.msra.mxu0 0.0
    %4701 = vmatprep.subr.mxu0 0.0
    %4702 = vmatpush1.xpose.msra.mxu0 0.0
    %4703 = vmatprep.subr.mxu0 0.0
    %4704 = vmatpush1.xpose.msra.mxu0 0.0
    %4705 = vmatprep.subr.mxu0 0.0
    %4706 = vmatpush1.xpose.msra.mxu0 0.0
    %4707 = vmatprep.subr.mxu0 0.0
    %4708 = vmatpush1.xpose.msra.mxu0 0.0
    %4709 = vmatprep.subr.mxu0 0.0
    %4710 = vmatpush1.xpose.msra.mxu0 0.0
    %4711 = vmatprep.subr.mxu0 0.0
    %4712 = vmatpush1.xpose.msra.mxu0 0.0
    %4713 = vmatprep.subr.mxu0 0.0
    %4714 = vmatpush1.xpose.msra.mxu0 0.0
    %4715 = vmatprep.subr.mxu0 0.0
    %4716 = vmatpush1.xpose.msra.mxu0 0.0
    %4717 = vmatprep.subr.mxu0 0.0
    %4718 = vmatpush1.xpose.msra.mxu0 0.0
    %4719 = vmatprep.mubr.f32.mxu0 0.0
    %4720 = vmatmul.mubr.f32.gmra.mrb[0].mxu0 %v4651
    %v4721 = vpop.f32.mrb[0].mxu0
    %v4722 = vadd.f32 0.0, %v4721
    %v4723 = vpop.f32.mrb[0].mxu0
    %4724 = vdwg.mxu0
    %v4725 = vsel %vm601, %v4190, -inf
    %4726 = vmax.xlane.f32.xlu0 %v4725
    %v4727 = vpop.xlane.xlu0 %4726
    %v4728 = vsel %vm601, %v4266, -inf
    %4729 = vmax.xlane.f32.xlu0 %v4728
    %v4730 = vpop.xlane.xlu0 %4729
    %v4731 = vsel %vm601, %v4342, -inf
    %4732 = vmax.xlane.f32.xlu0 %v4731
    %v4733 = vpop.xlane.xlu0 %4732
    %v4734 = vsel %vm601, %v4418, -inf
    %4735 = vmax.xlane.f32.xlu0 %v4734
    %v4736 = vpop.xlane.xlu0 %4735
    %v4737 = vsel %vm601, %v4494, -inf
    %4738 = vmax.xlane.f32.xlu0 %v4737
    %v4739 = vpop.xlane.xlu0 %4738
    %v4740 = vsel %vm601, %v4570, -inf
    %4741 = vmax.xlane.f32.xlu0 %v4740
    %v4742 = vpop.xlane.xlu0 %4741
    %v4743 = vsel %vm601, %v4646, -inf
    %4744 = vmax.xlane.f32.xlu0 %v4743
    %v4745 = vpop.xlane.xlu0 %4744
    %v4746 = vsel %vm601, %v4722, -inf
    %4747 = vmax.xlane.f32.xlu0 %v4746
    %v4748 = vpop.xlane.xlu0 %4747
    %v4749 = vsub.f32 %v4190, %v4727
    %v4750 = vsub.f32 %v4266, %v4730
    %v4751 = vsub.f32 %v4342, %v4733
    %v4752 = vsub.f32 %v4418, %v4736
    %v4753 = vsub.f32 %v4494, %v4739
    %v4754 = vsub.f32 %v4570, %v4742
    %v4755 = vsub.f32 %v4646, %v4745
    %v4756 = vsub.f32 %v4722, %v4748
    %v4757 = vmul.f32 %v4749, 1.442695
    %v4758 = vpow.pop %v4757
    %v4759 = vmul.f32 %v4750, 1.442695
    %v4760 = vpow.pop %v4759
    %v4761 = vmul.f32 %v4751, 1.442695
    %v4762 = vpow.pop %v4761
    %v4763 = vmul.f32 %v4752, 1.442695
    %v4764 = vpow.pop %v4763
    %v4765 = vmul.f32 %v4753, 1.442695
    %v4766 = vpow.pop %v4765
    %v4767 = vmul.f32 %v4754, 1.442695
    %v4768 = vpow.pop %v4767
    %v4769 = vmul.f32 %v4755, 1.442695
    %v4770 = vpow.pop %v4769
    %v4771 = vmul.f32 %v4756, 1.442695
    %v4772 = vpow.pop %v4771
    %v4773 = vsel %vm601, %v4758, 0.0
    %4774 = vadd.xlane.f32.xlu0 %v4773
    %v4775 = vpop.xlane.xlu0 %4774
    %v4776 = vsel %vm601, %v4760, 0.0
    %4777 = vadd.xlane.f32.xlu0 %v4776
    %v4778 = vpop.xlane.xlu0 %4777
    %v4779 = vsel %vm601, %v4762, 0.0
    %4780 = vadd.xlane.f32.xlu0 %v4779
    %v4781 = vpop.xlane.xlu0 %4780
    %v4782 = vsel %vm601, %v4764, 0.0
    %4783 = vadd.xlane.f32.xlu0 %v4782
    %v4784 = vpop.xlane.xlu0 %4783
    %v4785 = vsel %vm601, %v4766, 0.0
    %4786 = vadd.xlane.f32.xlu0 %v4785
    %v4787 = vpop.xlane.xlu0 %4786
    %v4788 = vsel %vm601, %v4768, 0.0
    %4789 = vadd.xlane.f32.xlu0 %v4788
    %v4790 = vpop.xlane.xlu0 %4789
    %v4791 = vsel %vm601, %v4770, 0.0
    %4792 = vadd.xlane.f32.xlu0 %v4791
    %v4793 = vpop.xlane.xlu0 %4792
    %v4794 = vsel %vm601, %v4772, 0.0
    %4795 = vadd.xlane.f32.xlu0 %v4794
    %v4796 = vpop.xlane.xlu0 %4795
    %v4797 = vrcp.pop %v4775
    %v4798 = vrcp.pop %v4778
    %v4799 = vrcp.pop %v4781
    %v4800 = vrcp.pop %v4784
    %v4801 = vrcp.pop %v4787
    %v4802 = vrcp.pop %v4790
    %v4803 = vrcp.pop %v4793
    %v4804 = vrcp.pop %v4796
    %v4805 = vmul.f32 %v4758, %v4797
    %v4806 = vmul.f32 %v4760, %v4798
    %v4807 = vmul.f32 %v4762, %v4799
    %v4808 = vmul.f32 %v4764, %v4800
    %v4809 = vmul.f32 %v4766, %v4801
    %v4810 = vmul.f32 %v4768, %v4802
    %v4811 = vmul.f32 %v4770, %v4803
    %v4812 = vmul.f32 %v4772, %v4804
    %4813 = vrot.lane.b32.xlu0 %v4066, 64
    %v4814 = vpop.permute.xlu0 %4813
    %v4817 = vsel %vm601, %v4805, 0
    %4819 = vmatprep.subr.mxu0 0.0
    %4820 = vmatpush1.msra.mxu0 %v4814
    %4821 = vmatprep.subr.mxu0 0.0
    %4822 = vmatpush1.msra.mxu0 0.0
    %4823 = vmatprep.subr.mxu0 0.0
    %4824 = vmatpush1.msra.mxu0 0.0
    %4825 = vmatprep.subr.mxu0 0.0
    %4826 = vmatpush1.msra.mxu0 0.0
    %4827 = vmatprep.subr.mxu0 0.0
    %4828 = vmatpush1.msra.mxu0 0.0
    %4829 = vmatprep.subr.mxu0 0.0
    %4830 = vmatpush1.msra.mxu0 0.0
    %4831 = vmatprep.subr.mxu0 0.0
    %4832 = vmatpush1.msra.mxu0 0.0
    %4833 = vmatprep.subr.mxu0 0.0
    %4834 = vmatpush1.msra.mxu0 0.0
    %4835 = vmatprep.subr.mxu0 0.0
    %4836 = vmatpush1.msra.mxu0 0.0
    %4837 = vmatprep.subr.mxu0 0.0
    %4838 = vmatpush1.msra.mxu0 0.0
    %4839 = vmatprep.subr.mxu0 0.0
    %4840 = vmatpush1.msra.mxu0 0.0
    %4841 = vmatprep.subr.mxu0 0.0
    %4842 = vmatpush1.msra.mxu0 0.0
    %4843 = vmatprep.subr.mxu0 0.0
    %4844 = vmatpush1.msra.mxu0 0.0
    %4845 = vmatprep.subr.mxu0 0.0
    %4846 = vmatpush1.msra.mxu0 0.0
    %4847 = vmatprep.subr.mxu0 0.0
    %4848 = vmatpush1.msra.mxu0 0.0
    %4849 = vmatprep.subr.mxu0 0.0
    %4850 = vmatpush1.msra.mxu0 0.0
    %4851 = vmatprep.subr.mxu0 0.0
    %4852 = vmatpush1.msra.mxu0 0.0
    %4853 = vmatprep.subr.mxu0 0.0
    %4854 = vmatpush1.msra.mxu0 0.0
    %4855 = vmatprep.subr.mxu0 0.0
    %4856 = vmatpush1.msra.mxu0 0.0
    %4857 = vmatprep.subr.mxu0 0.0
    %4858 = vmatpush1.msra.mxu0 0.0
    %4859 = vmatprep.subr.mxu0 0.0
    %4860 = vmatpush1.msra.mxu0 0.0
    %4861 = vmatprep.subr.mxu0 0.0
    %4862 = vmatpush1.msra.mxu0 0.0
    %4863 = vmatprep.subr.mxu0 0.0
    %4864 = vmatpush1.msra.mxu0 0.0
    %4865 = vmatprep.subr.mxu0 0.0
    %4866 = vmatpush1.msra.mxu0 0.0
    %4867 = vmatprep.subr.mxu0 0.0
    %4868 = vmatpush1.msra.mxu0 0.0
    %4869 = vmatprep.subr.mxu0 0.0
    %4870 = vmatpush1.msra.mxu0 0.0
    %4871 = vmatprep.subr.mxu0 0.0
    %4872 = vmatpush1.msra.mxu0 0.0
    %4873 = vmatprep.subr.mxu0 0.0
    %4874 = vmatpush1.msra.mxu0 0.0
    %4875 = vmatprep.subr.mxu0 0.0
    %4876 = vmatpush1.msra.mxu0 0.0
    %4877 = vmatprep.subr.mxu0 0.0
    %4878 = vmatpush1.msra.mxu0 0.0
    %4879 = vmatprep.subr.mxu0 0.0
    %4880 = vmatpush1.msra.mxu0 0.0
    %4881 = vmatprep.subr.mxu0 0.0
    %4882 = vmatpush1.msra.mxu0 0.0
    %4883 = vmatprep.mubr.f32.mxu0 0.0
    %4884 = vmatmul.mubr.f32.gmra.mrb[0].mxu0 %v4817
    %v4885 = vpop.f32.mrb[0].mxu0
    %v4886 = vadd.f32 0.0, %v4885
    %v4887 = vpop.f32.mrb[0].mxu0
    %4888 = vdwg.mxu0
    %4889 = vrot.lane.b32.xlu0 %v4067, 64
    %v4890 = vpop.permute.xlu0 %4889
    %v4893 = vsel %vm601, %v4806, 0
    %4895 = vmatprep.subr.mxu0 0.0
    %4896 = vmatpush1.msra.mxu0 %v4890
    %4897 = vmatprep.subr.mxu0 0.0
    %4898 = vmatpush1.msra.mxu0 0.0
    %4899 = vmatprep.subr.mxu0 0.0
    %4900 = vmatpush1.msra.mxu0 0.0
    %4901 = vmatprep.subr.mxu0 0.0
    %4902 = vmatpush1.msra.mxu0 0.0
    %4903 = vmatprep.subr.mxu0 0.0
    %4904 = vmatpush1.msra.mxu0 0.0
    %4905 = vmatprep.subr.mxu0 0.0
    %4906 = vmatpush1.msra.mxu0 0.0
    %4907 = vmatprep.subr.mxu0 0.0
    %4908 = vmatpush1.msra.mxu0 0.0
    %4909 = vmatprep.subr.mxu0 0.0
    %4910 = vmatpush1.msra.mxu0 0.0
    %4911 = vmatprep.subr.mxu0 0.0
    %4912 = vmatpush1.msra.mxu0 0.0
    %4913 = vmatprep.subr.mxu0 0.0
    %4914 = vmatpush1.msra.mxu0 0.0
    %4915 = vmatprep.subr.mxu0 0.0
    %4916 = vmatpush1.msra.mxu0 0.0
    %4917 = vmatprep.subr.mxu0 0.0
    %4918 = vmatpush1.msra.mxu0 0.0
    %4919 = vmatprep.subr.mxu0 0.0
    %4920 = vmatpush1.msra.mxu0 0.0
    %4921 = vmatprep.subr.mxu0 0.0
    %4922 = vmatpush1.msra.mxu0 0.0
    %4923 = vmatprep.subr.mxu0 0.0
    %4924 = vmatpush1.msra.mxu0 0.0
    %4925 = vmatprep.subr.mxu0 0.0
    %4926 = vmatpush1.msra.mxu0 0.0
    %4927 = vmatprep.subr.mxu0 0.0
    %4928 = vmatpush1.msra.mxu0 0.0
    %4929 = vmatprep.subr.mxu0 0.0
    %4930 = vmatpush1.msra.mxu0 0.0
    %4931 = vmatprep.subr.mxu0 0.0
    %4932 = vmatpush1.msra.mxu0 0.0
    %4933 = vmatprep.subr.mxu0 0.0
    %4934 = vmatpush1.msra.mxu0 0.0
    %4935 = vmatprep.subr.mxu0 0.0
    %4936 = vmatpush1.msra.mxu0 0.0
    %4937 = vmatprep.subr.mxu0 0.0
    %4938 = vmatpush1.msra.mxu0 0.0
    %4939 = vmatprep.subr.mxu0 0.0
    %4940 = vmatpush1.msra.mxu0 0.0
    %4941 = vmatprep.subr.mxu0 0.0
    %4942 = vmatpush1.msra.mxu0 0.0
    %4943 = vmatprep.subr.mxu0 0.0
    %4944 = vmatpush1.msra.mxu0 0.0
    %4945 = vmatprep.subr.mxu0 0.0
    %4946 = vmatpush1.msra.mxu0 0.0
    %4947 = vmatprep.subr.mxu0 0.0
    %4948 = vmatpush1.msra.mxu0 0.0
    %4949 = vmatprep.subr.mxu0 0.0
    %4950 = vmatpush1.msra.mxu0 0.0
    %4951 = vmatprep.subr.mxu0 0.0
    %4952 = vmatpush1.msra.mxu0 0.0
    %4953 = vmatprep.subr.mxu0 0.0
    %4954 = vmatpush1.msra.mxu0 0.0
    %4955 = vmatprep.subr.mxu0 0.0
    %4956 = vmatpush1.msra.mxu0 0.0
    %4957 = vmatprep.subr.mxu0 0.0
    %4958 = vmatpush1.msra.mxu0 0.0
    %4959 = vmatprep.mubr.f32.mxu0 0.0
    %4960 = vmatmul.mubr.f32.gmra.mrb[0].mxu0 %v4893
    %v4961 = vpop.f32.mrb[0].mxu0
    %v4962 = vadd.f32 0.0, %v4961
    %v4963 = vpop.f32.mrb[0].mxu0
    %4964 = vdwg.mxu0
    %4965 = vrot.lane.b32.xlu0 %v4106, 64
    %v4966 = vpop.permute.xlu0 %4965
    %v4969 = vsel %vm601, %v4807, 0
    %4971 = vmatprep.subr.mxu0 0.0
    %4972 = vmatpush1.msra.mxu0 %v4966
    %4973 = vmatprep.subr.mxu0 0.0
    %4974 = vmatpush1.msra.mxu0 0.0
    %4975 = vmatprep.subr.mxu0 0.0
    %4976 = vmatpush1.msra.mxu0 0.0
    %4977 = vmatprep.subr.mxu0 0.0
    %4978 = vmatpush1.msra.mxu0 0.0
    %4979 = vmatprep.subr.mxu0 0.0
    %4980 = vmatpush1.msra.mxu0 0.0
    %4981 = vmatprep.subr.mxu0 0.0
    %4982 = vmatpush1.msra.mxu0 0.0
    %4983 = vmatprep.subr.mxu0 0.0
    %4984 = vmatpush1.msra.mxu0 0.0
    %4985 = vmatprep.subr.mxu0 0.0
    %4986 = vmatpush1.msra.mxu0 0.0
    %4987 = vmatprep.subr.mxu0 0.0
    %4988 = vmatpush1.msra.mxu0 0.0
    %4989 = vmatprep.subr.mxu0 0.0
    %4990 = vmatpush1.msra.mxu0 0.0
    %4991 = vmatprep.subr.mxu0 0.0
    %4992 = vmatpush1.msra.mxu0 0.0
    %4993 = vmatprep.subr.mxu0 0.0
    %4994 = vmatpush1.msra.mxu0 0.0
    %4995 = vmatprep.subr.mxu0 0.0
    %4996 = vmatpush1.msra.mxu0 0.0
    %4997 = vmatprep.subr.mxu0 0.0
    %4998 = vmatpush1.msra.mxu0 0.0
    %4999 = vmatprep.subr.mxu0 0.0
    %5000 = vmatpush1.msra.mxu0 0.0
    %5001 = vmatprep.subr.mxu0 0.0
    %5002 = vmatpush1.msra.mxu0 0.0
    %5003 = vmatprep.subr.mxu0 0.0
    %5004 = vmatpush1.msra.mxu0 0.0
    %5005 = vmatprep.subr.mxu0 0.0
    %5006 = vmatpush1.msra.mxu0 0.0
    %5007 = vmatprep.subr.mxu0 0.0
    %5008 = vmatpush1.msra.mxu0 0.0
    %5009 = vmatprep.subr.mxu0 0.0
    %5010 = vmatpush1.msra.mxu0 0.0
    %5011 = vmatprep.subr.mxu0 0.0
    %5012 = vmatpush1.msra.mxu0 0.0
    %5013 = vmatprep.subr.mxu0 0.0
    %5014 = vmatpush1.msra.mxu0 0.0
    %5015 = vmatprep.subr.mxu0 0.0
    %5016 = vmatpush1.msra.mxu0 0.0
    %5017 = vmatprep.subr.mxu0 0.0
    %5018 = vmatpush1.msra.mxu0 0.0
    %5019 = vmatprep.subr.mxu0 0.0
    %5020 = vmatpush1.msra.mxu0 0.0
    %5021 = vmatprep.subr.mxu0 0.0
    %5022 = vmatpush1.msra.mxu0 0.0
    %5023 = vmatprep.subr.mxu0 0.0
    %5024 = vmatpush1.msra.mxu0 0.0
    %5025 = vmatprep.subr.mxu0 0.0
    %5026 = vmatpush1.msra.mxu0 0.0
    %5027 = vmatprep.subr.mxu0 0.0
    %5028 = vmatpush1.msra.mxu0 0.0
    %5029 = vmatprep.subr.mxu0 0.0
    %5030 = vmatpush1.msra.mxu0 0.0
    %5031 = vmatprep.subr.mxu0 0.0
    %5032 = vmatpush1.msra.mxu0 0.0
    %5033 = vmatprep.subr.mxu0 0.0
    %5034 = vmatpush1.msra.mxu0 0.0
    %5035 = vmatprep.mubr.f32.mxu0 0.0
    %5036 = vmatmul.mubr.f32.gmra.mrb[0].mxu0 %v4969
    %v5037 = vpop.f32.mrb[0].mxu0
    %v5038 = vadd.f32 0.0, %v5037
    %v5039 = vpop.f32.mrb[0].mxu0
    %5040 = vdwg.mxu0
    %5041 = vrot.lane.b32.xlu0 %v4108, 64
    %v5042 = vpop.permute.xlu0 %5041
    %v5045 = vsel %vm601, %v4808, 0
    %5047 = vmatprep.subr.mxu0 0.0
    %5048 = vmatpush1.msra.mxu0 %v5042
    %5049 = vmatprep.subr.mxu0 0.0
    %5050 = vmatpush1.msra.mxu0 0.0
    %5051 = vmatprep.subr.mxu0 0.0
    %5052 = vmatpush1.msra.mxu0 0.0
    %5053 = vmatprep.subr.mxu0 0.0
    %5054 = vmatpush1.msra.mxu0 0.0
    %5055 = vmatprep.subr.mxu0 0.0
    %5056 = vmatpush1.msra.mxu0 0.0
    %5057 = vmatprep.subr.mxu0 0.0
    %5058 = vmatpush1.msra.mxu0 0.0
    %5059 = vmatprep.subr.mxu0 0.0
    %5060 = vmatpush1.msra.mxu0 0.0
    %5061 = vmatprep.subr.mxu0 0.0
    %5062 = vmatpush1.msra.mxu0 0.0
    %5063 = vmatprep.subr.mxu0 0.0
    %5064 = vmatpush1.msra.mxu0 0.0
    %5065 = vmatprep.subr.mxu0 0.0
    %5066 = vmatpush1.msra.mxu0 0.0
    %5067 = vmatprep.subr.mxu0 0.0
    %5068 = vmatpush1.msra.mxu0 0.0
    %5069 = vmatprep.subr.mxu0 0.0
    %5070 = vmatpush1.msra.mxu0 0.0
    %5071 = vmatprep.subr.mxu0 0.0
    %5072 = vmatpush1.msra.mxu0 0.0
    %5073 = vmatprep.subr.mxu0 0.0
    %5074 = vmatpush1.msra.mxu0 0.0
    %5075 = vmatprep.subr.mxu0 0.0
    %5076 = vmatpush1.msra.mxu0 0.0
    %5077 = vmatprep.subr.mxu0 0.0
    %5078 = vmatpush1.msra.mxu0 0.0
    %5079 = vmatprep.subr.mxu0 0.0
    %5080 = vmatpush1.msra.mxu0 0.0
    %5081 = vmatprep.subr.mxu0 0.0
    %5082 = vmatpush1.msra.mxu0 0.0
    %5083 = vmatprep.subr.mxu0 0.0
    %5084 = vmatpush1.msra.mxu0 0.0
    %5085 = vmatprep.subr.mxu0 0.0
    %5086 = vmatpush1.msra.mxu0 0.0
    %5087 = vmatprep.subr.mxu0 0.0
    %5088 = vmatpush1.msra.mxu0 0.0
    %5089 = vmatprep.subr.mxu0 0.0
    %5090 = vmatpush1.msra.mxu0 0.0
    %5091 = vmatprep.subr.mxu0 0.0
    %5092 = vmatpush1.msra.mxu0 0.0
    %5093 = vmatprep.subr.mxu0 0.0
    %5094 = vmatpush1.msra.mxu0 0.0
    %5095 = vmatprep.subr.mxu0 0.0
    %5096 = vmatpush1.msra.mxu0 0.0
    %5097 = vmatprep.subr.mxu0 0.0
    %5098 = vmatpush1.msra.mxu0 0.0
    %5099 = vmatprep.subr.mxu0 0.0
    %5100 = vmatpush1.msra.mxu0 0.0
    %5101 = vmatprep.subr.mxu0 0.0
    %5102 = vmatpush1.msra.mxu0 0.0
    %5103 = vmatprep.subr.mxu0 0.0
    %5104 = vmatpush1.msra.mxu0 0.0
    %5105 = vmatprep.subr.mxu0 0.0
    %5106 = vmatpush1.msra.mxu0 0.0
    %5107 = vmatprep.subr.mxu0 0.0
    %5108 = vmatpush1.msra.mxu0 0.0
    %5109 = vmatprep.subr.mxu0 0.0
    %5110 = vmatpush1.msra.mxu0 0.0
    %5111 = vmatprep.mubr.f32.mxu0 0.0
    %5112 = vmatmul.mubr.f32.gmra.mrb[0].mxu0 %v5045
    %v5113 = vpop.f32.mrb[0].mxu0
    %v5114 = vadd.f32 0.0, %v5113
    %v5115 = vpop.f32.mrb[0].mxu0
    %5116 = vdwg.mxu0
    %5117 = vrot.lane.b32.xlu0 %v4110, 64
    %v5118 = vpop.permute.xlu0 %5117
    %v5121 = vsel %vm601, %v4809, 0
    %5123 = vmatprep.subr.mxu0 0.0
    %5124 = vmatpush1.msra.mxu0 %v5118
    %5125 = vmatprep.subr.mxu0 0.0
    %5126 = vmatpush1.msra.mxu0 0.0
    %5127 = vmatprep.subr.mxu0 0.0
    %5128 = vmatpush1.msra.mxu0 0.0
    %5129 = vmatprep.subr.mxu0 0.0
    %5130 = vmatpush1.msra.mxu0 0.0
    %5131 = vmatprep.subr.mxu0 0.0
    %5132 = vmatpush1.msra.mxu0 0.0
    %5133 = vmatprep.subr.mxu0 0.0
    %5134 = vmatpush1.msra.mxu0 0.0
    %5135 = vmatprep.subr.mxu0 0.0
    %5136 = vmatpush1.msra.mxu0 0.0
    %5137 = vmatprep.subr.mxu0 0.0
    %5138 = vmatpush1.msra.mxu0 0.0
    %5139 = vmatprep.subr.mxu0 0.0
    %5140 = vmatpush1.msra.mxu0 0.0
    %5141 = vmatprep.subr.mxu0 0.0
    %5142 = vmatpush1.msra.mxu0 0.0
    %5143 = vmatprep.subr.mxu0 0.0
    %5144 = vmatpush1.msra.mxu0 0.0
    %5145 = vmatprep.subr.mxu0 0.0
    %5146 = vmatpush1.msra.mxu0 0.0
    %5147 = vmatprep.subr.mxu0 0.0
    %5148 = vmatpush1.msra.mxu0 0.0
    %5149 = vmatprep.subr.mxu0 0.0
    %5150 = vmatpush1.msra.mxu0 0.0
    %5151 = vmatprep.subr.mxu0 0.0
    %5152 = vmatpush1.msra.mxu0 0.0
    %5153 = vmatprep.subr.mxu0 0.0
    %5154 = vmatpush1.msra.mxu0 0.0
    %5155 = vmatprep.subr.mxu0 0.0
    %5156 = vmatpush1.msra.mxu0 0.0
    %5157 = vmatprep.subr.mxu0 0.0
    %5158 = vmatpush1.msra.mxu0 0.0
    %5159 = vmatprep.subr.mxu0 0.0
    %5160 = vmatpush1.msra.mxu0 0.0
    %5161 = vmatprep.subr.mxu0 0.0
    %5162 = vmatpush1.msra.mxu0 0.0
    %5163 = vmatprep.subr.mxu0 0.0
    %5164 = vmatpush1.msra.mxu0 0.0
    %5165 = vmatprep.subr.mxu0 0.0
    %5166 = vmatpush1.msra.mxu0 0.0
    %5167 = vmatprep.subr.mxu0 0.0
    %5168 = vmatpush1.msra.mxu0 0.0
    %5169 = vmatprep.subr.mxu0 0.0
    %5170 = vmatpush1.msra.mxu0 0.0
    %5171 = vmatprep.subr.mxu0 0.0
    %5172 = vmatpush1.msra.mxu0 0.0
    %5173 = vmatprep.subr.mxu0 0.0
    %5174 = vmatpush1.msra.mxu0 0.0
    %5175 = vmatprep.subr.mxu0 0.0
    %5176 = vmatpush1.msra.mxu0 0.0
    %5177 = vmatprep.subr.mxu0 0.0
    %5178 = vmatpush1.msra.mxu0 0.0
    %5179 = vmatprep.subr.mxu0 0.0
    %5180 = vmatpush1.msra.mxu0 0.0
    %5181 = vmatprep.subr.mxu0 0.0
    %5182 = vmatpush1.msra.mxu0 0.0
    %5183 = vmatprep.subr.mxu0 0.0
    %5184 = vmatpush1.msra.mxu0 0.0
    %5185 = vmatprep.subr.mxu0 0.0
    %5186 = vmatpush1.msra.mxu0 0.0
    %5187 = vmatprep.mubr.f32.mxu0 0.0
    %5188 = vmatmul.mubr.f32.gmra.mrb[0].mxu0 %v5121
    %v5189 = vpop.f32.mrb[0].mxu0
    %v5190 = vadd.f32 0.0, %v5189
    %v5191 = vpop.f32.mrb[0].mxu0
    %5192 = vdwg.mxu0
    %5193 = vrot.lane.b32.xlu0 %v4112, 64
    %v5194 = vpop.permute.xlu0 %5193
    %v5197 = vsel %vm601, %v4810, 0
    %5199 = vmatprep.subr.mxu0 0.0
    %5200 = vmatpush1.msra.mxu0 %v5194
    %5201 = vmatprep.subr.mxu0 0.0
    %5202 = vmatpush1.msra.mxu0 0.0
    %5203 = vmatprep.subr.mxu0 0.0
    %5204 = vmatpush1.msra.mxu0 0.0
    %5205 = vmatprep.subr.mxu0 0.0
    %5206 = vmatpush1.msra.mxu0 0.0
    %5207 = vmatprep.subr.mxu0 0.0
    %5208 = vmatpush1.msra.mxu0 0.0
    %5209 = vmatprep.subr.mxu0 0.0
    %5210 = vmatpush1.msra.mxu0 0.0
    %5211 = vmatprep.subr.mxu0 0.0
    %5212 = vmatpush1.msra.mxu0 0.0
    %5213 = vmatprep.subr.mxu0 0.0
    %5214 = vmatpush1.msra.mxu0 0.0
    %5215 = vmatprep.subr.mxu0 0.0
    %5216 = vmatpush1.msra.mxu0 0.0
    %5217 = vmatprep.subr.mxu0 0.0
    %5218 = vmatpush1.msra.mxu0 0.0
    %5219 = vmatprep.subr.mxu0 0.0
    %5220 = vmatpush1.msra.mxu0 0.0
    %5221 = vmatprep.subr.mxu0 0.0
    %5222 = vmatpush1.msra.mxu0 0.0
    %5223 = vmatprep.subr.mxu0 0.0
    %5224 = vmatpush1.msra.mxu0 0.0
    %5225 = vmatprep.subr.mxu0 0.0
    %5226 = vmatpush1.msra.mxu0 0.0
    %5227 = vmatprep.subr.mxu0 0.0
    %5228 = vmatpush1.msra.mxu0 0.0
    %5229 = vmatprep.subr.mxu0 0.0
    %5230 = vmatpush1.msra.mxu0 0.0
    %5231 = vmatprep.subr.mxu0 0.0
    %5232 = vmatpush1.msra.mxu0 0.0
    %5233 = vmatprep.subr.mxu0 0.0
    %5234 = vmatpush1.msra.mxu0 0.0
    %5235 = vmatprep.subr.mxu0 0.0
    %5236 = vmatpush1.msra.mxu0 0.0
    %5237 = vmatprep.subr.mxu0 0.0
    %5238 = vmatpush1.msra.mxu0 0.0
    %5239 = vmatprep.subr.mxu0 0.0
    %5240 = vmatpush1.msra.mxu0 0.0
    %5241 = vmatprep.subr.mxu0 0.0
    %5242 = vmatpush1.msra.mxu0 0.0
    %5243 = vmatprep.subr.mxu0 0.0
    %5244 = vmatpush1.msra.mxu0 0.0
    %5245 = vmatprep.subr.mxu0 0.0
    %5246 = vmatpush1.msra.mxu0 0.0
    %5247 = vmatprep.subr.mxu0 0.0
    %5248 = vmatpush1.msra.mxu0 0.0
    %5249 = vmatprep.subr.mxu0 0.0
    %5250 = vmatpush1.msra.mxu0 0.0
    %5251 = vmatprep.subr.mxu0 0.0
    %5252 = vmatpush1.msra.mxu0 0.0
    %5253 = vmatprep.subr.mxu0 0.0
    %5254 = vmatpush1.msra.mxu0 0.0
    %5255 = vmatprep.subr.mxu0 0.0
    %5256 = vmatpush1.msra.mxu0 0.0
    %5257 = vmatprep.subr.mxu0 0.0
    %5258 = vmatpush1.msra.mxu0 0.0
    %5259 = vmatprep.subr.mxu0 0.0
    %5260 = vmatpush1.msra.mxu0 0.0
    %5261 = vmatprep.subr.mxu0 0.0
    %5262 = vmatpush1.msra.mxu0 0.0
    %5263 = vmatprep.mubr.f32.mxu0 0.0
    %5264 = vmatmul.mubr.f32.gmra.mrb[0].mxu0 %v5197
    %v5265 = vpop.f32.mrb[0].mxu0
    %v5266 = vadd.f32 0.0, %v5265
    %v5267 = vpop.f32.mrb[0].mxu0
    %5268 = vdwg.mxu0
    %5269 = vrot.lane.b32.xlu0 %v4114, 64
    %v5270 = vpop.permute.xlu0 %5269
    %v5273 = vsel %vm601, %v4811, 0
    %5275 = vmatprep.subr.mxu0 0.0
    %5276 = vmatpush1.msra.mxu0 %v5270
    %5277 = vmatprep.subr.mxu0 0.0
    %5278 = vmatpush1.msra.mxu0 0.0
    %5279 = vmatprep.subr.mxu0 0.0
    %5280 = vmatpush1.msra.mxu0 0.0
    %5281 = vmatprep.subr.mxu0 0.0
    %5282 = vmatpush1.msra.mxu0 0.0
    %5283 = vmatprep.subr.mxu0 0.0
    %5284 = vmatpush1.msra.mxu0 0.0
    %5285 = vmatprep.subr.mxu0 0.0
    %5286 = vmatpush1.msra.mxu0 0.0
    %5287 = vmatprep.subr.mxu0 0.0
    %5288 = vmatpush1.msra.mxu0 0.0
    %5289 = vmatprep.subr.mxu0 0.0
    %5290 = vmatpush1.msra.mxu0 0.0
    %5291 = vmatprep.subr.mxu0 0.0
    %5292 = vmatpush1.msra.mxu0 0.0
    %5293 = vmatprep.subr.mxu0 0.0
    %5294 = vmatpush1.msra.mxu0 0.0
    %5295 = vmatprep.subr.mxu0 0.0
    %5296 = vmatpush1.msra.mxu0 0.0
    %5297 = vmatprep.subr.mxu0 0.0
    %5298 = vmatpush1.msra.mxu0 0.0
    %5299 = vmatprep.subr.mxu0 0.0
    %5300 = vmatpush1.msra.mxu0 0.0
    %5301 = vmatprep.subr.mxu0 0.0
    %5302 = vmatpush1.msra.mxu0 0.0
    %5303 = vmatprep.subr.mxu0 0.0
    %5304 = vmatpush1.msra.mxu0 0.0
    %5305 = vmatprep.subr.mxu0 0.0
    %5306 = vmatpush1.msra.mxu0 0.0
    %5307 = vmatprep.subr.mxu0 0.0
    %5308 = vmatpush1.msra.mxu0 0.0
    %5309 = vmatprep.subr.mxu0 0.0
    %5310 = vmatpush1.msra.mxu0 0.0
    %5311 = vmatprep.subr.mxu0 0.0
    %5312 = vmatpush1.msra.mxu0 0.0
    %5313 = vmatprep.subr.mxu0 0.0
    %5314 = vmatpush1.msra.mxu0 0.0
    %5315 = vmatprep.subr.mxu0 0.0
    %5316 = vmatpush1.msra.mxu0 0.0
    %5317 = vmatprep.subr.mxu0 0.0
    %5318 = vmatpush1.msra.mxu0 0.0
    %5319 = vmatprep.subr.mxu0 0.0
    %5320 = vmatpush1.msra.mxu0 0.0
    %5321 = vmatprep.subr.mxu0 0.0
    %5322 = vmatpush1.msra.mxu0 0.0
    %5323 = vmatprep.subr.mxu0 0.0
    %5324 = vmatpush1.msra.mxu0 0.0
    %5325 = vmatprep.subr.mxu0 0.0
    %5326 = vmatpush1.msra.mxu0 0.0
    %5327 = vmatprep.subr.mxu0 0.0
    %5328 = vmatpush1.msra.mxu0 0.0
    %5329 = vmatprep.subr.mxu0 0.0
    %5330 = vmatpush1.msra.mxu0 0.0
    %5331 = vmatprep.subr.mxu0 0.0
    %5332 = vmatpush1.msra.mxu0 0.0
    %5333 = vmatprep.subr.mxu0 0.0
    %5334 = vmatpush1.msra.mxu0 0.0
    %5335 = vmatprep.subr.mxu0 0.0
    %5336 = vmatpush1.msra.mxu0 0.0
    %5337 = vmatprep.subr.mxu0 0.0
    %5338 = vmatpush1.msra.mxu0 0.0
    %5339 = vmatprep.mubr.f32.mxu0 0.0
    %5340 = vmatmul.mubr.f32.gmra.mrb[0].mxu0 %v5273
    %v5341 = vpop.f32.mrb[0].mxu0
    %v5342 = vadd.f32 0.0, %v5341
    %v5343 = vpop.f32.mrb[0].mxu0
    %5344 = vdwg.mxu0
    %5345 = vrot.lane.b32.xlu0 %v4116, 64
    %v5346 = vpop.permute.xlu0 %5345
    %v5349 = vsel %vm601, %v4812, 0
    %5351 = vmatprep.subr.mxu0 0.0
    %5352 = vmatpush1.msra.mxu0 %v5346
    %5353 = vmatprep.subr.mxu0 0.0
    %5354 = vmatpush1.msra.mxu0 0.0
    %5355 = vmatprep.subr.mxu0 0.0
    %5356 = vmatpush1.msra.mxu0 0.0
    %5357 = vmatprep.subr.mxu0 0.0
    %5358 = vmatpush1.msra.mxu0 0.0
    %5359 = vmatprep.subr.mxu0 0.0
    %5360 = vmatpush1.msra.mxu0 0.0
    %5361 = vmatprep.subr.mxu0 0.0
    %5362 = vmatpush1.msra.mxu0 0.0
    %5363 = vmatprep.subr.mxu0 0.0
    %5364 = vmatpush1.msra.mxu0 0.0
    %5365 = vmatprep.subr.mxu0 0.0
    %5366 = vmatpush1.msra.mxu0 0.0
    %5367 = vmatprep.subr.mxu0 0.0
    %5368 = vmatpush1.msra.mxu0 0.0
    %5369 = vmatprep.subr.mxu0 0.0
    %5370 = vmatpush1.msra.mxu0 0.0
    %5371 = vmatprep.subr.mxu0 0.0
    %5372 = vmatpush1.msra.mxu0 0.0
    %5373 = vmatprep.subr.mxu0 0.0
    %5374 = vmatpush1.msra.mxu0 0.0
    %5375 = vmatprep.subr.mxu0 0.0
    %5376 = vmatpush1.msra.mxu0 0.0
    %5377 = vmatprep.subr.mxu0 0.0
    %5378 = vmatpush1.msra.mxu0 0.0
    %5379 = vmatprep.subr.mxu0 0.0
    %5380 = vmatpush1.msra.mxu0 0.0
    %5381 = vmatprep.subr.mxu0 0.0
    %5382 = vmatpush1.msra.mxu0 0.0
    %5383 = vmatprep.subr.mxu0 0.0
    %5384 = vmatpush1.msra.mxu0 0.0
    %5385 = vmatprep.subr.mxu0 0.0
    %5386 = vmatpush1.msra.mxu0 0.0
    %5387 = vmatprep.subr.mxu0 0.0
    %5388 = vmatpush1.msra.mxu0 0.0
    %5389 = vmatprep.subr.mxu0 0.0
    %5390 = vmatpush1.msra.mxu0 0.0
    %5391 = vmatprep.subr.mxu0 0.0
    %5392 = vmatpush1.msra.mxu0 0.0
    %5393 = vmatprep.subr.mxu0 0.0
    %5394 = vmatpush1.msra.mxu0 0.0
    %5395 = vmatprep.subr.mxu0 0.0
    %5396 = vmatpush1.msra.mxu0 0.0
    %5397 = vmatprep.subr.mxu0 0.0
    %5398 = vmatpush1.msra.mxu0 0.0
    %5399 = vmatprep.subr.mxu0 0.0
    %5400 = vmatpush1.msra.mxu0 0.0
    %5401 = vmatprep.subr.mxu0 0.0
    %5402 = vmatpush1.msra.mxu0 0.0
    %5403 = vmatprep.subr.mxu0 0.0
    %5404 = vmatpush1.msra.mxu0 0.0
    %5405 = vmatprep.subr.mxu0 0.0
    %5406 = vmatpush1.msra.mxu0 0.0
    %5407 = vmatprep.subr.mxu0 0.0
    %5408 = vmatpush1.msra.mxu0 0.0
    %5409 = vmatprep.subr.mxu0 0.0
    %5410 = vmatpush1.msra.mxu0 0.0
    %5411 = vmatprep.subr.mxu0 0.0
    %5412 = vmatpush1.msra.mxu0 0.0
    %5413 = vmatprep.subr.mxu0 0.0
    %5414 = vmatpush1.msra.mxu0 0.0
    %5415 = vmatprep.mubr.f32.mxu0 0.0
    %5416 = vmatmul.mubr.f32.gmra.mrb[0].mxu0 %v5349
    %v5417 = vpop.f32.mrb[0].mxu0
    %v5418 = vadd.f32 0.0, %v5417
    %v5419 = vpop.f32.mrb[0].mxu0
    %5420 = vdwg.mxu0
    %5423 = vrot.lane.b32.xlu0 %v5038, 8
    %v5424 = vpop.permute.xlu0 %5423
    %5425 = vrot.lane.b32.xlu0 %v5114, 8
    %v5426 = vpop.permute.xlu0 %5425
    %5431 = vrot.lane.b32.xlu0 %v5190, 16
    %v5432 = vpop.permute.xlu0 %5431
    %5433 = vrot.lane.b32.xlu0 %v5266, 16
    %v5434 = vpop.permute.xlu0 %5433
    %5439 = vrot.lane.b32.xlu0 %v5342, 24
    %v5440 = vpop.permute.xlu0 %5439
    %5441 = vrot.lane.b32.xlu0 %v5418, 24
    %v5442 = vpop.permute.xlu0 %5441
    %v5445 = vsel %vm601, %v4886, %v5424
    %v5446 = vsel %vm601, %v4962, %v5426
    %v5447 = vsel %vm1930, %v5445, %v5432
    %v5448 = vsel %vm1930, %v5446, %v5434
    %v5449 = vsel %vm1933, %v5447, %v5440
    %v5450 = vsel %vm1933, %v5448, %v5442
    %v5452 = vlaneseq
    %v5453 = vshrl.u32 %v5452, 7
    %v5454 = vsub.s32 0, %v5453
    %v5455 = vrot.slane %v4074, %v5454
    %v5458 = vsel %vm105, %v5449, 0
    %v5461 = vsel %vm105, %v5450, 0
    %5463 = vmatprep.subr.mxu0 0.0
    %5464 = vmatpush1.msra.mxu0 %v4069
    %5465 = vmatprep.subr.mxu0 0.0
    %5466 = vmatpush1.msra.mxu0 %v4070
    %5467 = vmatprep.subr.mxu0 0.0
    %5468 = vmatpush1.msra.mxu0 %v4071
    %5469 = vmatprep.subr.mxu0 0.0
    %5470 = vmatpush1.msra.mxu0 %v4072
    %5471 = vmatprep.subr.mxu0 0.0
    %5472 = vmatpush1.msra.mxu0 0.0
    %5473 = vmatprep.subr.mxu0 0.0
    %5474 = vmatpush1.msra.mxu0 0.0
    %5475 = vmatprep.subr.mxu0 0.0
    %5476 = vmatpush1.msra.mxu0 0.0
    %5477 = vmatprep.subr.mxu0 0.0
    %5478 = vmatpush1.msra.mxu0 0.0
    %5479 = vmatprep.subr.mxu0 0.0
    %5480 = vmatpush1.msra.mxu0 0.0
    %5481 = vmatprep.subr.mxu0 0.0
    %5482 = vmatpush1.msra.mxu0 0.0
    %5483 = vmatprep.subr.mxu0 0.0
    %5484 = vmatpush1.msra.mxu0 0.0
    %5485 = vmatprep.subr.mxu0 0.0
    %5486 = vmatpush1.msra.mxu0 0.0
    %5487 = vmatprep.subr.mxu0 0.0
    %5488 = vmatpush1.msra.mxu0 0.0
    %5489 = vmatprep.subr.mxu0 0.0
    %5490 = vmatpush1.msra.mxu0 0.0
    %5491 = vmatprep.subr.mxu0 0.0
    %5492 = vmatpush1.msra.mxu0 0.0
    %5493 = vmatprep.subr.mxu0 0.0
    %5494 = vmatpush1.msra.mxu0 0.0
    %5495 = vmatprep.subr.mxu0 0.0
    %5496 = vmatpush1.msra.mxu0 0.0
    %5497 = vmatprep.subr.mxu0 0.0
    %5498 = vmatpush1.msra.mxu0 0.0
    %5499 = vmatprep.subr.mxu0 0.0
    %5500 = vmatpush1.msra.mxu0 0.0
    %5501 = vmatprep.subr.mxu0 0.0
    %5502 = vmatpush1.msra.mxu0 0.0
    %5503 = vmatprep.subr.mxu0 0.0
    %5504 = vmatpush1.msra.mxu0 0.0
    %5505 = vmatprep.subr.mxu0 0.0
    %5506 = vmatpush1.msra.mxu0 0.0
    %5507 = vmatprep.subr.mxu0 0.0
    %5508 = vmatpush1.msra.mxu0 0.0
    %5509 = vmatprep.subr.mxu0 0.0
    %5510 = vmatpush1.msra.mxu0 0.0
    %5511 = vmatprep.subr.mxu0 0.0
    %5512 = vmatpush1.msra.mxu0 0.0
    %5513 = vmatprep.subr.mxu0 0.0
    %5514 = vmatpush1.msra.mxu0 0.0
    %5515 = vmatprep.subr.mxu0 0.0
    %5516 = vmatpush1.msra.mxu0 0.0
    %5517 = vmatprep.subr.mxu0 0.0
    %5518 = vmatpush1.msra.mxu0 0.0
    %5519 = vmatprep.subr.mxu0 0.0
    %5520 = vmatpush1.msra.mxu0 0.0
    %5521 = vmatprep.subr.mxu0 0.0
    %5522 = vmatpush1.msra.mxu0 0.0
    %5523 = vmatprep.subr.mxu0 0.0
    %5524 = vmatpush1.msra.mxu0 0.0
    %5525 = vmatprep.subr.mxu0 0.0
    %5526 = vmatpush1.msra.mxu0 0.0
    %5527 = vmatprep.mubr.f32.mxu0 0.0
    %5528 = vmatmul.mubr.f32.gmra.mrb[0].mxu0 %v5458
    %v5529 = vpop.f32.mrb[0].mxu0
    %v5530 = vadd.f32 %v5455, %v5529
    %v5531 = vpop.f32.mrb[0].mxu0
    %5532 = vmatprep.mubr.f32.mxu0 0.0
    %5533 = vmatmul.mubr.f32.gmra.mrb[0].mxu0 %v5461
    %v5534 = vpop.f32.mrb[0].mxu0
    %v5535 = vadd.f32 %v5455, %v5534
    %v5536 = vpop.f32.mrb[0].mxu0
    %5537 = vdwg.mxu0
    %v5538 = vadd.f32 %v3900, %v5530
    %v5539 = vadd.f32 %v3901, %v5535
    %s5540 = scalar_lea.vmem %s14, 4
    %v5541 = vld [vmem:[%s5540] sm:$0x1]
    %s5542 = scalar_lea.vmem %s14, 10
    %v5543 = vld [vmem:[%s5542] sm:$0x1]
    %v5544 = vsel %vm105, %v5538, 0.0
    %5545 = vadd.xlane.f32.xlu0 %v5544
    %v5546 = vpop.xlane.xlu0 %5545
    %v5547 = vsel %vm105, %v5539, 0.0
    %5548 = vadd.xlane.f32.xlu0 %v5547
    %v5549 = vpop.xlane.xlu0 %5548
    %v5550 = vmul.f32 %v5546, %v425
    %v5551 = vmul.f32 %v5549, %v425
    %v5552 = vmul.f32 %v5538, %v5538
    %v5553 = vmul.f32 %v5539, %v5539
    %v5554 = vsel %vm105, %v5552, 0.0
    %5555 = vadd.xlane.f32.xlu0 %v5554
    %v5556 = vpop.xlane.xlu0 %5555
    %v5557 = vsel %vm105, %v5553, 0.0
    %5558 = vadd.xlane.f32.xlu0 %v5557
    %v5559 = vpop.xlane.xlu0 %5558
    %v5560 = vmul.f32 %v5556, %v425
    %v5561 = vmul.f32 %v5559, %v425
    %v5562 = vsub.f32 %v5538, %v5550
    %v5563 = vsub.f32 %v5539, %v5551
    %v5564 = vmul.f32 %v5550, %v5550
    %v5565 = vmul.f32 %v5551, %v5551
    %v5566 = vsub.f32 %v5560, %v5564
    %v5567 = vsub.f32 %v5561, %v5565
    %v5568 = vadd.f32 %v5566, 1e-05
    %v5569 = vadd.f32 %v5567, 1e-05
    %v5570 = vrsqrt.pop %v5568
    %v5571 = vrsqrt.pop %v5569
    %v5572 = vmul.f32 %v5562, %v5570
    %v5573 = vmul.f32 %v5563, %v5571
    %v5575 = vlaneseq
    %v5576 = vshrl.u32 %v5575, 7
    %v5577 = vsub.s32 0, %v5576
    %v5578 = vrot.slane %v5541, %v5577
    %v5580 = vmul.f32 %v5572, %v5578
    %v5581 = vmul.f32 %v5573, %v5578
    %v5583 = vlaneseq
    %v5584 = vshrl.u32 %v5583, 7
    %v5585 = vsub.s32 0, %v5584
    %v5586 = vrot.slane %v5543, %v5585
    %v5588 = vadd.f32 %v5580, %v5586
    %v5589 = vadd.f32 %v5581, %v5586
    %s5590 = scalar_lea.vmem %s5, 96
    %v5591 = vld [vmem:[%s5590] sm:$0xff]
    %v5592 = vld [vmem:[%s5590 + $0x8] sm:$0xff]
    %v5593 = vld [vmem:[%s5590 + $0x10] sm:$0xff]
    %v5594 = vld [vmem:[%s5590 + $0x18] sm:$0xff]
    %5595 = vrot.lane.b32.xlu0 %v408, 96
    %v5596 = vpop.permute.xlu0 %5595
    %5597 = vrot.lane.b32.xlu0 %v414, 96
    %v5598 = vpop.permute.xlu0 %5597
    %v5602 = vsel %vm105, %v5588, 0
    %v5605 = vsel %vm105, %v5589, 0
    %5607 = vmatprep.subr.mxu0 0.0
    %5608 = vmatpush1.msra.mxu0 %v5591
    %5609 = vmatprep.subr.mxu0 0.0
    %5610 = vmatpush1.msra.mxu0 %v5592
    %5611 = vmatprep.subr.mxu0 0.0
    %5612 = vmatpush1.msra.mxu0 %v5593
    %5613 = vmatprep.subr.mxu0 0.0
    %5614 = vmatpush1.msra.mxu0 %v5594
    %5615 = vmatprep.subr.mxu0 0.0
    %5616 = vmatpush1.msra.mxu0 0.0
    %5617 = vmatprep.subr.mxu0 0.0
    %5618 = vmatpush1.msra.mxu0 0.0
    %5619 = vmatprep.subr.mxu0 0.0
    %5620 = vmatpush1.msra.mxu0 0.0
    %5621 = vmatprep.subr.mxu0 0.0
    %5622 = vmatpush1.msra.mxu0 0.0
    %5623 = vmatprep.subr.mxu0 0.0
    %5624 = vmatpush1.msra.mxu0 0.0
    %5625 = vmatprep.subr.mxu0 0.0
    %5626 = vmatpush1.msra.mxu0 0.0
    %5627 = vmatprep.subr.mxu0 0.0
    %5628 = vmatpush1.msra.mxu0 0.0
    %5629 = vmatprep.subr.mxu0 0.0
    %5630 = vmatpush1.msra.mxu0 0.0
    %5631 = vmatprep.subr.mxu0 0.0
    %5632 = vmatpush1.msra.mxu0 0.0
    %5633 = vmatprep.subr.mxu0 0.0
    %5634 = vmatpush1.msra.mxu0 0.0
    %5635 = vmatprep.subr.mxu0 0.0
    %5636 = vmatpush1.msra.mxu0 0.0
    %5637 = vmatprep.subr.mxu0 0.0
    %5638 = vmatpush1.msra.mxu0 0.0
    %5639 = vmatprep.subr.mxu0 0.0
    %5640 = vmatpush1.msra.mxu0 0.0
    %5641 = vmatprep.subr.mxu0 0.0
    %5642 = vmatpush1.msra.mxu0 0.0
    %5643 = vmatprep.subr.mxu0 0.0
    %5644 = vmatpush1.msra.mxu0 0.0
    %5645 = vmatprep.subr.mxu0 0.0
    %5646 = vmatpush1.msra.mxu0 0.0
    %5647 = vmatprep.subr.mxu0 0.0
    %5648 = vmatpush1.msra.mxu0 0.0
    %5649 = vmatprep.subr.mxu0 0.0
    %5650 = vmatpush1.msra.mxu0 0.0
    %5651 = vmatprep.subr.mxu0 0.0
    %5652 = vmatpush1.msra.mxu0 0.0
    %5653 = vmatprep.subr.mxu0 0.0
    %5654 = vmatpush1.msra.mxu0 0.0
    %5655 = vmatprep.subr.mxu0 0.0
    %5656 = vmatpush1.msra.mxu0 0.0
    %5657 = vmatprep.subr.mxu0 0.0
    %5658 = vmatpush1.msra.mxu0 0.0
    %5659 = vmatprep.subr.mxu0 0.0
    %5660 = vmatpush1.msra.mxu0 0.0
    %5661 = vmatprep.subr.mxu0 0.0
    %5662 = vmatpush1.msra.mxu0 0.0
    %5663 = vmatprep.subr.mxu0 0.0
    %5664 = vmatpush1.msra.mxu0 0.0
    %5665 = vmatprep.subr.mxu0 0.0
    %5666 = vmatpush1.msra.mxu0 0.0
    %5667 = vmatprep.subr.mxu0 0.0
    %5668 = vmatpush1.msra.mxu0 0.0
    %5669 = vmatprep.subr.mxu0 0.0
    %5670 = vmatpush1.msra.mxu0 0.0
    %5671 = vmatprep.mubr.f32.mxu0 0.0
    %5672 = vmatmul.mubr.f32.gmra.mrb[0].mxu0 %v5602
    %v5673 = vpop.f32.mrb[0].mxu0
    %v5674 = vadd.f32 %v5596, %v5673
    %v5675 = vpop.f32.mrb[0].mxu0
    %5676 = vmatprep.mubr.f32.mxu0 0.0
    %5677 = vmatmul.mubr.f32.gmra.mrb[0].mxu0 %v5605
    %v5678 = vpop.f32.mrb[0].mxu0
    %v5679 = vadd.f32 %v5598, %v5678
    %v5680 = vpop.f32.mrb[0].mxu0
    %5681 = vdwg.mxu0
    %s5682 = scalar_lea.vmem %s5, 160
    %v5683 = vld [vmem:[%s5682] sm:$0xff]
    %v5684 = vld [vmem:[%s5682 + $0x8] sm:$0xff]
    %v5685 = vld [vmem:[%s5682 + $0x10] sm:$0xff]
    %v5686 = vld [vmem:[%s5682 + $0x18] sm:$0xff]
    %s5687 = scalar_lea.vmem %s6, 6
    %v5688 = vld [vmem:[%s5687] sm:$0x1]
    %5691 = vrot.lane.b32.xlu0 %v5674, 120
    %v5692 = vpop.permute.xlu0 %5691
    %5693 = vrot.lane.b32.xlu0 %v5679, 120
    %v5694 = vpop.permute.xlu0 %5693
    %5695 = vrot.lane.b32.xlu0 %v5674, 112
    %v5696 = vpop.permute.xlu0 %5695
    %5697 = vrot.lane.b32.xlu0 %v5679, 112
    %v5698 = vpop.permute.xlu0 %5697
    %5699 = vrot.lane.b32.xlu0 %v5674, 104
    %v5700 = vpop.permute.xlu0 %5699
    %5701 = vrot.lane.b32.xlu0 %v5679, 104
    %v5702 = vpop.permute.xlu0 %5701
    %5703 = vrot.lane.b32.xlu0 %v185, 96
    %v5704 = vpop.permute.xlu0 %5703
    %5705 = vrot.lane.b32.xlu0 %v190, 96
    %v5706 = vpop.permute.xlu0 %5705
    %v5707 = vsel %vm601, %v5674, 0
    %v5709 = vsel %vm601, %v5704, 0
    %v5711 = vsel %vm601, %v5706, 0
    %5713 = vmatprep.subr.mxu0 0.0
    %5714 = vmatpush1.xpose.msra.mxu0 %v5709
    %5715 = vmatprep.subr.mxu0 0.0
    %5716 = vmatpush1.xpose.msra.mxu0 %v5711
    %5717 = vmatprep.subr.mxu0 0.0
    %5718 = vmatpush1.xpose.msra.mxu0 0.0
    %5719 = vmatprep.subr.mxu0 0.0
    %5720 = vmatpush1.xpose.msra.mxu0 0.0
    %5721 = vmatprep.subr.mxu0 0.0
    %5722 = vmatpush1.xpose.msra.mxu0 0.0
    %5723 = vmatprep.subr.mxu0 0.0
    %5724 = vmatpush1.xpose.msra.mxu0 0.0
    %5725 = vmatprep.subr.mxu0 0.0
    %5726 = vmatpush1.xpose.msra.mxu0 0.0
    %5727 = vmatprep.subr.mxu0 0.0
    %5728 = vmatpush1.xpose.msra.mxu0 0.0
    %5729 = vmatprep.subr.mxu0 0.0
    %5730 = vmatpush1.xpose.msra.mxu0 0.0
    %5731 = vmatprep.subr.mxu0 0.0
    %5732 = vmatpush1.xpose.msra.mxu0 0.0
    %5733 = vmatprep.subr.mxu0 0.0
    %5734 = vmatpush1.xpose.msra.mxu0 0.0
    %5735 = vmatprep.subr.mxu0 0.0
    %5736 = vmatpush1.xpose.msra.mxu0 0.0
    %5737 = vmatprep.subr.mxu0 0.0
    %5738 = vmatpush1.xpose.msra.mxu0 0.0
    %5739 = vmatprep.subr.mxu0 0.0
    %5740 = vmatpush1.xpose.msra.mxu0 0.0
    %5741 = vmatprep.subr.mxu0 0.0
    %5742 = vmatpush1.xpose.msra.mxu0 0.0
    %5743 = vmatprep.subr.mxu0 0.0
    %5744 = vmatpush1.xpose.msra.mxu0 0.0
    %5745 = vmatprep.subr.mxu0 0.0
    %5746 = vmatpush1.xpose.msra.mxu0 0.0
    %5747 = vmatprep.subr.mxu0 0.0
    %5748 = vmatpush1.xpose.msra.mxu0 0.0
    %5749 = vmatprep.subr.mxu0 0.0
    %5750 = vmatpush1.xpose.msra.mxu0 0.0
    %5751 = vmatprep.subr.mxu0 0.0
    %5752 = vmatpush1.xpose.msra.mxu0 0.0
    %5753 = vmatprep.subr.mxu0 0.0
    %5754 = vmatpush1.xpose.msra.mxu0 0.0
    %5755 = vmatprep.subr.mxu0 0.0
    %5756 = vmatpush1.xpose.msra.mxu0 0.0
    %5757 = vmatprep.subr.mxu0 0.0
    %5758 = vmatpush1.xpose.msra.mxu0 0.0
    %5759 = vmatprep.subr.mxu0 0.0
    %5760 = vmatpush1.xpose.msra.mxu0 0.0
    %5761 = vmatprep.subr.mxu0 0.0
    %5762 = vmatpush1.xpose.msra.mxu0 0.0
    %5763 = vmatprep.subr.mxu0 0.0
    %5764 = vmatpush1.xpose.msra.mxu0 0.0
    %5765 = vmatprep.subr.mxu0 0.0
    %5766 = vmatpush1.xpose.msra.mxu0 0.0
    %5767 = vmatprep.subr.mxu0 0.0
    %5768 = vmatpush1.xpose.msra.mxu0 0.0
    %5769 = vmatprep.subr.mxu0 0.0
    %5770 = vmatpush1.xpose.msra.mxu0 0.0
    %5771 = vmatprep.subr.mxu0 0.0
    %5772 = vmatpush1.xpose.msra.mxu0 0.0
    %5773 = vmatprep.subr.mxu0 0.0
    %5774 = vmatpush1.xpose.msra.mxu0 0.0
    %5775 = vmatprep.subr.mxu0 0.0
    %5776 = vmatpush1.xpose.msra.mxu0 0.0
    %5777 = vmatprep.mubr.f32.mxu0 0.0
    %5778 = vmatmul.mubr.f32.gmra.mrb[0].mxu0 %v5707
    %v5779 = vpop.f32.mrb[0].mxu0
    %v5780 = vadd.f32 0.0, %v5779
    %v5781 = vpop.f32.mrb[0].mxu0
    %5782 = vdwg.mxu0
    %5783 = vrot.lane.b32.xlu0 %v195, 96
    %v5784 = vpop.permute.xlu0 %5783
    %5785 = vrot.lane.b32.xlu0 %v200, 96
    %v5786 = vpop.permute.xlu0 %5785
    %v5787 = vsel %vm601, %v5679, 0
    %v5789 = vsel %vm601, %v5784, 0
    %v5791 = vsel %vm601, %v5786, 0
    %5793 = vmatprep.subr.mxu0 0.0
    %5794 = vmatpush1.xpose.msra.mxu0 %v5789
    %5795 = vmatprep.subr.mxu0 0.0
    %5796 = vmatpush1.xpose.msra.mxu0 %v5791
    %5797 = vmatprep.subr.mxu0 0.0
    %5798 = vmatpush1.xpose.msra.mxu0 0.0
    %5799 = vmatprep.subr.mxu0 0.0
    %5800 = vmatpush1.xpose.msra.mxu0 0.0
    %5801 = vmatprep.subr.mxu0 0.0
    %5802 = vmatpush1.xpose.msra.mxu0 0.0
    %5803 = vmatprep.subr.mxu0 0.0
    %5804 = vmatpush1.xpose.msra.mxu0 0.0
    %5805 = vmatprep.subr.mxu0 0.0
    %5806 = vmatpush1.xpose.msra.mxu0 0.0
    %5807 = vmatprep.subr.mxu0 0.0
    %5808 = vmatpush1.xpose.msra.mxu0 0.0
    %5809 = vmatprep.subr.mxu0 0.0
    %5810 = vmatpush1.xpose.msra.mxu0 0.0
    %5811 = vmatprep.subr.mxu0 0.0
    %5812 = vmatpush1.xpose.msra.mxu0 0.0
    %5813 = vmatprep.subr.mxu0 0.0
    %5814 = vmatpush1.xpose.msra.mxu0 0.0
    %5815 = vmatprep.subr.mxu0 0.0
    %5816 = vmatpush1.xpose.msra.mxu0 0.0
    %5817 = vmatprep.subr.mxu0 0.0
    %5818 = vmatpush1.xpose.msra.mxu0 0.0
    %5819 = vmatprep.subr.mxu0 0.0
    %5820 = vmatpush1.xpose.msra.mxu0 0.0
    %5821 = vmatprep.subr.mxu0 0.0
    %5822 = vmatpush1.xpose.msra.mxu0 0.0
    %5823 = vmatprep.subr.mxu0 0.0
    %5824 = vmatpush1.xpose.msra.mxu0 0.0
    %5825 = vmatprep.subr.mxu0 0.0
    %5826 = vmatpush1.xpose.msra.mxu0 0.0
    %5827 = vmatprep.subr.mxu0 0.0
    %5828 = vmatpush1.xpose.msra.mxu0 0.0
    %5829 = vmatprep.subr.mxu0 0.0
    %5830 = vmatpush1.xpose.msra.mxu0 0.0
    %5831 = vmatprep.subr.mxu0 0.0
    %5832 = vmatpush1.xpose.msra.mxu0 0.0
    %5833 = vmatprep.subr.mxu0 0.0
    %5834 = vmatpush1.xpose.msra.mxu0 0.0
    %5835 = vmatprep.subr.mxu0 0.0
    %5836 = vmatpush1.xpose.msra.mxu0 0.0
    %5837 = vmatprep.subr.mxu0 0.0
    %5838 = vmatpush1.xpose.msra.mxu0 0.0
    %5839 = vmatprep.subr.mxu0 0.0
    %5840 = vmatpush1.xpose.msra.mxu0 0.0
    %5841 = vmatprep.subr.mxu0 0.0
    %5842 = vmatpush1.xpose.msra.mxu0 0.0
    %5843 = vmatprep.subr.mxu0 0.0
    %5844 = vmatpush1.xpose.msra.mxu0 0.0
    %5845 = vmatprep.subr.mxu0 0.0
    %5846 = vmatpush1.xpose.msra.mxu0 0.0
    %5847 = vmatprep.subr.mxu0 0.0
    %5848 = vmatpush1.xpose.msra.mxu0 0.0
    %5849 = vmatprep.subr.mxu0 0.0
    %5850 = vmatpush1.xpose.msra.mxu0 0.0
    %5851 = vmatprep.subr.mxu0 0.0
    %5852 = vmatpush1.xpose.msra.mxu0 0.0
    %5853 = vmatprep.subr.mxu0 0.0
    %5854 = vmatpush1.xpose.msra.mxu0 0.0
    %5855 = vmatprep.subr.mxu0 0.0
    %5856 = vmatpush1.xpose.msra.mxu0 0.0
    %5857 = vmatprep.mubr.f32.mxu0 0.0
    %5858 = vmatmul.mubr.f32.gmra.mrb[0].mxu0 %v5787
    %v5859 = vpop.f32.mrb[0].mxu0
    %v5860 = vadd.f32 0.0, %v5859
    %v5861 = vpop.f32.mrb[0].mxu0
    %5862 = vdwg.mxu0
    %5863 = vrot.lane.b32.xlu0 %v2194, 96
    %v5864 = vpop.permute.xlu0 %5863
    %5865 = vrot.lane.b32.xlu0 %v2196, 96
    %v5866 = vpop.permute.xlu0 %5865
    %v5867 = vsel %vm601, %v5692, 0
    %v5869 = vsel %vm601, %v5864, 0
    %v5871 = vsel %vm601, %v5866, 0
    %5873 = vmatprep.subr.mxu0 0.0
    %5874 = vmatpush1.xpose.msra.mxu0 %v5869
    %5875 = vmatprep.subr.mxu0 0.0
    %5876 = vmatpush1.xpose.msra.mxu0 %v5871
    %5877 = vmatprep.subr.mxu0 0.0
    %5878 = vmatpush1.xpose.msra.mxu0 0.0
    %5879 = vmatprep.subr.mxu0 0.0
    %5880 = vmatpush1.xpose.msra.mxu0 0.0
    %5881 = vmatprep.subr.mxu0 0.0
    %5882 = vmatpush1.xpose.msra.mxu0 0.0
    %5883 = vmatprep.subr.mxu0 0.0
    %5884 = vmatpush1.xpose.msra.mxu0 0.0
    %5885 = vmatprep.subr.mxu0 0.0
    %5886 = vmatpush1.xpose.msra.mxu0 0.0
    %5887 = vmatprep.subr.mxu0 0.0
    %5888 = vmatpush1.xpose.msra.mxu0 0.0
    %5889 = vmatprep.subr.mxu0 0.0
    %5890 = vmatpush1.xpose.msra.mxu0 0.0
    %5891 = vmatprep.subr.mxu0 0.0
    %5892 = vmatpush1.xpose.msra.mxu0 0.0
    %5893 = vmatprep.subr.mxu0 0.0
    %5894 = vmatpush1.xpose.msra.mxu0 0.0
    %5895 = vmatprep.subr.mxu0 0.0
    %5896 = vmatpush1.xpose.msra.mxu0 0.0
    %5897 = vmatprep.subr.mxu0 0.0
    %5898 = vmatpush1.xpose.msra.mxu0 0.0
    %5899 = vmatprep.subr.mxu0 0.0
    %5900 = vmatpush1.xpose.msra.mxu0 0.0
    %5901 = vmatprep.subr.mxu0 0.0
    %5902 = vmatpush1.xpose.msra.mxu0 0.0
    %5903 = vmatprep.subr.mxu0 0.0
    %5904 = vmatpush1.xpose.msra.mxu0 0.0
    %5905 = vmatprep.subr.mxu0 0.0
    %5906 = vmatpush1.xpose.msra.mxu0 0.0
    %5907 = vmatprep.subr.mxu0 0.0
    %5908 = vmatpush1.xpose.msra.mxu0 0.0
    %5909 = vmatprep.subr.mxu0 0.0
    %5910 = vmatpush1.xpose.msra.mxu0 0.0
    %5911 = vmatprep.subr.mxu0 0.0
    %5912 = vmatpush1.xpose.msra.mxu0 0.0
    %5913 = vmatprep.subr.mxu0 0.0
    %5914 = vmatpush1.xpose.msra.mxu0 0.0
    %5915 = vmatprep.subr.mxu0 0.0
    %5916 = vmatpush1.xpose.msra.mxu0 0.0
    %5917 = vmatprep.subr.mxu0 0.0
    %5918 = vmatpush1.xpose.msra.mxu0 0.0
    %5919 = vmatprep.subr.mxu0 0.0
    %5920 = vmatpush1.xpose.msra.mxu0 0.0
    %5921 = vmatprep.subr.mxu0 0.0
    %5922 = vmatpush1.xpose.msra.mxu0 0.0
    %5923 = vmatprep.subr.mxu0 0.0
    %5924 = vmatpush1.xpose.msra.mxu0 0.0
    %5925 = vmatprep.subr.mxu0 0.0
    %5926 = vmatpush1.xpose.msra.mxu0 0.0
    %5927 = vmatprep.subr.mxu0 0.0
    %5928 = vmatpush1.xpose.msra.mxu0 0.0
    %5929 = vmatprep.subr.mxu0 0.0
    %5930 = vmatpush1.xpose.msra.mxu0 0.0
    %5931 = vmatprep.subr.mxu0 0.0
    %5932 = vmatpush1.xpose.msra.mxu0 0.0
    %5933 = vmatprep.subr.mxu0 0.0
    %5934 = vmatpush1.xpose.msra.mxu0 0.0
    %5935 = vmatprep.subr.mxu0 0.0
    %5936 = vmatpush1.xpose.msra.mxu0 0.0
    %5937 = vmatprep.mubr.f32.mxu0 0.0
    %5938 = vmatmul.mubr.f32.gmra.mrb[0].mxu0 %v5867
    %v5939 = vpop.f32.mrb[0].mxu0
    %v5940 = vadd.f32 0.0, %v5939
    %v5941 = vpop.f32.mrb[0].mxu0
    %5942 = vdwg.mxu0
    %5943 = vrot.lane.b32.xlu0 %v2198, 96
    %v5944 = vpop.permute.xlu0 %5943
    %5945 = vrot.lane.b32.xlu0 %v2200, 96
    %v5946 = vpop.permute.xlu0 %5945
    %v5947 = vsel %vm601, %v5694, 0
    %v5949 = vsel %vm601, %v5944, 0
    %v5951 = vsel %vm601, %v5946, 0
    %5953 = vmatprep.subr.mxu0 0.0
    %5954 = vmatpush1.xpose.msra.mxu0 %v5949
    %5955 = vmatprep.subr.mxu0 0.0
    %5956 = vmatpush1.xpose.msra.mxu0 %v5951
    %5957 = vmatprep.subr.mxu0 0.0
    %5958 = vmatpush1.xpose.msra.mxu0 0.0
    %5959 = vmatprep.subr.mxu0 0.0
    %5960 = vmatpush1.xpose.msra.mxu0 0.0
    %5961 = vmatprep.subr.mxu0 0.0
    %5962 = vmatpush1.xpose.msra.mxu0 0.0
    %5963 = vmatprep.subr.mxu0 0.0
    %5964 = vmatpush1.xpose.msra.mxu0 0.0
    %5965 = vmatprep.subr.mxu0 0.0
    %5966 = vmatpush1.xpose.msra.mxu0 0.0
    %5967 = vmatprep.subr.mxu0 0.0
    %5968 = vmatpush1.xpose.msra.mxu0 0.0
    %5969 = vmatprep.subr.mxu0 0.0
    %5970 = vmatpush1.xpose.msra.mxu0 0.0
    %5971 = vmatprep.subr.mxu0 0.0
    %5972 = vmatpush1.xpose.msra.mxu0 0.0
    %5973 = vmatprep.subr.mxu0 0.0
    %5974 = vmatpush1.xpose.msra.mxu0 0.0
    %5975 = vmatprep.subr.mxu0 0.0
    %5976 = vmatpush1.xpose.msra.mxu0 0.0
    %5977 = vmatprep.subr.mxu0 0.0
    %5978 = vmatpush1.xpose.msra.mxu0 0.0
    %5979 = vmatprep.subr.mxu0 0.0
    %5980 = vmatpush1.xpose.msra.mxu0 0.0
    %5981 = vmatprep.subr.mxu0 0.0
    %5982 = vmatpush1.xpose.msra.mxu0 0.0
    %5983 = vmatprep.subr.mxu0 0.0
    %5984 = vmatpush1.xpose.msra.mxu0 0.0
    %5985 = vmatprep.subr.mxu0 0.0
    %5986 = vmatpush1.xpose.msra.mxu0 0.0
    %5987 = vmatprep.subr.mxu0 0.0
    %5988 = vmatpush1.xpose.msra.mxu0 0.0
    %5989 = vmatprep.subr.mxu0 0.0
    %5990 = vmatpush1.xpose.msra.mxu0 0.0
    %5991 = vmatprep.subr.mxu0 0.0
    %5992 = vmatpush1.xpose.msra.mxu0 0.0
    %5993 = vmatprep.subr.mxu0 0.0
    %5994 = vmatpush1.xpose.msra.mxu0 0.0
    %5995 = vmatprep.subr.mxu0 0.0
    %5996 = vmatpush1.xpose.msra.mxu0 0.0
    %5997 = vmatprep.subr.mxu0 0.0
    %5998 = vmatpush1.xpose.msra.mxu0 0.0
    %5999 = vmatprep.subr.mxu0 0.0
    %6000 = vmatpush1.xpose.msra.mxu0 0.0
    %6001 = vmatprep.subr.mxu0 0.0
    %6002 = vmatpush1.xpose.msra.mxu0 0.0
    %6003 = vmatprep.subr.mxu0 0.0
    %6004 = vmatpush1.xpose.msra.mxu0 0.0
    %6005 = vmatprep.subr.mxu0 0.0
    %6006 = vmatpush1.xpose.msra.mxu0 0.0
    %6007 = vmatprep.subr.mxu0 0.0
    %6008 = vmatpush1.xpose.msra.mxu0 0.0
    %6009 = vmatprep.subr.mxu0 0.0
    %6010 = vmatpush1.xpose.msra.mxu0 0.0
    %6011 = vmatprep.subr.mxu0 0.0
    %6012 = vmatpush1.xpose.msra.mxu0 0.0
    %6013 = vmatprep.subr.mxu0 0.0
    %6014 = vmatpush1.xpose.msra.mxu0 0.0
    %6015 = vmatprep.subr.mxu0 0.0
    %6016 = vmatpush1.xpose.msra.mxu0 0.0
    %6017 = vmatprep.mubr.f32.mxu0 0.0
    %6018 = vmatmul.mubr.f32.gmra.mrb[0].mxu0 %v5947
    %v6019 = vpop.f32.mrb[0].mxu0
    %v6020 = vadd.f32 0.0, %v6019
    %v6021 = vpop.f32.mrb[0].mxu0
    %6022 = vdwg.mxu0
    %6023 = vrot.lane.b32.xlu0 %v2202, 96
    %v6024 = vpop.permute.xlu0 %6023
    %6025 = vrot.lane.b32.xlu0 %v2204, 96
    %v6026 = vpop.permute.xlu0 %6025
    %v6027 = vsel %vm601, %v5696, 0
    %v6029 = vsel %vm601, %v6024, 0
    %v6031 = vsel %vm601, %v6026, 0
    %6033 = vmatprep.subr.mxu0 0.0
    %6034 = vmatpush1.xpose.msra.mxu0 %v6029
    %6035 = vmatprep.subr.mxu0 0.0
    %6036 = vmatpush1.xpose.msra.mxu0 %v6031
    %6037 = vmatprep.subr.mxu0 0.0
    %6038 = vmatpush1.xpose.msra.mxu0 0.0
    %6039 = vmatprep.subr.mxu0 0.0
    %6040 = vmatpush1.xpose.msra.mxu0 0.0
    %6041 = vmatprep.subr.mxu0 0.0
    %6042 = vmatpush1.xpose.msra.mxu0 0.0
    %6043 = vmatprep.subr.mxu0 0.0
    %6044 = vmatpush1.xpose.msra.mxu0 0.0
    %6045 = vmatprep.subr.mxu0 0.0
    %6046 = vmatpush1.xpose.msra.mxu0 0.0
    %6047 = vmatprep.subr.mxu0 0.0
    %6048 = vmatpush1.xpose.msra.mxu0 0.0
    %6049 = vmatprep.subr.mxu0 0.0
    %6050 = vmatpush1.xpose.msra.mxu0 0.0
    %6051 = vmatprep.subr.mxu0 0.0
    %6052 = vmatpush1.xpose.msra.mxu0 0.0
    %6053 = vmatprep.subr.mxu0 0.0
    %6054 = vmatpush1.xpose.msra.mxu0 0.0
    %6055 = vmatprep.subr.mxu0 0.0
    %6056 = vmatpush1.xpose.msra.mxu0 0.0
    %6057 = vmatprep.subr.mxu0 0.0
    %6058 = vmatpush1.xpose.msra.mxu0 0.0
    %6059 = vmatprep.subr.mxu0 0.0
    %6060 = vmatpush1.xpose.msra.mxu0 0.0
    %6061 = vmatprep.subr.mxu0 0.0
    %6062 = vmatpush1.xpose.msra.mxu0 0.0
    %6063 = vmatprep.subr.mxu0 0.0
    %6064 = vmatpush1.xpose.msra.mxu0 0.0
    %6065 = vmatprep.subr.mxu0 0.0
    %6066 = vmatpush1.xpose.msra.mxu0 0.0
    %6067 = vmatprep.subr.mxu0 0.0
    %6068 = vmatpush1.xpose.msra.mxu0 0.0
    %6069 = vmatprep.subr.mxu0 0.0
    %6070 = vmatpush1.xpose.msra.mxu0 0.0
    %6071 = vmatprep.subr.mxu0 0.0
    %6072 = vmatpush1.xpose.msra.mxu0 0.0
    %6073 = vmatprep.subr.mxu0 0.0
    %6074 = vmatpush1.xpose.msra.mxu0 0.0
    %6075 = vmatprep.subr.mxu0 0.0
    %6076 = vmatpush1.xpose.msra.mxu0 0.0
    %6077 = vmatprep.subr.mxu0 0.0
    %6078 = vmatpush1.xpose.msra.mxu0 0.0
    %6079 = vmatprep.subr.mxu0 0.0
    %6080 = vmatpush1.xpose.msra.mxu0 0.0
    %6081 = vmatprep.subr.mxu0 0.0
    %6082 = vmatpush1.xpose.msra.mxu0 0.0
    %6083 = vmatprep.subr.mxu0 0.0
    %6084 = vmatpush1.xpose.msra.mxu0 0.0
    %6085 = vmatprep.subr.mxu0 0.0
    %6086 = vmatpush1.xpose.msra.mxu0 0.0
    %6087 = vmatprep.subr.mxu0 0.0
    %6088 = vmatpush1.xpose.msra.mxu0 0.0
    %6089 = vmatprep.subr.mxu0 0.0
    %6090 = vmatpush1.xpose.msra.mxu0 0.0
    %6091 = vmatprep.subr.mxu0 0.0
    %6092 = vmatpush1.xpose.msra.mxu0 0.0
    %6093 = vmatprep.subr.mxu0 0.0
    %6094 = vmatpush1.xpose.msra.mxu0 0.0
    %6095 = vmatprep.subr.mxu0 0.0
    %6096 = vmatpush1.xpose.msra.mxu0 0.0
    %6097 = vmatprep.mubr.f32.mxu0 0.0
    %6098 = vmatmul.mubr.f32.gmra.mrb[0].mxu0 %v6027
    %v6099 = vpop.f32.mrb[0].mxu0
    %v6100 = vadd.f32 0.0, %v6099
    %v6101 = vpop.f32.mrb[0].mxu0
    %6102 = vdwg.mxu0
    %6103 = vrot.lane.b32.xlu0 %v2206, 96
    %v6104 = vpop.permute.xlu0 %6103
    %6105 = vrot.lane.b32.xlu0 %v2208, 96
    %v6106 = vpop.permute.xlu0 %6105
    %v6107 = vsel %vm601, %v5698, 0
    %v6109 = vsel %vm601, %v6104, 0
    %v6111 = vsel %vm601, %v6106, 0
    %6113 = vmatprep.subr.mxu0 0.0
    %6114 = vmatpush1.xpose.msra.mxu0 %v6109
    %6115 = vmatprep.subr.mxu0 0.0
    %6116 = vmatpush1.xpose.msra.mxu0 %v6111
    %6117 = vmatprep.subr.mxu0 0.0
    %6118 = vmatpush1.xpose.msra.mxu0 0.0
    %6119 = vmatprep.subr.mxu0 0.0
    %6120 = vmatpush1.xpose.msra.mxu0 0.0
    %6121 = vmatprep.subr.mxu0 0.0
    %6122 = vmatpush1.xpose.msra.mxu0 0.0
    %6123 = vmatprep.subr.mxu0 0.0
    %6124 = vmatpush1.xpose.msra.mxu0 0.0
    %6125 = vmatprep.subr.mxu0 0.0
    %6126 = vmatpush1.xpose.msra.mxu0 0.0
    %6127 = vmatprep.subr.mxu0 0.0
    %6128 = vmatpush1.xpose.msra.mxu0 0.0
    %6129 = vmatprep.subr.mxu0 0.0
    %6130 = vmatpush1.xpose.msra.mxu0 0.0
    %6131 = vmatprep.subr.mxu0 0.0
    %6132 = vmatpush1.xpose.msra.mxu0 0.0
    %6133 = vmatprep.subr.mxu0 0.0
    %6134 = vmatpush1.xpose.msra.mxu0 0.0
    %6135 = vmatprep.subr.mxu0 0.0
    %6136 = vmatpush1.xpose.msra.mxu0 0.0
    %6137 = vmatprep.subr.mxu0 0.0
    %6138 = vmatpush1.xpose.msra.mxu0 0.0
    %6139 = vmatprep.subr.mxu0 0.0
    %6140 = vmatpush1.xpose.msra.mxu0 0.0
    %6141 = vmatprep.subr.mxu0 0.0
    %6142 = vmatpush1.xpose.msra.mxu0 0.0
    %6143 = vmatprep.subr.mxu0 0.0
    %6144 = vmatpush1.xpose.msra.mxu0 0.0
    %6145 = vmatprep.subr.mxu0 0.0
    %6146 = vmatpush1.xpose.msra.mxu0 0.0
    %6147 = vmatprep.subr.mxu0 0.0
    %6148 = vmatpush1.xpose.msra.mxu0 0.0
    %6149 = vmatprep.subr.mxu0 0.0
    %6150 = vmatpush1.xpose.msra.mxu0 0.0
    %6151 = vmatprep.subr.mxu0 0.0
    %6152 = vmatpush1.xpose.msra.mxu0 0.0
    %6153 = vmatprep.subr.mxu0 0.0
    %6154 = vmatpush1.xpose.msra.mxu0 0.0
    %6155 = vmatprep.subr.mxu0 0.0
    %6156 = vmatpush1.xpose.msra.mxu0 0.0
    %6157 = vmatprep.subr.mxu0 0.0
    %6158 = vmatpush1.xpose.msra.mxu0 0.0
    %6159 = vmatprep.subr.mxu0 0.0
    %6160 = vmatpush1.xpose.msra.mxu0 0.0
    %6161 = vmatprep.subr.mxu0 0.0
    %6162 = vmatpush1.xpose.msra.mxu0 0.0
    %6163 = vmatprep.subr.mxu0 0.0
    %6164 = vmatpush1.xpose.msra.mxu0 0.0
    %6165 = vmatprep.subr.mxu0 0.0
    %6166 = vmatpush1.xpose.msra.mxu0 0.0
    %6167 = vmatprep.subr.mxu0 0.0
    %6168 = vmatpush1.xpose.msra.mxu0 0.0
    %6169 = vmatprep.subr.mxu0 0.0
    %6170 = vmatpush1.xpose.msra.mxu0 0.0
    %6171 = vmatprep.subr.mxu0 0.0
    %6172 = vmatpush1.xpose.msra.mxu0 0.0
    %6173 = vmatprep.subr.mxu0 0.0
    %6174 = vmatpush1.xpose.msra.mxu0 0.0
    %6175 = vmatprep.subr.mxu0 0.0
    %6176 = vmatpush1.xpose.msra.mxu0 0.0
    %6177 = vmatprep.mubr.f32.mxu0 0.0
    %6178 = vmatmul.mubr.f32.gmra.mrb[0].mxu0 %v6107
    %v6179 = vpop.f32.mrb[0].mxu0
    %v6180 = vadd.f32 0.0, %v6179
    %v6181 = vpop.f32.mrb[0].mxu0
    %6182 = vdwg.mxu0
    %6183 = vrot.lane.b32.xlu0 %v2210, 96
    %v6184 = vpop.permute.xlu0 %6183
    %6185 = vrot.lane.b32.xlu0 %v2212, 96
    %v6186 = vpop.permute.xlu0 %6185
    %v6187 = vsel %vm601, %v5700, 0
    %v6189 = vsel %vm601, %v6184, 0
    %v6191 = vsel %vm601, %v6186, 0
    %6193 = vmatprep.subr.mxu0 0.0
    %6194 = vmatpush1.xpose.msra.mxu0 %v6189
    %6195 = vmatprep.subr.mxu0 0.0
    %6196 = vmatpush1.xpose.msra.mxu0 %v6191
    %6197 = vmatprep.subr.mxu0 0.0
    %6198 = vmatpush1.xpose.msra.mxu0 0.0
    %6199 = vmatprep.subr.mxu0 0.0
    %6200 = vmatpush1.xpose.msra.mxu0 0.0
    %6201 = vmatprep.subr.mxu0 0.0
    %6202 = vmatpush1.xpose.msra.mxu0 0.0
    %6203 = vmatprep.subr.mxu0 0.0
    %6204 = vmatpush1.xpose.msra.mxu0 0.0
    %6205 = vmatprep.subr.mxu0 0.0
    %6206 = vmatpush1.xpose.msra.mxu0 0.0
    %6207 = vmatprep.subr.mxu0 0.0
    %6208 = vmatpush1.xpose.msra.mxu0 0.0
    %6209 = vmatprep.subr.mxu0 0.0
    %6210 = vmatpush1.xpose.msra.mxu0 0.0
    %6211 = vmatprep.subr.mxu0 0.0
    %6212 = vmatpush1.xpose.msra.mxu0 0.0
    %6213 = vmatprep.subr.mxu0 0.0
    %6214 = vmatpush1.xpose.msra.mxu0 0.0
    %6215 = vmatprep.subr.mxu0 0.0
    %6216 = vmatpush1.xpose.msra.mxu0 0.0
    %6217 = vmatprep.subr.mxu0 0.0
    %6218 = vmatpush1.xpose.msra.mxu0 0.0
    %6219 = vmatprep.subr.mxu0 0.0
    %6220 = vmatpush1.xpose.msra.mxu0 0.0
    %6221 = vmatprep.subr.mxu0 0.0
    %6222 = vmatpush1.xpose.msra.mxu0 0.0
    %6223 = vmatprep.subr.mxu0 0.0
    %6224 = vmatpush1.xpose.msra.mxu0 0.0
    %6225 = vmatprep.subr.mxu0 0.0
    %6226 = vmatpush1.xpose.msra.mxu0 0.0
    %6227 = vmatprep.subr.mxu0 0.0
    %6228 = vmatpush1.xpose.msra.mxu0 0.0
    %6229 = vmatprep.subr.mxu0 0.0
    %6230 = vmatpush1.xpose.msra.mxu0 0.0
    %6231 = vmatprep.subr.mxu0 0.0
    %6232 = vmatpush1.xpose.msra.mxu0 0.0
    %6233 = vmatprep.subr.mxu0 0.0
    %6234 = vmatpush1.xpose.msra.mxu0 0.0
    %6235 = vmatprep.subr.mxu0 0.0
    %6236 = vmatpush1.xpose.msra.mxu0 0.0
    %6237 = vmatprep.subr.mxu0 0.0
    %6238 = vmatpush1.xpose.msra.mxu0 0.0
    %6239 = vmatprep.subr.mxu0 0.0
    %6240 = vmatpush1.xpose.msra.mxu0 0.0
    %6241 = vmatprep.subr.mxu0 0.0
    %6242 = vmatpush1.xpose.msra.mxu0 0.0
    %6243 = vmatprep.subr.mxu0 0.0
    %6244 = vmatpush1.xpose.msra.mxu0 0.0
    %6245 = vmatprep.subr.mxu0 0.0
    %6246 = vmatpush1.xpose.msra.mxu0 0.0
    %6247 = vmatprep.subr.mxu0 0.0
    %6248 = vmatpush1.xpose.msra.mxu0 0.0
    %6249 = vmatprep.subr.mxu0 0.0
    %6250 = vmatpush1.xpose.msra.mxu0 0.0
    %6251 = vmatprep.subr.mxu0 0.0
    %6252 = vmatpush1.xpose.msra.mxu0 0.0
    %6253 = vmatprep.subr.mxu0 0.0
    %6254 = vmatpush1.xpose.msra.mxu0 0.0
    %6255 = vmatprep.subr.mxu0 0.0
    %6256 = vmatpush1.xpose.msra.mxu0 0.0
    %6257 = vmatprep.mubr.f32.mxu0 0.0
    %6258 = vmatmul.mubr.f32.gmra.mrb[0].mxu0 %v6187
    %v6259 = vpop.f32.mrb[0].mxu0
    %v6260 = vadd.f32 0.0, %v6259
    %v6261 = vpop.f32.mrb[0].mxu0
    %6262 = vdwg.mxu0
    %6263 = vrot.lane.b32.xlu0 %v2214, 96
    %v6264 = vpop.permute.xlu0 %6263
    %6265 = vrot.lane.b32.xlu0 %v2216, 96
    %v6266 = vpop.permute.xlu0 %6265
    %v6267 = vsel %vm601, %v5702, 0
    %v6269 = vsel %vm601, %v6264, 0
    %v6271 = vsel %vm601, %v6266, 0
    %6273 = vmatprep.subr.mxu0 0.0
    %6274 = vmatpush1.xpose.msra.mxu0 %v6269
    %6275 = vmatprep.subr.mxu0 0.0
    %6276 = vmatpush1.xpose.msra.mxu0 %v6271
    %6277 = vmatprep.subr.mxu0 0.0
    %6278 = vmatpush1.xpose.msra.mxu0 0.0
    %6279 = vmatprep.subr.mxu0 0.0
    %6280 = vmatpush1.xpose.msra.mxu0 0.0
    %6281 = vmatprep.subr.mxu0 0.0
    %6282 = vmatpush1.xpose.msra.mxu0 0.0
    %6283 = vmatprep.subr.mxu0 0.0
    %6284 = vmatpush1.xpose.msra.mxu0 0.0
    %6285 = vmatprep.subr.mxu0 0.0
    %6286 = vmatpush1.xpose.msra.mxu0 0.0
    %6287 = vmatprep.subr.mxu0 0.0
    %6288 = vmatpush1.xpose.msra.mxu0 0.0
    %6289 = vmatprep.subr.mxu0 0.0
    %6290 = vmatpush1.xpose.msra.mxu0 0.0
    %6291 = vmatprep.subr.mxu0 0.0
    %6292 = vmatpush1.xpose.msra.mxu0 0.0
    %6293 = vmatprep.subr.mxu0 0.0
    %6294 = vmatpush1.xpose.msra.mxu0 0.0
    %6295 = vmatprep.subr.mxu0 0.0
    %6296 = vmatpush1.xpose.msra.mxu0 0.0
    %6297 = vmatprep.subr.mxu0 0.0
    %6298 = vmatpush1.xpose.msra.mxu0 0.0
    %6299 = vmatprep.subr.mxu0 0.0
    %6300 = vmatpush1.xpose.msra.mxu0 0.0
    %6301 = vmatprep.subr.mxu0 0.0
    %6302 = vmatpush1.xpose.msra.mxu0 0.0
    %6303 = vmatprep.subr.mxu0 0.0
    %6304 = vmatpush1.xpose.msra.mxu0 0.0
    %6305 = vmatprep.subr.mxu0 0.0
    %6306 = vmatpush1.xpose.msra.mxu0 0.0
    %6307 = vmatprep.subr.mxu0 0.0
    %6308 = vmatpush1.xpose.msra.mxu0 0.0
    %6309 = vmatprep.subr.mxu0 0.0
    %6310 = vmatpush1.xpose.msra.mxu0 0.0
    %6311 = vmatprep.subr.mxu0 0.0
    %6312 = vmatpush1.xpose.msra.mxu0 0.0
    %6313 = vmatprep.subr.mxu0 0.0
    %6314 = vmatpush1.xpose.msra.mxu0 0.0
    %6315 = vmatprep.subr.mxu0 0.0
    %6316 = vmatpush1.xpose.msra.mxu0 0.0
    %6317 = vmatprep.subr.mxu0 0.0
    %6318 = vmatpush1.xpose.msra.mxu0 0.0
    %6319 = vmatprep.subr.mxu0 0.0
    %6320 = vmatpush1.xpose.msra.mxu0 0.0
    %6321 = vmatprep.subr.mxu0 0.0
    %6322 = vmatpush1.xpose.msra.mxu0 0.0
    %6323 = vmatprep.subr.mxu0 0.0
    %6324 = vmatpush1.xpose.msra.mxu0 0.0
    %6325 = vmatprep.subr.mxu0 0.0
    %6326 = vmatpush1.xpose.msra.mxu0 0.0
    %6327 = vmatprep.subr.mxu0 0.0
    %6328 = vmatpush1.xpose.msra.mxu0 0.0
    %6329 = vmatprep.subr.mxu0 0.0
    %6330 = vmatpush1.xpose.msra.mxu0 0.0
    %6331 = vmatprep.subr.mxu0 0.0
    %6332 = vmatpush1.xpose.msra.mxu0 0.0
    %6333 = vmatprep.subr.mxu0 0.0
    %6334 = vmatpush1.xpose.msra.mxu0 0.0
    %6335 = vmatprep.subr.mxu0 0.0
    %6336 = vmatpush1.xpose.msra.mxu0 0.0
    %6337 = vmatprep.mubr.f32.mxu0 0.0
    %6338 = vmatmul.mubr.f32.gmra.mrb[0].mxu0 %v6267
    %v6339 = vpop.f32.mrb[0].mxu0
    %v6340 = vadd.f32 0.0, %v6339
    %v6341 = vpop.f32.mrb[0].mxu0
    %6342 = vdwg.mxu0
    %v6343 = vsel %vm1930, %v5780, -inf
    %6344 = vmax.xlane.f32.xlu0 %v6343
    %v6345 = vpop.xlane.xlu0 %6344
    %v6346 = vsel %vm1930, %v5860, -inf
    %6347 = vmax.xlane.f32.xlu0 %v6346
    %v6348 = vpop.xlane.xlu0 %6347
    %v6349 = vsel %vm1930, %v5940, -inf
    %6350 = vmax.xlane.f32.xlu0 %v6349
    %v6351 = vpop.xlane.xlu0 %6350
    %v6352 = vsel %vm1930, %v6020, -inf
    %6353 = vmax.xlane.f32.xlu0 %v6352
    %v6354 = vpop.xlane.xlu0 %6353
    %v6355 = vsel %vm1930, %v6100, -inf
    %6356 = vmax.xlane.f32.xlu0 %v6355
    %v6357 = vpop.xlane.xlu0 %6356
    %v6358 = vsel %vm1930, %v6180, -inf
    %6359 = vmax.xlane.f32.xlu0 %v6358
    %v6360 = vpop.xlane.xlu0 %6359
    %v6361 = vsel %vm1930, %v6260, -inf
    %6362 = vmax.xlane.f32.xlu0 %v6361
    %v6363 = vpop.xlane.xlu0 %6362
    %v6364 = vsel %vm1930, %v6340, -inf
    %6365 = vmax.xlane.f32.xlu0 %v6364
    %v6366 = vpop.xlane.xlu0 %6365
    %v6367 = vsub.f32 %v5780, %v6345
    %v6368 = vsub.f32 %v5860, %v6348
    %v6369 = vsub.f32 %v5940, %v6351
    %v6370 = vsub.f32 %v6020, %v6354
    %v6371 = vsub.f32 %v6100, %v6357
    %v6372 = vsub.f32 %v6180, %v6360
    %v6373 = vsub.f32 %v6260, %v6363
    %v6374 = vsub.f32 %v6340, %v6366
    %v6375 = vmul.f32 %v6367, 1.442695
    %v6376 = vpow.pop %v6375
    %v6377 = vmul.f32 %v6368, 1.442695
    %v6378 = vpow.pop %v6377
    %v6379 = vmul.f32 %v6369, 1.442695
    %v6380 = vpow.pop %v6379
    %v6381 = vmul.f32 %v6370, 1.442695
    %v6382 = vpow.pop %v6381
    %v6383 = vmul.f32 %v6371, 1.442695
    %v6384 = vpow.pop %v6383
    %v6385 = vmul.f32 %v6372, 1.442695
    %v6386 = vpow.pop %v6385
    %v6387 = vmul.f32 %v6373, 1.442695
    %v6388 = vpow.pop %v6387
    %v6389 = vmul.f32 %v6374, 1.442695
    %v6390 = vpow.pop %v6389
    %v6391 = vsel %vm1930, %v6376, 0.0
    %6392 = vadd.xlane.f32.xlu0 %v6391
    %v6393 = vpop.xlane.xlu0 %6392
    %v6394 = vsel %vm1930, %v6378, 0.0
    %6395 = vadd.xlane.f32.xlu0 %v6394
    %v6396 = vpop.xlane.xlu0 %6395
    %v6397 = vsel %vm1930, %v6380, 0.0
    %6398 = vadd.xlane.f32.xlu0 %v6397
    %v6399 = vpop.xlane.xlu0 %6398
    %v6400 = vsel %vm1930, %v6382, 0.0
    %6401 = vadd.xlane.f32.xlu0 %v6400
    %v6402 = vpop.xlane.xlu0 %6401
    %v6403 = vsel %vm1930, %v6384, 0.0
    %6404 = vadd.xlane.f32.xlu0 %v6403
    %v6405 = vpop.xlane.xlu0 %6404
    %v6406 = vsel %vm1930, %v6386, 0.0
    %6407 = vadd.xlane.f32.xlu0 %v6406
    %v6408 = vpop.xlane.xlu0 %6407
    %v6409 = vsel %vm1930, %v6388, 0.0
    %6410 = vadd.xlane.f32.xlu0 %v6409
    %v6411 = vpop.xlane.xlu0 %6410
    %v6412 = vsel %vm1930, %v6390, 0.0
    %6413 = vadd.xlane.f32.xlu0 %v6412
    %v6414 = vpop.xlane.xlu0 %6413
    %v6415 = vrcp.pop %v6393
    %v6416 = vrcp.pop %v6396
    %v6417 = vrcp.pop %v6399
    %v6418 = vrcp.pop %v6402
    %v6419 = vrcp.pop %v6405
    %v6420 = vrcp.pop %v6408
    %v6421 = vrcp.pop %v6411
    %v6422 = vrcp.pop %v6414
    %v6423 = vmul.f32 %v6376, %v6415
    %v6424 = vmul.f32 %v6378, %v6416
    %v6425 = vmul.f32 %v6380, %v6417
    %v6426 = vmul.f32 %v6382, %v6418
    %v6427 = vmul.f32 %v6384, %v6419
    %v6428 = vmul.f32 %v6386, %v6420
    %v6429 = vmul.f32 %v6388, %v6421
    %v6430 = vmul.f32 %v6390, %v6422
    %6431 = vrot.lane.b32.xlu0 %v295, 96
    %v6432 = vpop.permute.xlu0 %6431
    %6433 = vrot.lane.b32.xlu0 %v300, 96
    %v6434 = vpop.permute.xlu0 %6433
    %v6438 = vsel %vm1930, %v6423, 0
    %6440 = vmatprep.subr.mxu0 0.0
    %6441 = vmatpush1.msra.mxu0 %v6432
    %6442 = vmatprep.subr.mxu0 0.0
    %6443 = vmatpush1.msra.mxu0 %v6434
    %6444 = vmatprep.subr.mxu0 0.0
    %6445 = vmatpush1.msra.mxu0 0.0
    %6446 = vmatprep.subr.mxu0 0.0
    %6447 = vmatpush1.msra.mxu0 0.0
    %6448 = vmatprep.subr.mxu0 0.0
    %6449 = vmatpush1.msra.mxu0 0.0
    %6450 = vmatprep.subr.mxu0 0.0
    %6451 = vmatpush1.msra.mxu0 0.0
    %6452 = vmatprep.subr.mxu0 0.0
    %6453 = vmatpush1.msra.mxu0 0.0
    %6454 = vmatprep.subr.mxu0 0.0
    %6455 = vmatpush1.msra.mxu0 0.0
    %6456 = vmatprep.subr.mxu0 0.0
    %6457 = vmatpush1.msra.mxu0 0.0
    %6458 = vmatprep.subr.mxu0 0.0
    %6459 = vmatpush1.msra.mxu0 0.0
    %6460 = vmatprep.subr.mxu0 0.0
    %6461 = vmatpush1.msra.mxu0 0.0
    %6462 = vmatprep.subr.mxu0 0.0
    %6463 = vmatpush1.msra.mxu0 0.0
    %6464 = vmatprep.subr.mxu0 0.0
    %6465 = vmatpush1.msra.mxu0 0.0
    %6466 = vmatprep.subr.mxu0 0.0
    %6467 = vmatpush1.msra.mxu0 0.0
    %6468 = vmatprep.subr.mxu0 0.0
    %6469 = vmatpush1.msra.mxu0 0.0
    %6470 = vmatprep.subr.mxu0 0.0
    %6471 = vmatpush1.msra.mxu0 0.0
    %6472 = vmatprep.subr.mxu0 0.0
    %6473 = vmatpush1.msra.mxu0 0.0
    %6474 = vmatprep.subr.mxu0 0.0
    %6475 = vmatpush1.msra.mxu0 0.0
    %6476 = vmatprep.subr.mxu0 0.0
    %6477 = vmatpush1.msra.mxu0 0.0
    %6478 = vmatprep.subr.mxu0 0.0
    %6479 = vmatpush1.msra.mxu0 0.0
    %6480 = vmatprep.subr.mxu0 0.0
    %6481 = vmatpush1.msra.mxu0 0.0
    %6482 = vmatprep.subr.mxu0 0.0
    %6483 = vmatpush1.msra.mxu0 0.0
    %6484 = vmatprep.subr.mxu0 0.0
    %6485 = vmatpush1.msra.mxu0 0.0
    %6486 = vmatprep.subr.mxu0 0.0
    %6487 = vmatpush1.msra.mxu0 0.0
    %6488 = vmatprep.subr.mxu0 0.0
    %6489 = vmatpush1.msra.mxu0 0.0
    %6490 = vmatprep.subr.mxu0 0.0
    %6491 = vmatpush1.msra.mxu0 0.0
    %6492 = vmatprep.subr.mxu0 0.0
    %6493 = vmatpush1.msra.mxu0 0.0
    %6494 = vmatprep.subr.mxu0 0.0
    %6495 = vmatpush1.msra.mxu0 0.0
    %6496 = vmatprep.subr.mxu0 0.0
    %6497 = vmatpush1.msra.mxu0 0.0
    %6498 = vmatprep.subr.mxu0 0.0
    %6499 = vmatpush1.msra.mxu0 0.0
    %6500 = vmatprep.subr.mxu0 0.0
    %6501 = vmatpush1.msra.mxu0 0.0
    %6502 = vmatprep.subr.mxu0 0.0
    %6503 = vmatpush1.msra.mxu0 0.0
    %6504 = vmatprep.mubr.f32.mxu0 0.0
    %6505 = vmatmul.mubr.f32.gmra.mrb[0].mxu0 %v6438
    %v6506 = vpop.f32.mrb[0].mxu0
    %v6507 = vadd.f32 0.0, %v6506
    %v6508 = vpop.f32.mrb[0].mxu0
    %6509 = vdwg.mxu0
    %6510 = vrot.lane.b32.xlu0 %v305, 96
    %v6511 = vpop.permute.xlu0 %6510
    %6512 = vrot.lane.b32.xlu0 %v310, 96
    %v6513 = vpop.permute.xlu0 %6512
    %v6517 = vsel %vm1930, %v6424, 0
    %6519 = vmatprep.subr.mxu0 0.0
    %6520 = vmatpush1.msra.mxu0 %v6511
    %6521 = vmatprep.subr.mxu0 0.0
    %6522 = vmatpush1.msra.mxu0 %v6513
    %6523 = vmatprep.subr.mxu0 0.0
    %6524 = vmatpush1.msra.mxu0 0.0
    %6525 = vmatprep.subr.mxu0 0.0
    %6526 = vmatpush1.msra.mxu0 0.0
    %6527 = vmatprep.subr.mxu0 0.0
    %6528 = vmatpush1.msra.mxu0 0.0
    %6529 = vmatprep.subr.mxu0 0.0
    %6530 = vmatpush1.msra.mxu0 0.0
    %6531 = vmatprep.subr.mxu0 0.0
    %6532 = vmatpush1.msra.mxu0 0.0
    %6533 = vmatprep.subr.mxu0 0.0
    %6534 = vmatpush1.msra.mxu0 0.0
    %6535 = vmatprep.subr.mxu0 0.0
    %6536 = vmatpush1.msra.mxu0 0.0
    %6537 = vmatprep.subr.mxu0 0.0
    %6538 = vmatpush1.msra.mxu0 0.0
    %6539 = vmatprep.subr.mxu0 0.0
    %6540 = vmatpush1.msra.mxu0 0.0
    %6541 = vmatprep.subr.mxu0 0.0
    %6542 = vmatpush1.msra.mxu0 0.0
    %6543 = vmatprep.subr.mxu0 0.0
    %6544 = vmatpush1.msra.mxu0 0.0
    %6545 = vmatprep.subr.mxu0 0.0
    %6546 = vmatpush1.msra.mxu0 0.0
    %6547 = vmatprep.subr.mxu0 0.0
    %6548 = vmatpush1.msra.mxu0 0.0
    %6549 = vmatprep.subr.mxu0 0.0
    %6550 = vmatpush1.msra.mxu0 0.0
    %6551 = vmatprep.subr.mxu0 0.0
    %6552 = vmatpush1.msra.mxu0 0.0
    %6553 = vmatprep.subr.mxu0 0.0
    %6554 = vmatpush1.msra.mxu0 0.0
    %6555 = vmatprep.subr.mxu0 0.0
    %6556 = vmatpush1.msra.mxu0 0.0
    %6557 = vmatprep.subr.mxu0 0.0
    %6558 = vmatpush1.msra.mxu0 0.0
    %6559 = vmatprep.subr.mxu0 0.0
    %6560 = vmatpush1.msra.mxu0 0.0
    %6561 = vmatprep.subr.mxu0 0.0
    %6562 = vmatpush1.msra.mxu0 0.0
    %6563 = vmatprep.subr.mxu0 0.0
    %6564 = vmatpush1.msra.mxu0 0.0
    %6565 = vmatprep.subr.mxu0 0.0
    %6566 = vmatpush1.msra.mxu0 0.0
    %6567 = vmatprep.subr.mxu0 0.0
    %6568 = vmatpush1.msra.mxu0 0.0
    %6569 = vmatprep.subr.mxu0 0.0
    %6570 = vmatpush1.msra.mxu0 0.0
    %6571 = vmatprep.subr.mxu0 0.0
    %6572 = vmatpush1.msra.mxu0 0.0
    %6573 = vmatprep.subr.mxu0 0.0
    %6574 = vmatpush1.msra.mxu0 0.0
    %6575 = vmatprep.subr.mxu0 0.0
    %6576 = vmatpush1.msra.mxu0 0.0
    %6577 = vmatprep.subr.mxu0 0.0
    %6578 = vmatpush1.msra.mxu0 0.0
    %6579 = vmatprep.subr.mxu0 0.0
    %6580 = vmatpush1.msra.mxu0 0.0
    %6581 = vmatprep.subr.mxu0 0.0
    %6582 = vmatpush1.msra.mxu0 0.0
    %6583 = vmatprep.mubr.f32.mxu0 0.0
    %6584 = vmatmul.mubr.f32.gmra.mrb[0].mxu0 %v6517
    %v6585 = vpop.f32.mrb[0].mxu0
    %v6586 = vadd.f32 0.0, %v6585
    %v6587 = vpop.f32.mrb[0].mxu0
    %6588 = vdwg.mxu0
    %6589 = vrot.lane.b32.xlu0 %v2222, 96
    %v6590 = vpop.permute.xlu0 %6589
    %6591 = vrot.lane.b32.xlu0 %v2224, 96
    %v6592 = vpop.permute.xlu0 %6591
    %v6596 = vsel %vm1930, %v6425, 0
    %6598 = vmatprep.subr.mxu0 0.0
    %6599 = vmatpush1.msra.mxu0 %v6590
    %6600 = vmatprep.subr.mxu0 0.0
    %6601 = vmatpush1.msra.mxu0 %v6592
    %6602 = vmatprep.subr.mxu0 0.0
    %6603 = vmatpush1.msra.mxu0 0.0
    %6604 = vmatprep.subr.mxu0 0.0
    %6605 = vmatpush1.msra.mxu0 0.0
    %6606 = vmatprep.subr.mxu0 0.0
    %6607 = vmatpush1.msra.mxu0 0.0
    %6608 = vmatprep.subr.mxu0 0.0
    %6609 = vmatpush1.msra.mxu0 0.0
    %6610 = vmatprep.subr.mxu0 0.0
    %6611 = vmatpush1.msra.mxu0 0.0
    %6612 = vmatprep.subr.mxu0 0.0
    %6613 = vmatpush1.msra.mxu0 0.0
    %6614 = vmatprep.subr.mxu0 0.0
    %6615 = vmatpush1.msra.mxu0 0.0
    %6616 = vmatprep.subr.mxu0 0.0
    %6617 = vmatpush1.msra.mxu0 0.0
    %6618 = vmatprep.subr.mxu0 0.0
    %6619 = vmatpush1.msra.mxu0 0.0
    %6620 = vmatprep.subr.mxu0 0.0
    %6621 = vmatpush1.msra.mxu0 0.0
    %6622 = vmatprep.subr.mxu0 0.0
    %6623 = vmatpush1.msra.mxu0 0.0
    %6624 = vmatprep.subr.mxu0 0.0
    %6625 = vmatpush1.msra.mxu0 0.0
    %6626 = vmatprep.subr.mxu0 0.0
    %6627 = vmatpush1.msra.mxu0 0.0
    %6628 = vmatprep.subr.mxu0 0.0
    %6629 = vmatpush1.msra.mxu0 0.0
    %6630 = vmatprep.subr.mxu0 0.0
    %6631 = vmatpush1.msra.mxu0 0.0
    %6632 = vmatprep.subr.mxu0 0.0
    %6633 = vmatpush1.msra.mxu0 0.0
    %6634 = vmatprep.subr.mxu0 0.0
    %6635 = vmatpush1.msra.mxu0 0.0
    %6636 = vmatprep.subr.mxu0 0.0
    %6637 = vmatpush1.msra.mxu0 0.0
    %6638 = vmatprep.subr.mxu0 0.0
    %6639 = vmatpush1.msra.mxu0 0.0
    %6640 = vmatprep.subr.mxu0 0.0
    %6641 = vmatpush1.msra.mxu0 0.0
    %6642 = vmatprep.subr.mxu0 0.0
    %6643 = vmatpush1.msra.mxu0 0.0
    %6644 = vmatprep.subr.mxu0 0.0
    %6645 = vmatpush1.msra.mxu0 0.0
    %6646 = vmatprep.subr.mxu0 0.0
    %6647 = vmatpush1.msra.mxu0 0.0
    %6648 = vmatprep.subr.mxu0 0.0
    %6649 = vmatpush1.msra.mxu0 0.0
    %6650 = vmatprep.subr.mxu0 0.0
    %6651 = vmatpush1.msra.mxu0 0.0
    %6652 = vmatprep.subr.mxu0 0.0
    %6653 = vmatpush1.msra.mxu0 0.0
    %6654 = vmatprep.subr.mxu0 0.0
    %6655 = vmatpush1.msra.mxu0 0.0
    %6656 = vmatprep.subr.mxu0 0.0
    %6657 = vmatpush1.msra.mxu0 0.0
    %6658 = vmatprep.subr.mxu0 0.0
    %6659 = vmatpush1.msra.mxu0 0.0
    %6660 = vmatprep.subr.mxu0 0.0
    %6661 = vmatpush1.msra.mxu0 0.0
    %6662 = vmatprep.mubr.f32.mxu0 0.0
    %6663 = vmatmul.mubr.f32.gmra.mrb[0].mxu0 %v6596
    %v6664 = vpop.f32.mrb[0].mxu0
    %v6665 = vadd.f32 0.0, %v6664
    %v6666 = vpop.f32.mrb[0].mxu0
    %6667 = vdwg.mxu0
    %6668 = vrot.lane.b32.xlu0 %v2226, 96
    %v6669 = vpop.permute.xlu0 %6668
    %6670 = vrot.lane.b32.xlu0 %v2228, 96
    %v6671 = vpop.permute.xlu0 %6670
    %v6675 = vsel %vm1930, %v6426, 0
    %6677 = vmatprep.subr.mxu0 0.0
    %6678 = vmatpush1.msra.mxu0 %v6669
    %6679 = vmatprep.subr.mxu0 0.0
    %6680 = vmatpush1.msra.mxu0 %v6671
    %6681 = vmatprep.subr.mxu0 0.0
    %6682 = vmatpush1.msra.mxu0 0.0
    %6683 = vmatprep.subr.mxu0 0.0
    %6684 = vmatpush1.msra.mxu0 0.0
    %6685 = vmatprep.subr.mxu0 0.0
    %6686 = vmatpush1.msra.mxu0 0.0
    %6687 = vmatprep.subr.mxu0 0.0
    %6688 = vmatpush1.msra.mxu0 0.0
    %6689 = vmatprep.subr.mxu0 0.0
    %6690 = vmatpush1.msra.mxu0 0.0
    %6691 = vmatprep.subr.mxu0 0.0
    %6692 = vmatpush1.msra.mxu0 0.0
    %6693 = vmatprep.subr.mxu0 0.0
    %6694 = vmatpush1.msra.mxu0 0.0
    %6695 = vmatprep.subr.mxu0 0.0
    %6696 = vmatpush1.msra.mxu0 0.0
    %6697 = vmatprep.subr.mxu0 0.0
    %6698 = vmatpush1.msra.mxu0 0.0
    %6699 = vmatprep.subr.mxu0 0.0
    %6700 = vmatpush1.msra.mxu0 0.0
    %6701 = vmatprep.subr.mxu0 0.0
    %6702 = vmatpush1.msra.mxu0 0.0
    %6703 = vmatprep.subr.mxu0 0.0
    %6704 = vmatpush1.msra.mxu0 0.0
    %6705 = vmatprep.subr.mxu0 0.0
    %6706 = vmatpush1.msra.mxu0 0.0
    %6707 = vmatprep.subr.mxu0 0.0
    %6708 = vmatpush1.msra.mxu0 0.0
    %6709 = vmatprep.subr.mxu0 0.0
    %6710 = vmatpush1.msra.mxu0 0.0
    %6711 = vmatprep.subr.mxu0 0.0
    %6712 = vmatpush1.msra.mxu0 0.0
    %6713 = vmatprep.subr.mxu0 0.0
    %6714 = vmatpush1.msra.mxu0 0.0
    %6715 = vmatprep.subr.mxu0 0.0
    %6716 = vmatpush1.msra.mxu0 0.0
    %6717 = vmatprep.subr.mxu0 0.0
    %6718 = vmatpush1.msra.mxu0 0.0
    %6719 = vmatprep.subr.mxu0 0.0
    %6720 = vmatpush1.msra.mxu0 0.0
    %6721 = vmatprep.subr.mxu0 0.0
    %6722 = vmatpush1.msra.mxu0 0.0
    %6723 = vmatprep.subr.mxu0 0.0
    %6724 = vmatpush1.msra.mxu0 0.0
    %6725 = vmatprep.subr.mxu0 0.0
    %6726 = vmatpush1.msra.mxu0 0.0
    %6727 = vmatprep.subr.mxu0 0.0
    %6728 = vmatpush1.msra.mxu0 0.0
    %6729 = vmatprep.subr.mxu0 0.0
    %6730 = vmatpush1.msra.mxu0 0.0
    %6731 = vmatprep.subr.mxu0 0.0
    %6732 = vmatpush1.msra.mxu0 0.0
    %6733 = vmatprep.subr.mxu0 0.0
    %6734 = vmatpush1.msra.mxu0 0.0
    %6735 = vmatprep.subr.mxu0 0.0
    %6736 = vmatpush1.msra.mxu0 0.0
    %6737 = vmatprep.subr.mxu0 0.0
    %6738 = vmatpush1.msra.mxu0 0.0
    %6739 = vmatprep.subr.mxu0 0.0
    %6740 = vmatpush1.msra.mxu0 0.0
    %6741 = vmatprep.mubr.f32.mxu0 0.0
    %6742 = vmatmul.mubr.f32.gmra.mrb[0].mxu0 %v6675
    %v6743 = vpop.f32.mrb[0].mxu0
    %v6744 = vadd.f32 0.0, %v6743
    %v6745 = vpop.f32.mrb[0].mxu0
    %6746 = vdwg.mxu0
    %6747 = vrot.lane.b32.xlu0 %v2234, 96
    %v6748 = vpop.permute.xlu0 %6747
    %6749 = vrot.lane.b32.xlu0 %v2236, 96
    %v6750 = vpop.permute.xlu0 %6749
    %v6754 = vsel %vm1930, %v6427, 0
    %6756 = vmatprep.subr.mxu0 0.0
    %6757 = vmatpush1.msra.mxu0 %v6748
    %6758 = vmatprep.subr.mxu0 0.0
    %6759 = vmatpush1.msra.mxu0 %v6750
    %6760 = vmatprep.subr.mxu0 0.0
    %6761 = vmatpush1.msra.mxu0 0.0
    %6762 = vmatprep.subr.mxu0 0.0
    %6763 = vmatpush1.msra.mxu0 0.0
    %6764 = vmatprep.subr.mxu0 0.0
    %6765 = vmatpush1.msra.mxu0 0.0
    %6766 = vmatprep.subr.mxu0 0.0
    %6767 = vmatpush1.msra.mxu0 0.0
    %6768 = vmatprep.subr.mxu0 0.0
    %6769 = vmatpush1.msra.mxu0 0.0
    %6770 = vmatprep.subr.mxu0 0.0
    %6771 = vmatpush1.msra.mxu0 0.0
    %6772 = vmatprep.subr.mxu0 0.0
    %6773 = vmatpush1.msra.mxu0 0.0
    %6774 = vmatprep.subr.mxu0 0.0
    %6775 = vmatpush1.msra.mxu0 0.0
    %6776 = vmatprep.subr.mxu0 0.0
    %6777 = vmatpush1.msra.mxu0 0.0
    %6778 = vmatprep.subr.mxu0 0.0
    %6779 = vmatpush1.msra.mxu0 0.0
    %6780 = vmatprep.subr.mxu0 0.0
    %6781 = vmatpush1.msra.mxu0 0.0
    %6782 = vmatprep.subr.mxu0 0.0
    %6783 = vmatpush1.msra.mxu0 0.0
    %6784 = vmatprep.subr.mxu0 0.0
    %6785 = vmatpush1.msra.mxu0 0.0
    %6786 = vmatprep.subr.mxu0 0.0
    %6787 = vmatpush1.msra.mxu0 0.0
    %6788 = vmatprep.subr.mxu0 0.0
    %6789 = vmatpush1.msra.mxu0 0.0
    %6790 = vmatprep.subr.mxu0 0.0
    %6791 = vmatpush1.msra.mxu0 0.0
    %6792 = vmatprep.subr.mxu0 0.0
    %6793 = vmatpush1.msra.mxu0 0.0
    %6794 = vmatprep.subr.mxu0 0.0
    %6795 = vmatpush1.msra.mxu0 0.0
    %6796 = vmatprep.subr.mxu0 0.0
    %6797 = vmatpush1.msra.mxu0 0.0
    %6798 = vmatprep.subr.mxu0 0.0
    %6799 = vmatpush1.msra.mxu0 0.0
    %6800 = vmatprep.subr.mxu0 0.0
    %6801 = vmatpush1.msra.mxu0 0.0
    %6802 = vmatprep.subr.mxu0 0.0
    %6803 = vmatpush1.msra.mxu0 0.0
    %6804 = vmatprep.subr.mxu0 0.0
    %6805 = vmatpush1.msra.mxu0 0.0
    %6806 = vmatprep.subr.mxu0 0.0
    %6807 = vmatpush1.msra.mxu0 0.0
    %6808 = vmatprep.subr.mxu0 0.0
    %6809 = vmatpush1.msra.mxu0 0.0
    %6810 = vmatprep.subr.mxu0 0.0
    %6811 = vmatpush1.msra.mxu0 0.0
    %6812 = vmatprep.subr.mxu0 0.0
    %6813 = vmatpush1.msra.mxu0 0.0
    %6814 = vmatprep.subr.mxu0 0.0
    %6815 = vmatpush1.msra.mxu0 0.0
    %6816 = vmatprep.subr.mxu0 0.0
    %6817 = vmatpush1.msra.mxu0 0.0
    %6818 = vmatprep.subr.mxu0 0.0
    %6819 = vmatpush1.msra.mxu0 0.0
    %6820 = vmatprep.mubr.f32.mxu0 0.0
    %6821 = vmatmul.mubr.f32.gmra.mrb[0].mxu0 %v6754
    %v6822 = vpop.f32.mrb[0].mxu0
    %v6823 = vadd.f32 0.0, %v6822
    %v6824 = vpop.f32.mrb[0].mxu0
    %6825 = vdwg.mxu0
    %6826 = vrot.lane.b32.xlu0 %v2238, 96
    %v6827 = vpop.permute.xlu0 %6826
    %6828 = vrot.lane.b32.xlu0 %v2240, 96
    %v6829 = vpop.permute.xlu0 %6828
    %v6833 = vsel %vm1930, %v6428, 0
    %6835 = vmatprep.subr.mxu0 0.0
    %6836 = vmatpush1.msra.mxu0 %v6827
    %6837 = vmatprep.subr.mxu0 0.0
    %6838 = vmatpush1.msra.mxu0 %v6829
    %6839 = vmatprep.subr.mxu0 0.0
    %6840 = vmatpush1.msra.mxu0 0.0
    %6841 = vmatprep.subr.mxu0 0.0
    %6842 = vmatpush1.msra.mxu0 0.0
    %6843 = vmatprep.subr.mxu0 0.0
    %6844 = vmatpush1.msra.mxu0 0.0
    %6845 = vmatprep.subr.mxu0 0.0
    %6846 = vmatpush1.msra.mxu0 0.0
    %6847 = vmatprep.subr.mxu0 0.0
    %6848 = vmatpush1.msra.mxu0 0.0
    %6849 = vmatprep.subr.mxu0 0.0
    %6850 = vmatpush1.msra.mxu0 0.0
    %6851 = vmatprep.subr.mxu0 0.0
    %6852 = vmatpush1.msra.mxu0 0.0
    %6853 = vmatprep.subr.mxu0 0.0
    %6854 = vmatpush1.msra.mxu0 0.0
    %6855 = vmatprep.subr.mxu0 0.0
    %6856 = vmatpush1.msra.mxu0 0.0
    %6857 = vmatprep.subr.mxu0 0.0
    %6858 = vmatpush1.msra.mxu0 0.0
    %6859 = vmatprep.subr.mxu0 0.0
    %6860 = vmatpush1.msra.mxu0 0.0
    %6861 = vmatprep.subr.mxu0 0.0
    %6862 = vmatpush1.msra.mxu0 0.0
    %6863 = vmatprep.subr.mxu0 0.0
    %6864 = vmatpush1.msra.mxu0 0.0
    %6865 = vmatprep.subr.mxu0 0.0
    %6866 = vmatpush1.msra.mxu0 0.0
    %6867 = vmatprep.subr.mxu0 0.0
    %6868 = vmatpush1.msra.mxu0 0.0
    %6869 = vmatprep.subr.mxu0 0.0
    %6870 = vmatpush1.msra.mxu0 0.0
    %6871 = vmatprep.subr.mxu0 0.0
    %6872 = vmatpush1.msra.mxu0 0.0
    %6873 = vmatprep.subr.mxu0 0.0
    %6874 = vmatpush1.msra.mxu0 0.0
    %6875 = vmatprep.subr.mxu0 0.0
    %6876 = vmatpush1.msra.mxu0 0.0
    %6877 = vmatprep.subr.mxu0 0.0
    %6878 = vmatpush1.msra.mxu0 0.0
    %6879 = vmatprep.subr.mxu0 0.0
    %6880 = vmatpush1.msra.mxu0 0.0
    %6881 = vmatprep.subr.mxu0 0.0
    %6882 = vmatpush1.msra.mxu0 0.0
    %6883 = vmatprep.subr.mxu0 0.0
    %6884 = vmatpush1.msra.mxu0 0.0
    %6885 = vmatprep.subr.mxu0 0.0
    %6886 = vmatpush1.msra.mxu0 0.0
    %6887 = vmatprep.subr.mxu0 0.0
    %6888 = vmatpush1.msra.mxu0 0.0
    %6889 = vmatprep.subr.mxu0 0.0
    %6890 = vmatpush1.msra.mxu0 0.0
    %6891 = vmatprep.subr.mxu0 0.0
    %6892 = vmatpush1.msra.mxu0 0.0
    %6893 = vmatprep.subr.mxu0 0.0
    %6894 = vmatpush1.msra.mxu0 0.0
    %6895 = vmatprep.subr.mxu0 0.0
    %6896 = vmatpush1.msra.mxu0 0.0
    %6897 = vmatprep.subr.mxu0 0.0
    %6898 = vmatpush1.msra.mxu0 0.0
    %6899 = vmatprep.mubr.f32.mxu0 0.0
    %6900 = vmatmul.mubr.f32.gmra.mrb[0].mxu0 %v6833
    %v6901 = vpop.f32.mrb[0].mxu0
    %v6902 = vadd.f32 0.0, %v6901
    %v6903 = vpop.f32.mrb[0].mxu0
    %6904 = vdwg.mxu0
    %6905 = vrot.lane.b32.xlu0 %v2246, 96
    %v6906 = vpop.permute.xlu0 %6905
    %6907 = vrot.lane.b32.xlu0 %v2248, 96
    %v6908 = vpop.permute.xlu0 %6907
    %v6912 = vsel %vm1930, %v6429, 0
    %6914 = vmatprep.subr.mxu0 0.0
    %6915 = vmatpush1.msra.mxu0 %v6906
    %6916 = vmatprep.subr.mxu0 0.0
    %6917 = vmatpush1.msra.mxu0 %v6908
    %6918 = vmatprep.subr.mxu0 0.0
    %6919 = vmatpush1.msra.mxu0 0.0
    %6920 = vmatprep.subr.mxu0 0.0
    %6921 = vmatpush1.msra.mxu0 0.0
    %6922 = vmatprep.subr.mxu0 0.0
    %6923 = vmatpush1.msra.mxu0 0.0
    %6924 = vmatprep.subr.mxu0 0.0
    %6925 = vmatpush1.msra.mxu0 0.0
    %6926 = vmatprep.subr.mxu0 0.0
    %6927 = vmatpush1.msra.mxu0 0.0
    %6928 = vmatprep.subr.mxu0 0.0
    %6929 = vmatpush1.msra.mxu0 0.0
    %6930 = vmatprep.subr.mxu0 0.0
    %6931 = vmatpush1.msra.mxu0 0.0
    %6932 = vmatprep.subr.mxu0 0.0
    %6933 = vmatpush1.msra.mxu0 0.0
    %6934 = vmatprep.subr.mxu0 0.0
    %6935 = vmatpush1.msra.mxu0 0.0
    %6936 = vmatprep.subr.mxu0 0.0
    %6937 = vmatpush1.msra.mxu0 0.0
    %6938 = vmatprep.subr.mxu0 0.0
    %6939 = vmatpush1.msra.mxu0 0.0
    %6940 = vmatprep.subr.mxu0 0.0
    %6941 = vmatpush1.msra.mxu0 0.0
    %6942 = vmatprep.subr.mxu0 0.0
    %6943 = vmatpush1.msra.mxu0 0.0
    %6944 = vmatprep.subr.mxu0 0.0
    %6945 = vmatpush1.msra.mxu0 0.0
    %6946 = vmatprep.subr.mxu0 0.0
    %6947 = vmatpush1.msra.mxu0 0.0
    %6948 = vmatprep.subr.mxu0 0.0
    %6949 = vmatpush1.msra.mxu0 0.0
    %6950 = vmatprep.subr.mxu0 0.0
    %6951 = vmatpush1.msra.mxu0 0.0
    %6952 = vmatprep.subr.mxu0 0.0
    %6953 = vmatpush1.msra.mxu0 0.0
    %6954 = vmatprep.subr.mxu0 0.0
    %6955 = vmatpush1.msra.mxu0 0.0
    %6956 = vmatprep.subr.mxu0 0.0
    %6957 = vmatpush1.msra.mxu0 0.0
    %6958 = vmatprep.subr.mxu0 0.0
    %6959 = vmatpush1.msra.mxu0 0.0
    %6960 = vmatprep.subr.mxu0 0.0
    %6961 = vmatpush1.msra.mxu0 0.0
    %6962 = vmatprep.subr.mxu0 0.0
    %6963 = vmatpush1.msra.mxu0 0.0
    %6964 = vmatprep.subr.mxu0 0.0
    %6965 = vmatpush1.msra.mxu0 0.0
    %6966 = vmatprep.subr.mxu0 0.0
    %6967 = vmatpush1.msra.mxu0 0.0
    %6968 = vmatprep.subr.mxu0 0.0
    %6969 = vmatpush1.msra.mxu0 0.0
    %6970 = vmatprep.subr.mxu0 0.0
    %6971 = vmatpush1.msra.mxu0 0.0
    %6972 = vmatprep.subr.mxu0 0.0
    %6973 = vmatpush1.msra.mxu0 0.0
    %6974 = vmatprep.subr.mxu0 0.0
    %6975 = vmatpush1.msra.mxu0 0.0
    %6976 = vmatprep.subr.mxu0 0.0
    %6977 = vmatpush1.msra.mxu0 0.0
    %6978 = vmatprep.mubr.f32.mxu0 0.0
    %6979 = vmatmul.mubr.f32.gmra.mrb[0].mxu0 %v6912
    %v6980 = vpop.f32.mrb[0].mxu0
    %v6981 = vadd.f32 0.0, %v6980
    %v6982 = vpop.f32.mrb[0].mxu0
    %6983 = vdwg.mxu0
    %6984 = vrot.lane.b32.xlu0 %v2250, 96
    %v6985 = vpop.permute.xlu0 %6984
    %6986 = vrot.lane.b32.xlu0 %v2252, 96
    %v6987 = vpop.permute.xlu0 %6986
    %v6991 = vsel %vm1930, %v6430, 0
    %6993 = vmatprep.subr.mxu0 0.0
    %6994 = vmatpush1.msra.mxu0 %v6985
    %6995 = vmatprep.subr.mxu0 0.0
    %6996 = vmatpush1.msra.mxu0 %v6987
    %6997 = vmatprep.subr.mxu0 0.0
    %6998 = vmatpush1.msra.mxu0 0.0
    %6999 = vmatprep.subr.mxu0 0.0
    %7000 = vmatpush1.msra.mxu0 0.0
    %7001 = vmatprep.subr.mxu0 0.0
    %7002 = vmatpush1.msra.mxu0 0.0
    %7003 = vmatprep.subr.mxu0 0.0
    %7004 = vmatpush1.msra.mxu0 0.0
    %7005 = vmatprep.subr.mxu0 0.0
    %7006 = vmatpush1.msra.mxu0 0.0
    %7007 = vmatprep.subr.mxu0 0.0
    %7008 = vmatpush1.msra.mxu0 0.0
    %7009 = vmatprep.subr.mxu0 0.0
    %7010 = vmatpush1.msra.mxu0 0.0
    %7011 = vmatprep.subr.mxu0 0.0
    %7012 = vmatpush1.msra.mxu0 0.0
    %7013 = vmatprep.subr.mxu0 0.0
    %7014 = vmatpush1.msra.mxu0 0.0
    %7015 = vmatprep.subr.mxu0 0.0
    %7016 = vmatpush1.msra.mxu0 0.0
    %7017 = vmatprep.subr.mxu0 0.0
    %7018 = vmatpush1.msra.mxu0 0.0
    %7019 = vmatprep.subr.mxu0 0.0
    %7020 = vmatpush1.msra.mxu0 0.0
    %7021 = vmatprep.subr.mxu0 0.0
    %7022 = vmatpush1.msra.mxu0 0.0
    %7023 = vmatprep.subr.mxu0 0.0
    %7024 = vmatpush1.msra.mxu0 0.0
    %7025 = vmatprep.subr.mxu0 0.0
    %7026 = vmatpush1.msra.mxu0 0.0
    %7027 = vmatprep.subr.mxu0 0.0
    %7028 = vmatpush1.msra.mxu0 0.0
    %7029 = vmatprep.subr.mxu0 0.0
    %7030 = vmatpush1.msra.mxu0 0.0
    %7031 = vmatprep.subr.mxu0 0.0
    %7032 = vmatpush1.msra.mxu0 0.0
    %7033 = vmatprep.subr.mxu0 0.0
    %7034 = vmatpush1.msra.mxu0 0.0
    %7035 = vmatprep.subr.mxu0 0.0
    %7036 = vmatpush1.msra.mxu0 0.0
    %7037 = vmatprep.subr.mxu0 0.0
    %7038 = vmatpush1.msra.mxu0 0.0
    %7039 = vmatprep.subr.mxu0 0.0
    %7040 = vmatpush1.msra.mxu0 0.0
    %7041 = vmatprep.subr.mxu0 0.0
    %7042 = vmatpush1.msra.mxu0 0.0
    %7043 = vmatprep.subr.mxu0 0.0
    %7044 = vmatpush1.msra.mxu0 0.0
    %7045 = vmatprep.subr.mxu0 0.0
    %7046 = vmatpush1.msra.mxu0 0.0
    %7047 = vmatprep.subr.mxu0 0.0
    %7048 = vmatpush1.msra.mxu0 0.0
    %7049 = vmatprep.subr.mxu0 0.0
    %7050 = vmatpush1.msra.mxu0 0.0
    %7051 = vmatprep.subr.mxu0 0.0
    %7052 = vmatpush1.msra.mxu0 0.0
    %7053 = vmatprep.subr.mxu0 0.0
    %7054 = vmatpush1.msra.mxu0 0.0
    %7055 = vmatprep.subr.mxu0 0.0
    %7056 = vmatpush1.msra.mxu0 0.0
    %7057 = vmatprep.mubr.f32.mxu0 0.0
    %7058 = vmatmul.mubr.f32.gmra.mrb[0].mxu0 %v6991
    %v7059 = vpop.f32.mrb[0].mxu0
    %v7060 = vadd.f32 0.0, %v7059
    %v7061 = vpop.f32.mrb[0].mxu0
    %7062 = vdwg.mxu0
    %7065 = vrot.lane.b32.xlu0 %v6665, 8
    %v7066 = vpop.permute.xlu0 %7065
    %7067 = vrot.lane.b32.xlu0 %v6744, 8
    %v7068 = vpop.permute.xlu0 %7067
    %7073 = vrot.lane.b32.xlu0 %v6823, 16
    %v7074 = vpop.permute.xlu0 %7073
    %7075 = vrot.lane.b32.xlu0 %v6902, 16
    %v7076 = vpop.permute.xlu0 %7075
    %7081 = vrot.lane.b32.xlu0 %v6981, 24
    %v7082 = vpop.permute.xlu0 %7081
    %7083 = vrot.lane.b32.xlu0 %v7060, 24
    %v7084 = vpop.permute.xlu0 %7083
    %v7087 = vsel %vm601, %v6507, %v7066
    %v7088 = vsel %vm601, %v6586, %v7068
    %v7089 = vsel %vm1930, %v7087, %v7074
    %v7090 = vsel %vm1930, %v7088, %v7076
    %v7091 = vsel %vm1933, %v7089, %v7082
    %v7092 = vsel %vm1933, %v7090, %v7084
    %v7094 = vlaneseq
    %v7095 = vshrl.u32 %v7094, 7
    %v7096 = vsub.s32 0, %v7095
    %v7097 = vrot.slane %v5688, %v7096
    %v7100 = vsel %vm105, %v7091, 0
    %v7103 = vsel %vm105, %v7092, 0
    %7105 = vmatprep.subr.mxu0 0.0
    %7106 = vmatpush1.msra.mxu0 %v5683
    %7107 = vmatprep.subr.mxu0 0.0
    %7108 = vmatpush1.msra.mxu0 %v5684
    %7109 = vmatprep.subr.mxu0 0.0
    %7110 = vmatpush1.msra.mxu0 %v5685
    %7111 = vmatprep.subr.mxu0 0.0
    %7112 = vmatpush1.msra.mxu0 %v5686
    %7113 = vmatprep.subr.mxu0 0.0
    %7114 = vmatpush1.msra.mxu0 0.0
    %7115 = vmatprep.subr.mxu0 0.0
    %7116 = vmatpush1.msra.mxu0 0.0
    %7117 = vmatprep.subr.mxu0 0.0
    %7118 = vmatpush1.msra.mxu0 0.0
    %7119 = vmatprep.subr.mxu0 0.0
    %7120 = vmatpush1.msra.mxu0 0.0
    %7121 = vmatprep.subr.mxu0 0.0
    %7122 = vmatpush1.msra.mxu0 0.0
    %7123 = vmatprep.subr.mxu0 0.0
    %7124 = vmatpush1.msra.mxu0 0.0
    %7125 = vmatprep.subr.mxu0 0.0
    %7126 = vmatpush1.msra.mxu0 0.0
    %7127 = vmatprep.subr.mxu0 0.0
    %7128 = vmatpush1.msra.mxu0 0.0
    %7129 = vmatprep.subr.mxu0 0.0
    %7130 = vmatpush1.msra.mxu0 0.0
    %7131 = vmatprep.subr.mxu0 0.0
    %7132 = vmatpush1.msra.mxu0 0.0
    %7133 = vmatprep.subr.mxu0 0.0
    %7134 = vmatpush1.msra.mxu0 0.0
    %7135 = vmatprep.subr.mxu0 0.0
    %7136 = vmatpush1.msra.mxu0 0.0
    %7137 = vmatprep.subr.mxu0 0.0
    %7138 = vmatpush1.msra.mxu0 0.0
    %7139 = vmatprep.subr.mxu0 0.0
    %7140 = vmatpush1.msra.mxu0 0.0
    %7141 = vmatprep.subr.mxu0 0.0
    %7142 = vmatpush1.msra.mxu0 0.0
    %7143 = vmatprep.subr.mxu0 0.0
    %7144 = vmatpush1.msra.mxu0 0.0
    %7145 = vmatprep.subr.mxu0 0.0
    %7146 = vmatpush1.msra.mxu0 0.0
    %7147 = vmatprep.subr.mxu0 0.0
    %7148 = vmatpush1.msra.mxu0 0.0
    %7149 = vmatprep.subr.mxu0 0.0
    %7150 = vmatpush1.msra.mxu0 0.0
    %7151 = vmatprep.subr.mxu0 0.0
    %7152 = vmatpush1.msra.mxu0 0.0
    %7153 = vmatprep.subr.mxu0 0.0
    %7154 = vmatpush1.msra.mxu0 0.0
    %7155 = vmatprep.subr.mxu0 0.0
    %7156 = vmatpush1.msra.mxu0 0.0
    %7157 = vmatprep.subr.mxu0 0.0
    %7158 = vmatpush1.msra.mxu0 0.0
    %7159 = vmatprep.subr.mxu0 0.0
    %7160 = vmatpush1.msra.mxu0 0.0
    %7161 = vmatprep.subr.mxu0 0.0
    %7162 = vmatpush1.msra.mxu0 0.0
    %7163 = vmatprep.subr.mxu0 0.0
    %7164 = vmatpush1.msra.mxu0 0.0
    %7165 = vmatprep.subr.mxu0 0.0
    %7166 = vmatpush1.msra.mxu0 0.0
    %7167 = vmatprep.subr.mxu0 0.0
    %7168 = vmatpush1.msra.mxu0 0.0
    %7169 = vmatprep.mubr.f32.mxu0 0.0
    %7170 = vmatmul.mubr.f32.gmra.mrb[0].mxu0 %v7100
    %v7171 = vpop.f32.mrb[0].mxu0
    %v7172 = vadd.f32 %v7097, %v7171
    %v7173 = vpop.f32.mrb[0].mxu0
    %7174 = vmatprep.mubr.f32.mxu0 0.0
    %7175 = vmatmul.mubr.f32.gmra.mrb[0].mxu0 %v7103
    %v7176 = vpop.f32.mrb[0].mxu0
    %v7177 = vadd.f32 %v7097, %v7176
    %v7178 = vpop.f32.mrb[0].mxu0
    %7179 = vdwg.mxu0
    %v7180 = vadd.f32 %v5538, %v7172
    %v7181 = vadd.f32 %v5539, %v7177
    %s7182 = scalar_lea.vmem %s14, 5
    %v7183 = vld [vmem:[%s7182] sm:$0x1]
    %s7184 = scalar_lea.vmem %s14, 11
    %v7185 = vld [vmem:[%s7184] sm:$0x1]
    %v7186 = vsel %vm105, %v7180, 0.0
    %7187 = vadd.xlane.f32.xlu0 %v7186
    %v7188 = vpop.xlane.xlu0 %7187
    %v7189 = vsel %vm105, %v7181, 0.0
    %7190 = vadd.xlane.f32.xlu0 %v7189
    %v7191 = vpop.xlane.xlu0 %7190
    %v7192 = vmul.f32 %v7188, %v425
    %v7193 = vmul.f32 %v7191, %v425
    %v7194 = vmul.f32 %v7180, %v7180
    %v7195 = vmul.f32 %v7181, %v7181
    %v7196 = vsel %vm105, %v7194, 0.0
    %7197 = vadd.xlane.f32.xlu0 %v7196
    %v7198 = vpop.xlane.xlu0 %7197
    %v7199 = vsel %vm105, %v7195, 0.0
    %7200 = vadd.xlane.f32.xlu0 %v7199
    %v7201 = vpop.xlane.xlu0 %7200
    %v7202 = vmul.f32 %v7198, %v425
    %v7203 = vmul.f32 %v7201, %v425
    %v7204 = vsub.f32 %v7180, %v7192
    %v7205 = vsub.f32 %v7181, %v7193
    %v7206 = vmul.f32 %v7192, %v7192
    %v7207 = vmul.f32 %v7193, %v7193
    %v7208 = vsub.f32 %v7202, %v7206
    %v7209 = vsub.f32 %v7203, %v7207
    %v7210 = vadd.f32 %v7208, 1e-05
    %v7211 = vadd.f32 %v7209, 1e-05
    %v7212 = vrsqrt.pop %v7210
    %v7213 = vrsqrt.pop %v7211
    %v7214 = vmul.f32 %v7204, %v7212
    %v7215 = vmul.f32 %v7205, %v7213
    %v7217 = vlaneseq
    %v7218 = vshrl.u32 %v7217, 7
    %v7219 = vsub.s32 0, %v7218
    %v7220 = vrot.slane %v7183, %v7219
    %v7222 = vmul.f32 %v7214, %v7220
    %v7223 = vmul.f32 %v7215, %v7220
    %v7225 = vlaneseq
    %v7226 = vshrl.u32 %v7225, 7
    %v7227 = vsub.s32 0, %v7226
    %v7228 = vrot.slane %v7185, %v7227
    %v7230 = vadd.f32 %v7222, %v7228
    %v7231 = vadd.f32 %v7223, %v7228
    %s7232 = scalar_lea.vmem [#allocation4], 32
    %v7233 = vld [vmem:[%s7232] sm:$0xff]
    %v7234 = vld [vmem:[%s7232 + $0x8] sm:$0xff]
    %v7235 = vld [vmem:[%s7232 + $0x10] sm:$0xff]
    %v7236 = vld [vmem:[%s7232 + $0x18] sm:$0xff]
    %s7237 = scalar_lea.vmem %s12, 1
    %v7238 = vld [vmem:[%s7237] sm:$0x1]
    %v7240 = vlaneseq
    %v7241 = vshrl.u32 %v7240, 7
    %v7242 = vsub.s32 0, %v7241
    %v7243 = vrot.slane %v7238, %v7242
    %v7246 = vsel %vm105, %v7230, 0
    %v7249 = vsel %vm105, %v7231, 0
    %7251 = vmatprep.subr.mxu0 0.0
    %7252 = vmatpush1.msra.mxu0 %v7233
    %7253 = vmatprep.subr.mxu0 0.0
    %7254 = vmatpush1.msra.mxu0 %v7234
    %7255 = vmatprep.subr.mxu0 0.0
    %7256 = vmatpush1.msra.mxu0 %v7235
    %7257 = vmatprep.subr.mxu0 0.0
    %7258 = vmatpush1.msra.mxu0 %v7236
    %7259 = vmatprep.subr.mxu0 0.0
    %7260 = vmatpush1.msra.mxu0 0.0
    %7261 = vmatprep.subr.mxu0 0.0
    %7262 = vmatpush1.msra.mxu0 0.0
    %7263 = vmatprep.subr.mxu0 0.0
    %7264 = vmatpush1.msra.mxu0 0.0
    %7265 = vmatprep.subr.mxu0 0.0
    %7266 = vmatpush1.msra.mxu0 0.0
    %7267 = vmatprep.subr.mxu0 0.0
    %7268 = vmatpush1.msra.mxu0 0.0
    %7269 = vmatprep.subr.mxu0 0.0
    %7270 = vmatpush1.msra.mxu0 0.0
    %7271 = vmatprep.subr.mxu0 0.0
    %7272 = vmatpush1.msra.mxu0 0.0
    %7273 = vmatprep.subr.mxu0 0.0
    %7274 = vmatpush1.msra.mxu0 0.0
    %7275 = vmatprep.subr.mxu0 0.0
    %7276 = vmatpush1.msra.mxu0 0.0
    %7277 = vmatprep.subr.mxu0 0.0
    %7278 = vmatpush1.msra.mxu0 0.0
    %7279 = vmatprep.subr.mxu0 0.0
    %7280 = vmatpush1.msra.mxu0 0.0
    %7281 = vmatprep.subr.mxu0 0.0
    %7282 = vmatpush1.msra.mxu0 0.0
    %7283 = vmatprep.subr.mxu0 0.0
    %7284 = vmatpush1.msra.mxu0 0.0
    %7285 = vmatprep.subr.mxu0 0.0
    %7286 = vmatpush1.msra.mxu0 0.0
    %7287 = vmatprep.subr.mxu0 0.0
    %7288 = vmatpush1.msra.mxu0 0.0
    %7289 = vmatprep.subr.mxu0 0.0
    %7290 = vmatpush1.msra.mxu0 0.0
    %7291 = vmatprep.subr.mxu0 0.0
    %7292 = vmatpush1.msra.mxu0 0.0
    %7293 = vmatprep.subr.mxu0 0.0
    %7294 = vmatpush1.msra.mxu0 0.0
    %7295 = vmatprep.subr.mxu0 0.0
    %7296 = vmatpush1.msra.mxu0 0.0
    %7297 = vmatprep.subr.mxu0 0.0
    %7298 = vmatpush1.msra.mxu0 0.0
    %7299 = vmatprep.subr.mxu0 0.0
    %7300 = vmatpush1.msra.mxu0 0.0
    %7301 = vmatprep.subr.mxu0 0.0
    %7302 = vmatpush1.msra.mxu0 0.0
    %7303 = vmatprep.subr.mxu0 0.0
    %7304 = vmatpush1.msra.mxu0 0.0
    %7305 = vmatprep.subr.mxu0 0.0
    %7306 = vmatpush1.msra.mxu0 0.0
    %7307 = vmatprep.subr.mxu0 0.0
    %7308 = vmatpush1.msra.mxu0 0.0
    %7309 = vmatprep.subr.mxu0 0.0
    %7310 = vmatpush1.msra.mxu0 0.0
    %7311 = vmatprep.subr.mxu0 0.0
    %7312 = vmatpush1.msra.mxu0 0.0
    %7313 = vmatprep.subr.mxu0 0.0
    %7314 = vmatpush1.msra.mxu0 0.0
    %7315 = vmatprep.mubr.f32.mxu0 0.0
    %7316 = vmatmul.mubr.f32.gmra.mrb[0].mxu0 %v7246
    %v7317 = vpop.f32.mrb[0].mxu0
    %v7318 = vadd.f32 %v7243, %v7317
    %v7319 = vpop.f32.mrb[0].mxu0
    %7320 = vmatprep.mubr.f32.mxu0 0.0
    %7321 = vmatmul.mubr.f32.gmra.mrb[0].mxu0 %v7249
    %v7322 = vpop.f32.mrb[0].mxu0
    %v7323 = vadd.f32 %v7243, %v7322
    %v7324 = vpop.f32.mrb[0].mxu0
    %7325 = vdwg.mxu0
    %v7326 = vmax.f32 %v7318, 0.0
    %v7327 = vmax.f32 %v7323, 0.0
    %s7328 = scalar_lea.vmem %s13, 64
    %v7329 = vld [vmem:[%s7328] sm:$0xff]
    %v7330 = vld [vmem:[%s7328 + $0x8] sm:$0xff]
    %v7331 = vld [vmem:[%s7328 + $0x10] sm:$0xff]
    %v7332 = vld [vmem:[%s7328 + $0x18] sm:$0xff]
    %v7333 = vld [vmem:[%s7328 + $0x20] sm:$0xff]
    %v7334 = vld [vmem:[%s7328 + $0x28] sm:$0xff]
    %v7335 = vld [vmem:[%s7328 + $0x30] sm:$0xff]
    %v7336 = vld [vmem:[%s7328 + $0x38] sm:$0xff]
    %v7338 = vsel %vm3808, %v7326, 0
    %v7341 = vsel %vm3808, %v7327, 0
    %7343 = vmatprep.subr.mxu0 0.0
    %7344 = vmatpush1.msra.mxu0 %v7329
    %7345 = vmatprep.subr.mxu0 0.0
    %7346 = vmatpush1.msra.mxu0 %v7330
    %7347 = vmatprep.subr.mxu0 0.0
    %7348 = vmatpush1.msra.mxu0 %v7331
    %7349 = vmatprep.subr.mxu0 0.0
    %7350 = vmatpush1.msra.mxu0 %v7332
    %7351 = vmatprep.subr.mxu0 0.0
    %7352 = vmatpush1.msra.mxu0 %v7333
    %7353 = vmatprep.subr.mxu0 0.0
    %7354 = vmatpush1.msra.mxu0 %v7334
    %7355 = vmatprep.subr.mxu0 0.0
    %7356 = vmatpush1.msra.mxu0 %v7335
    %7357 = vmatprep.subr.mxu0 0.0
    %7358 = vmatpush1.msra.mxu0 %v7336
    %7359 = vmatprep.subr.mxu0 0.0
    %7360 = vmatpush1.msra.mxu0 0.0
    %7361 = vmatprep.subr.mxu0 0.0
    %7362 = vmatpush1.msra.mxu0 0.0
    %7363 = vmatprep.subr.mxu0 0.0
    %7364 = vmatpush1.msra.mxu0 0.0
    %7365 = vmatprep.subr.mxu0 0.0
    %7366 = vmatpush1.msra.mxu0 0.0
    %7367 = vmatprep.subr.mxu0 0.0
    %7368 = vmatpush1.msra.mxu0 0.0
    %7369 = vmatprep.subr.mxu0 0.0
    %7370 = vmatpush1.msra.mxu0 0.0
    %7371 = vmatprep.subr.mxu0 0.0
    %7372 = vmatpush1.msra.mxu0 0.0
    %7373 = vmatprep.subr.mxu0 0.0
    %7374 = vmatpush1.msra.mxu0 0.0
    %7375 = vmatprep.subr.mxu0 0.0
    %7376 = vmatpush1.msra.mxu0 0.0
    %7377 = vmatprep.subr.mxu0 0.0
    %7378 = vmatpush1.msra.mxu0 0.0
    %7379 = vmatprep.subr.mxu0 0.0
    %7380 = vmatpush1.msra.mxu0 0.0
    %7381 = vmatprep.subr.mxu0 0.0
    %7382 = vmatpush1.msra.mxu0 0.0
    %7383 = vmatprep.subr.mxu0 0.0
    %7384 = vmatpush1.msra.mxu0 0.0
    %7385 = vmatprep.subr.mxu0 0.0
    %7386 = vmatpush1.msra.mxu0 0.0
    %7387 = vmatprep.subr.mxu0 0.0
    %7388 = vmatpush1.msra.mxu0 0.0
    %7389 = vmatprep.subr.mxu0 0.0
    %7390 = vmatpush1.msra.mxu0 0.0
    %7391 = vmatprep.subr.mxu0 0.0
    %7392 = vmatpush1.msra.mxu0 0.0
    %7393 = vmatprep.subr.mxu0 0.0
    %7394 = vmatpush1.msra.mxu0 0.0
    %7395 = vmatprep.subr.mxu0 0.0
    %7396 = vmatpush1.msra.mxu0 0.0
    %7397 = vmatprep.subr.mxu0 0.0
    %7398 = vmatpush1.msra.mxu0 0.0
    %7399 = vmatprep.subr.mxu0 0.0
    %7400 = vmatpush1.msra.mxu0 0.0
    %7401 = vmatprep.subr.mxu0 0.0
    %7402 = vmatpush1.msra.mxu0 0.0
    %7403 = vmatprep.subr.mxu0 0.0
    %7404 = vmatpush1.msra.mxu0 0.0
    %7405 = vmatprep.subr.mxu0 0.0
    %7406 = vmatpush1.msra.mxu0 0.0
    %7407 = vmatprep.mubr.f32.mxu0 0.0
    %7408 = vmatmul.mubr.f32.gmra.mrb[0].mxu0 %v7338
    %v7409 = vpop.f32.mrb[0].mxu0
    %v7410 = vadd.f32 0.0, %v7409
    %v7411 = vpop.f32.mrb[0].mxu0
    %7412 = vmatprep.mubr.f32.mxu0 0.0
    %7413 = vmatmul.mubr.f32.gmra.mrb[0].mxu0 %v7341
    %v7414 = vpop.f32.mrb[0].mxu0
    %v7415 = vadd.f32 0.0, %v7414
    %v7416 = vpop.f32.mrb[0].mxu0
    %7417 = vdwg.mxu0
    %v7418 = vadd.f32 %v7180, %v7410
    %v7419 = vadd.f32 %v7181, %v7415
    %s7420 = scalar_lea.vmem %s6, 7
    %v7421 = vld [vmem:[%s7420] sm:$0x1]
    %v7423 = vlaneseq
    %v7424 = vshrl.u32 %v7423, 7
    %v7425 = vsub.s32 0, %v7424
    %v7426 = vrot.slane %v7421, %v7425
    %v7428 = vadd.f32 %v7418, %v7426
    %v7429 = vadd.f32 %v7419, %v7426
    %7430 = vst.msk [vmem:[%s15] sm:$0xff] %vm105, %v7428
    %7431 = vst.msk [vmem:[%s15 + $0x8] sm:$0xff] %vm105, %v7429
    // Predicated region
    $region70: #{transformer_decoder.1} parent=1 // pred_check
      _
    $region71: #{transformer_decoder.1} parent=1 // pred_check_branch
      %7433 = sbr.rel (0) target = $region73
    $region72: #{transformer_decoder.1} parent=1 // pred_region
      _
    $region73: #{transformer_decoder.1} parent=1 // pred_fallthru
      _
    // Predicated region
    $region74: #{transformer_decoder.1} parent=1 // pred_check
      _
    $region75: #{transformer_decoder.1} parent=1 // pred_check_branch
      %7435 = sbr.rel (0) target = $region77
    $region76: #{transformer_decoder.1} parent=1 // pred_region
      _
    $region77: #{transformer_decoder.1} parent=1 // pred_fallthru
      _
    %7436 = vsyncpa [#allocation3], 1
    %7437 = vsyncpa [#allocation5], 1

</llo_original>
